<compile_context>
chip_gen: v6e
topology: v6e:2x2x1
jax: 0.10.0
libtpu: 0.0.40
codegen_flags: <defaults>
</compile_context>

<pallas_src>
from functools import partial

import numpy as np
import jax
import jax.numpy as jnp
from jax.experimental import pallas as pl
from jax.experimental.pallas import tpu as pltpu

_BN_EPS = 1e-5


# ---------------------------------------------------------------------------
# In-kernel helpers (all operate on VMEM-resident f32 values in NCL layout)
# ---------------------------------------------------------------------------
def _shift_matrices(L, offsets):
    """S_d[l', l] = 1 iff l' == l + d, so (y @ S_d)[:, l] == y[:, l + d]
    with zeros outside [0, L).  Exact 0/1 selection matrices built via iota."""
    row = jax.lax.broadcasted_iota(jnp.int32, (L, L), 0)
    col = jax.lax.broadcasted_iota(jnp.int32, (L, L), 1)
    return [(row == col + int(d)).astype(jnp.float32) for d in offsets]


def _decimate_matrix(L, R):
    """D[l, o] = 1 iff l == R*o  ->  (y @ D)[:, o] == y[:, R*o]."""
    row = jax.lax.broadcasted_iota(jnp.int32, (L, L // R), 0)
    col = jax.lax.broadcasted_iota(jnp.int32, (L, L // R), 1)
    return (row == R * col).astype(jnp.float32)


def _conv(h, w_ref, shift_mats, cout):
    """'same' Conv1d in NCL layout.
    h: (Cin, L).  w_ref: (K*Cout, Cin) tap-stacked weight, rows
    k*Cout:(k+1)*Cout hold the tap-k weight.  shift_mats[k] shifts by k-pad."""
    p = jnp.dot(w_ref[...], h, preferred_element_type=jnp.float32)   # (K*Cout, L)
    y = None
    for k, s in enumerate(shift_mats):
        yk = jnp.dot(p[k * cout:(k + 1) * cout, :], s,
                     preferred_element_type=jnp.float32)
        y = yk if y is None else y + yk
    return y                                                         # (Cout, L)


def _conv_relu_bn(h, w_ref, vec_ref, shift_mats, cout):
    """conv(+bias) -> ReLU -> BatchNorm1d(eval-mode affine) -> Dropout(p=0).
    vec_ref: (3, Cout, 1) = [effective_bias, bn_scale, bn_shift]."""
    y = _conv(h, w_ref, shift_mats, cout) + vec_ref[0]
    y = jnp.maximum(y, 0.0)
    return y * vec_ref[1] + vec_ref[2]


def _block(h, w0_ref, chains, shift_mats, cout):
    """One ReasonerBlock: 1x1-conv branch + 3 conv chains, branches summed
    (ParallelMapReduce + Stack(dim=1) + Sum(dim=1))."""
    acc = jnp.dot(w0_ref[...], h, preferred_element_type=jnp.float32)  # k=1, no bias
    for chain in chains:
        hb = h
        for w_ref, v_ref in chain:
            hb = _conv_relu_bn(hb, w_ref, v_ref, shift_mats, cout)
        acc = acc + hb
    return acc


def _maxpool(y, R):
    """MaxPool1d(kernel=stride=R) along the lane (length) axis; L % R == 0."""
    _, L = y.shape
    m = y
    for s in _shift_matrices(L, range(1, R)):
        m = jnp.maximum(m, jnp.dot(y, s, preferred_element_type=jnp.float32))
    # m[:, l] == max(y[:, l:l+R]); keep every R-th lane via exact selection.
    return jnp.dot(m, _decimate_matrix(L, R), preferred_element_type=jnp.float32)


def _reasoner_kernel(x_ref, *rest, depth1, depth2, n_branch, pool_r, K, cout):
    o_ref = rest[-1]
    it = iter(rest[:-1])
    pad = (K - 1) // 2

    def take_block(depth):
        w0 = next(it)
        chains = [[(next(it), next(it)) for _ in range(depth)]
                  for _ in range(n_branch)]
        return w0, chains

    h = x_ref[...].astype(jnp.float32)                     # (Cin_pad, L)

    # ---- block 1 -----------------------------------------------------------
    s1 = _shift_matrices(h.shape[1], range(-pad, pad + 1))
    w0, chains = take_block(depth1)
    h = _block(h, w0, chains, s1, cout)                    # (Cout, L)

    # ---- maxpool bottleneck ------------------------------------------------
    h = _maxpool(h, pool_r)                                # (Cout, L // R)

    # ---- block 2 -----------------------------------------------------------
    s2 = _shift_matrices(h.shape[1], range(-pad, pad + 1))
    w0, chains = take_block(depth2)
    h = _block(h, w0, chains, s2, cout)                    # (Cout, L // R)

    # ---- AdaptiveAvgPool1d(O) as a pooling matmul --------------------------
    pm_ref = next(it)                                      # (L // R, O)
    o_ref[...] = jnp.dot(h, pm_ref[...],
                         preferred_element_type=jnp.float32).astype(o_ref.dtype)


# ---------------------------------------------------------------------------
# Wrapper: a single fused pallas_call over the batch
# ---------------------------------------------------------------------------
def reasoner_forward(x_ncl, flat_params, pool_mat, *, depth1=1, depth2=2,
                     n_branch=3, pool_r=4, K=7):
    """x_ncl: (B, num_context_panels, L) -> (B, num_hidden_panels, O)."""
    B, cin, L = x_ncl.shape
    cout = flat_params[0].shape[0]
    cin_pad = flat_params[0].shape[1]
    O = pool_mat.shape[1]
    assert L % pool_r == 0 and pool_mat.shape[0] == L // pool_r

    x = x_ncl.astype(jnp.float32)
    if cin_pad > cin:                                   # zero channels; matching
        x = jnp.pad(x, ((0, 0), (0, cin_pad - cin), (0, 0)))   # weight cols are 0

    kern = partial(_reasoner_kernel, depth1=depth1, depth2=depth2,
                   n_branch=n_branch, pool_r=pool_r, K=K, cout=cout)

    in_specs = [pl.BlockSpec((None, cin_pad, L), lambda b: (b, 0, 0))]
    for p in list(flat_params) + [pool_mat]:
        in_specs.append(pl.BlockSpec(p.shape, lambda b, _n=p.ndim: (0,) * _n))

    return pl.pallas_call(
        kern,
        out_shape=jax.ShapeDtypeStruct((B, cout, O), jnp.float32),
        grid=(B,),
        in_specs=in_specs,
        out_specs=pl.BlockSpec((None, cout, O), lambda b: (b, 0, 0)),
        compiler_params=pltpu.CompilerParams(
            dimension_semantics=("parallel",)),
    )(x, *flat_params, pool_mat)


# ---------------------------------------------------------------------------
# Parameter construction: fold groups / row-pairs / taps into dense weights
# ---------------------------------------------------------------------------
def _fold_taps(w_eff):
    """(Cout, Cin, K) torch Conv1d weight -> tap-stacked (K*Cout, Cin)."""
    co, ci, k = w_eff.shape
    return jnp.transpose(w_eff, (2, 0, 1)).reshape(k * co, ci)


def _pad_cols(w2d, mult=8):
    c = w2d.shape[1]
    cp = -(-c // mult) * mult
    return jnp.pad(w2d, ((0, 0), (0, cp - c))) if cp != c else w2d


def adaptive_avg_pool_matrix(L, O):
    """torch AdaptiveAvgPool1d(O) pooling matrix, (L, O)."""
    m = np.zeros((L, O), np.float32)
    for o in range(O):
        s = (o * L) // O
        e = -((-(o + 1) * L) // O)
        m[s:e, o] = 1.0 / (e - s)
    return jnp.asarray(m)


def init_params(key, *, num_context_panels=9, num_hidden_panels=32, K=7,
                g1_row=3, g1_pair=3, g2_row=8, g2_pair=4):
    """Deterministic init; returns the flat parameter list in kernel order."""
    kit = iter(jax.random.split(key, 64))
    cout = num_hidden_panels

    def unif(shape, fan_in):
        b = float(1.0 / np.sqrt(fan_in))
        return jax.random.uniform(next(kit), shape, jnp.float32, -b, b)

    def bn_vec(bias_eff, gamma, beta):
        scale = gamma * float(1.0 / np.sqrt(1.0 + _BN_EPS))  # eval-mode BN
        return jnp.stack([bias_eff, scale, beta], axis=0)[:, :, None]  # (3,Cout,1)

    def layer(cin, kind, g):
        if kind == 'row':            # SharedGroupConv1d('sum'): tile shared W
            cg = cin // g
            w_sh = unif((cout, cg, K), cg * K)
            b = unif((cout,), cg * K)
            w_eff = jnp.tile(w_sh, (1, g, 1))
            bias_eff = float(g) * b
        elif kind == 'pair':         # RowPairSharedGroupConv1d('sum')
            cg = cin // g
            w_sh = unif((cout, 2 * cg, K), 2 * cg * K)
            b = unif((cout,), 2 * cg * K)
            w1, w2 = w_sh[:, :cg, :], w_sh[:, cg:, :]
            w_eff = jnp.concatenate(
                [float(g - 1 - i) * w1 + float(i) * w2 for i in range(g)], axis=1)
            bias_eff = float(g * (g - 1) // 2) * b
        else:                        # full-context Conv1d
            w_eff = unif((cout, cin, K), cin * K)
            bias_eff = unif((cout,), cin * K)
        gamma = 1.0 + 0.1 * unif((cout,), 1.0)
        beta = 0.1 * unif((cout,), 1.0)
        return _pad_cols(_fold_taps(w_eff)), bn_vec(bias_eff, gamma, beta)

    def block(cin, depth, g_row, g_pair):
        flat = [_pad_cols(unif((cout, cin), cin))]        # 1x1 conv, bias=False
        for kind, g in (('row', g_row), ('pair', g_pair), ('full', None)):
            c = cin
            for _ in range(depth):
                w, v = layer(c, kind, g)
                flat += [w, v]
                c = cout
        return flat

    # block 1: block_depth=1, group counts = 3; block 2: depth=2, groups 8 / 4
    return (block(num_context_panels, 1, g1_row, g1_pair)
            + block(num_hidden_panels, 2, g2_row, g2_pair))


if __name__ == "__main__":
    key = jax.random.PRNGKey(0)
    pkey, xkey = jax.random.split(key)

    flat_params = init_params(pkey)

    # small, module-consistent shapes: (batch=2, num_context_panels=9, L=128)
    B, C, L = 2, 9, 128
    x = jax.random.normal(xkey, (B, C, L), jnp.float32)
    pool_mat = adaptive_avg_pool_matrix(L // 4, 16)       # maxpool R=round(1/0.25)

    fwd = jax.jit(reasoner_forward)
    out = fwd(x, flat_params, pool_mat)
    jax.block_until_ready(out)

    assert out.shape == (B, 32, 16), out.shape
    assert bool(jnp.all(jnp.isfinite(out)))
    print("KERNEL_OK")
</pallas_src>

<mosaic_0001>
module attributes {stable_mosaic.version = 11 : i64} {
  func.func @_reasoner_kernel(%arg0: i32, %arg1: memref<1x16x128xf32, #tpu.memory_space<vmem>>, %arg2: memref<32x16xf32, #tpu.memory_space<vmem>>, %arg3: memref<224x16xf32, #tpu.memory_space<vmem>>, %arg4: memref<3x32x1xf32, #tpu.memory_space<vmem>>, %arg5: memref<224x16xf32, #tpu.memory_space<vmem>>, %arg6: memref<3x32x1xf32, #tpu.memory_space<vmem>>, %arg7: memref<224x16xf32, #tpu.memory_space<vmem>>, %arg8: memref<3x32x1xf32, #tpu.memory_space<vmem>>, %arg9: memref<32x32xf32, #tpu.memory_space<vmem>>, %arg10: memref<224x32xf32, #tpu.memory_space<vmem>>, %arg11: memref<3x32x1xf32, #tpu.memory_space<vmem>>, %arg12: memref<224x32xf32, #tpu.memory_space<vmem>>, %arg13: memref<3x32x1xf32, #tpu.memory_space<vmem>>, %arg14: memref<224x32xf32, #tpu.memory_space<vmem>>, %arg15: memref<3x32x1xf32, #tpu.memory_space<vmem>>, %arg16: memref<224x32xf32, #tpu.memory_space<vmem>>, %arg17: memref<3x32x1xf32, #tpu.memory_space<vmem>>, %arg18: memref<224x32xf32, #tpu.memory_space<vmem>>, %arg19: memref<3x32x1xf32, #tpu.memory_space<vmem>>, %arg20: memref<224x32xf32, #tpu.memory_space<vmem>>, %arg21: memref<3x32x1xf32, #tpu.memory_space<vmem>>, %arg22: memref<32x16xf32, #tpu.memory_space<vmem>>, %arg23: memref<1x32x16xf32, #tpu.memory_space<vmem>>) attributes {dimension_semantics = [#tpu.dimension_semantics<parallel>], iteration_bounds = array<i64: 2>, scalar_prefetch = 0 : i64, scratch_operands = 0 : i64, tpu.core_type = #tpu.core_type<tc>, window_params = [{transform_indices = @transform_0, window_bounds = array<i64: 1, 16, 128>}, {pipeline_mode = #tpu.pipeline_mode<synchronous>, transform_indices = @transform_1, window_bounds = array<i64: 32, 16>}, {pipeline_mode = #tpu.pipeline_mode<synchronous>, transform_indices = @transform_2, window_bounds = array<i64: 224, 16>}, {pipeline_mode = #tpu.pipeline_mode<synchronous>, transform_indices = @transform_3, window_bounds = array<i64: 3, 32, 1>}, {pipeline_mode = #tpu.pipeline_mode<synchronous>, transform_indices = @transform_4, window_bounds = array<i64: 224, 16>}, {pipeline_mode = #tpu.pipeline_mode<synchronous>, transform_indices = @transform_5, window_bounds = array<i64: 3, 32, 1>}, {pipeline_mode = #tpu.pipeline_mode<synchronous>, transform_indices = @transform_6, window_bounds = array<i64: 224, 16>}, {pipeline_mode = #tpu.pipeline_mode<synchronous>, transform_indices = @transform_7, window_bounds = array<i64: 3, 32, 1>}, {pipeline_mode = #tpu.pipeline_mode<synchronous>, transform_indices = @transform_8, window_bounds = array<i64: 32, 32>}, {pipeline_mode = #tpu.pipeline_mode<synchronous>, transform_indices = @transform_9, window_bounds = array<i64: 224, 32>}, {pipeline_mode = #tpu.pipeline_mode<synchronous>, transform_indices = @transform_10, window_bounds = array<i64: 3, 32, 1>}, {pipeline_mode = #tpu.pipeline_mode<synchronous>, transform_indices = @transform_11, window_bounds = array<i64: 224, 32>}, {pipeline_mode = #tpu.pipeline_mode<synchronous>, transform_indices = @transform_12, window_bounds = array<i64: 3, 32, 1>}, {pipeline_mode = #tpu.pipeline_mode<synchronous>, transform_indices = @transform_13, window_bounds = array<i64: 224, 32>}, {pipeline_mode = #tpu.pipeline_mode<synchronous>, transform_indices = @transform_14, window_bounds = array<i64: 3, 32, 1>}, {pipeline_mode = #tpu.pipeline_mode<synchronous>, transform_indices = @transform_15, window_bounds = array<i64: 224, 32>}, {pipeline_mode = #tpu.pipeline_mode<synchronous>, transform_indices = @transform_16, window_bounds = array<i64: 3, 32, 1>}, {pipeline_mode = #tpu.pipeline_mode<synchronous>, transform_indices = @transform_17, window_bounds = array<i64: 224, 32>}, {pipeline_mode = #tpu.pipeline_mode<synchronous>, transform_indices = @transform_18, window_bounds = array<i64: 3, 32, 1>}, {pipeline_mode = #tpu.pipeline_mode<synchronous>, transform_indices = @transform_19, window_bounds = array<i64: 224, 32>}, {pipeline_mode = #tpu.pipeline_mode<synchronous>, transform_indices = @transform_20, window_bounds = array<i64: 3, 32, 1>}, {pipeline_mode = #tpu.pipeline_mode<synchronous>, transform_indices = @transform_21, window_bounds = array<i64: 32, 16>}, {transform_indices = @transform_22, window_bounds = array<i64: 1, 32, 16>}]} {
    %c0 = arith.constant 0 : index
    %c0_0 = arith.constant 0 : index
    %c0_1 = arith.constant 0 : index
    %0 = vector.load %arg1[%c0, %c0_0, %c0_1] : memref<1x16x128xf32, #tpu.memory_space<vmem>>, vector<1x16x128xf32>
    %1 = vector.shape_cast %0 : vector<1x16x128xf32> to vector<16x128xf32>
    %2 = tpu.iota {dimensions = array<i32: 0>} : vector<128x128xi32>
    %3 = tpu.iota {dimensions = array<i32: 1>} : vector<128x128xi32>
    %c-3_i32 = arith.constant -3 : i32
    %4 = vector.broadcast %c-3_i32 : i32 to vector<128x128xi32>
    %5 = arith.addi %3, %4 : vector<128x128xi32>
    %6 = arith.cmpi eq, %2, %5 : vector<128x128xi32>
    %7 = arith.extui %6 : vector<128x128xi1> to vector<128x128xi32>
    %8 = arith.sitofp %7 : vector<128x128xi32> to vector<128x128xf32>
    %c-2_i32 = arith.constant -2 : i32
    %9 = vector.broadcast %c-2_i32 : i32 to vector<128x128xi32>
    %10 = arith.addi %3, %9 : vector<128x128xi32>
    %11 = arith.cmpi eq, %2, %10 : vector<128x128xi32>
    %12 = arith.extui %11 : vector<128x128xi1> to vector<128x128xi32>
    %13 = arith.sitofp %12 : vector<128x128xi32> to vector<128x128xf32>
    %c-1_i32 = arith.constant -1 : i32
    %14 = vector.broadcast %c-1_i32 : i32 to vector<128x128xi32>
    %15 = arith.addi %3, %14 : vector<128x128xi32>
    %16 = arith.cmpi eq, %2, %15 : vector<128x128xi32>
    %17 = arith.extui %16 : vector<128x128xi1> to vector<128x128xi32>
    %18 = arith.sitofp %17 : vector<128x128xi32> to vector<128x128xf32>
    %c0_i32 = arith.constant 0 : i32
    %19 = vector.broadcast %c0_i32 : i32 to vector<128x128xi32>
    %20 = arith.addi %3, %19 : vector<128x128xi32>
    %21 = arith.cmpi eq, %2, %20 : vector<128x128xi32>
    %22 = arith.extui %21 : vector<128x128xi1> to vector<128x128xi32>
    %23 = arith.sitofp %22 : vector<128x128xi32> to vector<128x128xf32>
    %c1_i32 = arith.constant 1 : i32
    %24 = vector.broadcast %c1_i32 : i32 to vector<128x128xi32>
    %25 = arith.addi %3, %24 : vector<128x128xi32>
    %26 = arith.cmpi eq, %2, %25 : vector<128x128xi32>
    %27 = arith.extui %26 : vector<128x128xi1> to vector<128x128xi32>
    %28 = arith.sitofp %27 : vector<128x128xi32> to vector<128x128xf32>
    %c2_i32 = arith.constant 2 : i32
    %29 = vector.broadcast %c2_i32 : i32 to vector<128x128xi32>
    %30 = arith.addi %3, %29 : vector<128x128xi32>
    %31 = arith.cmpi eq, %2, %30 : vector<128x128xi32>
    %32 = arith.extui %31 : vector<128x128xi1> to vector<128x128xi32>
    %33 = arith.sitofp %32 : vector<128x128xi32> to vector<128x128xf32>
    %c3_i32 = arith.constant 3 : i32
    %34 = vector.broadcast %c3_i32 : i32 to vector<128x128xi32>
    %35 = arith.addi %3, %34 : vector<128x128xi32>
    %36 = arith.cmpi eq, %2, %35 : vector<128x128xi32>
    %37 = arith.extui %36 : vector<128x128xi1> to vector<128x128xi32>
    %38 = arith.sitofp %37 : vector<128x128xi32> to vector<128x128xf32>
    %c0_2 = arith.constant 0 : index
    %c0_3 = arith.constant 0 : index
    %39 = vector.load %arg2[%c0_2, %c0_3] : memref<32x16xf32, #tpu.memory_space<vmem>>, vector<32x16xf32>
    %cst = arith.constant dense<0.000000e+00> : vector<32x128xf32>
    %40 = tpu.matmul %39, %1, %cst {dimension_numbers = #tpu.dot_dimension_numbers<[1], [0], [0], [1], [0, 0, 1, 1], [], []>} : vector<32x16xf32>, vector<16x128xf32>, vector<32x128xf32> -> vector<32x128xf32>
    %c0_4 = arith.constant 0 : index
    %c0_5 = arith.constant 0 : index
    %41 = vector.load %arg3[%c0_4, %c0_5] : memref<224x16xf32, #tpu.memory_space<vmem>>, vector<224x16xf32>
    %cst_6 = arith.constant dense<0.000000e+00> : vector<224x128xf32>
    %42 = tpu.matmul %41, %1, %cst_6 {dimension_numbers = #tpu.dot_dimension_numbers<[1], [0], [0], [1], [0, 0, 1, 1], [], []>} : vector<224x16xf32>, vector<16x128xf32>, vector<224x128xf32> -> vector<224x128xf32>
    %43 = vector.extract_strided_slice %42 {offsets = [0, 0], sizes = [32, 128], strides = [1, 1]} : vector<224x128xf32> to vector<32x128xf32>
    %cst_7 = arith.constant dense<0.000000e+00> : vector<32x128xf32>
    %44 = tpu.matmul %43, %8, %cst_7 {dimension_numbers = #tpu.dot_dimension_numbers<[1], [0], [0], [1], [0, 0, 1, 1], [], []>} : vector<32x128xf32>, vector<128x128xf32>, vector<32x128xf32> -> vector<32x128xf32>
    %45 = vector.extract_strided_slice %42 {offsets = [32, 0], sizes = [32, 128], strides = [1, 1]} : vector<224x128xf32> to vector<32x128xf32>
    %cst_8 = arith.constant dense<0.000000e+00> : vector<32x128xf32>
    %46 = tpu.matmul %45, %13, %cst_8 {dimension_numbers = #tpu.dot_dimension_numbers<[1], [0], [0], [1], [0, 0, 1, 1], [], []>} : vector<32x128xf32>, vector<128x128xf32>, vector<32x128xf32> -> vector<32x128xf32>
    %47 = arith.addf %44, %46 : vector<32x128xf32>
    %48 = vector.extract_strided_slice %42 {offsets = [64, 0], sizes = [32, 128], strides = [1, 1]} : vector<224x128xf32> to vector<32x128xf32>
    %cst_9 = arith.constant dense<0.000000e+00> : vector<32x128xf32>
    %49 = tpu.matmul %48, %18, %cst_9 {dimension_numbers = #tpu.dot_dimension_numbers<[1], [0], [0], [1], [0, 0, 1, 1], [], []>} : vector<32x128xf32>, vector<128x128xf32>, vector<32x128xf32> -> vector<32x128xf32>
    %50 = arith.addf %47, %49 : vector<32x128xf32>
    %51 = vector.extract_strided_slice %42 {offsets = [96, 0], sizes = [32, 128], strides = [1, 1]} : vector<224x128xf32> to vector<32x128xf32>
    %cst_10 = arith.constant dense<0.000000e+00> : vector<32x128xf32>
    %52 = tpu.matmul %51, %23, %cst_10 {dimension_numbers = #tpu.dot_dimension_numbers<[1], [0], [0], [1], [0, 0, 1, 1], [], []>} : vector<32x128xf32>, vector<128x128xf32>, vector<32x128xf32> -> vector<32x128xf32>
    %53 = arith.addf %50, %52 : vector<32x128xf32>
    %54 = vector.extract_strided_slice %42 {offsets = [128, 0], sizes = [32, 128], strides = [1, 1]} : vector<224x128xf32> to vector<32x128xf32>
    %cst_11 = arith.constant dense<0.000000e+00> : vector<32x128xf32>
    %55 = tpu.matmul %54, %28, %cst_11 {dimension_numbers = #tpu.dot_dimension_numbers<[1], [0], [0], [1], [0, 0, 1, 1], [], []>} : vector<32x128xf32>, vector<128x128xf32>, vector<32x128xf32> -> vector<32x128xf32>
    %56 = arith.addf %53, %55 : vector<32x128xf32>
    %57 = vector.extract_strided_slice %42 {offsets = [160, 0], sizes = [32, 128], strides = [1, 1]} : vector<224x128xf32> to vector<32x128xf32>
    %cst_12 = arith.constant dense<0.000000e+00> : vector<32x128xf32>
    %58 = tpu.matmul %57, %33, %cst_12 {dimension_numbers = #tpu.dot_dimension_numbers<[1], [0], [0], [1], [0, 0, 1, 1], [], []>} : vector<32x128xf32>, vector<128x128xf32>, vector<32x128xf32> -> vector<32x128xf32>
    %59 = arith.addf %56, %58 : vector<32x128xf32>
    %60 = vector.extract_strided_slice %42 {offsets = [192, 0], sizes = [32, 128], strides = [1, 1]} : vector<224x128xf32> to vector<32x128xf32>
    %cst_13 = arith.constant dense<0.000000e+00> : vector<32x128xf32>
    %61 = tpu.matmul %60, %38, %cst_13 {dimension_numbers = #tpu.dot_dimension_numbers<[1], [0], [0], [1], [0, 0, 1, 1], [], []>} : vector<32x128xf32>, vector<128x128xf32>, vector<32x128xf32> -> vector<32x128xf32>
    %62 = arith.addf %59, %61 : vector<32x128xf32>
    %c0_14 = arith.constant 0 : index
    %c0_15 = arith.constant 0 : index
    %c0_16 = arith.constant 0 : index
    %63 = vector.load %arg4[%c0_14, %c0_15, %c0_16] : memref<3x32x1xf32, #tpu.memory_space<vmem>>, vector<1x32x1xf32>
    %64 = vector.shape_cast %63 : vector<1x32x1xf32> to vector<32x1xf32>
    %65 = vector.broadcast %64 : vector<32x1xf32> to vector<32x128xf32>
    %66 = arith.addf %62, %65 : vector<32x128xf32>
    %cst_17 = arith.constant 0.000000e+00 : f32
    %67 = vector.broadcast %cst_17 : f32 to vector<32x128xf32>
    %68 = arith.maximumf %66, %67 : vector<32x128xf32>
    %c1 = arith.constant 1 : index
    %c0_18 = arith.constant 0 : index
    %c0_19 = arith.constant 0 : index
    %69 = vector.load %arg4[%c1, %c0_18, %c0_19] : memref<3x32x1xf32, #tpu.memory_space<vmem>>, vector<1x32x1xf32>
    %70 = vector.shape_cast %69 : vector<1x32x1xf32> to vector<32x1xf32>
    %71 = vector.broadcast %70 : vector<32x1xf32> to vector<32x128xf32>
    %72 = arith.mulf %68, %71 : vector<32x128xf32>
    %c2 = arith.constant 2 : index
    %c0_20 = arith.constant 0 : index
    %c0_21 = arith.constant 0 : index
    %73 = vector.load %arg4[%c2, %c0_20, %c0_21] : memref<3x32x1xf32, #tpu.memory_space<vmem>>, vector<1x32x1xf32>
    %74 = vector.shape_cast %73 : vector<1x32x1xf32> to vector<32x1xf32>
    %75 = vector.broadcast %74 : vector<32x1xf32> to vector<32x128xf32>
    %76 = arith.addf %72, %75 : vector<32x128xf32>
    %77 = arith.addf %40, %76 : vector<32x128xf32>
    %c0_22 = arith.constant 0 : index
    %c0_23 = arith.constant 0 : index
    %78 = vector.load %arg5[%c0_22, %c0_23] : memref<224x16xf32, #tpu.memory_space<vmem>>, vector<224x16xf32>
    %cst_24 = arith.constant dense<0.000000e+00> : vector<224x128xf32>
    %79 = tpu.matmul %78, %1, %cst_24 {dimension_numbers = #tpu.dot_dimension_numbers<[1], [0], [0], [1], [0, 0, 1, 1], [], []>} : vector<224x16xf32>, vector<16x128xf32>, vector<224x128xf32> -> vector<224x128xf32>
    %80 = vector.extract_strided_slice %79 {offsets = [0, 0], sizes = [32, 128], strides = [1, 1]} : vector<224x128xf32> to vector<32x128xf32>
    %cst_25 = arith.constant dense<0.000000e+00> : vector<32x128xf32>
    %81 = tpu.matmul %80, %8, %cst_25 {dimension_numbers = #tpu.dot_dimension_numbers<[1], [0], [0], [1], [0, 0, 1, 1], [], []>} : vector<32x128xf32>, vector<128x128xf32>, vector<32x128xf32> -> vector<32x128xf32>
    %82 = vector.extract_strided_slice %79 {offsets = [32, 0], sizes = [32, 128], strides = [1, 1]} : vector<224x128xf32> to vector<32x128xf32>
    %cst_26 = arith.constant dense<0.000000e+00> : vector<32x128xf32>
    %83 = tpu.matmul %82, %13, %cst_26 {dimension_numbers = #tpu.dot_dimension_numbers<[1], [0], [0], [1], [0, 0, 1, 1], [], []>} : vector<32x128xf32>, vector<128x128xf32>, vector<32x128xf32> -> vector<32x128xf32>
    %84 = arith.addf %81, %83 : vector<32x128xf32>
    %85 = vector.extract_strided_slice %79 {offsets = [64, 0], sizes = [32, 128], strides = [1, 1]} : vector<224x128xf32> to vector<32x128xf32>
    %cst_27 = arith.constant dense<0.000000e+00> : vector<32x128xf32>
    %86 = tpu.matmul %85, %18, %cst_27 {dimension_numbers = #tpu.dot_dimension_numbers<[1], [0], [0], [1], [0, 0, 1, 1], [], []>} : vector<32x128xf32>, vector<128x128xf32>, vector<32x128xf32> -> vector<32x128xf32>
    %87 = arith.addf %84, %86 : vector<32x128xf32>
    %88 = vector.extract_strided_slice %79 {offsets = [96, 0], sizes = [32, 128], strides = [1, 1]} : vector<224x128xf32> to vector<32x128xf32>
    %cst_28 = arith.constant dense<0.000000e+00> : vector<32x128xf32>
    %89 = tpu.matmul %88, %23, %cst_28 {dimension_numbers = #tpu.dot_dimension_numbers<[1], [0], [0], [1], [0, 0, 1, 1], [], []>} : vector<32x128xf32>, vector<128x128xf32>, vector<32x128xf32> -> vector<32x128xf32>
    %90 = arith.addf %87, %89 : vector<32x128xf32>
    %91 = vector.extract_strided_slice %79 {offsets = [128, 0], sizes = [32, 128], strides = [1, 1]} : vector<224x128xf32> to vector<32x128xf32>
    %cst_29 = arith.constant dense<0.000000e+00> : vector<32x128xf32>
    %92 = tpu.matmul %91, %28, %cst_29 {dimension_numbers = #tpu.dot_dimension_numbers<[1], [0], [0], [1], [0, 0, 1, 1], [], []>} : vector<32x128xf32>, vector<128x128xf32>, vector<32x128xf32> -> vector<32x128xf32>
    %93 = arith.addf %90, %92 : vector<32x128xf32>
    %94 = vector.extract_strided_slice %79 {offsets = [160, 0], sizes = [32, 128], strides = [1, 1]} : vector<224x128xf32> to vector<32x128xf32>
    %cst_30 = arith.constant dense<0.000000e+00> : vector<32x128xf32>
    %95 = tpu.matmul %94, %33, %cst_30 {dimension_numbers = #tpu.dot_dimension_numbers<[1], [0], [0], [1], [0, 0, 1, 1], [], []>} : vector<32x128xf32>, vector<128x128xf32>, vector<32x128xf32> -> vector<32x128xf32>
    %96 = arith.addf %93, %95 : vector<32x128xf32>
    %97 = vector.extract_strided_slice %79 {offsets = [192, 0], sizes = [32, 128], strides = [1, 1]} : vector<224x128xf32> to vector<32x128xf32>
    %cst_31 = arith.constant dense<0.000000e+00> : vector<32x128xf32>
    %98 = tpu.matmul %97, %38, %cst_31 {dimension_numbers = #tpu.dot_dimension_numbers<[1], [0], [0], [1], [0, 0, 1, 1], [], []>} : vector<32x128xf32>, vector<128x128xf32>, vector<32x128xf32> -> vector<32x128xf32>
    %99 = arith.addf %96, %98 : vector<32x128xf32>
    %c0_32 = arith.constant 0 : index
    %c0_33 = arith.constant 0 : index
    %c0_34 = arith.constant 0 : index
    %100 = vector.load %arg6[%c0_32, %c0_33, %c0_34] : memref<3x32x1xf32, #tpu.memory_space<vmem>>, vector<1x32x1xf32>
    %101 = vector.shape_cast %100 : vector<1x32x1xf32> to vector<32x1xf32>
    %102 = vector.broadcast %101 : vector<32x1xf32> to vector<32x128xf32>
    %103 = arith.addf %99, %102 : vector<32x128xf32>
    %cst_35 = arith.constant 0.000000e+00 : f32
    %104 = vector.broadcast %cst_35 : f32 to vector<32x128xf32>
    %105 = arith.maximumf %103, %104 : vector<32x128xf32>
    %c1_36 = arith.constant 1 : index
    %c0_37 = arith.constant 0 : index
    %c0_38 = arith.constant 0 : index
    %106 = vector.load %arg6[%c1_36, %c0_37, %c0_38] : memref<3x32x1xf32, #tpu.memory_space<vmem>>, vector<1x32x1xf32>
    %107 = vector.shape_cast %106 : vector<1x32x1xf32> to vector<32x1xf32>
    %108 = vector.broadcast %107 : vector<32x1xf32> to vector<32x128xf32>
    %109 = arith.mulf %105, %108 : vector<32x128xf32>
    %c2_39 = arith.constant 2 : index
    %c0_40 = arith.constant 0 : index
    %c0_41 = arith.constant 0 : index
    %110 = vector.load %arg6[%c2_39, %c0_40, %c0_41] : memref<3x32x1xf32, #tpu.memory_space<vmem>>, vector<1x32x1xf32>
    %111 = vector.shape_cast %110 : vector<1x32x1xf32> to vector<32x1xf32>
    %112 = vector.broadcast %111 : vector<32x1xf32> to vector<32x128xf32>
    %113 = arith.addf %109, %112 : vector<32x128xf32>
    %114 = arith.addf %77, %113 : vector<32x128xf32>
    %c0_42 = arith.constant 0 : index
    %c0_43 = arith.constant 0 : index
    %115 = vector.load %arg7[%c0_42, %c0_43] : memref<224x16xf32, #tpu.memory_space<vmem>>, vector<224x16xf32>
    %cst_44 = arith.constant dense<0.000000e+00> : vector<224x128xf32>
    %116 = tpu.matmul %115, %1, %cst_44 {dimension_numbers = #tpu.dot_dimension_numbers<[1], [0], [0], [1], [0, 0, 1, 1], [], []>} : vector<224x16xf32>, vector<16x128xf32>, vector<224x128xf32> -> vector<224x128xf32>
    %117 = vector.extract_strided_slice %116 {offsets = [0, 0], sizes = [32, 128], strides = [1, 1]} : vector<224x128xf32> to vector<32x128xf32>
    %cst_45 = arith.constant dense<0.000000e+00> : vector<32x128xf32>
    %118 = tpu.matmul %117, %8, %cst_45 {dimension_numbers = #tpu.dot_dimension_numbers<[1], [0], [0], [1], [0, 0, 1, 1], [], []>} : vector<32x128xf32>, vector<128x128xf32>, vector<32x128xf32> -> vector<32x128xf32>
    %119 = vector.extract_strided_slice %116 {offsets = [32, 0], sizes = [32, 128], strides = [1, 1]} : vector<224x128xf32> to vector<32x128xf32>
    %cst_46 = arith.constant dense<0.000000e+00> : vector<32x128xf32>
    %120 = tpu.matmul %119, %13, %cst_46 {dimension_numbers = #tpu.dot_dimension_numbers<[1], [0], [0], [1], [0, 0, 1, 1], [], []>} : vector<32x128xf32>, vector<128x128xf32>, vector<32x128xf32> -> vector<32x128xf32>
    %121 = arith.addf %118, %120 : vector<32x128xf32>
    %122 = vector.extract_strided_slice %116 {offsets = [64, 0], sizes = [32, 128], strides = [1, 1]} : vector<224x128xf32> to vector<32x128xf32>
    %cst_47 = arith.constant dense<0.000000e+00> : vector<32x128xf32>
    %123 = tpu.matmul %122, %18, %cst_47 {dimension_numbers = #tpu.dot_dimension_numbers<[1], [0], [0], [1], [0, 0, 1, 1], [], []>} : vector<32x128xf32>, vector<128x128xf32>, vector<32x128xf32> -> vector<32x128xf32>
    %124 = arith.addf %121, %123 : vector<32x128xf32>
    %125 = vector.extract_strided_slice %116 {offsets = [96, 0], sizes = [32, 128], strides = [1, 1]} : vector<224x128xf32> to vector<32x128xf32>
    %cst_48 = arith.constant dense<0.000000e+00> : vector<32x128xf32>
    %126 = tpu.matmul %125, %23, %cst_48 {dimension_numbers = #tpu.dot_dimension_numbers<[1], [0], [0], [1], [0, 0, 1, 1], [], []>} : vector<32x128xf32>, vector<128x128xf32>, vector<32x128xf32> -> vector<32x128xf32>
    %127 = arith.addf %124, %126 : vector<32x128xf32>
    %128 = vector.extract_strided_slice %116 {offsets = [128, 0], sizes = [32, 128], strides = [1, 1]} : vector<224x128xf32> to vector<32x128xf32>
    %cst_49 = arith.constant dense<0.000000e+00> : vector<32x128xf32>
    %129 = tpu.matmul %128, %28, %cst_49 {dimension_numbers = #tpu.dot_dimension_numbers<[1], [0], [0], [1], [0, 0, 1, 1], [], []>} : vector<32x128xf32>, vector<128x128xf32>, vector<32x128xf32> -> vector<32x128xf32>
    %130 = arith.addf %127, %129 : vector<32x128xf32>
    %131 = vector.extract_strided_slice %116 {offsets = [160, 0], sizes = [32, 128], strides = [1, 1]} : vector<224x128xf32> to vector<32x128xf32>
    %cst_50 = arith.constant dense<0.000000e+00> : vector<32x128xf32>
    %132 = tpu.matmul %131, %33, %cst_50 {dimension_numbers = #tpu.dot_dimension_numbers<[1], [0], [0], [1], [0, 0, 1, 1], [], []>} : vector<32x128xf32>, vector<128x128xf32>, vector<32x128xf32> -> vector<32x128xf32>
    %133 = arith.addf %130, %132 : vector<32x128xf32>
    %134 = vector.extract_strided_slice %116 {offsets = [192, 0], sizes = [32, 128], strides = [1, 1]} : vector<224x128xf32> to vector<32x128xf32>
    %cst_51 = arith.constant dense<0.000000e+00> : vector<32x128xf32>
    %135 = tpu.matmul %134, %38, %cst_51 {dimension_numbers = #tpu.dot_dimension_numbers<[1], [0], [0], [1], [0, 0, 1, 1], [], []>} : vector<32x128xf32>, vector<128x128xf32>, vector<32x128xf32> -> vector<32x128xf32>
    %136 = arith.addf %133, %135 : vector<32x128xf32>
    %c0_52 = arith.constant 0 : index
    %c0_53 = arith.constant 0 : index
    %c0_54 = arith.constant 0 : index
    %137 = vector.load %arg8[%c0_52, %c0_53, %c0_54] : memref<3x32x1xf32, #tpu.memory_space<vmem>>, vector<1x32x1xf32>
    %138 = vector.shape_cast %137 : vector<1x32x1xf32> to vector<32x1xf32>
    %139 = vector.broadcast %138 : vector<32x1xf32> to vector<32x128xf32>
    %140 = arith.addf %136, %139 : vector<32x128xf32>
    %cst_55 = arith.constant 0.000000e+00 : f32
    %141 = vector.broadcast %cst_55 : f32 to vector<32x128xf32>
    %142 = arith.maximumf %140, %141 : vector<32x128xf32>
    %c1_56 = arith.constant 1 : index
    %c0_57 = arith.constant 0 : index
    %c0_58 = arith.constant 0 : index
    %143 = vector.load %arg8[%c1_56, %c0_57, %c0_58] : memref<3x32x1xf32, #tpu.memory_space<vmem>>, vector<1x32x1xf32>
    %144 = vector.shape_cast %143 : vector<1x32x1xf32> to vector<32x1xf32>
    %145 = vector.broadcast %144 : vector<32x1xf32> to vector<32x128xf32>
    %146 = arith.mulf %142, %145 : vector<32x128xf32>
    %c2_59 = arith.constant 2 : index
    %c0_60 = arith.constant 0 : index
    %c0_61 = arith.constant 0 : index
    %147 = vector.load %arg8[%c2_59, %c0_60, %c0_61] : memref<3x32x1xf32, #tpu.memory_space<vmem>>, vector<1x32x1xf32>
    %148 = vector.shape_cast %147 : vector<1x32x1xf32> to vector<32x1xf32>
    %149 = vector.broadcast %148 : vector<32x1xf32> to vector<32x128xf32>
    %150 = arith.addf %146, %149 : vector<32x128xf32>
    %151 = arith.addf %114, %150 : vector<32x128xf32>
    %152 = tpu.iota {dimensions = array<i32: 0>} : vector<128x128xi32>
    %153 = tpu.iota {dimensions = array<i32: 1>} : vector<128x128xi32>
    %c1_i32_62 = arith.constant 1 : i32
    %154 = vector.broadcast %c1_i32_62 : i32 to vector<128x128xi32>
    %155 = arith.addi %153, %154 : vector<128x128xi32>
    %156 = arith.cmpi eq, %152, %155 : vector<128x128xi32>
    %157 = arith.extui %156 : vector<128x128xi1> to vector<128x128xi32>
    %158 = arith.sitofp %157 : vector<128x128xi32> to vector<128x128xf32>
    %c2_i32_63 = arith.constant 2 : i32
    %159 = vector.broadcast %c2_i32_63 : i32 to vector<128x128xi32>
    %160 = arith.addi %153, %159 : vector<128x128xi32>
    %161 = arith.cmpi eq, %152, %160 : vector<128x128xi32>
    %162 = arith.extui %161 : vector<128x128xi1> to vector<128x128xi32>
    %163 = arith.sitofp %162 : vector<128x128xi32> to vector<128x128xf32>
    %c3_i32_64 = arith.constant 3 : i32
    %164 = vector.broadcast %c3_i32_64 : i32 to vector<128x128xi32>
    %165 = arith.addi %153, %164 : vector<128x128xi32>
    %166 = arith.cmpi eq, %152, %165 : vector<128x128xi32>
    %167 = arith.extui %166 : vector<128x128xi1> to vector<128x128xi32>
    %168 = arith.sitofp %167 : vector<128x128xi32> to vector<128x128xf32>
    %cst_65 = arith.constant dense<0.000000e+00> : vector<32x128xf32>
    %169 = tpu.matmul %151, %158, %cst_65 {dimension_numbers = #tpu.dot_dimension_numbers<[1], [0], [0], [1], [0, 0, 1, 1], [], []>} : vector<32x128xf32>, vector<128x128xf32>, vector<32x128xf32> -> vector<32x128xf32>
    %170 = arith.maximumf %151, %169 : vector<32x128xf32>
    %cst_66 = arith.constant dense<0.000000e+00> : vector<32x128xf32>
    %171 = tpu.matmul %151, %163, %cst_66 {dimension_numbers = #tpu.dot_dimension_numbers<[1], [0], [0], [1], [0, 0, 1, 1], [], []>} : vector<32x128xf32>, vector<128x128xf32>, vector<32x128xf32> -> vector<32x128xf32>
    %172 = arith.maximumf %170, %171 : vector<32x128xf32>
    %cst_67 = arith.constant dense<0.000000e+00> : vector<32x128xf32>
    %173 = tpu.matmul %151, %168, %cst_67 {dimension_numbers = #tpu.dot_dimension_numbers<[1], [0], [0], [1], [0, 0, 1, 1], [], []>} : vector<32x128xf32>, vector<128x128xf32>, vector<32x128xf32> -> vector<32x128xf32>
    %174 = arith.maximumf %172, %173 : vector<32x128xf32>
    %175 = tpu.iota {dimensions = array<i32: 0>} : vector<128x32xi32>
    %176 = tpu.iota {dimensions = array<i32: 1>} : vector<128x32xi32>
    %c4_i32 = arith.constant 4 : i32
    %177 = vector.broadcast %c4_i32 : i32 to vector<128x32xi32>
    %178 = arith.muli %177, %176 : vector<128x32xi32>
    %179 = arith.cmpi eq, %175, %178 : vector<128x32xi32>
    %180 = arith.extui %179 : vector<128x32xi1> to vector<128x32xi32>
    %181 = arith.sitofp %180 : vector<128x32xi32> to vector<128x32xf32>
    %cst_68 = arith.constant dense<0.000000e+00> : vector<32x32xf32>
    %182 = tpu.matmul %174, %181, %cst_68 {dimension_numbers = #tpu.dot_dimension_numbers<[1], [0], [0], [1], [0, 0, 1, 1], [], []>} : vector<32x128xf32>, vector<128x32xf32>, vector<32x32xf32> -> vector<32x32xf32>
    %183 = tpu.iota {dimensions = array<i32: 0>} : vector<32x32xi32>
    %184 = tpu.iota {dimensions = array<i32: 1>} : vector<32x32xi32>
    %c-3_i32_69 = arith.constant -3 : i32
    %185 = vector.broadcast %c-3_i32_69 : i32 to vector<32x32xi32>
    %186 = arith.addi %184, %185 : vector<32x32xi32>
    %187 = arith.cmpi eq, %183, %186 : vector<32x32xi32>
    %188 = arith.extui %187 : vector<32x32xi1> to vector<32x32xi32>
    %189 = arith.sitofp %188 : vector<32x32xi32> to vector<32x32xf32>
    %c-2_i32_70 = arith.constant -2 : i32
    %190 = vector.broadcast %c-2_i32_70 : i32 to vector<32x32xi32>
    %191 = arith.addi %184, %190 : vector<32x32xi32>
    %192 = arith.cmpi eq, %183, %191 : vector<32x32xi32>
    %193 = arith.extui %192 : vector<32x32xi1> to vector<32x32xi32>
    %194 = arith.sitofp %193 : vector<32x32xi32> to vector<32x32xf32>
    %c-1_i32_71 = arith.constant -1 : i32
    %195 = vector.broadcast %c-1_i32_71 : i32 to vector<32x32xi32>
    %196 = arith.addi %184, %195 : vector<32x32xi32>
    %197 = arith.cmpi eq, %183, %196 : vector<32x32xi32>
    %198 = arith.extui %197 : vector<32x32xi1> to vector<32x32xi32>
    %199 = arith.sitofp %198 : vector<32x32xi32> to vector<32x32xf32>
    %c0_i32_72 = arith.constant 0 : i32
    %200 = vector.broadcast %c0_i32_72 : i32 to vector<32x32xi32>
    %201 = arith.addi %184, %200 : vector<32x32xi32>
    %202 = arith.cmpi eq, %183, %201 : vector<32x32xi32>
    %203 = arith.extui %202 : vector<32x32xi1> to vector<32x32xi32>
    %204 = arith.sitofp %203 : vector<32x32xi32> to vector<32x32xf32>
    %c1_i32_73 = arith.constant 1 : i32
    %205 = vector.broadcast %c1_i32_73 : i32 to vector<32x32xi32>
    %206 = arith.addi %184, %205 : vector<32x32xi32>
    %207 = arith.cmpi eq, %183, %206 : vector<32x32xi32>
    %208 = arith.extui %207 : vector<32x32xi1> to vector<32x32xi32>
    %209 = arith.sitofp %208 : vector<32x32xi32> to vector<32x32xf32>
    %c2_i32_74 = arith.constant 2 : i32
    %210 = vector.broadcast %c2_i32_74 : i32 to vector<32x32xi32>
    %211 = arith.addi %184, %210 : vector<32x32xi32>
    %212 = arith.cmpi eq, %183, %211 : vector<32x32xi32>
    %213 = arith.extui %212 : vector<32x32xi1> to vector<32x32xi32>
    %214 = arith.sitofp %213 : vector<32x32xi32> to vector<32x32xf32>
    %c3_i32_75 = arith.constant 3 : i32
    %215 = vector.broadcast %c3_i32_75 : i32 to vector<32x32xi32>
    %216 = arith.addi %184, %215 : vector<32x32xi32>
    %217 = arith.cmpi eq, %183, %216 : vector<32x32xi32>
    %218 = arith.extui %217 : vector<32x32xi1> to vector<32x32xi32>
    %219 = arith.sitofp %218 : vector<32x32xi32> to vector<32x32xf32>
    %c0_76 = arith.constant 0 : index
    %c0_77 = arith.constant 0 : index
    %220 = vector.load %arg9[%c0_76, %c0_77] : memref<32x32xf32, #tpu.memory_space<vmem>>, vector<32x32xf32>
    %cst_78 = arith.constant dense<0.000000e+00> : vector<32x32xf32>
    %221 = tpu.matmul %220, %182, %cst_78 {dimension_numbers = #tpu.dot_dimension_numbers<[1], [0], [0], [1], [0, 0, 1, 1], [], []>} : vector<32x32xf32>, vector<32x32xf32>, vector<32x32xf32> -> vector<32x32xf32>
    %c0_79 = arith.constant 0 : index
    %c0_80 = arith.constant 0 : index
    %222 = vector.load %arg10[%c0_79, %c0_80] : memref<224x32xf32, #tpu.memory_space<vmem>>, vector<224x32xf32>
    %cst_81 = arith.constant dense<0.000000e+00> : vector<224x32xf32>
    %223 = tpu.matmul %222, %182, %cst_81 {dimension_numbers = #tpu.dot_dimension_numbers<[1], [0], [0], [1], [0, 0, 1, 1], [], []>} : vector<224x32xf32>, vector<32x32xf32>, vector<224x32xf32> -> vector<224x32xf32>
    %224 = vector.extract_strided_slice %223 {offsets = [0, 0], sizes = [32, 32], strides = [1, 1]} : vector<224x32xf32> to vector<32x32xf32>
    %cst_82 = arith.constant dense<0.000000e+00> : vector<32x32xf32>
    %225 = tpu.matmul %224, %189, %cst_82 {dimension_numbers = #tpu.dot_dimension_numbers<[1], [0], [0], [1], [0, 0, 1, 1], [], []>} : vector<32x32xf32>, vector<32x32xf32>, vector<32x32xf32> -> vector<32x32xf32>
    %226 = vector.extract_strided_slice %223 {offsets = [32, 0], sizes = [32, 32], strides = [1, 1]} : vector<224x32xf32> to vector<32x32xf32>
    %cst_83 = arith.constant dense<0.000000e+00> : vector<32x32xf32>
    %227 = tpu.matmul %226, %194, %cst_83 {dimension_numbers = #tpu.dot_dimension_numbers<[1], [0], [0], [1], [0, 0, 1, 1], [], []>} : vector<32x32xf32>, vector<32x32xf32>, vector<32x32xf32> -> vector<32x32xf32>
    %228 = arith.addf %225, %227 : vector<32x32xf32>
    %229 = vector.extract_strided_slice %223 {offsets = [64, 0], sizes = [32, 32], strides = [1, 1]} : vector<224x32xf32> to vector<32x32xf32>
    %cst_84 = arith.constant dense<0.000000e+00> : vector<32x32xf32>
    %230 = tpu.matmul %229, %199, %cst_84 {dimension_numbers = #tpu.dot_dimension_numbers<[1], [0], [0], [1], [0, 0, 1, 1], [], []>} : vector<32x32xf32>, vector<32x32xf32>, vector<32x32xf32> -> vector<32x32xf32>
    %231 = arith.addf %228, %230 : vector<32x32xf32>
    %232 = vector.extract_strided_slice %223 {offsets = [96, 0], sizes = [32, 32], strides = [1, 1]} : vector<224x32xf32> to vector<32x32xf32>
    %cst_85 = arith.constant dense<0.000000e+00> : vector<32x32xf32>
    %233 = tpu.matmul %232, %204, %cst_85 {dimension_numbers = #tpu.dot_dimension_numbers<[1], [0], [0], [1], [0, 0, 1, 1], [], []>} : vector<32x32xf32>, vector<32x32xf32>, vector<32x32xf32> -> vector<32x32xf32>
    %234 = arith.addf %231, %233 : vector<32x32xf32>
    %235 = vector.extract_strided_slice %223 {offsets = [128, 0], sizes = [32, 32], strides = [1, 1]} : vector<224x32xf32> to vector<32x32xf32>
    %cst_86 = arith.constant dense<0.000000e+00> : vector<32x32xf32>
    %236 = tpu.matmul %235, %209, %cst_86 {dimension_numbers = #tpu.dot_dimension_numbers<[1], [0], [0], [1], [0, 0, 1, 1], [], []>} : vector<32x32xf32>, vector<32x32xf32>, vector<32x32xf32> -> vector<32x32xf32>
    %237 = arith.addf %234, %236 : vector<32x32xf32>
    %238 = vector.extract_strided_slice %223 {offsets = [160, 0], sizes = [32, 32], strides = [1, 1]} : vector<224x32xf32> to vector<32x32xf32>
    %cst_87 = arith.constant dense<0.000000e+00> : vector<32x32xf32>
    %239 = tpu.matmul %238, %214, %cst_87 {dimension_numbers = #tpu.dot_dimension_numbers<[1], [0], [0], [1], [0, 0, 1, 1], [], []>} : vector<32x32xf32>, vector<32x32xf32>, vector<32x32xf32> -> vector<32x32xf32>
    %240 = arith.addf %237, %239 : vector<32x32xf32>
    %241 = vector.extract_strided_slice %223 {offsets = [192, 0], sizes = [32, 32], strides = [1, 1]} : vector<224x32xf32> to vector<32x32xf32>
    %cst_88 = arith.constant dense<0.000000e+00> : vector<32x32xf32>
    %242 = tpu.matmul %241, %219, %cst_88 {dimension_numbers = #tpu.dot_dimension_numbers<[1], [0], [0], [1], [0, 0, 1, 1], [], []>} : vector<32x32xf32>, vector<32x32xf32>, vector<32x32xf32> -> vector<32x32xf32>
    %243 = arith.addf %240, %242 : vector<32x32xf32>
    %c0_89 = arith.constant 0 : index
    %c0_90 = arith.constant 0 : index
    %c0_91 = arith.constant 0 : index
    %244 = vector.load %arg11[%c0_89, %c0_90, %c0_91] : memref<3x32x1xf32, #tpu.memory_space<vmem>>, vector<1x32x1xf32>
    %245 = vector.shape_cast %244 : vector<1x32x1xf32> to vector<32x1xf32>
    %246 = vector.broadcast %245 : vector<32x1xf32> to vector<32x32xf32>
    %247 = arith.addf %243, %246 : vector<32x32xf32>
    %cst_92 = arith.constant 0.000000e+00 : f32
    %248 = vector.broadcast %cst_92 : f32 to vector<32x32xf32>
    %249 = arith.maximumf %247, %248 : vector<32x32xf32>
    %c1_93 = arith.constant 1 : index
    %c0_94 = arith.constant 0 : index
    %c0_95 = arith.constant 0 : index
    %250 = vector.load %arg11[%c1_93, %c0_94, %c0_95] : memref<3x32x1xf32, #tpu.memory_space<vmem>>, vector<1x32x1xf32>
    %251 = vector.shape_cast %250 : vector<1x32x1xf32> to vector<32x1xf32>
    %252 = vector.broadcast %251 : vector<32x1xf32> to vector<32x32xf32>
    %253 = arith.mulf %249, %252 : vector<32x32xf32>
    %c2_96 = arith.constant 2 : index
    %c0_97 = arith.constant 0 : index
    %c0_98 = arith.constant 0 : index
    %254 = vector.load %arg11[%c2_96, %c0_97, %c0_98] : memref<3x32x1xf32, #tpu.memory_space<vmem>>, vector<1x32x1xf32>
    %255 = vector.shape_cast %254 : vector<1x32x1xf32> to vector<32x1xf32>
    %256 = vector.broadcast %255 : vector<32x1xf32> to vector<32x32xf32>
    %257 = arith.addf %253, %256 : vector<32x32xf32>
    %c0_99 = arith.constant 0 : index
    %c0_100 = arith.constant 0 : index
    %258 = vector.load %arg12[%c0_99, %c0_100] : memref<224x32xf32, #tpu.memory_space<vmem>>, vector<224x32xf32>
    %cst_101 = arith.constant dense<0.000000e+00> : vector<224x32xf32>
    %259 = tpu.matmul %258, %257, %cst_101 {dimension_numbers = #tpu.dot_dimension_numbers<[1], [0], [0], [1], [0, 0, 1, 1], [], []>} : vector<224x32xf32>, vector<32x32xf32>, vector<224x32xf32> -> vector<224x32xf32>
    %260 = vector.extract_strided_slice %259 {offsets = [0, 0], sizes = [32, 32], strides = [1, 1]} : vector<224x32xf32> to vector<32x32xf32>
    %cst_102 = arith.constant dense<0.000000e+00> : vector<32x32xf32>
    %261 = tpu.matmul %260, %189, %cst_102 {dimension_numbers = #tpu.dot_dimension_numbers<[1], [0], [0], [1], [0, 0, 1, 1], [], []>} : vector<32x32xf32>, vector<32x32xf32>, vector<32x32xf32> -> vector<32x32xf32>
    %262 = vector.extract_strided_slice %259 {offsets = [32, 0], sizes = [32, 32], strides = [1, 1]} : vector<224x32xf32> to vector<32x32xf32>
    %cst_103 = arith.constant dense<0.000000e+00> : vector<32x32xf32>
    %263 = tpu.matmul %262, %194, %cst_103 {dimension_numbers = #tpu.dot_dimension_numbers<[1], [0], [0], [1], [0, 0, 1, 1], [], []>} : vector<32x32xf32>, vector<32x32xf32>, vector<32x32xf32> -> vector<32x32xf32>
    %264 = arith.addf %261, %263 : vector<32x32xf32>
    %265 = vector.extract_strided_slice %259 {offsets = [64, 0], sizes = [32, 32], strides = [1, 1]} : vector<224x32xf32> to vector<32x32xf32>
    %cst_104 = arith.constant dense<0.000000e+00> : vector<32x32xf32>
    %266 = tpu.matmul %265, %199, %cst_104 {dimension_numbers = #tpu.dot_dimension_numbers<[1], [0], [0], [1], [0, 0, 1, 1], [], []>} : vector<32x32xf32>, vector<32x32xf32>, vector<32x32xf32> -> vector<32x32xf32>
    %267 = arith.addf %264, %266 : vector<32x32xf32>
    %268 = vector.extract_strided_slice %259 {offsets = [96, 0], sizes = [32, 32], strides = [1, 1]} : vector<224x32xf32> to vector<32x32xf32>
    %cst_105 = arith.constant dense<0.000000e+00> : vector<32x32xf32>
    %269 = tpu.matmul %268, %204, %cst_105 {dimension_numbers = #tpu.dot_dimension_numbers<[1], [0], [0], [1], [0, 0, 1, 1], [], []>} : vector<32x32xf32>, vector<32x32xf32>, vector<32x32xf32> -> vector<32x32xf32>
    %270 = arith.addf %267, %269 : vector<32x32xf32>
    %271 = vector.extract_strided_slice %259 {offsets = [128, 0], sizes = [32, 32], strides = [1, 1]} : vector<224x32xf32> to vector<32x32xf32>
    %cst_106 = arith.constant dense<0.000000e+00> : vector<32x32xf32>
    %272 = tpu.matmul %271, %209, %cst_106 {dimension_numbers = #tpu.dot_dimension_numbers<[1], [0], [0], [1], [0, 0, 1, 1], [], []>} : vector<32x32xf32>, vector<32x32xf32>, vector<32x32xf32> -> vector<32x32xf32>
    %273 = arith.addf %270, %272 : vector<32x32xf32>
    %274 = vector.extract_strided_slice %259 {offsets = [160, 0], sizes = [32, 32], strides = [1, 1]} : vector<224x32xf32> to vector<32x32xf32>
    %cst_107 = arith.constant dense<0.000000e+00> : vector<32x32xf32>
    %275 = tpu.matmul %274, %214, %cst_107 {dimension_numbers = #tpu.dot_dimension_numbers<[1], [0], [0], [1], [0, 0, 1, 1], [], []>} : vector<32x32xf32>, vector<32x32xf32>, vector<32x32xf32> -> vector<32x32xf32>
    %276 = arith.addf %273, %275 : vector<32x32xf32>
    %277 = vector.extract_strided_slice %259 {offsets = [192, 0], sizes = [32, 32], strides = [1, 1]} : vector<224x32xf32> to vector<32x32xf32>
    %cst_108 = arith.constant dense<0.000000e+00> : vector<32x32xf32>
    %278 = tpu.matmul %277, %219, %cst_108 {dimension_numbers = #tpu.dot_dimension_numbers<[1], [0], [0], [1], [0, 0, 1, 1], [], []>} : vector<32x32xf32>, vector<32x32xf32>, vector<32x32xf32> -> vector<32x32xf32>
    %279 = arith.addf %276, %278 : vector<32x32xf32>
    %c0_109 = arith.constant 0 : index
    %c0_110 = arith.constant 0 : index
    %c0_111 = arith.constant 0 : index
    %280 = vector.load %arg13[%c0_109, %c0_110, %c0_111] : memref<3x32x1xf32, #tpu.memory_space<vmem>>, vector<1x32x1xf32>
    %281 = vector.shape_cast %280 : vector<1x32x1xf32> to vector<32x1xf32>
    %282 = vector.broadcast %281 : vector<32x1xf32> to vector<32x32xf32>
    %283 = arith.addf %279, %282 : vector<32x32xf32>
    %cst_112 = arith.constant 0.000000e+00 : f32
    %284 = vector.broadcast %cst_112 : f32 to vector<32x32xf32>
    %285 = arith.maximumf %283, %284 : vector<32x32xf32>
    %c1_113 = arith.constant 1 : index
    %c0_114 = arith.constant 0 : index
    %c0_115 = arith.constant 0 : index
    %286 = vector.load %arg13[%c1_113, %c0_114, %c0_115] : memref<3x32x1xf32, #tpu.memory_space<vmem>>, vector<1x32x1xf32>
    %287 = vector.shape_cast %286 : vector<1x32x1xf32> to vector<32x1xf32>
    %288 = vector.broadcast %287 : vector<32x1xf32> to vector<32x32xf32>
    %289 = arith.mulf %285, %288 : vector<32x32xf32>
    %c2_116 = arith.constant 2 : index
    %c0_117 = arith.constant 0 : index
    %c0_118 = arith.constant 0 : index
    %290 = vector.load %arg13[%c2_116, %c0_117, %c0_118] : memref<3x32x1xf32, #tpu.memory_space<vmem>>, vector<1x32x1xf32>
    %291 = vector.shape_cast %290 : vector<1x32x1xf32> to vector<32x1xf32>
    %292 = vector.broadcast %291 : vector<32x1xf32> to vector<32x32xf32>
    %293 = arith.addf %289, %292 : vector<32x32xf32>
    %294 = arith.addf %221, %293 : vector<32x32xf32>
    %c0_119 = arith.constant 0 : index
    %c0_120 = arith.constant 0 : index
    %295 = vector.load %arg14[%c0_119, %c0_120] : memref<224x32xf32, #tpu.memory_space<vmem>>, vector<224x32xf32>
    %cst_121 = arith.constant dense<0.000000e+00> : vector<224x32xf32>
    %296 = tpu.matmul %295, %182, %cst_121 {dimension_numbers = #tpu.dot_dimension_numbers<[1], [0], [0], [1], [0, 0, 1, 1], [], []>} : vector<224x32xf32>, vector<32x32xf32>, vector<224x32xf32> -> vector<224x32xf32>
    %297 = vector.extract_strided_slice %296 {offsets = [0, 0], sizes = [32, 32], strides = [1, 1]} : vector<224x32xf32> to vector<32x32xf32>
    %cst_122 = arith.constant dense<0.000000e+00> : vector<32x32xf32>
    %298 = tpu.matmul %297, %189, %cst_122 {dimension_numbers = #tpu.dot_dimension_numbers<[1], [0], [0], [1], [0, 0, 1, 1], [], []>} : vector<32x32xf32>, vector<32x32xf32>, vector<32x32xf32> -> vector<32x32xf32>
    %299 = vector.extract_strided_slice %296 {offsets = [32, 0], sizes = [32, 32], strides = [1, 1]} : vector<224x32xf32> to vector<32x32xf32>
    %cst_123 = arith.constant dense<0.000000e+00> : vector<32x32xf32>
    %300 = tpu.matmul %299, %194, %cst_123 {dimension_numbers = #tpu.dot_dimension_numbers<[1], [0], [0], [1], [0, 0, 1, 1], [], []>} : vector<32x32xf32>, vector<32x32xf32>, vector<32x32xf32> -> vector<32x32xf32>
    %301 = arith.addf %298, %300 : vector<32x32xf32>
    %302 = vector.extract_strided_slice %296 {offsets = [64, 0], sizes = [32, 32], strides = [1, 1]} : vector<224x32xf32> to vector<32x32xf32>
    %cst_124 = arith.constant dense<0.000000e+00> : vector<32x32xf32>
    %303 = tpu.matmul %302, %199, %cst_124 {dimension_numbers = #tpu.dot_dimension_numbers<[1], [0], [0], [1], [0, 0, 1, 1], [], []>} : vector<32x32xf32>, vector<32x32xf32>, vector<32x32xf32> -> vector<32x32xf32>
    %304 = arith.addf %301, %303 : vector<32x32xf32>
    %305 = vector.extract_strided_slice %296 {offsets = [96, 0], sizes = [32, 32], strides = [1, 1]} : vector<224x32xf32> to vector<32x32xf32>
    %cst_125 = arith.constant dense<0.000000e+00> : vector<32x32xf32>
    %306 = tpu.matmul %305, %204, %cst_125 {dimension_numbers = #tpu.dot_dimension_numbers<[1], [0], [0], [1], [0, 0, 1, 1], [], []>} : vector<32x32xf32>, vector<32x32xf32>, vector<32x32xf32> -> vector<32x32xf32>
    %307 = arith.addf %304, %306 : vector<32x32xf32>
    %308 = vector.extract_strided_slice %296 {offsets = [128, 0], sizes = [32, 32], strides = [1, 1]} : vector<224x32xf32> to vector<32x32xf32>
    %cst_126 = arith.constant dense<0.000000e+00> : vector<32x32xf32>
    %309 = tpu.matmul %308, %209, %cst_126 {dimension_numbers = #tpu.dot_dimension_numbers<[1], [0], [0], [1], [0, 0, 1, 1], [], []>} : vector<32x32xf32>, vector<32x32xf32>, vector<32x32xf32> -> vector<32x32xf32>
    %310 = arith.addf %307, %309 : vector<32x32xf32>
    %311 = vector.extract_strided_slice %296 {offsets = [160, 0], sizes = [32, 32], strides = [1, 1]} : vector<224x32xf32> to vector<32x32xf32>
    %cst_127 = arith.constant dense<0.000000e+00> : vector<32x32xf32>
    %312 = tpu.matmul %311, %214, %cst_127 {dimension_numbers = #tpu.dot_dimension_numbers<[1], [0], [0], [1], [0, 0, 1, 1], [], []>} : vector<32x32xf32>, vector<32x32xf32>, vector<32x32xf32> -> vector<32x32xf32>
    %313 = arith.addf %310, %312 : vector<32x32xf32>
    %314 = vector.extract_strided_slice %296 {offsets = [192, 0], sizes = [32, 32], strides = [1, 1]} : vector<224x32xf32> to vector<32x32xf32>
    %cst_128 = arith.constant dense<0.000000e+00> : vector<32x32xf32>
    %315 = tpu.matmul %314, %219, %cst_128 {dimension_numbers = #tpu.dot_dimension_numbers<[1], [0], [0], [1], [0, 0, 1, 1], [], []>} : vector<32x32xf32>, vector<32x32xf32>, vector<32x32xf32> -> vector<32x32xf32>
    %316 = arith.addf %313, %315 : vector<32x32xf32>
    %c0_129 = arith.constant 0 : index
    %c0_130 = arith.constant 0 : index
    %c0_131 = arith.constant 0 : index
    %317 = vector.load %arg15[%c0_129, %c0_130, %c0_131] : memref<3x32x1xf32, #tpu.memory_space<vmem>>, vector<1x32x1xf32>
    %318 = vector.shape_cast %317 : vector<1x32x1xf32> to vector<32x1xf32>
    %319 = vector.broadcast %318 : vector<32x1xf32> to vector<32x32xf32>
    %320 = arith.addf %316, %319 : vector<32x32xf32>
    %cst_132 = arith.constant 0.000000e+00 : f32
    %321 = vector.broadcast %cst_132 : f32 to vector<32x32xf32>
    %322 = arith.maximumf %320, %321 : vector<32x32xf32>
    %c1_133 = arith.constant 1 : index
    %c0_134 = arith.constant 0 : index
    %c0_135 = arith.constant 0 : index
    %323 = vector.load %arg15[%c1_133, %c0_134, %c0_135] : memref<3x32x1xf32, #tpu.memory_space<vmem>>, vector<1x32x1xf32>
    %324 = vector.shape_cast %323 : vector<1x32x1xf32> to vector<32x1xf32>
    %325 = vector.broadcast %324 : vector<32x1xf32> to vector<32x32xf32>
    %326 = arith.mulf %322, %325 : vector<32x32xf32>
    %c2_136 = arith.constant 2 : index
    %c0_137 = arith.constant 0 : index
    %c0_138 = arith.constant 0 : index
    %327 = vector.load %arg15[%c2_136, %c0_137, %c0_138] : memref<3x32x1xf32, #tpu.memory_space<vmem>>, vector<1x32x1xf32>
    %328 = vector.shape_cast %327 : vector<1x32x1xf32> to vector<32x1xf32>
    %329 = vector.broadcast %328 : vector<32x1xf32> to vector<32x32xf32>
    %330 = arith.addf %326, %329 : vector<32x32xf32>
    %c0_139 = arith.constant 0 : index
    %c0_140 = arith.constant 0 : index
    %331 = vector.load %arg16[%c0_139, %c0_140] : memref<224x32xf32, #tpu.memory_space<vmem>>, vector<224x32xf32>
    %cst_141 = arith.constant dense<0.000000e+00> : vector<224x32xf32>
    %332 = tpu.matmul %331, %330, %cst_141 {dimension_numbers = #tpu.dot_dimension_numbers<[1], [0], [0], [1], [0, 0, 1, 1], [], []>} : vector<224x32xf32>, vector<32x32xf32>, vector<224x32xf32> -> vector<224x32xf32>
    %333 = vector.extract_strided_slice %332 {offsets = [0, 0], sizes = [32, 32], strides = [1, 1]} : vector<224x32xf32> to vector<32x32xf32>
    %cst_142 = arith.constant dense<0.000000e+00> : vector<32x32xf32>
    %334 = tpu.matmul %333, %189, %cst_142 {dimension_numbers = #tpu.dot_dimension_numbers<[1], [0], [0], [1], [0, 0, 1, 1], [], []>} : vector<32x32xf32>, vector<32x32xf32>, vector<32x32xf32> -> vector<32x32xf32>
    %335 = vector.extract_strided_slice %332 {offsets = [32, 0], sizes = [32, 32], strides = [1, 1]} : vector<224x32xf32> to vector<32x32xf32>
    %cst_143 = arith.constant dense<0.000000e+00> : vector<32x32xf32>
    %336 = tpu.matmul %335, %194, %cst_143 {dimension_numbers = #tpu.dot_dimension_numbers<[1], [0], [0], [1], [0, 0, 1, 1], [], []>} : vector<32x32xf32>, vector<32x32xf32>, vector<32x32xf32> -> vector<32x32xf32>
    %337 = arith.addf %334, %336 : vector<32x32xf32>
    %338 = vector.extract_strided_slice %332 {offsets = [64, 0], sizes = [32, 32], strides = [1, 1]} : vector<224x32xf32> to vector<32x32xf32>
    %cst_144 = arith.constant dense<0.000000e+00> : vector<32x32xf32>
    %339 = tpu.matmul %338, %199, %cst_144 {dimension_numbers = #tpu.dot_dimension_numbers<[1], [0], [0], [1], [0, 0, 1, 1], [], []>} : vector<32x32xf32>, vector<32x32xf32>, vector<32x32xf32> -> vector<32x32xf32>
    %340 = arith.addf %337, %339 : vector<32x32xf32>
    %341 = vector.extract_strided_slice %332 {offsets = [96, 0], sizes = [32, 32], strides = [1, 1]} : vector<224x32xf32> to vector<32x32xf32>
    %cst_145 = arith.constant dense<0.000000e+00> : vector<32x32xf32>
    %342 = tpu.matmul %341, %204, %cst_145 {dimension_numbers = #tpu.dot_dimension_numbers<[1], [0], [0], [1], [0, 0, 1, 1], [], []>} : vector<32x32xf32>, vector<32x32xf32>, vector<32x32xf32> -> vector<32x32xf32>
    %343 = arith.addf %340, %342 : vector<32x32xf32>
    %344 = vector.extract_strided_slice %332 {offsets = [128, 0], sizes = [32, 32], strides = [1, 1]} : vector<224x32xf32> to vector<32x32xf32>
    %cst_146 = arith.constant dense<0.000000e+00> : vector<32x32xf32>
    %345 = tpu.matmul %344, %209, %cst_146 {dimension_numbers = #tpu.dot_dimension_numbers<[1], [0], [0], [1], [0, 0, 1, 1], [], []>} : vector<32x32xf32>, vector<32x32xf32>, vector<32x32xf32> -> vector<32x32xf32>
    %346 = arith.addf %343, %345 : vector<32x32xf32>
    %347 = vector.extract_strided_slice %332 {offsets = [160, 0], sizes = [32, 32], strides = [1, 1]} : vector<224x32xf32> to vector<32x32xf32>
    %cst_147 = arith.constant dense<0.000000e+00> : vector<32x32xf32>
    %348 = tpu.matmul %347, %214, %cst_147 {dimension_numbers = #tpu.dot_dimension_numbers<[1], [0], [0], [1], [0, 0, 1, 1], [], []>} : vector<32x32xf32>, vector<32x32xf32>, vector<32x32xf32> -> vector<32x32xf32>
    %349 = arith.addf %346, %348 : vector<32x32xf32>
    %350 = vector.extract_strided_slice %332 {offsets = [192, 0], sizes = [32, 32], strides = [1, 1]} : vector<224x32xf32> to vector<32x32xf32>
    %cst_148 = arith.constant dense<0.000000e+00> : vector<32x32xf32>
    %351 = tpu.matmul %350, %219, %cst_148 {dimension_numbers = #tpu.dot_dimension_numbers<[1], [0], [0], [1], [0, 0, 1, 1], [], []>} : vector<32x32xf32>, vector<32x32xf32>, vector<32x32xf32> -> vector<32x32xf32>
    %352 = arith.addf %349, %351 : vector<32x32xf32>
    %c0_149 = arith.constant 0 : index
    %c0_150 = arith.constant 0 : index
    %c0_151 = arith.constant 0 : index
    %353 = vector.load %arg17[%c0_149, %c0_150, %c0_151] : memref<3x32x1xf32, #tpu.memory_space<vmem>>, vector<1x32x1xf32>
    %354 = vector.shape_cast %353 : vector<1x32x1xf32> to vector<32x1xf32>
    %355 = vector.broadcast %354 : vector<32x1xf32> to vector<32x32xf32>
    %356 = arith.addf %352, %355 : vector<32x32xf32>
    %cst_152 = arith.constant 0.000000e+00 : f32
    %357 = vector.broadcast %cst_152 : f32 to vector<32x32xf32>
    %358 = arith.maximumf %356, %357 : vector<32x32xf32>
    %c1_153 = arith.constant 1 : index
    %c0_154 = arith.constant 0 : index
    %c0_155 = arith.constant 0 : index
    %359 = vector.load %arg17[%c1_153, %c0_154, %c0_155] : memref<3x32x1xf32, #tpu.memory_space<vmem>>, vector<1x32x1xf32>
    %360 = vector.shape_cast %359 : vector<1x32x1xf32> to vector<32x1xf32>
    %361 = vector.broadcast %360 : vector<32x1xf32> to vector<32x32xf32>
    %362 = arith.mulf %358, %361 : vector<32x32xf32>
    %c2_156 = arith.constant 2 : index
    %c0_157 = arith.constant 0 : index
    %c0_158 = arith.constant 0 : index
    %363 = vector.load %arg17[%c2_156, %c0_157, %c0_158] : memref<3x32x1xf32, #tpu.memory_space<vmem>>, vector<1x32x1xf32>
    %364 = vector.shape_cast %363 : vector<1x32x1xf32> to vector<32x1xf32>
    %365 = vector.broadcast %364 : vector<32x1xf32> to vector<32x32xf32>
    %366 = arith.addf %362, %365 : vector<32x32xf32>
    %367 = arith.addf %294, %366 : vector<32x32xf32>
    %c0_159 = arith.constant 0 : index
    %c0_160 = arith.constant 0 : index
    %368 = vector.load %arg18[%c0_159, %c0_160] : memref<224x32xf32, #tpu.memory_space<vmem>>, vector<224x32xf32>
    %cst_161 = arith.constant dense<0.000000e+00> : vector<224x32xf32>
    %369 = tpu.matmul %368, %182, %cst_161 {dimension_numbers = #tpu.dot_dimension_numbers<[1], [0], [0], [1], [0, 0, 1, 1], [], []>} : vector<224x32xf32>, vector<32x32xf32>, vector<224x32xf32> -> vector<224x32xf32>
    %370 = vector.extract_strided_slice %369 {offsets = [0, 0], sizes = [32, 32], strides = [1, 1]} : vector<224x32xf32> to vector<32x32xf32>
    %cst_162 = arith.constant dense<0.000000e+00> : vector<32x32xf32>
    %371 = tpu.matmul %370, %189, %cst_162 {dimension_numbers = #tpu.dot_dimension_numbers<[1], [0], [0], [1], [0, 0, 1, 1], [], []>} : vector<32x32xf32>, vector<32x32xf32>, vector<32x32xf32> -> vector<32x32xf32>
    %372 = vector.extract_strided_slice %369 {offsets = [32, 0], sizes = [32, 32], strides = [1, 1]} : vector<224x32xf32> to vector<32x32xf32>
    %cst_163 = arith.constant dense<0.000000e+00> : vector<32x32xf32>
    %373 = tpu.matmul %372, %194, %cst_163 {dimension_numbers = #tpu.dot_dimension_numbers<[1], [0], [0], [1], [0, 0, 1, 1], [], []>} : vector<32x32xf32>, vector<32x32xf32>, vector<32x32xf32> -> vector<32x32xf32>
    %374 = arith.addf %371, %373 : vector<32x32xf32>
    %375 = vector.extract_strided_slice %369 {offsets = [64, 0], sizes = [32, 32], strides = [1, 1]} : vector<224x32xf32> to vector<32x32xf32>
    %cst_164 = arith.constant dense<0.000000e+00> : vector<32x32xf32>
    %376 = tpu.matmul %375, %199, %cst_164 {dimension_numbers = #tpu.dot_dimension_numbers<[1], [0], [0], [1], [0, 0, 1, 1], [], []>} : vector<32x32xf32>, vector<32x32xf32>, vector<32x32xf32> -> vector<32x32xf32>
    %377 = arith.addf %374, %376 : vector<32x32xf32>
    %378 = vector.extract_strided_slice %369 {offsets = [96, 0], sizes = [32, 32], strides = [1, 1]} : vector<224x32xf32> to vector<32x32xf32>
    %cst_165 = arith.constant dense<0.000000e+00> : vector<32x32xf32>
    %379 = tpu.matmul %378, %204, %cst_165 {dimension_numbers = #tpu.dot_dimension_numbers<[1], [0], [0], [1], [0, 0, 1, 1], [], []>} : vector<32x32xf32>, vector<32x32xf32>, vector<32x32xf32> -> vector<32x32xf32>
    %380 = arith.addf %377, %379 : vector<32x32xf32>
    %381 = vector.extract_strided_slice %369 {offsets = [128, 0], sizes = [32, 32], strides = [1, 1]} : vector<224x32xf32> to vector<32x32xf32>
    %cst_166 = arith.constant dense<0.000000e+00> : vector<32x32xf32>
    %382 = tpu.matmul %381, %209, %cst_166 {dimension_numbers = #tpu.dot_dimension_numbers<[1], [0], [0], [1], [0, 0, 1, 1], [], []>} : vector<32x32xf32>, vector<32x32xf32>, vector<32x32xf32> -> vector<32x32xf32>
    %383 = arith.addf %380, %382 : vector<32x32xf32>
    %384 = vector.extract_strided_slice %369 {offsets = [160, 0], sizes = [32, 32], strides = [1, 1]} : vector<224x32xf32> to vector<32x32xf32>
    %cst_167 = arith.constant dense<0.000000e+00> : vector<32x32xf32>
    %385 = tpu.matmul %384, %214, %cst_167 {dimension_numbers = #tpu.dot_dimension_numbers<[1], [0], [0], [1], [0, 0, 1, 1], [], []>} : vector<32x32xf32>, vector<32x32xf32>, vector<32x32xf32> -> vector<32x32xf32>
    %386 = arith.addf %383, %385 : vector<32x32xf32>
    %387 = vector.extract_strided_slice %369 {offsets = [192, 0], sizes = [32, 32], strides = [1, 1]} : vector<224x32xf32> to vector<32x32xf32>
    %cst_168 = arith.constant dense<0.000000e+00> : vector<32x32xf32>
    %388 = tpu.matmul %387, %219, %cst_168 {dimension_numbers = #tpu.dot_dimension_numbers<[1], [0], [0], [1], [0, 0, 1, 1], [], []>} : vector<32x32xf32>, vector<32x32xf32>, vector<32x32xf32> -> vector<32x32xf32>
    %389 = arith.addf %386, %388 : vector<32x32xf32>
    %c0_169 = arith.constant 0 : index
    %c0_170 = arith.constant 0 : index
    %c0_171 = arith.constant 0 : index
    %390 = vector.load %arg19[%c0_169, %c0_170, %c0_171] : memref<3x32x1xf32, #tpu.memory_space<vmem>>, vector<1x32x1xf32>
    %391 = vector.shape_cast %390 : vector<1x32x1xf32> to vector<32x1xf32>
    %392 = vector.broadcast %391 : vector<32x1xf32> to vector<32x32xf32>
    %393 = arith.addf %389, %392 : vector<32x32xf32>
    %cst_172 = arith.constant 0.000000e+00 : f32
    %394 = vector.broadcast %cst_172 : f32 to vector<32x32xf32>
    %395 = arith.maximumf %393, %394 : vector<32x32xf32>
    %c1_173 = arith.constant 1 : index
    %c0_174 = arith.constant 0 : index
    %c0_175 = arith.constant 0 : index
    %396 = vector.load %arg19[%c1_173, %c0_174, %c0_175] : memref<3x32x1xf32, #tpu.memory_space<vmem>>, vector<1x32x1xf32>
    %397 = vector.shape_cast %396 : vector<1x32x1xf32> to vector<32x1xf32>
    %398 = vector.broadcast %397 : vector<32x1xf32> to vector<32x32xf32>
    %399 = arith.mulf %395, %398 : vector<32x32xf32>
    %c2_176 = arith.constant 2 : index
    %c0_177 = arith.constant 0 : index
    %c0_178 = arith.constant 0 : index
    %400 = vector.load %arg19[%c2_176, %c0_177, %c0_178] : memref<3x32x1xf32, #tpu.memory_space<vmem>>, vector<1x32x1xf32>
    %401 = vector.shape_cast %400 : vector<1x32x1xf32> to vector<32x1xf32>
    %402 = vector.broadcast %401 : vector<32x1xf32> to vector<32x32xf32>
    %403 = arith.addf %399, %402 : vector<32x32xf32>
    %c0_179 = arith.constant 0 : index
    %c0_180 = arith.constant 0 : index
    %404 = vector.load %arg20[%c0_179, %c0_180] : memref<224x32xf32, #tpu.memory_space<vmem>>, vector<224x32xf32>
    %cst_181 = arith.constant dense<0.000000e+00> : vector<224x32xf32>
    %405 = tpu.matmul %404, %403, %cst_181 {dimension_numbers = #tpu.dot_dimension_numbers<[1], [0], [0], [1], [0, 0, 1, 1], [], []>} : vector<224x32xf32>, vector<32x32xf32>, vector<224x32xf32> -> vector<224x32xf32>
    %406 = vector.extract_strided_slice %405 {offsets = [0, 0], sizes = [32, 32], strides = [1, 1]} : vector<224x32xf32> to vector<32x32xf32>
    %cst_182 = arith.constant dense<0.000000e+00> : vector<32x32xf32>
    %407 = tpu.matmul %406, %189, %cst_182 {dimension_numbers = #tpu.dot_dimension_numbers<[1], [0], [0], [1], [0, 0, 1, 1], [], []>} : vector<32x32xf32>, vector<32x32xf32>, vector<32x32xf32> -> vector<32x32xf32>
    %408 = vector.extract_strided_slice %405 {offsets = [32, 0], sizes = [32, 32], strides = [1, 1]} : vector<224x32xf32> to vector<32x32xf32>
    %cst_183 = arith.constant dense<0.000000e+00> : vector<32x32xf32>
    %409 = tpu.matmul %408, %194, %cst_183 {dimension_numbers = #tpu.dot_dimension_numbers<[1], [0], [0], [1], [0, 0, 1, 1], [], []>} : vector<32x32xf32>, vector<32x32xf32>, vector<32x32xf32> -> vector<32x32xf32>
    %410 = arith.addf %407, %409 : vector<32x32xf32>
    %411 = vector.extract_strided_slice %405 {offsets = [64, 0], sizes = [32, 32], strides = [1, 1]} : vector<224x32xf32> to vector<32x32xf32>
    %cst_184 = arith.constant dense<0.000000e+00> : vector<32x32xf32>
    %412 = tpu.matmul %411, %199, %cst_184 {dimension_numbers = #tpu.dot_dimension_numbers<[1], [0], [0], [1], [0, 0, 1, 1], [], []>} : vector<32x32xf32>, vector<32x32xf32>, vector<32x32xf32> -> vector<32x32xf32>
    %413 = arith.addf %410, %412 : vector<32x32xf32>
    %414 = vector.extract_strided_slice %405 {offsets = [96, 0], sizes = [32, 32], strides = [1, 1]} : vector<224x32xf32> to vector<32x32xf32>
    %cst_185 = arith.constant dense<0.000000e+00> : vector<32x32xf32>
    %415 = tpu.matmul %414, %204, %cst_185 {dimension_numbers = #tpu.dot_dimension_numbers<[1], [0], [0], [1], [0, 0, 1, 1], [], []>} : vector<32x32xf32>, vector<32x32xf32>, vector<32x32xf32> -> vector<32x32xf32>
    %416 = arith.addf %413, %415 : vector<32x32xf32>
    %417 = vector.extract_strided_slice %405 {offsets = [128, 0], sizes = [32, 32], strides = [1, 1]} : vector<224x32xf32> to vector<32x32xf32>
    %cst_186 = arith.constant dense<0.000000e+00> : vector<32x32xf32>
    %418 = tpu.matmul %417, %209, %cst_186 {dimension_numbers = #tpu.dot_dimension_numbers<[1], [0], [0], [1], [0, 0, 1, 1], [], []>} : vector<32x32xf32>, vector<32x32xf32>, vector<32x32xf32> -> vector<32x32xf32>
    %419 = arith.addf %416, %418 : vector<32x32xf32>
    %420 = vector.extract_strided_slice %405 {offsets = [160, 0], sizes = [32, 32], strides = [1, 1]} : vector<224x32xf32> to vector<32x32xf32>
    %cst_187 = arith.constant dense<0.000000e+00> : vector<32x32xf32>
    %421 = tpu.matmul %420, %214, %cst_187 {dimension_numbers = #tpu.dot_dimension_numbers<[1], [0], [0], [1], [0, 0, 1, 1], [], []>} : vector<32x32xf32>, vector<32x32xf32>, vector<32x32xf32> -> vector<32x32xf32>
    %422 = arith.addf %419, %421 : vector<32x32xf32>
    %423 = vector.extract_strided_slice %405 {offsets = [192, 0], sizes = [32, 32], strides = [1, 1]} : vector<224x32xf32> to vector<32x32xf32>
    %cst_188 = arith.constant dense<0.000000e+00> : vector<32x32xf32>
    %424 = tpu.matmul %423, %219, %cst_188 {dimension_numbers = #tpu.dot_dimension_numbers<[1], [0], [0], [1], [0, 0, 1, 1], [], []>} : vector<32x32xf32>, vector<32x32xf32>, vector<32x32xf32> -> vector<32x32xf32>
    %425 = arith.addf %422, %424 : vector<32x32xf32>
    %c0_189 = arith.constant 0 : index
    %c0_190 = arith.constant 0 : index
    %c0_191 = arith.constant 0 : index
    %426 = vector.load %arg21[%c0_189, %c0_190, %c0_191] : memref<3x32x1xf32, #tpu.memory_space<vmem>>, vector<1x32x1xf32>
    %427 = vector.shape_cast %426 : vector<1x32x1xf32> to vector<32x1xf32>
    %428 = vector.broadcast %427 : vector<32x1xf32> to vector<32x32xf32>
    %429 = arith.addf %425, %428 : vector<32x32xf32>
    %cst_192 = arith.constant 0.000000e+00 : f32
    %430 = vector.broadcast %cst_192 : f32 to vector<32x32xf32>
    %431 = arith.maximumf %429, %430 : vector<32x32xf32>
    %c1_193 = arith.constant 1 : index
    %c0_194 = arith.constant 0 : index
    %c0_195 = arith.constant 0 : index
    %432 = vector.load %arg21[%c1_193, %c0_194, %c0_195] : memref<3x32x1xf32, #tpu.memory_space<vmem>>, vector<1x32x1xf32>
    %433 = vector.shape_cast %432 : vector<1x32x1xf32> to vector<32x1xf32>
    %434 = vector.broadcast %433 : vector<32x1xf32> to vector<32x32xf32>
    %435 = arith.mulf %431, %434 : vector<32x32xf32>
    %c2_196 = arith.constant 2 : index
    %c0_197 = arith.constant 0 : index
    %c0_198 = arith.constant 0 : index
    %436 = vector.load %arg21[%c2_196, %c0_197, %c0_198] : memref<3x32x1xf32, #tpu.memory_space<vmem>>, vector<1x32x1xf32>
    %437 = vector.shape_cast %436 : vector<1x32x1xf32> to vector<32x1xf32>
    %438 = vector.broadcast %437 : vector<32x1xf32> to vector<32x32xf32>
    %439 = arith.addf %435, %438 : vector<32x32xf32>
    %440 = arith.addf %367, %439 : vector<32x32xf32>
    %c0_199 = arith.constant 0 : index
    %c0_200 = arith.constant 0 : index
    %441 = vector.load %arg22[%c0_199, %c0_200] : memref<32x16xf32, #tpu.memory_space<vmem>>, vector<32x16xf32>
    %cst_201 = arith.constant dense<0.000000e+00> : vector<32x16xf32>
    %442 = tpu.matmul %440, %441, %cst_201 {dimension_numbers = #tpu.dot_dimension_numbers<[1], [0], [0], [1], [0, 0, 1, 1], [], []>} : vector<32x32xf32>, vector<32x16xf32>, vector<32x16xf32> -> vector<32x16xf32>
    %c0_202 = arith.constant 0 : index
    %c0_203 = arith.constant 0 : index
    %c0_204 = arith.constant 0 : index
    %443 = vector.load %arg23[%c0_202, %c0_203, %c0_204] : memref<1x32x16xf32, #tpu.memory_space<vmem>>, vector<1x32x16xf32>
    %444 = vector.shape_cast %443 : vector<1x32x16xf32> to vector<32x16xf32>
    %445 = vector.shape_cast %442 : vector<32x16xf32> to vector<1x32x16xf32>
    tpu.vector_store %arg23[%c0_202, %c0_203, %c0_204], %445 {strides = array<i32>} : memref<1x32x16xf32, #tpu.memory_space<vmem>>, vector<1x32x16xf32>,
    return
  }
  func.func @transform_0(%arg0: i32) -> (i32, i32, i32) {
    %c0_i32 = arith.constant 0 : i32
    %c0_i32_0 = arith.constant 0 : i32
    %c0_i32_1 = arith.constant 0 : i32
    return %arg0, %c0_i32, %c0_i32_0 : i32, i32, i32
  }
  func.func @transform_1(%arg0: i32) -> (i32, i32) {
    %c0_i32 = arith.constant 0 : i32
    %c0_i32_0 = arith.constant 0 : i32
    %c0_i32_1 = arith.constant 0 : i32
    return %c0_i32, %c0_i32_0 : i32, i32
  }
  func.func @transform_2(%arg0: i32) -> (i32, i32) {
    %c0_i32 = arith.constant 0 : i32
    %c0_i32_0 = arith.constant 0 : i32
    %c0_i32_1 = arith.constant 0 : i32
    return %c0_i32, %c0_i32_0 : i32, i32
  }
  func.func @transform_3(%arg0: i32) -> (i32, i32, i32) {
    %c0_i32 = arith.constant 0 : i32
    %c0_i32_0 = arith.constant 0 : i32
    %c0_i32_1 = arith.constant 0 : i32
    %c0_i32_2 = arith.constant 0 : i32
    return %c0_i32, %c0_i32_0, %c0_i32_1 : i32, i32, i32
  }
  func.func @transform_4(%arg0: i32) -> (i32, i32) {
    %c0_i32 = arith.constant 0 : i32
    %c0_i32_0 = arith.constant 0 : i32
    %c0_i32_1 = arith.constant 0 : i32
    return %c0_i32, %c0_i32_0 : i32, i32
  }
  func.func @transform_5(%arg0: i32) -> (i32, i32, i32) {
    %c0_i32 = arith.constant 0 : i32
    %c0_i32_0 = arith.constant 0 : i32
    %c0_i32_1 = arith.constant 0 : i32
    %c0_i32_2 = arith.constant 0 : i32
    return %c0_i32, %c0_i32_0, %c0_i32_1 : i32, i32, i32
  }
  func.func @transform_6(%arg0: i32) -> (i32, i32) {
    %c0_i32 = arith.constant 0 : i32
    %c0_i32_0 = arith.constant 0 : i32
    %c0_i32_1 = arith.constant 0 : i32
    return %c0_i32, %c0_i32_0 : i32, i32
  }
  func.func @transform_7(%arg0: i32) -> (i32, i32, i32) {
    %c0_i32 = arith.constant 0 : i32
    %c0_i32_0 = arith.constant 0 : i32
    %c0_i32_1 = arith.constant 0 : i32
    %c0_i32_2 = arith.constant 0 : i32
    return %c0_i32, %c0_i32_0, %c0_i32_1 : i32, i32, i32
  }
  func.func @transform_8(%arg0: i32) -> (i32, i32) {
    %c0_i32 = arith.constant 0 : i32
    %c0_i32_0 = arith.constant 0 : i32
    %c0_i32_1 = arith.constant 0 : i32
    return %c0_i32, %c0_i32_0 : i32, i32
  }
  func.func @transform_9(%arg0: i32) -> (i32, i32) {
    %c0_i32 = arith.constant 0 : i32
    %c0_i32_0 = arith.constant 0 : i32
    %c0_i32_1 = arith.constant 0 : i32
    return %c0_i32, %c0_i32_0 : i32, i32
  }
  func.func @transform_10(%arg0: i32) -> (i32, i32, i32) {
    %c0_i32 = arith.constant 0 : i32
    %c0_i32_0 = arith.constant 0 : i32
    %c0_i32_1 = arith.constant 0 : i32
    %c0_i32_2 = arith.constant 0 : i32
    return %c0_i32, %c0_i32_0, %c0_i32_1 : i32, i32, i32
  }
  func.func @transform_11(%arg0: i32) -> (i32, i32) {
    %c0_i32 = arith.constant 0 : i32
    %c0_i32_0 = arith.constant 0 : i32
    %c0_i32_1 = arith.constant 0 : i32
    return %c0_i32, %c0_i32_0 : i32, i32
  }
  func.func @transform_12(%arg0: i32) -> (i32, i32, i32) {
    %c0_i32 = arith.constant 0 : i32
    %c0_i32_0 = arith.constant 0 : i32
    %c0_i32_1 = arith.constant 0 : i32
    %c0_i32_2 = arith.constant 0 : i32
    return %c0_i32, %c0_i32_0, %c0_i32_1 : i32, i32, i32
  }
  func.func @transform_13(%arg0: i32) -> (i32, i32) {
    %c0_i32 = arith.constant 0 : i32
    %c0_i32_0 = arith.constant 0 : i32
    %c0_i32_1 = arith.constant 0 : i32
    return %c0_i32, %c0_i32_0 : i32, i32
  }
  func.func @transform_14(%arg0: i32) -> (i32, i32, i32) {
    %c0_i32 = arith.constant 0 : i32
    %c0_i32_0 = arith.constant 0 : i32
    %c0_i32_1 = arith.constant 0 : i32
    %c0_i32_2 = arith.constant 0 : i32
    return %c0_i32, %c0_i32_0, %c0_i32_1 : i32, i32, i32
  }
  func.func @transform_15(%arg0: i32) -> (i32, i32) {
    %c0_i32 = arith.constant 0 : i32
    %c0_i32_0 = arith.constant 0 : i32
    %c0_i32_1 = arith.constant 0 : i32
    return %c0_i32, %c0_i32_0 : i32, i32
  }
  func.func @transform_16(%arg0: i32) -> (i32, i32, i32) {
    %c0_i32 = arith.constant 0 : i32
    %c0_i32_0 = arith.constant 0 : i32
    %c0_i32_1 = arith.constant 0 : i32
    %c0_i32_2 = arith.constant 0 : i32
    return %c0_i32, %c0_i32_0, %c0_i32_1 : i32, i32, i32
  }
  func.func @transform_17(%arg0: i32) -> (i32, i32) {
    %c0_i32 = arith.constant 0 : i32
    %c0_i32_0 = arith.constant 0 : i32
    %c0_i32_1 = arith.constant 0 : i32
    return %c0_i32, %c0_i32_0 : i32, i32
  }
  func.func @transform_18(%arg0: i32) -> (i32, i32, i32) {
    %c0_i32 = arith.constant 0 : i32
    %c0_i32_0 = arith.constant 0 : i32
    %c0_i32_1 = arith.constant 0 : i32
    %c0_i32_2 = arith.constant 0 : i32
    return %c0_i32, %c0_i32_0, %c0_i32_1 : i32, i32, i32
  }
  func.func @transform_19(%arg0: i32) -> (i32, i32) {
    %c0_i32 = arith.constant 0 : i32
    %c0_i32_0 = arith.constant 0 : i32
    %c0_i32_1 = arith.constant 0 : i32
    return %c0_i32, %c0_i32_0 : i32, i32
  }
  func.func @transform_20(%arg0: i32) -> (i32, i32, i32) {
    %c0_i32 = arith.constant 0 : i32
    %c0_i32_0 = arith.constant 0 : i32
    %c0_i32_1 = arith.constant 0 : i32
    %c0_i32_2 = arith.constant 0 : i32
    return %c0_i32, %c0_i32_0, %c0_i32_1 : i32, i32, i32
  }
  func.func @transform_21(%arg0: i32) -> (i32, i32) {
    %c0_i32 = arith.constant 0 : i32
    %c0_i32_0 = arith.constant 0 : i32
    %c0_i32_1 = arith.constant 0 : i32
    return %c0_i32, %c0_i32_0 : i32, i32
  }
  func.func @transform_22(%arg0: i32) -> (i32, i32, i32) {
    %c0_i32 = arith.constant 0 : i32
    %c0_i32_0 = arith.constant 0 : i32
    %c0_i32_1 = arith.constant 0 : i32
    return %arg0, %c0_i32, %c0_i32_0 : i32, i32, i32
  }
}

</mosaic_0001>

<llo_original>
// kernel: reasoner_forward.1
$region0: #{reasoner_forward.1}
  #allocation0 [shape = 'u32[]', space=smem, size = 0x4, offset = 0x4, fixed_abs, tag = 'smem constant byte address 0x4 - core index']
  #allocation1 [shape = 'u32[144,128]{1,0:T(1,128)}', space=vmem, size = 0x12000, scoped, tag = 'internal scratch']
  %s0 = inlined_call_operand.vmem [shape: f32[2,16,128], index: 0, kind: input, shape index: {}]
  %s1 = inlined_call_operand.vmem [shape: f32[32,16], index: 1, kind: input, shape index: {}]
  %s2 = inlined_call_operand.vmem [shape: f32[224,16], index: 2, kind: input, shape index: {}]
  %s3 = inlined_call_operand.vmem [shape: f32[3,32,1], index: 3, kind: input, shape index: {}]
  %s4 = inlined_call_operand.vmem [shape: f32[224,16], index: 4, kind: input, shape index: {}]
  %s5 = inlined_call_operand.vmem [shape: f32[3,32,1], index: 5, kind: input, shape index: {}]
  %s6 = inlined_call_operand.vmem [shape: f32[224,16], index: 6, kind: input, shape index: {}]
  %s7 = inlined_call_operand.vmem [shape: f32[3,32,1], index: 7, kind: input, shape index: {}]
  %s8 = inlined_call_operand.vmem [shape: f32[32,32], index: 8, kind: input, shape index: {}]
  %s9 = inlined_call_operand.vmem [shape: f32[224,32], index: 9, kind: input, shape index: {}]
  %s10 = inlined_call_operand.vmem [shape: f32[3,32,1], index: 10, kind: input, shape index: {}]
  %s11 = inlined_call_operand.vmem [shape: f32[224,32], index: 11, kind: input, shape index: {}]
  %s12 = inlined_call_operand.vmem [shape: f32[3,32,1], index: 12, kind: input, shape index: {}]
  %s13 = inlined_call_operand.vmem [shape: f32[224,32], index: 13, kind: input, shape index: {}]
  %s14 = inlined_call_operand.vmem [shape: f32[3,32,1], index: 14, kind: input, shape index: {}]
  %s15 = inlined_call_operand.vmem [shape: f32[224,32], index: 15, kind: input, shape index: {}]
  %s16 = inlined_call_operand.vmem [shape: f32[3,32,1], index: 16, kind: input, shape index: {}]
  %s17 = inlined_call_operand.vmem [shape: f32[224,32], index: 17, kind: input, shape index: {}]
  %s18 = inlined_call_operand.vmem [shape: f32[3,32,1], index: 18, kind: input, shape index: {}]
  %s19 = inlined_call_operand.vmem [shape: f32[224,32], index: 19, kind: input, shape index: {}]
  %s20 = inlined_call_operand.vmem [shape: f32[3,32,1], index: 20, kind: input, shape index: {}]
  %s21 = inlined_call_operand.vmem [shape: f32[32,16], index: 21, kind: input, shape index: {}]
  %s22 = inlined_call_operand.vmem [shape: f32[2,32,16], index: 22, kind: output, shape index: {}]
  %s23 = sld [smem:[#allocation0]]
  $region121: #{reasoner_forward.1} parent=0
    _
  %s25 = ssub.s32 1, %s23
  %s26 = scalar_select 0, %s25, %s23
  loop: start=0, step=1, limit=4
  $region2: #{reasoner_forward.1} parent=0 // loop_pre_header
    _
  $region3: #{reasoner_forward.1} parent=0 // loop_header
    %s28 = sphi 0, %s32
    %p29 = scmp.ge.s32.totalorder %s28, 4
    %s38 = sphi 0, %s40
    %s41 = sphi 0, %s38
    %s42 = sphi 0, %s41
    %s58 = sphi 0, %s42
    %s62 = sphi 0, %s62
    %s64 = sphi 0, %s62
    %s65 = sphi 0, %s64
    %s79 = sphi 0, %s65
    %s83 = sphi 0, %s83
    %s85 = sphi 0, %s83
    %s86 = sphi 0, %s85
    %s100 = sphi 0, %s86
    %s104 = sphi 0, %s104
    %s106 = sphi 0, %s104
    %s107 = sphi 0, %s106
    %s121 = sphi 0, %s107
    %s125 = sphi 0, %s125
    %s127 = sphi 0, %s125
    %s128 = sphi 0, %s127
    %s142 = sphi 0, %s128
    %s146 = sphi 0, %s146
    %s148 = sphi 0, %s146
    %s149 = sphi 0, %s148
    %s163 = sphi 0, %s149
    %s167 = sphi 0, %s167
    %s169 = sphi 0, %s167
    %s170 = sphi 0, %s169
    %s184 = sphi 0, %s170
    %s188 = sphi 0, %s188
    %s190 = sphi 0, %s188
    %s191 = sphi 0, %s190
    %s205 = sphi 0, %s191
    %s209 = sphi 0, %s209
    %s211 = sphi 0, %s209
    %s212 = sphi 0, %s211
    %s226 = sphi 0, %s212
    %s230 = sphi 0, %s230
    %s232 = sphi 0, %s230
    %s233 = sphi 0, %s232
    %s247 = sphi 0, %s233
    %s251 = sphi 0, %s251
    %s253 = sphi 0, %s251
    %s254 = sphi 0, %s253
    %s268 = sphi 0, %s254
    %s272 = sphi 0, %s272
    %s274 = sphi 0, %s272
    %s275 = sphi 0, %s274
    %s289 = sphi 0, %s275
    %s293 = sphi 0, %s293
    %s295 = sphi 0, %s293
    %s296 = sphi 0, %s295
    %s310 = sphi 0, %s296
    %s314 = sphi 0, %s314
    %s316 = sphi 0, %s314
    %s317 = sphi 0, %s316
    %s331 = sphi 0, %s317
    %s335 = sphi 0, %s335
    %s337 = sphi 0, %s335
    %s338 = sphi 0, %s337
    %s352 = sphi 0, %s338
    %s356 = sphi 0, %s356
    %s358 = sphi 0, %s356
    %s359 = sphi 0, %s358
    %s373 = sphi 0, %s359
    %s377 = sphi 0, %s377
    %s379 = sphi 0, %s377
    %s380 = sphi 0, %s379
    %s394 = sphi 0, %s380
    %s398 = sphi 0, %s398
    %s400 = sphi 0, %s398
    %s401 = sphi 0, %s400
    %s415 = sphi 0, %s401
    %s419 = sphi 0, %s419
    %s421 = sphi 0, %s419
    %s422 = sphi 0, %s421
    %s436 = sphi 0, %s422
    %s440 = sphi 0, %s440
    %s442 = sphi 0, %s440
    %s443 = sphi 0, %s442
    %s457 = sphi 0, %s443
    %s461 = sphi 0, %s461
    %s463 = sphi 0, %s461
    %s464 = sphi 0, %s463
    %s478 = sphi 0, %s464
    %s482 = sphi 0, %s482
    %s484 = sphi 0, %s482
    %s485 = sphi 0, %s484
    %s499 = sphi 0, %s485
    %s505 = sphi 0, %s507
    %s508 = sphi 0, %s505
    %s509 = sphi 0, %s508
    %s525 = sphi 0, %s509
  $region4: #{reasoner_forward.1} parent=0 // loop_header_branch
    %31 = sbr.rel (%p29) target = $region8
  $region5: #{reasoner_forward.1} parent=0 // loop_body
    %s33 = ssub.s32 %s28, 1
    %s34 = ssub.s32 %s28, 2
    %s35 = sadd.s32 %s28, 1
    %s36 = ssub.s32 %s28, %s35
    %p37 = scmp.eq.s32.totalorder %s36, 0
    %s39 = sadd.s32 %s38, 1
    %s40 = scalar_select %p37, %s38, %s39
    %p43 = pneg %p37
    %p44 = scmp.eq.s32.totalorder %s28, 1
    %p45 = por %p43, %p44
    %p46 = scmp.ne.s32.totalorder %s38, %s41
    %p47 = scmp.eq.s32.totalorder %s28, 0
    %p48 = por %p46, %p47
    %p49 = scmp.ne.s32.totalorder %s38, %s41
    %p50 = scmp.eq.s32.totalorder %s33, 1
    %p51 = por %p49, %p50
    %p52 = scmp.ne.s32.totalorder %s41, %s42
    %p53 = scmp.eq.s32.totalorder %s33, 0
    %p54 = por %p52, %p53
    %p55 = scmp.ne.s32.totalorder %s41, %s42
    %p56 = scmp.eq.s32.totalorder %s34, 1
    %p57 = por %p55, %p56
    %p59 = scmp.ne.s32.totalorder %s42, %s58
    %p60 = scmp.eq.s32.totalorder %s34, 0
    %p61 = por %p59, %p60
    %s63 = sadd.s32 %s62, 1
    %p66 = scmp.eq.s32.totalorder %s28, 1
    %p67 = scmp.ne.s32.totalorder %s62, %s64
    %p68 = scmp.eq.s32.totalorder %s28, 0
    %p69 = por %p67, %p68
    %p70 = scmp.ne.s32.totalorder %s62, %s64
    %p71 = scmp.eq.s32.totalorder %s33, 1
    %p72 = por %p70, %p71
    %p73 = scmp.ne.s32.totalorder %s64, %s65
    %p74 = scmp.eq.s32.totalorder %s33, 0
    %p75 = por %p73, %p74
    %p76 = scmp.ne.s32.totalorder %s64, %s65
    %p77 = scmp.eq.s32.totalorder %s34, 1
    %p78 = por %p76, %p77
    %p80 = scmp.ne.s32.totalorder %s65, %s79
    %p81 = scmp.eq.s32.totalorder %s34, 0
    %p82 = por %p80, %p81
    %s84 = sadd.s32 %s83, 1
    %p87 = scmp.eq.s32.totalorder %s28, 1
    %p88 = scmp.ne.s32.totalorder %s83, %s85
    %p89 = scmp.eq.s32.totalorder %s28, 0
    %p90 = por %p88, %p89
    %p91 = scmp.ne.s32.totalorder %s83, %s85
    %p92 = scmp.eq.s32.totalorder %s33, 1
    %p93 = por %p91, %p92
    %p94 = scmp.ne.s32.totalorder %s85, %s86
    %p95 = scmp.eq.s32.totalorder %s33, 0
    %p96 = por %p94, %p95
    %p97 = scmp.ne.s32.totalorder %s85, %s86
    %p98 = scmp.eq.s32.totalorder %s34, 1
    %p99 = por %p97, %p98
    %p101 = scmp.ne.s32.totalorder %s86, %s100
    %p102 = scmp.eq.s32.totalorder %s34, 0
    %p103 = por %p101, %p102
    %s105 = sadd.s32 %s104, 1
    %p108 = scmp.eq.s32.totalorder %s28, 1
    %p109 = scmp.ne.s32.totalorder %s104, %s106
    %p110 = scmp.eq.s32.totalorder %s28, 0
    %p111 = por %p109, %p110
    %p112 = scmp.ne.s32.totalorder %s104, %s106
    %p113 = scmp.eq.s32.totalorder %s33, 1
    %p114 = por %p112, %p113
    %p115 = scmp.ne.s32.totalorder %s106, %s107
    %p116 = scmp.eq.s32.totalorder %s33, 0
    %p117 = por %p115, %p116
    %p118 = scmp.ne.s32.totalorder %s106, %s107
    %p119 = scmp.eq.s32.totalorder %s34, 1
    %p120 = por %p118, %p119
    %p122 = scmp.ne.s32.totalorder %s107, %s121
    %p123 = scmp.eq.s32.totalorder %s34, 0
    %p124 = por %p122, %p123
    %s126 = sadd.s32 %s125, 1
    %p129 = scmp.eq.s32.totalorder %s28, 1
    %p130 = scmp.ne.s32.totalorder %s125, %s127
    %p131 = scmp.eq.s32.totalorder %s28, 0
    %p132 = por %p130, %p131
    %p133 = scmp.ne.s32.totalorder %s125, %s127
    %p134 = scmp.eq.s32.totalorder %s33, 1
    %p135 = por %p133, %p134
    %p136 = scmp.ne.s32.totalorder %s127, %s128
    %p137 = scmp.eq.s32.totalorder %s33, 0
    %p138 = por %p136, %p137
    %p139 = scmp.ne.s32.totalorder %s127, %s128
    %p140 = scmp.eq.s32.totalorder %s34, 1
    %p141 = por %p139, %p140
    %p143 = scmp.ne.s32.totalorder %s128, %s142
    %p144 = scmp.eq.s32.totalorder %s34, 0
    %p145 = por %p143, %p144
    %s147 = sadd.s32 %s146, 1
    %p150 = scmp.eq.s32.totalorder %s28, 1
    %p151 = scmp.ne.s32.totalorder %s146, %s148
    %p152 = scmp.eq.s32.totalorder %s28, 0
    %p153 = por %p151, %p152
    %p154 = scmp.ne.s32.totalorder %s146, %s148
    %p155 = scmp.eq.s32.totalorder %s33, 1
    %p156 = por %p154, %p155
    %p157 = scmp.ne.s32.totalorder %s148, %s149
    %p158 = scmp.eq.s32.totalorder %s33, 0
    %p159 = por %p157, %p158
    %p160 = scmp.ne.s32.totalorder %s148, %s149
    %p161 = scmp.eq.s32.totalorder %s34, 1
    %p162 = por %p160, %p161
    %p164 = scmp.ne.s32.totalorder %s149, %s163
    %p165 = scmp.eq.s32.totalorder %s34, 0
    %p166 = por %p164, %p165
    %s168 = sadd.s32 %s167, 1
    %p171 = scmp.eq.s32.totalorder %s28, 1
    %p172 = scmp.ne.s32.totalorder %s167, %s169
    %p173 = scmp.eq.s32.totalorder %s28, 0
    %p174 = por %p172, %p173
    %p175 = scmp.ne.s32.totalorder %s167, %s169
    %p176 = scmp.eq.s32.totalorder %s33, 1
    %p177 = por %p175, %p176
    %p178 = scmp.ne.s32.totalorder %s169, %s170
    %p179 = scmp.eq.s32.totalorder %s33, 0
    %p180 = por %p178, %p179
    %p181 = scmp.ne.s32.totalorder %s169, %s170
    %p182 = scmp.eq.s32.totalorder %s34, 1
    %p183 = por %p181, %p182
    %p185 = scmp.ne.s32.totalorder %s170, %s184
    %p186 = scmp.eq.s32.totalorder %s34, 0
    %p187 = por %p185, %p186
    %s189 = sadd.s32 %s188, 1
    %p192 = scmp.eq.s32.totalorder %s28, 1
    %p193 = scmp.ne.s32.totalorder %s188, %s190
    %p194 = scmp.eq.s32.totalorder %s28, 0
    %p195 = por %p193, %p194
    %p196 = scmp.ne.s32.totalorder %s188, %s190
    %p197 = scmp.eq.s32.totalorder %s33, 1
    %p198 = por %p196, %p197
    %p199 = scmp.ne.s32.totalorder %s190, %s191
    %p200 = scmp.eq.s32.totalorder %s33, 0
    %p201 = por %p199, %p200
    %p202 = scmp.ne.s32.totalorder %s190, %s191
    %p203 = scmp.eq.s32.totalorder %s34, 1
    %p204 = por %p202, %p203
    %p206 = scmp.ne.s32.totalorder %s191, %s205
    %p207 = scmp.eq.s32.totalorder %s34, 0
    %p208 = por %p206, %p207
    %s210 = sadd.s32 %s209, 1
    %p213 = scmp.eq.s32.totalorder %s28, 1
    %p214 = scmp.ne.s32.totalorder %s209, %s211
    %p215 = scmp.eq.s32.totalorder %s28, 0
    %p216 = por %p214, %p215
    %p217 = scmp.ne.s32.totalorder %s209, %s211
    %p218 = scmp.eq.s32.totalorder %s33, 1
    %p219 = por %p217, %p218
    %p220 = scmp.ne.s32.totalorder %s211, %s212
    %p221 = scmp.eq.s32.totalorder %s33, 0
    %p222 = por %p220, %p221
    %p223 = scmp.ne.s32.totalorder %s211, %s212
    %p224 = scmp.eq.s32.totalorder %s34, 1
    %p225 = por %p223, %p224
    %p227 = scmp.ne.s32.totalorder %s212, %s226
    %p228 = scmp.eq.s32.totalorder %s34, 0
    %p229 = por %p227, %p228
    %s231 = sadd.s32 %s230, 1
    %p234 = scmp.eq.s32.totalorder %s28, 1
    %p235 = scmp.ne.s32.totalorder %s230, %s232
    %p236 = scmp.eq.s32.totalorder %s28, 0
    %p237 = por %p235, %p236
    %p238 = scmp.ne.s32.totalorder %s230, %s232
    %p239 = scmp.eq.s32.totalorder %s33, 1
    %p240 = por %p238, %p239
    %p241 = scmp.ne.s32.totalorder %s232, %s233
    %p242 = scmp.eq.s32.totalorder %s33, 0
    %p243 = por %p241, %p242
    %p244 = scmp.ne.s32.totalorder %s232, %s233
    %p245 = scmp.eq.s32.totalorder %s34, 1
    %p246 = por %p244, %p245
    %p248 = scmp.ne.s32.totalorder %s233, %s247
    %p249 = scmp.eq.s32.totalorder %s34, 0
    %p250 = por %p248, %p249
    %s252 = sadd.s32 %s251, 1
    %p255 = scmp.eq.s32.totalorder %s28, 1
    %p256 = scmp.ne.s32.totalorder %s251, %s253
    %p257 = scmp.eq.s32.totalorder %s28, 0
    %p258 = por %p256, %p257
    %p259 = scmp.ne.s32.totalorder %s251, %s253
    %p260 = scmp.eq.s32.totalorder %s33, 1
    %p261 = por %p259, %p260
    %p262 = scmp.ne.s32.totalorder %s253, %s254
    %p263 = scmp.eq.s32.totalorder %s33, 0
    %p264 = por %p262, %p263
    %p265 = scmp.ne.s32.totalorder %s253, %s254
    %p266 = scmp.eq.s32.totalorder %s34, 1
    %p267 = por %p265, %p266
    %p269 = scmp.ne.s32.totalorder %s254, %s268
    %p270 = scmp.eq.s32.totalorder %s34, 0
    %p271 = por %p269, %p270
    %s273 = sadd.s32 %s272, 1
    %p276 = scmp.eq.s32.totalorder %s28, 1
    %p277 = scmp.ne.s32.totalorder %s272, %s274
    %p278 = scmp.eq.s32.totalorder %s28, 0
    %p279 = por %p277, %p278
    %p280 = scmp.ne.s32.totalorder %s272, %s274
    %p281 = scmp.eq.s32.totalorder %s33, 1
    %p282 = por %p280, %p281
    %p283 = scmp.ne.s32.totalorder %s274, %s275
    %p284 = scmp.eq.s32.totalorder %s33, 0
    %p285 = por %p283, %p284
    %p286 = scmp.ne.s32.totalorder %s274, %s275
    %p287 = scmp.eq.s32.totalorder %s34, 1
    %p288 = por %p286, %p287
    %p290 = scmp.ne.s32.totalorder %s275, %s289
    %p291 = scmp.eq.s32.totalorder %s34, 0
    %p292 = por %p290, %p291
    %s294 = sadd.s32 %s293, 1
    %p297 = scmp.eq.s32.totalorder %s28, 1
    %p298 = scmp.ne.s32.totalorder %s293, %s295
    %p299 = scmp.eq.s32.totalorder %s28, 0
    %p300 = por %p298, %p299
    %p301 = scmp.ne.s32.totalorder %s293, %s295
    %p302 = scmp.eq.s32.totalorder %s33, 1
    %p303 = por %p301, %p302
    %p304 = scmp.ne.s32.totalorder %s295, %s296
    %p305 = scmp.eq.s32.totalorder %s33, 0
    %p306 = por %p304, %p305
    %p307 = scmp.ne.s32.totalorder %s295, %s296
    %p308 = scmp.eq.s32.totalorder %s34, 1
    %p309 = por %p307, %p308
    %p311 = scmp.ne.s32.totalorder %s296, %s310
    %p312 = scmp.eq.s32.totalorder %s34, 0
    %p313 = por %p311, %p312
    %s315 = sadd.s32 %s314, 1
    %p318 = scmp.eq.s32.totalorder %s28, 1
    %p319 = scmp.ne.s32.totalorder %s314, %s316
    %p320 = scmp.eq.s32.totalorder %s28, 0
    %p321 = por %p319, %p320
    %p322 = scmp.ne.s32.totalorder %s314, %s316
    %p323 = scmp.eq.s32.totalorder %s33, 1
    %p324 = por %p322, %p323
    %p325 = scmp.ne.s32.totalorder %s316, %s317
    %p326 = scmp.eq.s32.totalorder %s33, 0
    %p327 = por %p325, %p326
    %p328 = scmp.ne.s32.totalorder %s316, %s317
    %p329 = scmp.eq.s32.totalorder %s34, 1
    %p330 = por %p328, %p329
    %p332 = scmp.ne.s32.totalorder %s317, %s331
    %p333 = scmp.eq.s32.totalorder %s34, 0
    %p334 = por %p332, %p333
    %s336 = sadd.s32 %s335, 1
    %p339 = scmp.eq.s32.totalorder %s28, 1
    %p340 = scmp.ne.s32.totalorder %s335, %s337
    %p341 = scmp.eq.s32.totalorder %s28, 0
    %p342 = por %p340, %p341
    %p343 = scmp.ne.s32.totalorder %s335, %s337
    %p344 = scmp.eq.s32.totalorder %s33, 1
    %p345 = por %p343, %p344
    %p346 = scmp.ne.s32.totalorder %s337, %s338
    %p347 = scmp.eq.s32.totalorder %s33, 0
    %p348 = por %p346, %p347
    %p349 = scmp.ne.s32.totalorder %s337, %s338
    %p350 = scmp.eq.s32.totalorder %s34, 1
    %p351 = por %p349, %p350
    %p353 = scmp.ne.s32.totalorder %s338, %s352
    %p354 = scmp.eq.s32.totalorder %s34, 0
    %p355 = por %p353, %p354
    %s357 = sadd.s32 %s356, 1
    %p360 = scmp.eq.s32.totalorder %s28, 1
    %p361 = scmp.ne.s32.totalorder %s356, %s358
    %p362 = scmp.eq.s32.totalorder %s28, 0
    %p363 = por %p361, %p362
    %p364 = scmp.ne.s32.totalorder %s356, %s358
    %p365 = scmp.eq.s32.totalorder %s33, 1
    %p366 = por %p364, %p365
    %p367 = scmp.ne.s32.totalorder %s358, %s359
    %p368 = scmp.eq.s32.totalorder %s33, 0
    %p369 = por %p367, %p368
    %p370 = scmp.ne.s32.totalorder %s358, %s359
    %p371 = scmp.eq.s32.totalorder %s34, 1
    %p372 = por %p370, %p371
    %p374 = scmp.ne.s32.totalorder %s359, %s373
    %p375 = scmp.eq.s32.totalorder %s34, 0
    %p376 = por %p374, %p375
    %s378 = sadd.s32 %s377, 1
    %p381 = scmp.eq.s32.totalorder %s28, 1
    %p382 = scmp.ne.s32.totalorder %s377, %s379
    %p383 = scmp.eq.s32.totalorder %s28, 0
    %p384 = por %p382, %p383
    %p385 = scmp.ne.s32.totalorder %s377, %s379
    %p386 = scmp.eq.s32.totalorder %s33, 1
    %p387 = por %p385, %p386
    %p388 = scmp.ne.s32.totalorder %s379, %s380
    %p389 = scmp.eq.s32.totalorder %s33, 0
    %p390 = por %p388, %p389
    %p391 = scmp.ne.s32.totalorder %s379, %s380
    %p392 = scmp.eq.s32.totalorder %s34, 1
    %p393 = por %p391, %p392
    %p395 = scmp.ne.s32.totalorder %s380, %s394
    %p396 = scmp.eq.s32.totalorder %s34, 0
    %p397 = por %p395, %p396
    %s399 = sadd.s32 %s398, 1
    %p402 = scmp.eq.s32.totalorder %s28, 1
    %p403 = scmp.ne.s32.totalorder %s398, %s400
    %p404 = scmp.eq.s32.totalorder %s28, 0
    %p405 = por %p403, %p404
    %p406 = scmp.ne.s32.totalorder %s398, %s400
    %p407 = scmp.eq.s32.totalorder %s33, 1
    %p408 = por %p406, %p407
    %p409 = scmp.ne.s32.totalorder %s400, %s401
    %p410 = scmp.eq.s32.totalorder %s33, 0
    %p411 = por %p409, %p410
    %p412 = scmp.ne.s32.totalorder %s400, %s401
    %p413 = scmp.eq.s32.totalorder %s34, 1
    %p414 = por %p412, %p413
    %p416 = scmp.ne.s32.totalorder %s401, %s415
    %p417 = scmp.eq.s32.totalorder %s34, 0
    %p418 = por %p416, %p417
    %s420 = sadd.s32 %s419, 1
    %p423 = scmp.eq.s32.totalorder %s28, 1
    %p424 = scmp.ne.s32.totalorder %s419, %s421
    %p425 = scmp.eq.s32.totalorder %s28, 0
    %p426 = por %p424, %p425
    %p427 = scmp.ne.s32.totalorder %s419, %s421
    %p428 = scmp.eq.s32.totalorder %s33, 1
    %p429 = por %p427, %p428
    %p430 = scmp.ne.s32.totalorder %s421, %s422
    %p431 = scmp.eq.s32.totalorder %s33, 0
    %p432 = por %p430, %p431
    %p433 = scmp.ne.s32.totalorder %s421, %s422
    %p434 = scmp.eq.s32.totalorder %s34, 1
    %p435 = por %p433, %p434
    %p437 = scmp.ne.s32.totalorder %s422, %s436
    %p438 = scmp.eq.s32.totalorder %s34, 0
    %p439 = por %p437, %p438
    %s441 = sadd.s32 %s440, 1
    %p444 = scmp.eq.s32.totalorder %s28, 1
    %p445 = scmp.ne.s32.totalorder %s440, %s442
    %p446 = scmp.eq.s32.totalorder %s28, 0
    %p447 = por %p445, %p446
    %p448 = scmp.ne.s32.totalorder %s440, %s442
    %p449 = scmp.eq.s32.totalorder %s33, 1
    %p450 = por %p448, %p449
    %p451 = scmp.ne.s32.totalorder %s442, %s443
    %p452 = scmp.eq.s32.totalorder %s33, 0
    %p453 = por %p451, %p452
    %p454 = scmp.ne.s32.totalorder %s442, %s443
    %p455 = scmp.eq.s32.totalorder %s34, 1
    %p456 = por %p454, %p455
    %p458 = scmp.ne.s32.totalorder %s443, %s457
    %p459 = scmp.eq.s32.totalorder %s34, 0
    %p460 = por %p458, %p459
    %s462 = sadd.s32 %s461, 1
    %p465 = scmp.eq.s32.totalorder %s28, 1
    %p466 = scmp.ne.s32.totalorder %s461, %s463
    %p467 = scmp.eq.s32.totalorder %s28, 0
    %p468 = por %p466, %p467
    %p469 = scmp.ne.s32.totalorder %s461, %s463
    %p470 = scmp.eq.s32.totalorder %s33, 1
    %p471 = por %p469, %p470
    %p472 = scmp.ne.s32.totalorder %s463, %s464
    %p473 = scmp.eq.s32.totalorder %s33, 0
    %p474 = por %p472, %p473
    %p475 = scmp.ne.s32.totalorder %s463, %s464
    %p476 = scmp.eq.s32.totalorder %s34, 1
    %p477 = por %p475, %p476
    %p479 = scmp.ne.s32.totalorder %s464, %s478
    %p480 = scmp.eq.s32.totalorder %s34, 0
    %p481 = por %p479, %p480
    %s483 = sadd.s32 %s482, 1
    %p486 = scmp.eq.s32.totalorder %s28, 1
    %p487 = scmp.ne.s32.totalorder %s482, %s484
    %p488 = scmp.eq.s32.totalorder %s28, 0
    %p489 = por %p487, %p488
    %p490 = scmp.ne.s32.totalorder %s482, %s484
    %p491 = scmp.eq.s32.totalorder %s33, 1
    %p492 = por %p490, %p491
    %p493 = scmp.ne.s32.totalorder %s484, %s485
    %p494 = scmp.eq.s32.totalorder %s33, 0
    %p495 = por %p493, %p494
    %p496 = scmp.ne.s32.totalorder %s484, %s485
    %p497 = scmp.eq.s32.totalorder %s34, 1
    %p498 = por %p496, %p497
    %p500 = scmp.ne.s32.totalorder %s485, %s499
    %p501 = scmp.eq.s32.totalorder %s34, 0
    %p502 = por %p500, %p501
    %s503 = ssub.s32 %s28, %s35
    %p504 = scmp.eq.s32.totalorder %s503, 0
    %s506 = sadd.s32 %s505, 1
    %s507 = scalar_select %p504, %s505, %s506
    %p510 = pneg %p504
    %p511 = scmp.eq.s32.totalorder %s28, 1
    %p512 = por %p510, %p511
    %p513 = scmp.ne.s32.totalorder %s505, %s508
    %p514 = scmp.eq.s32.totalorder %s28, 0
    %p515 = por %p513, %p514
    %p516 = scmp.ne.s32.totalorder %s505, %s508
    %p517 = scmp.eq.s32.totalorder %s33, 1
    %p518 = por %p516, %p517
    %p519 = scmp.ne.s32.totalorder %s508, %s509
    %p520 = scmp.eq.s32.totalorder %s33, 0
    %p521 = por %p519, %p520
    %p522 = scmp.ne.s32.totalorder %s508, %s509
    %p523 = scmp.eq.s32.totalorder %s34, 1
    %p524 = por %p522, %p523
    %p526 = scmp.ne.s32.totalorder %s509, %s525
    %p527 = scmp.eq.s32.totalorder %s34, 0
    %p528 = por %p526, %p527
    %p529 = scmp.le.s32.totalorder 1, %s28
    %p530 = scmp.lt.s32.totalorder %s28, 3
    %p531 = pnand %p529, %p530
    %p532 = pneg %p531
    // Predicated region
    $region9: #{reasoner_forward.1} parent=5 // pred_check
      _
    $region10: #{reasoner_forward.1} parent=5 // pred_check_branch
      %534 = sbr.rel (%p531) target = $region12
    $region11: #{reasoner_forward.1} parent=5 // pred_region
      %s535 = ssub.s32 %s28, 1
      // Predicated region
      $region13: #{reasoner_forward.1} parent=11 // pred_check
        %p536 = pneg %p75
      $region14: #{reasoner_forward.1} parent=11 // pred_check_branch
        %538 = sbr.rel (%p536) target = $region16
      $region15: #{reasoner_forward.1} parent=11 // pred_region
        _
      $region16: #{reasoner_forward.1} parent=11 // pred_fallthru
        _
      // Predicated region
      $region17: #{reasoner_forward.1} parent=11 // pred_check
        %p539 = pneg %p96
      $region18: #{reasoner_forward.1} parent=11 // pred_check_branch
        %541 = sbr.rel (%p539) target = $region20
      $region19: #{reasoner_forward.1} parent=11 // pred_region
        _
      $region20: #{reasoner_forward.1} parent=11 // pred_fallthru
        _
      // Predicated region
      $region21: #{reasoner_forward.1} parent=11 // pred_check
        %p542 = pneg %p117
      $region22: #{reasoner_forward.1} parent=11 // pred_check_branch
        %544 = sbr.rel (%p542) target = $region24
      $region23: #{reasoner_forward.1} parent=11 // pred_region
        _
      $region24: #{reasoner_forward.1} parent=11 // pred_fallthru
        _
      // Predicated region
      $region25: #{reasoner_forward.1} parent=11 // pred_check
        %p545 = pneg %p138
      $region26: #{reasoner_forward.1} parent=11 // pred_check_branch
        %547 = sbr.rel (%p545) target = $region28
      $region27: #{reasoner_forward.1} parent=11 // pred_region
        _
      $region28: #{reasoner_forward.1} parent=11 // pred_fallthru
        _
      // Predicated region
      $region29: #{reasoner_forward.1} parent=11 // pred_check
        %p548 = pneg %p159
      $region30: #{reasoner_forward.1} parent=11 // pred_check_branch
        %550 = sbr.rel (%p548) target = $region32
      $region31: #{reasoner_forward.1} parent=11 // pred_region
        _
      $region32: #{reasoner_forward.1} parent=11 // pred_fallthru
        _
      // Predicated region
      $region33: #{reasoner_forward.1} parent=11 // pred_check
        %p551 = pneg %p180
      $region34: #{reasoner_forward.1} parent=11 // pred_check_branch
        %553 = sbr.rel (%p551) target = $region36
      $region35: #{reasoner_forward.1} parent=11 // pred_region
        _
      $region36: #{reasoner_forward.1} parent=11 // pred_fallthru
        _
      // Predicated region
      $region37: #{reasoner_forward.1} parent=11 // pred_check
        %p554 = pneg %p201
      $region38: #{reasoner_forward.1} parent=11 // pred_check_branch
        %556 = sbr.rel (%p554) target = $region40
      $region39: #{reasoner_forward.1} parent=11 // pred_region
        _
      $region40: #{reasoner_forward.1} parent=11 // pred_fallthru
        _
      // Predicated region
      $region41: #{reasoner_forward.1} parent=11 // pred_check
        %p557 = pneg %p222
      $region42: #{reasoner_forward.1} parent=11 // pred_check_branch
        %559 = sbr.rel (%p557) target = $region44
      $region43: #{reasoner_forward.1} parent=11 // pred_region
        _
      $region44: #{reasoner_forward.1} parent=11 // pred_fallthru
        _
      // Predicated region
      $region45: #{reasoner_forward.1} parent=11 // pred_check
        %p560 = pneg %p243
      $region46: #{reasoner_forward.1} parent=11 // pred_check_branch
        %562 = sbr.rel (%p560) target = $region48
      $region47: #{reasoner_forward.1} parent=11 // pred_region
        _
      $region48: #{reasoner_forward.1} parent=11 // pred_fallthru
        _
      // Predicated region
      $region49: #{reasoner_forward.1} parent=11 // pred_check
        %p563 = pneg %p264
      $region50: #{reasoner_forward.1} parent=11 // pred_check_branch
        %565 = sbr.rel (%p563) target = $region52
      $region51: #{reasoner_forward.1} parent=11 // pred_region
        _
      $region52: #{reasoner_forward.1} parent=11 // pred_fallthru
        _
      // Predicated region
      $region53: #{reasoner_forward.1} parent=11 // pred_check
        %p566 = pneg %p285
      $region54: #{reasoner_forward.1} parent=11 // pred_check_branch
        %568 = sbr.rel (%p566) target = $region56
      $region55: #{reasoner_forward.1} parent=11 // pred_region
        _
      $region56: #{reasoner_forward.1} parent=11 // pred_fallthru
        _
      // Predicated region
      $region57: #{reasoner_forward.1} parent=11 // pred_check
        %p569 = pneg %p306
      $region58: #{reasoner_forward.1} parent=11 // pred_check_branch
        %571 = sbr.rel (%p569) target = $region60
      $region59: #{reasoner_forward.1} parent=11 // pred_region
        _
      $region60: #{reasoner_forward.1} parent=11 // pred_fallthru
        _
      // Predicated region
      $region61: #{reasoner_forward.1} parent=11 // pred_check
        %p572 = pneg %p327
      $region62: #{reasoner_forward.1} parent=11 // pred_check_branch
        %574 = sbr.rel (%p572) target = $region64
      $region63: #{reasoner_forward.1} parent=11 // pred_region
        _
      $region64: #{reasoner_forward.1} parent=11 // pred_fallthru
        _
      // Predicated region
      $region65: #{reasoner_forward.1} parent=11 // pred_check
        %p575 = pneg %p348
      $region66: #{reasoner_forward.1} parent=11 // pred_check_branch
        %577 = sbr.rel (%p575) target = $region68
      $region67: #{reasoner_forward.1} parent=11 // pred_region
        _
      $region68: #{reasoner_forward.1} parent=11 // pred_fallthru
        _
      // Predicated region
      $region69: #{reasoner_forward.1} parent=11 // pred_check
        %p578 = pneg %p369
      $region70: #{reasoner_forward.1} parent=11 // pred_check_branch
        %580 = sbr.rel (%p578) target = $region72
      $region71: #{reasoner_forward.1} parent=11 // pred_region
        _
      $region72: #{reasoner_forward.1} parent=11 // pred_fallthru
        _
      // Predicated region
      $region73: #{reasoner_forward.1} parent=11 // pred_check
        %p581 = pneg %p390
      $region74: #{reasoner_forward.1} parent=11 // pred_check_branch
        %583 = sbr.rel (%p581) target = $region76
      $region75: #{reasoner_forward.1} parent=11 // pred_region
        _
      $region76: #{reasoner_forward.1} parent=11 // pred_fallthru
        _
      // Predicated region
      $region77: #{reasoner_forward.1} parent=11 // pred_check
        %p584 = pneg %p411
      $region78: #{reasoner_forward.1} parent=11 // pred_check_branch
        %586 = sbr.rel (%p584) target = $region80
      $region79: #{reasoner_forward.1} parent=11 // pred_region
        _
      $region80: #{reasoner_forward.1} parent=11 // pred_fallthru
        _
      // Predicated region
      $region81: #{reasoner_forward.1} parent=11 // pred_check
        %p587 = pneg %p432
      $region82: #{reasoner_forward.1} parent=11 // pred_check_branch
        %589 = sbr.rel (%p587) target = $region84
      $region83: #{reasoner_forward.1} parent=11 // pred_region
        _
      $region84: #{reasoner_forward.1} parent=11 // pred_fallthru
        _
      // Predicated region
      $region85: #{reasoner_forward.1} parent=11 // pred_check
        %p590 = pneg %p453
      $region86: #{reasoner_forward.1} parent=11 // pred_check_branch
        %592 = sbr.rel (%p590) target = $region88
      $region87: #{reasoner_forward.1} parent=11 // pred_region
        _
      $region88: #{reasoner_forward.1} parent=11 // pred_fallthru
        _
      // Predicated region
      $region89: #{reasoner_forward.1} parent=11 // pred_check
        %p593 = pneg %p474
      $region90: #{reasoner_forward.1} parent=11 // pred_check_branch
        %595 = sbr.rel (%p593) target = $region92
      $region91: #{reasoner_forward.1} parent=11 // pred_region
        _
      $region92: #{reasoner_forward.1} parent=11 // pred_fallthru
        _
      // Predicated region
      $region93: #{reasoner_forward.1} parent=11 // pred_check
        %p596 = pneg %p495
      $region94: #{reasoner_forward.1} parent=11 // pred_check_branch
        %598 = sbr.rel (%p596) target = $region96
      $region95: #{reasoner_forward.1} parent=11 // pred_region
        _
      $region96: #{reasoner_forward.1} parent=11 // pred_fallthru
        _
    $region12: #{reasoner_forward.1} parent=5 // pred_fallthru
      _
    %p599 = scmp.lt.s32.totalorder %s28, 2
    // Predicated region
    $region97: #{reasoner_forward.1} parent=5 // pred_check
      %p600 = pneg %p599
    $region98: #{reasoner_forward.1} parent=5 // pred_check_branch
      %602 = sbr.rel (%p600) target = $region100
    $region99: #{reasoner_forward.1} parent=5 // pred_region
      // Predicated region
      $region101: #{reasoner_forward.1} parent=99 // pred_check
        %p603 = pneg %p48
      $region102: #{reasoner_forward.1} parent=99 // pred_check_branch
        %605 = sbr.rel (%p603) target = $region104
      $region103: #{reasoner_forward.1} parent=99 // pred_region
        %p606 = scmp.lt.s32.totalorder %s28, 1
        %s607 = scalar_select %p606, %s28, 1
        %s608 = smul.addr %s607, 2
        %s609 = smul.addr %s608, 8
        %s610 = scalar_lea.vmem %s0, %s609
      $region104: #{reasoner_forward.1} parent=99 // pred_fallthru
        _
    $region100: #{reasoner_forward.1} parent=5 // pred_fallthru
      _
    %p611 = scmp.le.s32.totalorder 1, %s28
    %p612 = scmp.lt.s32.totalorder %s28, 3
    %p613 = pnand %p611, %p612
    %p614 = pneg %p613
    // Predicated region
    $region105: #{reasoner_forward.1} parent=5 // pred_check
      _
    $region106: #{reasoner_forward.1} parent=5 // pred_check_branch
      %616 = sbr.rel (%p613) target = $region108
    $region107: #{reasoner_forward.1} parent=5 // pred_region
      %s617 = ssub.s32 %s28, 1
      %p618 = scmp.lt.s32.totalorder %s33, 1
      %s619 = scalar_select %p618, %s33, 1
      %s620 = smul.addr %s619, 2
      %s621 = smul.addr %s620, 8
      %s622 = scalar_lea.vmem %s0, %s621
      %p623 = pneg %p54
      %p624 = pneg %p51
      %p625 = pneg %p75
      %p626 = pneg %p72
      %p627 = pneg %p96
      %p628 = pneg %p93
      %p629 = pneg %p117
      %p630 = pneg %p114
      %p631 = pneg %p138
      %p632 = pneg %p135
      %p633 = pneg %p159
      %p634 = pneg %p156
      %p635 = pneg %p180
      %p636 = pneg %p177
      %p637 = pneg %p201
      %p638 = pneg %p198
      %p639 = pneg %p222
      %p640 = pneg %p219
      %p641 = pneg %p243
      %p642 = pneg %p240
      %p643 = pneg %p264
      %p644 = pneg %p261
      %p645 = pneg %p285
      %p646 = pneg %p282
      %p647 = pneg %p306
      %p648 = pneg %p303
      %p649 = pneg %p327
      %p650 = pneg %p324
      %p651 = pneg %p348
      %p652 = pneg %p345
      %p653 = pneg %p369
      %p654 = pneg %p366
      %p655 = pneg %p390
      %p656 = pneg %p387
      %p657 = pneg %p411
      %p658 = pneg %p408
      %p659 = pneg %p432
      %p660 = pneg %p429
      %p661 = pneg %p453
      %p662 = pneg %p450
      %p663 = pneg %p474
      %p664 = pneg %p471
      %p665 = pneg %p495
      %p666 = pneg %p492
      %p667 = pneg %p521
      %p668 = pneg %p518
      %p669 = scmp.lt.s32.totalorder %s33, 1
      %s670 = scalar_select %p669, %s33, 1
      %s671 = smul.addr %s670, 4
      %s672 = smul.addr %s671, 8
      %s673 = scalar_lea.vmem %s22, %s672
      %p674 = scmp.lt.s32.totalorder %s33, 1
      %s675 = scalar_select %p674, %s33, 1
      %s676 = smul.addr %s675, 2
      %s677 = smul.addr %s676, 8
      %s678 = scalar_lea.vmem %s0, %s677
      %p679 = scmp.lt.s32.totalorder %s33, 1
      %s680 = scalar_select %p679, %s33, 1
      %s681 = smul.addr %s680, 4
      %s682 = smul.addr %s681, 8
      %s683 = scalar_lea.vmem %s22, %s682
      %v684 = vld [vmem:[%s678] sm:$0xff]
      %v685 = vld [vmem:[%s678 + $0x8] sm:$0xff]
      %v686 = vlaneseq
      %v687 = vshrl.u32 %v686, 7
      %v688 = vadd.s32 %v687, 8
      %v689 = vadd.s32 %v687, 16
      %v690 = vadd.s32 %v687, 24
      %v691 = vadd.s32 %v687, 32
      %v692 = vadd.s32 %v687, 40
      %v693 = vadd.s32 %v687, 48
      %v694 = vadd.s32 %v687, 56
      %v695 = vadd.s32 %v687, 64
      %v696 = vadd.s32 %v687, 72
      %v697 = vadd.s32 %v687, 80
      %v698 = vadd.s32 %v687, 88
      %v699 = vadd.s32 %v687, 96
      %v700 = vadd.s32 %v687, 104
      %v701 = vadd.s32 %v687, 112
      %v702 = vadd.s32 %v687, 120
      %v703 = vlaneseq
      %v704 = vand.u32 %v703, 127
      %v705 = vadd.s32 %v704, 4294967293
      %vm706 = vcmp.eq.s32.totalorder %v687, %v705
      %vm707 = vcmp.eq.s32.totalorder %v688, %v705
      %vm708 = vcmp.eq.s32.totalorder %v689, %v705
      %vm709 = vcmp.eq.s32.totalorder %v690, %v705
      %vm710 = vcmp.eq.s32.totalorder %v691, %v705
      %vm711 = vcmp.eq.s32.totalorder %v692, %v705
      %vm712 = vcmp.eq.s32.totalorder %v693, %v705
      %vm713 = vcmp.eq.s32.totalorder %v694, %v705
      %vm714 = vcmp.eq.s32.totalorder %v695, %v705
      %vm715 = vcmp.eq.s32.totalorder %v696, %v705
      %vm716 = vcmp.eq.s32.totalorder %v697, %v705
      %vm717 = vcmp.eq.s32.totalorder %v698, %v705
      %vm718 = vcmp.eq.s32.totalorder %v699, %v705
      %vm719 = vcmp.eq.s32.totalorder %v700, %v705
      %vm720 = vcmp.eq.s32.totalorder %v701, %v705
      %vm721 = vcmp.eq.s32.totalorder %v702, %v705
      %v722 = vsel %vm706, 1, 0
      %v723 = vsel %vm707, 1, 0
      %v724 = vsel %vm708, 1, 0
      %v725 = vsel %vm709, 1, 0
      %v726 = vsel %vm710, 1, 0
      %v727 = vsel %vm711, 1, 0
      %v728 = vsel %vm712, 1, 0
      %v729 = vsel %vm713, 1, 0
      %v730 = vsel %vm714, 1, 0
      %v731 = vsel %vm715, 1, 0
      %v732 = vsel %vm716, 1, 0
      %v733 = vsel %vm717, 1, 0
      %v734 = vsel %vm718, 1, 0
      %v735 = vsel %vm719, 1, 0
      %v736 = vsel %vm720, 1, 0
      %v737 = vsel %vm721, 1, 0
      %v738 = vcvt.s32.f32 %v722
      %v739 = vcvt.s32.f32 %v723
      %v740 = vcvt.s32.f32 %v724
      %v741 = vcvt.s32.f32 %v725
      %v742 = vcvt.s32.f32 %v726
      %v743 = vcvt.s32.f32 %v727
      %v744 = vcvt.s32.f32 %v728
      %v745 = vcvt.s32.f32 %v729
      %v746 = vcvt.s32.f32 %v730
      %v747 = vcvt.s32.f32 %v731
      %v748 = vcvt.s32.f32 %v732
      %v749 = vcvt.s32.f32 %v733
      %v750 = vcvt.s32.f32 %v734
      %v751 = vcvt.s32.f32 %v735
      %v752 = vcvt.s32.f32 %v736
      %v753 = vcvt.s32.f32 %v737
      %v754 = vadd.s32 %v704, 4294967294
      %vm755 = vcmp.eq.s32.totalorder %v687, %v754
      %vm756 = vcmp.eq.s32.totalorder %v688, %v754
      %vm757 = vcmp.eq.s32.totalorder %v689, %v754
      %vm758 = vcmp.eq.s32.totalorder %v690, %v754
      %vm759 = vcmp.eq.s32.totalorder %v691, %v754
      %vm760 = vcmp.eq.s32.totalorder %v692, %v754
      %vm761 = vcmp.eq.s32.totalorder %v693, %v754
      %vm762 = vcmp.eq.s32.totalorder %v694, %v754
      %vm763 = vcmp.eq.s32.totalorder %v695, %v754
      %vm764 = vcmp.eq.s32.totalorder %v696, %v754
      %vm765 = vcmp.eq.s32.totalorder %v697, %v754
      %vm766 = vcmp.eq.s32.totalorder %v698, %v754
      %vm767 = vcmp.eq.s32.totalorder %v699, %v754
      %vm768 = vcmp.eq.s32.totalorder %v700, %v754
      %vm769 = vcmp.eq.s32.totalorder %v701, %v754
      %vm770 = vcmp.eq.s32.totalorder %v702, %v754
      %v771 = vsel %vm755, 1, 0
      %v772 = vsel %vm756, 1, 0
      %v773 = vsel %vm757, 1, 0
      %v774 = vsel %vm758, 1, 0
      %v775 = vsel %vm759, 1, 0
      %v776 = vsel %vm760, 1, 0
      %v777 = vsel %vm761, 1, 0
      %v778 = vsel %vm762, 1, 0
      %v779 = vsel %vm763, 1, 0
      %v780 = vsel %vm764, 1, 0
      %v781 = vsel %vm765, 1, 0
      %v782 = vsel %vm766, 1, 0
      %v783 = vsel %vm767, 1, 0
      %v784 = vsel %vm768, 1, 0
      %v785 = vsel %vm769, 1, 0
      %v786 = vsel %vm770, 1, 0
      %v787 = vcvt.s32.f32 %v771
      %v788 = vcvt.s32.f32 %v772
      %v789 = vcvt.s32.f32 %v773
      %v790 = vcvt.s32.f32 %v774
      %v791 = vcvt.s32.f32 %v775
      %v792 = vcvt.s32.f32 %v776
      %v793 = vcvt.s32.f32 %v777
      %v794 = vcvt.s32.f32 %v778
      %v795 = vcvt.s32.f32 %v779
      %v796 = vcvt.s32.f32 %v780
      %v797 = vcvt.s32.f32 %v781
      %v798 = vcvt.s32.f32 %v782
      %v799 = vcvt.s32.f32 %v783
      %v800 = vcvt.s32.f32 %v784
      %v801 = vcvt.s32.f32 %v785
      %v802 = vcvt.s32.f32 %v786
      %v803 = vadd.s32 %v704, 4294967295
      %vm804 = vcmp.eq.s32.totalorder %v687, %v803
      %vm805 = vcmp.eq.s32.totalorder %v688, %v803
      %vm806 = vcmp.eq.s32.totalorder %v689, %v803
      %vm807 = vcmp.eq.s32.totalorder %v690, %v803
      %vm808 = vcmp.eq.s32.totalorder %v691, %v803
      %vm809 = vcmp.eq.s32.totalorder %v692, %v803
      %vm810 = vcmp.eq.s32.totalorder %v693, %v803
      %vm811 = vcmp.eq.s32.totalorder %v694, %v803
      %vm812 = vcmp.eq.s32.totalorder %v695, %v803
      %vm813 = vcmp.eq.s32.totalorder %v696, %v803
      %vm814 = vcmp.eq.s32.totalorder %v697, %v803
      %vm815 = vcmp.eq.s32.totalorder %v698, %v803
      %vm816 = vcmp.eq.s32.totalorder %v699, %v803
      %vm817 = vcmp.eq.s32.totalorder %v700, %v803
      %vm818 = vcmp.eq.s32.totalorder %v701, %v803
      %vm819 = vcmp.eq.s32.totalorder %v702, %v803
      %v820 = vsel %vm804, 1, 0
      %v821 = vsel %vm805, 1, 0
      %v822 = vsel %vm806, 1, 0
      %v823 = vsel %vm807, 1, 0
      %v824 = vsel %vm808, 1, 0
      %v825 = vsel %vm809, 1, 0
      %v826 = vsel %vm810, 1, 0
      %v827 = vsel %vm811, 1, 0
      %v828 = vsel %vm812, 1, 0
      %v829 = vsel %vm813, 1, 0
      %v830 = vsel %vm814, 1, 0
      %v831 = vsel %vm815, 1, 0
      %v832 = vsel %vm816, 1, 0
      %v833 = vsel %vm817, 1, 0
      %v834 = vsel %vm818, 1, 0
      %v835 = vsel %vm819, 1, 0
      %v836 = vcvt.s32.f32 %v820
      %v837 = vcvt.s32.f32 %v821
      %v838 = vcvt.s32.f32 %v822
      %v839 = vcvt.s32.f32 %v823
      %v840 = vcvt.s32.f32 %v824
      %v841 = vcvt.s32.f32 %v825
      %v842 = vcvt.s32.f32 %v826
      %v843 = vcvt.s32.f32 %v827
      %v844 = vcvt.s32.f32 %v828
      %v845 = vcvt.s32.f32 %v829
      %v846 = vcvt.s32.f32 %v830
      %v847 = vcvt.s32.f32 %v831
      %v848 = vcvt.s32.f32 %v832
      %v849 = vcvt.s32.f32 %v833
      %v850 = vcvt.s32.f32 %v834
      %v851 = vcvt.s32.f32 %v835
      %vm852 = vcmp.eq.s32.totalorder %v687, %v704
      %vm853 = vcmp.eq.s32.totalorder %v688, %v704
      %vm854 = vcmp.eq.s32.totalorder %v689, %v704
      %vm855 = vcmp.eq.s32.totalorder %v690, %v704
      %vm856 = vcmp.eq.s32.totalorder %v691, %v704
      %vm857 = vcmp.eq.s32.totalorder %v692, %v704
      %vm858 = vcmp.eq.s32.totalorder %v693, %v704
      %vm859 = vcmp.eq.s32.totalorder %v694, %v704
      %vm860 = vcmp.eq.s32.totalorder %v695, %v704
      %vm861 = vcmp.eq.s32.totalorder %v696, %v704
      %vm862 = vcmp.eq.s32.totalorder %v697, %v704
      %vm863 = vcmp.eq.s32.totalorder %v698, %v704
      %vm864 = vcmp.eq.s32.totalorder %v699, %v704
      %vm865 = vcmp.eq.s32.totalorder %v700, %v704
      %vm866 = vcmp.eq.s32.totalorder %v701, %v704
      %vm867 = vcmp.eq.s32.totalorder %v702, %v704
      %v868 = vsel %vm852, 1, 0
      %v869 = vsel %vm853, 1, 0
      %v870 = vsel %vm854, 1, 0
      %v871 = vsel %vm855, 1, 0
      %v872 = vsel %vm856, 1, 0
      %v873 = vsel %vm857, 1, 0
      %v874 = vsel %vm858, 1, 0
      %v875 = vsel %vm859, 1, 0
      %v876 = vsel %vm860, 1, 0
      %v877 = vsel %vm861, 1, 0
      %v878 = vsel %vm862, 1, 0
      %v879 = vsel %vm863, 1, 0
      %v880 = vsel %vm864, 1, 0
      %v881 = vsel %vm865, 1, 0
      %v882 = vsel %vm866, 1, 0
      %v883 = vsel %vm867, 1, 0
      %v884 = vcvt.s32.f32 %v868
      %v885 = vcvt.s32.f32 %v869
      %v886 = vcvt.s32.f32 %v870
      %v887 = vcvt.s32.f32 %v871
      %v888 = vcvt.s32.f32 %v872
      %v889 = vcvt.s32.f32 %v873
      %v890 = vcvt.s32.f32 %v874
      %v891 = vcvt.s32.f32 %v875
      %v892 = vcvt.s32.f32 %v876
      %v893 = vcvt.s32.f32 %v877
      %v894 = vcvt.s32.f32 %v878
      %v895 = vcvt.s32.f32 %v879
      %v896 = vcvt.s32.f32 %v880
      %v897 = vcvt.s32.f32 %v881
      %v898 = vcvt.s32.f32 %v882
      %v899 = vcvt.s32.f32 %v883
      %v900 = vadd.s32 %v704, 1
      %vm901 = vcmp.eq.s32.totalorder %v687, %v900
      %vm902 = vcmp.eq.s32.totalorder %v688, %v900
      %vm903 = vcmp.eq.s32.totalorder %v689, %v900
      %vm904 = vcmp.eq.s32.totalorder %v690, %v900
      %vm905 = vcmp.eq.s32.totalorder %v691, %v900
      %vm906 = vcmp.eq.s32.totalorder %v692, %v900
      %vm907 = vcmp.eq.s32.totalorder %v693, %v900
      %vm908 = vcmp.eq.s32.totalorder %v694, %v900
      %vm909 = vcmp.eq.s32.totalorder %v695, %v900
      %vm910 = vcmp.eq.s32.totalorder %v696, %v900
      %vm911 = vcmp.eq.s32.totalorder %v697, %v900
      %vm912 = vcmp.eq.s32.totalorder %v698, %v900
      %vm913 = vcmp.eq.s32.totalorder %v699, %v900
      %vm914 = vcmp.eq.s32.totalorder %v700, %v900
      %vm915 = vcmp.eq.s32.totalorder %v701, %v900
      %vm916 = vcmp.eq.s32.totalorder %v702, %v900
      %v917 = vsel %vm901, 1, 0
      %v918 = vsel %vm902, 1, 0
      %v919 = vsel %vm903, 1, 0
      %v920 = vsel %vm904, 1, 0
      %v921 = vsel %vm905, 1, 0
      %v922 = vsel %vm906, 1, 0
      %v923 = vsel %vm907, 1, 0
      %v924 = vsel %vm908, 1, 0
      %v925 = vsel %vm909, 1, 0
      %v926 = vsel %vm910, 1, 0
      %v927 = vsel %vm911, 1, 0
      %v928 = vsel %vm912, 1, 0
      %v929 = vsel %vm913, 1, 0
      %v930 = vsel %vm914, 1, 0
      %v931 = vsel %vm915, 1, 0
      %v932 = vsel %vm916, 1, 0
      %v933 = vcvt.s32.f32 %v917
      %v934 = vcvt.s32.f32 %v918
      %v935 = vcvt.s32.f32 %v919
      %v936 = vcvt.s32.f32 %v920
      %v937 = vcvt.s32.f32 %v921
      %v938 = vcvt.s32.f32 %v922
      %v939 = vcvt.s32.f32 %v923
      %v940 = vcvt.s32.f32 %v924
      %v941 = vcvt.s32.f32 %v925
      %v942 = vcvt.s32.f32 %v926
      %v943 = vcvt.s32.f32 %v927
      %v944 = vcvt.s32.f32 %v928
      %v945 = vcvt.s32.f32 %v929
      %v946 = vcvt.s32.f32 %v930
      %v947 = vcvt.s32.f32 %v931
      %v948 = vcvt.s32.f32 %v932
      %v949 = vadd.s32 %v704, 2
      %vm950 = vcmp.eq.s32.totalorder %v687, %v949
      %vm951 = vcmp.eq.s32.totalorder %v688, %v949
      %vm952 = vcmp.eq.s32.totalorder %v689, %v949
      %vm953 = vcmp.eq.s32.totalorder %v690, %v949
      %vm954 = vcmp.eq.s32.totalorder %v691, %v949
      %vm955 = vcmp.eq.s32.totalorder %v692, %v949
      %vm956 = vcmp.eq.s32.totalorder %v693, %v949
      %vm957 = vcmp.eq.s32.totalorder %v694, %v949
      %vm958 = vcmp.eq.s32.totalorder %v695, %v949
      %vm959 = vcmp.eq.s32.totalorder %v696, %v949
      %vm960 = vcmp.eq.s32.totalorder %v697, %v949
      %vm961 = vcmp.eq.s32.totalorder %v698, %v949
      %vm962 = vcmp.eq.s32.totalorder %v699, %v949
      %vm963 = vcmp.eq.s32.totalorder %v700, %v949
      %vm964 = vcmp.eq.s32.totalorder %v701, %v949
      %vm965 = vcmp.eq.s32.totalorder %v702, %v949
      %v966 = vsel %vm950, 1, 0
      %v967 = vsel %vm951, 1, 0
      %v968 = vsel %vm952, 1, 0
      %v969 = vsel %vm953, 1, 0
      %v970 = vsel %vm954, 1, 0
      %v971 = vsel %vm955, 1, 0
      %v972 = vsel %vm956, 1, 0
      %v973 = vsel %vm957, 1, 0
      %v974 = vsel %vm958, 1, 0
      %v975 = vsel %vm959, 1, 0
      %v976 = vsel %vm960, 1, 0
      %v977 = vsel %vm961, 1, 0
      %v978 = vsel %vm962, 1, 0
      %v979 = vsel %vm963, 1, 0
      %v980 = vsel %vm964, 1, 0
      %v981 = vsel %vm965, 1, 0
      %v982 = vcvt.s32.f32 %v966
      %v983 = vcvt.s32.f32 %v967
      %v984 = vcvt.s32.f32 %v968
      %v985 = vcvt.s32.f32 %v969
      %v986 = vcvt.s32.f32 %v970
      %v987 = vcvt.s32.f32 %v971
      %v988 = vcvt.s32.f32 %v972
      %v989 = vcvt.s32.f32 %v973
      %v990 = vcvt.s32.f32 %v974
      %v991 = vcvt.s32.f32 %v975
      %v992 = vcvt.s32.f32 %v976
      %v993 = vcvt.s32.f32 %v977
      %v994 = vcvt.s32.f32 %v978
      %v995 = vcvt.s32.f32 %v979
      %v996 = vcvt.s32.f32 %v980
      %v997 = vcvt.s32.f32 %v981
      %v998 = vadd.s32 %v704, 3
      %vm999 = vcmp.eq.s32.totalorder %v687, %v998
      %vm1000 = vcmp.eq.s32.totalorder %v688, %v998
      %vm1001 = vcmp.eq.s32.totalorder %v689, %v998
      %vm1002 = vcmp.eq.s32.totalorder %v690, %v998
      %vm1003 = vcmp.eq.s32.totalorder %v691, %v998
      %vm1004 = vcmp.eq.s32.totalorder %v692, %v998
      %vm1005 = vcmp.eq.s32.totalorder %v693, %v998
      %vm1006 = vcmp.eq.s32.totalorder %v694, %v998
      %vm1007 = vcmp.eq.s32.totalorder %v695, %v998
      %vm1008 = vcmp.eq.s32.totalorder %v696, %v998
      %vm1009 = vcmp.eq.s32.totalorder %v697, %v998
      %vm1010 = vcmp.eq.s32.totalorder %v698, %v998
      %vm1011 = vcmp.eq.s32.totalorder %v699, %v998
      %vm1012 = vcmp.eq.s32.totalorder %v700, %v998
      %vm1013 = vcmp.eq.s32.totalorder %v701, %v998
      %vm1014 = vcmp.eq.s32.totalorder %v702, %v998
      %v1015 = vsel %vm999, 1, 0
      %v1016 = vsel %vm1000, 1, 0
      %v1017 = vsel %vm1001, 1, 0
      %v1018 = vsel %vm1002, 1, 0
      %v1019 = vsel %vm1003, 1, 0
      %v1020 = vsel %vm1004, 1, 0
      %v1021 = vsel %vm1005, 1, 0
      %v1022 = vsel %vm1006, 1, 0
      %v1023 = vsel %vm1007, 1, 0
      %v1024 = vsel %vm1008, 1, 0
      %v1025 = vsel %vm1009, 1, 0
      %v1026 = vsel %vm1010, 1, 0
      %v1027 = vsel %vm1011, 1, 0
      %v1028 = vsel %vm1012, 1, 0
      %v1029 = vsel %vm1013, 1, 0
      %v1030 = vsel %vm1014, 1, 0
      %v1031 = vcvt.s32.f32 %v1015
      %v1032 = vcvt.s32.f32 %v1016
      %v1033 = vcvt.s32.f32 %v1017
      %v1034 = vcvt.s32.f32 %v1018
      %v1035 = vcvt.s32.f32 %v1019
      %v1036 = vcvt.s32.f32 %v1020
      %v1037 = vcvt.s32.f32 %v1021
      %v1038 = vcvt.s32.f32 %v1022
      %v1039 = vcvt.s32.f32 %v1023
      %v1040 = vcvt.s32.f32 %v1024
      %v1041 = vcvt.s32.f32 %v1025
      %v1042 = vcvt.s32.f32 %v1026
      %v1043 = vcvt.s32.f32 %v1027
      %v1044 = vcvt.s32.f32 %v1028
      %v1045 = vcvt.s32.f32 %v1029
      %v1046 = vcvt.s32.f32 %v1030
      %v1047 = vld [vmem:[%s1] sm:$0xff]
      %v1048 = vld [vmem:[%s1 + $0x8] sm:$0xff]
      %v1049 = vld [vmem:[%s1 + $0x10] sm:$0xff]
      %v1050 = vld [vmem:[%s1 + $0x18] sm:$0xff]
      %v1051 = vld [vmem:[%s2] sm:$0xff]
      %v1052 = vld [vmem:[%s2 + $0x8] sm:$0xff]
      %v1053 = vld [vmem:[%s2 + $0x10] sm:$0xff]
      %v1054 = vld [vmem:[%s2 + $0x18] sm:$0xff]
      %v1055 = vld [vmem:[%s2 + $0x20] sm:$0xff]
      %v1056 = vld [vmem:[%s2 + $0x28] sm:$0xff]
      %v1057 = vld [vmem:[%s2 + $0x30] sm:$0xff]
      %v1058 = vld [vmem:[%s2 + $0x38] sm:$0xff]
      %v1059 = vld [vmem:[%s2 + $0x40] sm:$0xff]
      %v1060 = vld [vmem:[%s2 + $0x48] sm:$0xff]
      %v1061 = vld [vmem:[%s2 + $0x50] sm:$0xff]
      %v1062 = vld [vmem:[%s2 + $0x58] sm:$0xff]
      %v1063 = vld [vmem:[%s2 + $0x60] sm:$0xff]
      %v1064 = vld [vmem:[%s2 + $0x68] sm:$0xff]
      %v1065 = vld [vmem:[%s2 + $0x70] sm:$0xff]
      %v1066 = vld [vmem:[%s2 + $0x78] sm:$0xff]
      %v1067 = vld [vmem:[%s2 + $0x80] sm:$0xff]
      %v1068 = vld [vmem:[%s2 + $0x88] sm:$0xff]
      %v1069 = vld [vmem:[%s2 + $0x90] sm:$0xff]
      %v1070 = vld [vmem:[%s2 + $0x98] sm:$0xff]
      %v1071 = vld [vmem:[%s2 + $0xa0] sm:$0xff]
      %v1072 = vld [vmem:[%s2 + $0xa8] sm:$0xff]
      %v1073 = vld [vmem:[%s2 + $0xb0] sm:$0xff]
      %v1074 = vld [vmem:[%s2 + $0xb8] sm:$0xff]
      %v1075 = vld [vmem:[%s2 + $0xc0] sm:$0xff]
      %v1076 = vld [vmem:[%s2 + $0xc8] sm:$0xff]
      %v1077 = vld [vmem:[%s2 + $0xd0] sm:$0xff]
      %v1078 = vld [vmem:[%s2 + $0xd8] sm:$0xff]
      %vm1079 = vcmask 130048
      %v1081 = vsel %vm1079, %v1051, 0
      %v1084 = vsel %vm1079, %v1052, 0
      %v1087 = vsel %vm1079, %v1053, 0
      %v1090 = vsel %vm1079, %v1054, 0
      %v1093 = vsel %vm1079, %v1055, 0
      %v1096 = vsel %vm1079, %v1056, 0
      %v1099 = vsel %vm1079, %v1057, 0
      %v1102 = vsel %vm1079, %v1058, 0
      %v1105 = vsel %vm1079, %v1059, 0
      %v1108 = vsel %vm1079, %v1060, 0
      %v1111 = vsel %vm1079, %v1061, 0
      %v1114 = vsel %vm1079, %v1062, 0
      %v1117 = vsel %vm1079, %v1063, 0
      %v1120 = vsel %vm1079, %v1064, 0
      %v1123 = vsel %vm1079, %v1065, 0
      %v1126 = vsel %vm1079, %v1066, 0
      %v1129 = vsel %vm1079, %v1067, 0
      %v1132 = vsel %vm1079, %v1068, 0
      %v1135 = vsel %vm1079, %v1069, 0
      %v1138 = vsel %vm1079, %v1070, 0
      %v1141 = vsel %vm1079, %v1071, 0
      %v1144 = vsel %vm1079, %v1072, 0
      %v1147 = vsel %vm1079, %v1073, 0
      %v1150 = vsel %vm1079, %v1074, 0
      %v1153 = vsel %vm1079, %v1075, 0
      %v1156 = vsel %vm1079, %v1076, 0
      %v1159 = vsel %vm1079, %v1077, 0
      %v1162 = vsel %vm1079, %v1078, 0
      %1164 = vmatprep.subr.mxu0 0.0
      %1165 = vmatpush1.msra.mxu0 0.0
      %1166 = vmatprep.subr.mxu0 0.0
      %1167 = vmatpush1.msra.mxu0 0.0
      %1168 = vmatprep.subr.mxu0 0.0
      %1169 = vmatpush1.msra.mxu0 0.0
      %1170 = vmatprep.subr.mxu0 0.0
      %1171 = vmatpush1.msra.mxu0 0.0
      %1172 = vmatprep.subr.mxu0 0.0
      %1173 = vmatpush1.msra.mxu0 0.0
      %1174 = vmatprep.subr.mxu0 0.0
      %1175 = vmatpush1.msra.mxu0 0.0
      %1176 = vmatprep.subr.mxu0 0.0
      %1177 = vmatpush1.msra.mxu0 0.0
      %1178 = vmatprep.subr.mxu0 0.0
      %1179 = vmatpush1.msra.mxu0 0.0
      %1180 = vmatprep.subr.mxu0 0.0
      %1181 = vmatpush1.msra.mxu0 0.0
      %1182 = vmatprep.subr.mxu0 0.0
      %1183 = vmatpush1.msra.mxu0 0.0
      %1184 = vmatprep.subr.mxu0 0.0
      %1185 = vmatpush1.msra.mxu0 0.0
      %1186 = vmatprep.subr.mxu0 0.0
      %1187 = vmatpush1.msra.mxu0 0.0
      %1188 = vmatprep.subr.mxu0 0.0
      %1189 = vmatpush1.msra.mxu0 0.0
      %1190 = vmatprep.subr.mxu0 0.0
      %1191 = vmatpush1.msra.mxu0 0.0
      %1192 = vmatprep.subr.mxu0 0.0
      %1193 = vmatpush1.msra.mxu0 %v685
      %1194 = vmatprep.subr.mxu0 0.0
      %1195 = vmatpush1.msra.mxu0 %v684
      %1196 = vmatprep.subr.mxu0 0.0
      %1197 = vmatpush2.msra.mxu0 0.0
      %1198 = vmatprep.subr.mxu0 0.0
      %1199 = vmatpush2.msra.mxu0 0.0
      %1200 = vmatprep.subr.mxu0 0.0
      %1201 = vmatpush2.msra.mxu0 0.0
      %1202 = vmatprep.subr.mxu0 0.0
      %1203 = vmatpush2.msra.mxu0 0.0
      %1204 = vmatprep.subr.mxu0 0.0
      %1205 = vmatpush2.msra.mxu0 0.0
      %1206 = vmatprep.subr.mxu0 0.0
      %1207 = vmatpush2.msra.mxu0 0.0
      %1208 = vmatprep.subr.mxu0 0.0
      %1209 = vmatpush2.msra.mxu0 0.0
      %1210 = vmatprep.subr.mxu0 0.0
      %1211 = vmatpush2.msra.mxu0 0.0
      %1212 = vmatprep.subr.mxu0 0.0
      %1213 = vmatpush2.msra.mxu0 0.0
      %1214 = vmatprep.subr.mxu0 0.0
      %1215 = vmatpush2.msra.mxu0 0.0
      %1216 = vmatprep.subr.mxu0 0.0
      %1217 = vmatpush2.msra.mxu0 0.0
      %1218 = vmatprep.subr.mxu0 0.0
      %1219 = vmatpush2.msra.mxu0 0.0
      %1220 = vmatprep.subr.mxu0 0.0
      %1221 = vmatpush2.msra.mxu0 0.0
      %1222 = vmatprep.subr.mxu0 0.0
      %1223 = vmatpush2.msra.mxu0 0.0
      %1224 = vmatprep.subr.mxu0 0.0
      %1225 = vmatpush2.msra.mxu0 0.0
      %1226 = vmatprep.subr.mxu0 0.0
      %1227 = vmatpush2.msra.mxu0 0.0
      %1228 = vmatprep.mubr.f32.mxu0 0.0
      %1229 = vmatmul.mubr.f32.gmra.mxu0 %v1081
      %v1230 = vpop.f32.mrf.mxu0
      %v1231 = vadd.f32 0.0, %v1230
      %v1232 = vpop.f32.mrf.mxu0
      %1233 = vmatprep.mubr.f32.mxu0 0.0
      %1234 = vmatmul.mubr.f32.gmra.mxu0 %v1084
      %v1235 = vpop.f32.mrf.mxu0
      %v1236 = vadd.f32 0.0, %v1235
      %v1237 = vpop.f32.mrf.mxu0
      %1238 = vmatprep.mubr.f32.mxu0 0.0
      %1239 = vmatmul.mubr.f32.gmra.mxu0 %v1087
      %v1240 = vpop.f32.mrf.mxu0
      %v1241 = vadd.f32 0.0, %v1240
      %v1242 = vpop.f32.mrf.mxu0
      %1243 = vmatprep.mubr.f32.mxu0 0.0
      %1244 = vmatmul.mubr.f32.gmra.mxu0 %v1090
      %v1245 = vpop.f32.mrf.mxu0
      %v1246 = vadd.f32 0.0, %v1245
      %v1247 = vpop.f32.mrf.mxu0
      %1248 = vmatprep.mubr.f32.mxu0 0.0
      %1249 = vmatmul.mubr.f32.gmra.mxu0 %v1093
      %v1250 = vpop.f32.mrf.mxu0
      %v1251 = vadd.f32 0.0, %v1250
      %v1252 = vpop.f32.mrf.mxu0
      %1253 = vmatprep.mubr.f32.mxu0 0.0
      %1254 = vmatmul.mubr.f32.gmra.mxu0 %v1096
      %v1255 = vpop.f32.mrf.mxu0
      %v1256 = vadd.f32 0.0, %v1255
      %v1257 = vpop.f32.mrf.mxu0
      %1258 = vmatprep.mubr.f32.mxu0 0.0
      %1259 = vmatmul.mubr.f32.gmra.mxu0 %v1099
      %v1260 = vpop.f32.mrf.mxu0
      %v1261 = vadd.f32 0.0, %v1260
      %v1262 = vpop.f32.mrf.mxu0
      %1263 = vmatprep.mubr.f32.mxu0 0.0
      %1264 = vmatmul.mubr.f32.gmra.mxu0 %v1102
      %v1265 = vpop.f32.mrf.mxu0
      %v1266 = vadd.f32 0.0, %v1265
      %v1267 = vpop.f32.mrf.mxu0
      %1268 = vmatprep.mubr.f32.mxu0 0.0
      %1269 = vmatmul.mubr.f32.gmra.mxu0 %v1105
      %v1270 = vpop.f32.mrf.mxu0
      %v1271 = vadd.f32 0.0, %v1270
      %v1272 = vpop.f32.mrf.mxu0
      %1273 = vmatprep.mubr.f32.mxu0 0.0
      %1274 = vmatmul.mubr.f32.gmra.mxu0 %v1108
      %v1275 = vpop.f32.mrf.mxu0
      %v1276 = vadd.f32 0.0, %v1275
      %v1277 = vpop.f32.mrf.mxu0
      %1278 = vmatprep.mubr.f32.mxu0 0.0
      %1279 = vmatmul.mubr.f32.gmra.mxu0 %v1111
      %v1280 = vpop.f32.mrf.mxu0
      %v1281 = vadd.f32 0.0, %v1280
      %v1282 = vpop.f32.mrf.mxu0
      %1283 = vmatprep.mubr.f32.mxu0 0.0
      %1284 = vmatmul.mubr.f32.gmra.mxu0 %v1114
      %v1285 = vpop.f32.mrf.mxu0
      %v1286 = vadd.f32 0.0, %v1285
      %v1287 = vpop.f32.mrf.mxu0
      %1288 = vmatprep.mubr.f32.mxu0 0.0
      %1289 = vmatmul.mubr.f32.gmra.mxu0 %v1117
      %v1290 = vpop.f32.mrf.mxu0
      %v1291 = vadd.f32 0.0, %v1290
      %v1292 = vpop.f32.mrf.mxu0
      %1293 = vmatprep.mubr.f32.mxu0 0.0
      %1294 = vmatmul.mubr.f32.gmra.mxu0 %v1120
      %v1295 = vpop.f32.mrf.mxu0
      %v1296 = vadd.f32 0.0, %v1295
      %v1297 = vpop.f32.mrf.mxu0
      %1298 = vmatprep.mubr.f32.mxu0 0.0
      %1299 = vmatmul.mubr.f32.gmra.mxu0 %v1123
      %v1300 = vpop.f32.mrf.mxu0
      %v1301 = vadd.f32 0.0, %v1300
      %v1302 = vpop.f32.mrf.mxu0
      %1303 = vmatprep.mubr.f32.mxu0 0.0
      %1304 = vmatmul.mubr.f32.gmra.mxu0 %v1126
      %v1305 = vpop.f32.mrf.mxu0
      %v1306 = vadd.f32 0.0, %v1305
      %v1307 = vpop.f32.mrf.mxu0
      %1308 = vmatprep.mubr.f32.mxu0 0.0
      %1309 = vmatmul.mubr.f32.gmra.mxu0 %v1129
      %v1310 = vpop.f32.mrf.mxu0
      %v1311 = vadd.f32 0.0, %v1310
      %v1312 = vpop.f32.mrf.mxu0
      %1313 = vmatprep.mubr.f32.mxu0 0.0
      %1314 = vmatmul.mubr.f32.gmra.mxu0 %v1132
      %v1315 = vpop.f32.mrf.mxu0
      %v1316 = vadd.f32 0.0, %v1315
      %v1317 = vpop.f32.mrf.mxu0
      %1318 = vmatprep.mubr.f32.mxu0 0.0
      %1319 = vmatmul.mubr.f32.gmra.mxu0 %v1135
      %v1320 = vpop.f32.mrf.mxu0
      %v1321 = vadd.f32 0.0, %v1320
      %v1322 = vpop.f32.mrf.mxu0
      %1323 = vmatprep.mubr.f32.mxu0 0.0
      %1324 = vmatmul.mubr.f32.gmra.mxu0 %v1138
      %v1325 = vpop.f32.mrf.mxu0
      %v1326 = vadd.f32 0.0, %v1325
      %v1327 = vpop.f32.mrf.mxu0
      %1328 = vmatprep.mubr.f32.mxu0 0.0
      %1329 = vmatmul.mubr.f32.gmra.mxu0 %v1141
      %v1330 = vpop.f32.mrf.mxu0
      %v1331 = vadd.f32 0.0, %v1330
      %v1332 = vpop.f32.mrf.mxu0
      %1333 = vmatprep.mubr.f32.mxu0 0.0
      %1334 = vmatmul.mubr.f32.gmra.mxu0 %v1144
      %v1335 = vpop.f32.mrf.mxu0
      %v1336 = vadd.f32 0.0, %v1335
      %v1337 = vpop.f32.mrf.mxu0
      %1338 = vmatprep.mubr.f32.mxu0 0.0
      %1339 = vmatmul.mubr.f32.gmra.mxu0 %v1147
      %v1340 = vpop.f32.mrf.mxu0
      %v1341 = vadd.f32 0.0, %v1340
      %v1342 = vpop.f32.mrf.mxu0
      %1343 = vmatprep.mubr.f32.mxu0 0.0
      %1344 = vmatmul.mubr.f32.gmra.mxu0 %v1150
      %v1345 = vpop.f32.mrf.mxu0
      %v1346 = vadd.f32 0.0, %v1345
      %v1347 = vpop.f32.mrf.mxu0
      %1348 = vmatprep.mubr.f32.mxu0 0.0
      %1349 = vmatmul.mubr.f32.gmra.mxu0 %v1153
      %v1350 = vpop.f32.mrf.mxu0
      %v1351 = vadd.f32 0.0, %v1350
      %v1352 = vpop.f32.mrf.mxu0
      %1353 = vmatprep.mubr.f32.mxu0 0.0
      %1354 = vmatmul.mubr.f32.gmra.mxu0 %v1156
      %v1355 = vpop.f32.mrf.mxu0
      %v1356 = vadd.f32 0.0, %v1355
      %v1357 = vpop.f32.mrf.mxu0
      %1358 = vmatprep.mubr.f32.mxu0 0.0
      %1359 = vmatmul.mubr.f32.gmra.mxu0 %v1159
      %v1360 = vpop.f32.mrf.mxu0
      %v1361 = vadd.f32 0.0, %v1360
      %v1362 = vpop.f32.mrf.mxu0
      %1363 = vmatprep.mubr.f32.mxu0 0.0
      %1364 = vmatmul.mubr.f32.gmra.mxu0 %v1162
      %v1365 = vpop.f32.mrf.mxu0
      %v1366 = vadd.f32 0.0, %v1365
      %v1367 = vpop.f32.mrf.mxu0
      %1368 = vdwg.mxu0
      %1369 = vmatprep.subr.mxu0 0.0
      %1370 = vmatpush1.msra.mxu0 %v802
      %1371 = vmatprep.subr.mxu0 0.0
      %1372 = vmatpush1.msra.mxu0 %v801
      %1373 = vmatprep.subr.mxu0 0.0
      %1374 = vmatpush1.msra.mxu0 %v800
      %1375 = vmatprep.subr.mxu0 0.0
      %1376 = vmatpush1.msra.mxu0 %v799
      %1377 = vmatprep.subr.mxu0 0.0
      %1378 = vmatpush1.msra.mxu0 %v798
      %1379 = vmatprep.subr.mxu0 0.0
      %1380 = vmatpush1.msra.mxu0 %v797
      %1381 = vmatprep.subr.mxu0 0.0
      %1382 = vmatpush1.msra.mxu0 %v796
      %1383 = vmatprep.subr.mxu0 0.0
      %1384 = vmatpush1.msra.mxu0 %v795
      %1385 = vmatprep.subr.mxu0 0.0
      %1386 = vmatpush1.msra.mxu0 %v794
      %1387 = vmatprep.subr.mxu0 0.0
      %1388 = vmatpush1.msra.mxu0 %v793
      %1389 = vmatprep.subr.mxu0 0.0
      %1390 = vmatpush1.msra.mxu0 %v792
      %1391 = vmatprep.subr.mxu0 0.0
      %1392 = vmatpush1.msra.mxu0 %v791
      %1393 = vmatprep.subr.mxu0 0.0
      %1394 = vmatpush1.msra.mxu0 %v790
      %1395 = vmatprep.subr.mxu0 0.0
      %1396 = vmatpush1.msra.mxu0 %v789
      %1397 = vmatprep.subr.mxu0 0.0
      %1398 = vmatpush1.msra.mxu0 %v788
      %1399 = vmatprep.subr.mxu0 0.0
      %1400 = vmatpush1.msra.mxu0 %v787
      %1401 = vmatprep.subr.mxu0 0.0
      %1402 = vmatpush2.msra.mxu0 0.0
      %1403 = vmatprep.subr.mxu0 0.0
      %1404 = vmatpush2.msra.mxu0 0.0
      %1405 = vmatprep.subr.mxu0 0.0
      %1406 = vmatpush2.msra.mxu0 0.0
      %1407 = vmatprep.subr.mxu0 0.0
      %1408 = vmatpush2.msra.mxu0 0.0
      %1409 = vmatprep.subr.mxu0 0.0
      %1410 = vmatpush2.msra.mxu0 0.0
      %1411 = vmatprep.subr.mxu0 0.0
      %1412 = vmatpush2.msra.mxu0 0.0
      %1413 = vmatprep.subr.mxu0 0.0
      %1414 = vmatpush2.msra.mxu0 0.0
      %1415 = vmatprep.subr.mxu0 0.0
      %1416 = vmatpush2.msra.mxu0 0.0
      %1417 = vmatprep.subr.mxu0 0.0
      %1418 = vmatpush2.msra.mxu0 0.0
      %1419 = vmatprep.subr.mxu0 0.0
      %1420 = vmatpush2.msra.mxu0 0.0
      %1421 = vmatprep.subr.mxu0 0.0
      %1422 = vmatpush2.msra.mxu0 0.0
      %1423 = vmatprep.subr.mxu0 0.0
      %1424 = vmatpush2.msra.mxu0 0.0
      %1425 = vmatprep.subr.mxu0 0.0
      %1426 = vmatpush2.msra.mxu0 0.0
      %1427 = vmatprep.subr.mxu0 0.0
      %1428 = vmatpush2.msra.mxu0 0.0
      %1429 = vmatprep.subr.mxu0 0.0
      %1430 = vmatpush2.msra.mxu0 0.0
      %1431 = vmatprep.subr.mxu0 0.0
      %1432 = vmatpush2.msra.mxu0 0.0
      %1433 = vmatprep.mubr.f32.mxu0 0.0
      %1434 = vmatmul.mubr.f32.gmra.mxu0 %v1251
      %v1435 = vpop.f32.mrf.mxu0
      %v1436 = vadd.f32 0.0, %v1435
      %v1437 = vpop.f32.mrf.mxu0
      %1438 = vmatprep.mubr.f32.mxu0 0.0
      %1439 = vmatmul.mubr.f32.gmra.mxu0 %v1256
      %v1440 = vpop.f32.mrf.mxu0
      %v1441 = vadd.f32 0.0, %v1440
      %v1442 = vpop.f32.mrf.mxu0
      %1443 = vmatprep.mubr.f32.mxu0 0.0
      %1444 = vmatmul.mubr.f32.gmra.mxu0 %v1261
      %v1445 = vpop.f32.mrf.mxu0
      %v1446 = vadd.f32 0.0, %v1445
      %v1447 = vpop.f32.mrf.mxu0
      %1448 = vmatprep.mubr.f32.mxu0 0.0
      %1449 = vmatmul.mubr.f32.gmra.mxu0 %v1266
      %v1450 = vpop.f32.mrf.mxu0
      %v1451 = vadd.f32 0.0, %v1450
      %v1452 = vpop.f32.mrf.mxu0
      %1453 = vdwg.mxu0
      %1454 = vmatprep.subr.mxu0 0.0
      %1455 = vmatpush1.msra.mxu0 %v753
      %1456 = vmatprep.subr.mxu0 0.0
      %1457 = vmatpush1.msra.mxu0 %v752
      %1458 = vmatprep.subr.mxu0 0.0
      %1459 = vmatpush1.msra.mxu0 %v751
      %1460 = vmatprep.subr.mxu0 0.0
      %1461 = vmatpush1.msra.mxu0 %v750
      %1462 = vmatprep.subr.mxu0 0.0
      %1463 = vmatpush1.msra.mxu0 %v749
      %1464 = vmatprep.subr.mxu0 0.0
      %1465 = vmatpush1.msra.mxu0 %v748
      %1466 = vmatprep.subr.mxu0 0.0
      %1467 = vmatpush1.msra.mxu0 %v747
      %1468 = vmatprep.subr.mxu0 0.0
      %1469 = vmatpush1.msra.mxu0 %v746
      %1470 = vmatprep.subr.mxu0 0.0
      %1471 = vmatpush1.msra.mxu0 %v745
      %1472 = vmatprep.subr.mxu0 0.0
      %1473 = vmatpush1.msra.mxu0 %v744
      %1474 = vmatprep.subr.mxu0 0.0
      %1475 = vmatpush1.msra.mxu0 %v743
      %1476 = vmatprep.subr.mxu0 0.0
      %1477 = vmatpush1.msra.mxu0 %v742
      %1478 = vmatprep.subr.mxu0 0.0
      %1479 = vmatpush1.msra.mxu0 %v741
      %1480 = vmatprep.subr.mxu0 0.0
      %1481 = vmatpush1.msra.mxu0 %v740
      %1482 = vmatprep.subr.mxu0 0.0
      %1483 = vmatpush1.msra.mxu0 %v739
      %1484 = vmatprep.subr.mxu0 0.0
      %1485 = vmatpush1.msra.mxu0 %v738
      %1486 = vmatprep.subr.mxu0 0.0
      %1487 = vmatpush2.msra.mxu0 0.0
      %1488 = vmatprep.subr.mxu0 0.0
      %1489 = vmatpush2.msra.mxu0 0.0
      %1490 = vmatprep.subr.mxu0 0.0
      %1491 = vmatpush2.msra.mxu0 0.0
      %1492 = vmatprep.subr.mxu0 0.0
      %1493 = vmatpush2.msra.mxu0 0.0
      %1494 = vmatprep.subr.mxu0 0.0
      %1495 = vmatpush2.msra.mxu0 0.0
      %1496 = vmatprep.subr.mxu0 0.0
      %1497 = vmatpush2.msra.mxu0 0.0
      %1498 = vmatprep.subr.mxu0 0.0
      %1499 = vmatpush2.msra.mxu0 0.0
      %1500 = vmatprep.subr.mxu0 0.0
      %1501 = vmatpush2.msra.mxu0 0.0
      %1502 = vmatprep.subr.mxu0 0.0
      %1503 = vmatpush2.msra.mxu0 0.0
      %1504 = vmatprep.subr.mxu0 0.0
      %1505 = vmatpush2.msra.mxu0 0.0
      %1506 = vmatprep.subr.mxu0 0.0
      %1507 = vmatpush2.msra.mxu0 0.0
      %1508 = vmatprep.subr.mxu0 0.0
      %1509 = vmatpush2.msra.mxu0 0.0
      %1510 = vmatprep.subr.mxu0 0.0
      %1511 = vmatpush2.msra.mxu0 0.0
      %1512 = vmatprep.subr.mxu0 0.0
      %1513 = vmatpush2.msra.mxu0 0.0
      %1514 = vmatprep.subr.mxu0 0.0
      %1515 = vmatpush2.msra.mxu0 0.0
      %1516 = vmatprep.subr.mxu0 0.0
      %1517 = vmatpush2.msra.mxu0 0.0
      %1518 = vmatprep.mubr.f32.mxu0 0.0
      %1519 = vmatmul.mubr.f32.gmra.mxu0 %v1231
      %v1520 = vpop.f32.mrf.mxu0
      %v1521 = vadd.f32 %v1436, %v1520
      %v1522 = vpop.f32.mrf.mxu0
      %1523 = vmatprep.mubr.f32.mxu0 0.0
      %1524 = vmatmul.mubr.f32.gmra.mxu0 %v1236
      %v1525 = vpop.f32.mrf.mxu0
      %v1526 = vadd.f32 %v1441, %v1525
      %v1527 = vpop.f32.mrf.mxu0
      %1528 = vmatprep.mubr.f32.mxu0 0.0
      %1529 = vmatmul.mubr.f32.gmra.mxu0 %v1241
      %v1530 = vpop.f32.mrf.mxu0
      %v1531 = vadd.f32 %v1446, %v1530
      %v1532 = vpop.f32.mrf.mxu0
      %1533 = vmatprep.mubr.f32.mxu0 0.0
      %1534 = vmatmul.mubr.f32.gmra.mxu0 %v1246
      %v1535 = vpop.f32.mrf.mxu0
      %v1536 = vadd.f32 %v1451, %v1535
      %v1537 = vpop.f32.mrf.mxu0
      %1538 = vdwg.mxu0
      %1539 = vmatprep.subr.mxu0 0.0
      %1540 = vmatpush1.msra.mxu0 %v851
      %1541 = vmatprep.subr.mxu0 0.0
      %1542 = vmatpush1.msra.mxu0 %v850
      %1543 = vmatprep.subr.mxu0 0.0
      %1544 = vmatpush1.msra.mxu0 %v849
      %1545 = vmatprep.subr.mxu0 0.0
      %1546 = vmatpush1.msra.mxu0 %v848
      %1547 = vmatprep.subr.mxu0 0.0
      %1548 = vmatpush1.msra.mxu0 %v847
      %1549 = vmatprep.subr.mxu0 0.0
      %1550 = vmatpush1.msra.mxu0 %v846
      %1551 = vmatprep.subr.mxu0 0.0
      %1552 = vmatpush1.msra.mxu0 %v845
      %1553 = vmatprep.subr.mxu0 0.0
      %1554 = vmatpush1.msra.mxu0 %v844
      %1555 = vmatprep.subr.mxu0 0.0
      %1556 = vmatpush1.msra.mxu0 %v843
      %1557 = vmatprep.subr.mxu0 0.0
      %1558 = vmatpush1.msra.mxu0 %v842
      %1559 = vmatprep.subr.mxu0 0.0
      %1560 = vmatpush1.msra.mxu0 %v841
      %1561 = vmatprep.subr.mxu0 0.0
      %1562 = vmatpush1.msra.mxu0 %v840
      %1563 = vmatprep.subr.mxu0 0.0
      %1564 = vmatpush1.msra.mxu0 %v839
      %1565 = vmatprep.subr.mxu0 0.0
      %1566 = vmatpush1.msra.mxu0 %v838
      %1567 = vmatprep.subr.mxu0 0.0
      %1568 = vmatpush1.msra.mxu0 %v837
      %1569 = vmatprep.subr.mxu0 0.0
      %1570 = vmatpush1.msra.mxu0 %v836
      %1571 = vmatprep.subr.mxu0 0.0
      %1572 = vmatpush2.msra.mxu0 0.0
      %1573 = vmatprep.subr.mxu0 0.0
      %1574 = vmatpush2.msra.mxu0 0.0
      %1575 = vmatprep.subr.mxu0 0.0
      %1576 = vmatpush2.msra.mxu0 0.0
      %1577 = vmatprep.subr.mxu0 0.0
      %1578 = vmatpush2.msra.mxu0 0.0
      %1579 = vmatprep.subr.mxu0 0.0
      %1580 = vmatpush2.msra.mxu0 0.0
      %1581 = vmatprep.subr.mxu0 0.0
      %1582 = vmatpush2.msra.mxu0 0.0
      %1583 = vmatprep.subr.mxu0 0.0
      %1584 = vmatpush2.msra.mxu0 0.0
      %1585 = vmatprep.subr.mxu0 0.0
      %1586 = vmatpush2.msra.mxu0 0.0
      %1587 = vmatprep.subr.mxu0 0.0
      %1588 = vmatpush2.msra.mxu0 0.0
      %1589 = vmatprep.subr.mxu0 0.0
      %1590 = vmatpush2.msra.mxu0 0.0
      %1591 = vmatprep.subr.mxu0 0.0
      %1592 = vmatpush2.msra.mxu0 0.0
      %1593 = vmatprep.subr.mxu0 0.0
      %1594 = vmatpush2.msra.mxu0 0.0
      %1595 = vmatprep.subr.mxu0 0.0
      %1596 = vmatpush2.msra.mxu0 0.0
      %1597 = vmatprep.subr.mxu0 0.0
      %1598 = vmatpush2.msra.mxu0 0.0
      %1599 = vmatprep.subr.mxu0 0.0
      %1600 = vmatpush2.msra.mxu0 0.0
      %1601 = vmatprep.subr.mxu0 0.0
      %1602 = vmatpush2.msra.mxu0 0.0
      %1603 = vmatprep.mubr.f32.mxu0 0.0
      %1604 = vmatmul.mubr.f32.gmra.mxu0 %v1271
      %v1605 = vpop.f32.mrf.mxu0
      %v1606 = vadd.f32 0.0, %v1605
      %v1607 = vpop.f32.mrf.mxu0
      %1608 = vmatprep.mubr.f32.mxu0 0.0
      %1609 = vmatmul.mubr.f32.gmra.mxu0 %v1276
      %v1610 = vpop.f32.mrf.mxu0
      %v1611 = vadd.f32 0.0, %v1610
      %v1612 = vpop.f32.mrf.mxu0
      %1613 = vmatprep.mubr.f32.mxu0 0.0
      %1614 = vmatmul.mubr.f32.gmra.mxu0 %v1281
      %v1615 = vpop.f32.mrf.mxu0
      %v1616 = vadd.f32 0.0, %v1615
      %v1617 = vpop.f32.mrf.mxu0
      %1618 = vmatprep.mubr.f32.mxu0 0.0
      %1619 = vmatmul.mubr.f32.gmra.mxu0 %v1286
      %v1620 = vpop.f32.mrf.mxu0
      %v1621 = vadd.f32 0.0, %v1620
      %v1622 = vpop.f32.mrf.mxu0
      %1623 = vdwg.mxu0
      %v1624 = vadd.f32 %v1521, %v1606
      %v1625 = vadd.f32 %v1526, %v1611
      %v1626 = vadd.f32 %v1531, %v1616
      %v1627 = vadd.f32 %v1536, %v1621
      %1628 = vmatprep.subr.mxu0 0.0
      %1629 = vmatpush1.msra.mxu0 %v899
      %1630 = vmatprep.subr.mxu0 0.0
      %1631 = vmatpush1.msra.mxu0 %v898
      %1632 = vmatprep.subr.mxu0 0.0
      %1633 = vmatpush1.msra.mxu0 %v897
      %1634 = vmatprep.subr.mxu0 0.0
      %1635 = vmatpush1.msra.mxu0 %v896
      %1636 = vmatprep.subr.mxu0 0.0
      %1637 = vmatpush1.msra.mxu0 %v895
      %1638 = vmatprep.subr.mxu0 0.0
      %1639 = vmatpush1.msra.mxu0 %v894
      %1640 = vmatprep.subr.mxu0 0.0
      %1641 = vmatpush1.msra.mxu0 %v893
      %1642 = vmatprep.subr.mxu0 0.0
      %1643 = vmatpush1.msra.mxu0 %v892
      %1644 = vmatprep.subr.mxu0 0.0
      %1645 = vmatpush1.msra.mxu0 %v891
      %1646 = vmatprep.subr.mxu0 0.0
      %1647 = vmatpush1.msra.mxu0 %v890
      %1648 = vmatprep.subr.mxu0 0.0
      %1649 = vmatpush1.msra.mxu0 %v889
      %1650 = vmatprep.subr.mxu0 0.0
      %1651 = vmatpush1.msra.mxu0 %v888
      %1652 = vmatprep.subr.mxu0 0.0
      %1653 = vmatpush1.msra.mxu0 %v887
      %1654 = vmatprep.subr.mxu0 0.0
      %1655 = vmatpush1.msra.mxu0 %v886
      %1656 = vmatprep.subr.mxu0 0.0
      %1657 = vmatpush1.msra.mxu0 %v885
      %1658 = vmatprep.subr.mxu0 0.0
      %1659 = vmatpush1.msra.mxu0 %v884
      %1660 = vmatprep.subr.mxu0 0.0
      %1661 = vmatpush2.msra.mxu0 0.0
      %1662 = vmatprep.subr.mxu0 0.0
      %1663 = vmatpush2.msra.mxu0 0.0
      %1664 = vmatprep.subr.mxu0 0.0
      %1665 = vmatpush2.msra.mxu0 0.0
      %1666 = vmatprep.subr.mxu0 0.0
      %1667 = vmatpush2.msra.mxu0 0.0
      %1668 = vmatprep.subr.mxu0 0.0
      %1669 = vmatpush2.msra.mxu0 0.0
      %1670 = vmatprep.subr.mxu0 0.0
      %1671 = vmatpush2.msra.mxu0 0.0
      %1672 = vmatprep.subr.mxu0 0.0
      %1673 = vmatpush2.msra.mxu0 0.0
      %1674 = vmatprep.subr.mxu0 0.0
      %1675 = vmatpush2.msra.mxu0 0.0
      %1676 = vmatprep.subr.mxu0 0.0
      %1677 = vmatpush2.msra.mxu0 0.0
      %1678 = vmatprep.subr.mxu0 0.0
      %1679 = vmatpush2.msra.mxu0 0.0
      %1680 = vmatprep.subr.mxu0 0.0
      %1681 = vmatpush2.msra.mxu0 0.0
      %1682 = vmatprep.subr.mxu0 0.0
      %1683 = vmatpush2.msra.mxu0 0.0
      %1684 = vmatprep.subr.mxu0 0.0
      %1685 = vmatpush2.msra.mxu0 0.0
      %1686 = vmatprep.subr.mxu0 0.0
      %1687 = vmatpush2.msra.mxu0 0.0
      %1688 = vmatprep.subr.mxu0 0.0
      %1689 = vmatpush2.msra.mxu0 0.0
      %1690 = vmatprep.subr.mxu0 0.0
      %1691 = vmatpush2.msra.mxu0 0.0
      %1692 = vmatprep.mubr.f32.mxu0 0.0
      %1693 = vmatmul.mubr.f32.gmra.mxu0 %v1291
      %v1694 = vpop.f32.mrf.mxu0
      %v1695 = vadd.f32 0.0, %v1694
      %v1696 = vpop.f32.mrf.mxu0
      %1697 = vmatprep.mubr.f32.mxu0 0.0
      %1698 = vmatmul.mubr.f32.gmra.mxu0 %v1296
      %v1699 = vpop.f32.mrf.mxu0
      %v1700 = vadd.f32 0.0, %v1699
      %v1701 = vpop.f32.mrf.mxu0
      %1702 = vmatprep.mubr.f32.mxu0 0.0
      %1703 = vmatmul.mubr.f32.gmra.mxu0 %v1301
      %v1704 = vpop.f32.mrf.mxu0
      %v1705 = vadd.f32 0.0, %v1704
      %v1706 = vpop.f32.mrf.mxu0
      %1707 = vmatprep.mubr.f32.mxu0 0.0
      %1708 = vmatmul.mubr.f32.gmra.mxu0 %v1306
      %v1709 = vpop.f32.mrf.mxu0
      %v1710 = vadd.f32 0.0, %v1709
      %v1711 = vpop.f32.mrf.mxu0
      %1712 = vdwg.mxu0
      %v1713 = vadd.f32 %v1624, %v1695
      %v1714 = vadd.f32 %v1625, %v1700
      %v1715 = vadd.f32 %v1626, %v1705
      %v1716 = vadd.f32 %v1627, %v1710
      %1717 = vmatprep.subr.mxu0 0.0
      %1718 = vmatpush1.msra.mxu0 %v948
      %1719 = vmatprep.subr.mxu0 0.0
      %1720 = vmatpush1.msra.mxu0 %v947
      %1721 = vmatprep.subr.mxu0 0.0
      %1722 = vmatpush1.msra.mxu0 %v946
      %1723 = vmatprep.subr.mxu0 0.0
      %1724 = vmatpush1.msra.mxu0 %v945
      %1725 = vmatprep.subr.mxu0 0.0
      %1726 = vmatpush1.msra.mxu0 %v944
      %1727 = vmatprep.subr.mxu0 0.0
      %1728 = vmatpush1.msra.mxu0 %v943
      %1729 = vmatprep.subr.mxu0 0.0
      %1730 = vmatpush1.msra.mxu0 %v942
      %1731 = vmatprep.subr.mxu0 0.0
      %1732 = vmatpush1.msra.mxu0 %v941
      %1733 = vmatprep.subr.mxu0 0.0
      %1734 = vmatpush1.msra.mxu0 %v940
      %1735 = vmatprep.subr.mxu0 0.0
      %1736 = vmatpush1.msra.mxu0 %v939
      %1737 = vmatprep.subr.mxu0 0.0
      %1738 = vmatpush1.msra.mxu0 %v938
      %1739 = vmatprep.subr.mxu0 0.0
      %1740 = vmatpush1.msra.mxu0 %v937
      %1741 = vmatprep.subr.mxu0 0.0
      %1742 = vmatpush1.msra.mxu0 %v936
      %1743 = vmatprep.subr.mxu0 0.0
      %1744 = vmatpush1.msra.mxu0 %v935
      %1745 = vmatprep.subr.mxu0 0.0
      %1746 = vmatpush1.msra.mxu0 %v934
      %1747 = vmatprep.subr.mxu0 0.0
      %1748 = vmatpush1.msra.mxu0 %v933
      %1749 = vmatprep.subr.mxu0 0.0
      %1750 = vmatpush2.msra.mxu0 0.0
      %1751 = vmatprep.subr.mxu0 0.0
      %1752 = vmatpush2.msra.mxu0 0.0
      %1753 = vmatprep.subr.mxu0 0.0
      %1754 = vmatpush2.msra.mxu0 0.0
      %1755 = vmatprep.subr.mxu0 0.0
      %1756 = vmatpush2.msra.mxu0 0.0
      %1757 = vmatprep.subr.mxu0 0.0
      %1758 = vmatpush2.msra.mxu0 0.0
      %1759 = vmatprep.subr.mxu0 0.0
      %1760 = vmatpush2.msra.mxu0 0.0
      %1761 = vmatprep.subr.mxu0 0.0
      %1762 = vmatpush2.msra.mxu0 0.0
      %1763 = vmatprep.subr.mxu0 0.0
      %1764 = vmatpush2.msra.mxu0 0.0
      %1765 = vmatprep.subr.mxu0 0.0
      %1766 = vmatpush2.msra.mxu0 0.0
      %1767 = vmatprep.subr.mxu0 0.0
      %1768 = vmatpush2.msra.mxu0 0.0
      %1769 = vmatprep.subr.mxu0 0.0
      %1770 = vmatpush2.msra.mxu0 0.0
      %1771 = vmatprep.subr.mxu0 0.0
      %1772 = vmatpush2.msra.mxu0 0.0
      %1773 = vmatprep.subr.mxu0 0.0
      %1774 = vmatpush2.msra.mxu0 0.0
      %1775 = vmatprep.subr.mxu0 0.0
      %1776 = vmatpush2.msra.mxu0 0.0
      %1777 = vmatprep.subr.mxu0 0.0
      %1778 = vmatpush2.msra.mxu0 0.0
      %1779 = vmatprep.subr.mxu0 0.0
      %1780 = vmatpush2.msra.mxu0 0.0
      %1781 = vmatprep.mubr.f32.mxu0 0.0
      %1782 = vmatmul.mubr.f32.gmra.mxu0 %v1311
      %v1783 = vpop.f32.mrf.mxu0
      %v1784 = vadd.f32 0.0, %v1783
      %v1785 = vpop.f32.mrf.mxu0
      %1786 = vmatprep.mubr.f32.mxu0 0.0
      %1787 = vmatmul.mubr.f32.gmra.mxu0 %v1316
      %v1788 = vpop.f32.mrf.mxu0
      %v1789 = vadd.f32 0.0, %v1788
      %v1790 = vpop.f32.mrf.mxu0
      %1791 = vmatprep.mubr.f32.mxu0 0.0
      %1792 = vmatmul.mubr.f32.gmra.mxu0 %v1321
      %v1793 = vpop.f32.mrf.mxu0
      %v1794 = vadd.f32 0.0, %v1793
      %v1795 = vpop.f32.mrf.mxu0
      %1796 = vmatprep.mubr.f32.mxu0 0.0
      %1797 = vmatmul.mubr.f32.gmra.mxu0 %v1326
      %v1798 = vpop.f32.mrf.mxu0
      %v1799 = vadd.f32 0.0, %v1798
      %v1800 = vpop.f32.mrf.mxu0
      %1801 = vdwg.mxu0
      %v1802 = vadd.f32 %v1713, %v1784
      %v1803 = vadd.f32 %v1714, %v1789
      %v1804 = vadd.f32 %v1715, %v1794
      %v1805 = vadd.f32 %v1716, %v1799
      %1806 = vmatprep.subr.mxu0 0.0
      %1807 = vmatpush1.msra.mxu0 %v997
      %1808 = vmatprep.subr.mxu0 0.0
      %1809 = vmatpush1.msra.mxu0 %v996
      %1810 = vmatprep.subr.mxu0 0.0
      %1811 = vmatpush1.msra.mxu0 %v995
      %1812 = vmatprep.subr.mxu0 0.0
      %1813 = vmatpush1.msra.mxu0 %v994
      %1814 = vmatprep.subr.mxu0 0.0
      %1815 = vmatpush1.msra.mxu0 %v993
      %1816 = vmatprep.subr.mxu0 0.0
      %1817 = vmatpush1.msra.mxu0 %v992
      %1818 = vmatprep.subr.mxu0 0.0
      %1819 = vmatpush1.msra.mxu0 %v991
      %1820 = vmatprep.subr.mxu0 0.0
      %1821 = vmatpush1.msra.mxu0 %v990
      %1822 = vmatprep.subr.mxu0 0.0
      %1823 = vmatpush1.msra.mxu0 %v989
      %1824 = vmatprep.subr.mxu0 0.0
      %1825 = vmatpush1.msra.mxu0 %v988
      %1826 = vmatprep.subr.mxu0 0.0
      %1827 = vmatpush1.msra.mxu0 %v987
      %1828 = vmatprep.subr.mxu0 0.0
      %1829 = vmatpush1.msra.mxu0 %v986
      %1830 = vmatprep.subr.mxu0 0.0
      %1831 = vmatpush1.msra.mxu0 %v985
      %1832 = vmatprep.subr.mxu0 0.0
      %1833 = vmatpush1.msra.mxu0 %v984
      %1834 = vmatprep.subr.mxu0 0.0
      %1835 = vmatpush1.msra.mxu0 %v983
      %1836 = vmatprep.subr.mxu0 0.0
      %1837 = vmatpush1.msra.mxu0 %v982
      %1838 = vmatprep.subr.mxu0 0.0
      %1839 = vmatpush2.msra.mxu0 0.0
      %1840 = vmatprep.subr.mxu0 0.0
      %1841 = vmatpush2.msra.mxu0 0.0
      %1842 = vmatprep.subr.mxu0 0.0
      %1843 = vmatpush2.msra.mxu0 0.0
      %1844 = vmatprep.subr.mxu0 0.0
      %1845 = vmatpush2.msra.mxu0 0.0
      %1846 = vmatprep.subr.mxu0 0.0
      %1847 = vmatpush2.msra.mxu0 0.0
      %1848 = vmatprep.subr.mxu0 0.0
      %1849 = vmatpush2.msra.mxu0 0.0
      %1850 = vmatprep.subr.mxu0 0.0
      %1851 = vmatpush2.msra.mxu0 0.0
      %1852 = vmatprep.subr.mxu0 0.0
      %1853 = vmatpush2.msra.mxu0 0.0
      %1854 = vmatprep.subr.mxu0 0.0
      %1855 = vmatpush2.msra.mxu0 0.0
      %1856 = vmatprep.subr.mxu0 0.0
      %1857 = vmatpush2.msra.mxu0 0.0
      %1858 = vmatprep.subr.mxu0 0.0
      %1859 = vmatpush2.msra.mxu0 0.0
      %1860 = vmatprep.subr.mxu0 0.0
      %1861 = vmatpush2.msra.mxu0 0.0
      %1862 = vmatprep.subr.mxu0 0.0
      %1863 = vmatpush2.msra.mxu0 0.0
      %1864 = vmatprep.subr.mxu0 0.0
      %1865 = vmatpush2.msra.mxu0 0.0
      %1866 = vmatprep.subr.mxu0 0.0
      %1867 = vmatpush2.msra.mxu0 0.0
      %1868 = vmatprep.subr.mxu0 0.0
      %1869 = vmatpush2.msra.mxu0 0.0
      %1870 = vmatprep.mubr.f32.mxu0 0.0
      %1871 = vmatmul.mubr.f32.gmra.mxu0 %v1331
      %v1872 = vpop.f32.mrf.mxu0
      %v1873 = vadd.f32 0.0, %v1872
      %v1874 = vpop.f32.mrf.mxu0
      %1875 = vmatprep.mubr.f32.mxu0 0.0
      %1876 = vmatmul.mubr.f32.gmra.mxu0 %v1336
      %v1877 = vpop.f32.mrf.mxu0
      %v1878 = vadd.f32 0.0, %v1877
      %v1879 = vpop.f32.mrf.mxu0
      %1880 = vmatprep.mubr.f32.mxu0 0.0
      %1881 = vmatmul.mubr.f32.gmra.mxu0 %v1341
      %v1882 = vpop.f32.mrf.mxu0
      %v1883 = vadd.f32 0.0, %v1882
      %v1884 = vpop.f32.mrf.mxu0
      %1885 = vmatprep.mubr.f32.mxu0 0.0
      %1886 = vmatmul.mubr.f32.gmra.mxu0 %v1346
      %v1887 = vpop.f32.mrf.mxu0
      %v1888 = vadd.f32 0.0, %v1887
      %v1889 = vpop.f32.mrf.mxu0
      %1890 = vdwg.mxu0
      %v1891 = vadd.f32 %v1802, %v1873
      %v1892 = vadd.f32 %v1803, %v1878
      %v1893 = vadd.f32 %v1804, %v1883
      %v1894 = vadd.f32 %v1805, %v1888
      %1895 = vmatprep.subr.mxu0 0.0
      %1896 = vmatpush1.msra.mxu0 %v1046
      %1897 = vmatprep.subr.mxu0 0.0
      %1898 = vmatpush1.msra.mxu0 %v1045
      %1899 = vmatprep.subr.mxu0 0.0
      %1900 = vmatpush1.msra.mxu0 %v1044
      %1901 = vmatprep.subr.mxu0 0.0
      %1902 = vmatpush1.msra.mxu0 %v1043
      %1903 = vmatprep.subr.mxu0 0.0
      %1904 = vmatpush1.msra.mxu0 %v1042
      %1905 = vmatprep.subr.mxu0 0.0
      %1906 = vmatpush1.msra.mxu0 %v1041
      %1907 = vmatprep.subr.mxu0 0.0
      %1908 = vmatpush1.msra.mxu0 %v1040
      %1909 = vmatprep.subr.mxu0 0.0
      %1910 = vmatpush1.msra.mxu0 %v1039
      %1911 = vmatprep.subr.mxu0 0.0
      %1912 = vmatpush1.msra.mxu0 %v1038
      %1913 = vmatprep.subr.mxu0 0.0
      %1914 = vmatpush1.msra.mxu0 %v1037
      %1915 = vmatprep.subr.mxu0 0.0
      %1916 = vmatpush1.msra.mxu0 %v1036
      %1917 = vmatprep.subr.mxu0 0.0
      %1918 = vmatpush1.msra.mxu0 %v1035
      %1919 = vmatprep.subr.mxu0 0.0
      %1920 = vmatpush1.msra.mxu0 %v1034
      %1921 = vmatprep.subr.mxu0 0.0
      %1922 = vmatpush1.msra.mxu0 %v1033
      %1923 = vmatprep.subr.mxu0 0.0
      %1924 = vmatpush1.msra.mxu0 %v1032
      %1925 = vmatprep.subr.mxu0 0.0
      %1926 = vmatpush1.msra.mxu0 %v1031
      %1927 = vmatprep.subr.mxu0 0.0
      %1928 = vmatpush2.msra.mxu0 0.0
      %1929 = vmatprep.subr.mxu0 0.0
      %1930 = vmatpush2.msra.mxu0 0.0
      %1931 = vmatprep.subr.mxu0 0.0
      %1932 = vmatpush2.msra.mxu0 0.0
      %1933 = vmatprep.subr.mxu0 0.0
      %1934 = vmatpush2.msra.mxu0 0.0
      %1935 = vmatprep.subr.mxu0 0.0
      %1936 = vmatpush2.msra.mxu0 0.0
      %1937 = vmatprep.subr.mxu0 0.0
      %1938 = vmatpush2.msra.mxu0 0.0
      %1939 = vmatprep.subr.mxu0 0.0
      %1940 = vmatpush2.msra.mxu0 0.0
      %1941 = vmatprep.subr.mxu0 0.0
      %1942 = vmatpush2.msra.mxu0 0.0
      %1943 = vmatprep.subr.mxu0 0.0
      %1944 = vmatpush2.msra.mxu0 0.0
      %1945 = vmatprep.subr.mxu0 0.0
      %1946 = vmatpush2.msra.mxu0 0.0
      %1947 = vmatprep.subr.mxu0 0.0
      %1948 = vmatpush2.msra.mxu0 0.0
      %1949 = vmatprep.subr.mxu0 0.0
      %1950 = vmatpush2.msra.mxu0 0.0
      %1951 = vmatprep.subr.mxu0 0.0
      %1952 = vmatpush2.msra.mxu0 0.0
      %1953 = vmatprep.subr.mxu0 0.0
      %1954 = vmatpush2.msra.mxu0 0.0
      %1955 = vmatprep.subr.mxu0 0.0
      %1956 = vmatpush2.msra.mxu0 0.0
      %1957 = vmatprep.subr.mxu0 0.0
      %1958 = vmatpush2.msra.mxu0 0.0
      %1959 = vmatprep.mubr.f32.mxu0 0.0
      %1960 = vmatmul.mubr.f32.gmra.mxu0 %v1351
      %v1961 = vpop.f32.mrf.mxu0
      %v1962 = vadd.f32 0.0, %v1961
      %v1963 = vpop.f32.mrf.mxu0
      %1964 = vmatprep.mubr.f32.mxu0 0.0
      %1965 = vmatmul.mubr.f32.gmra.mxu0 %v1356
      %v1966 = vpop.f32.mrf.mxu0
      %v1967 = vadd.f32 0.0, %v1966
      %v1968 = vpop.f32.mrf.mxu0
      %1969 = vmatprep.mubr.f32.mxu0 0.0
      %1970 = vmatmul.mubr.f32.gmra.mxu0 %v1361
      %v1971 = vpop.f32.mrf.mxu0
      %v1972 = vadd.f32 0.0, %v1971
      %v1973 = vpop.f32.mrf.mxu0
      %1974 = vmatprep.mubr.f32.mxu0 0.0
      %1975 = vmatmul.mubr.f32.gmra.mxu0 %v1366
      %v1976 = vpop.f32.mrf.mxu0
      %v1977 = vadd.f32 0.0, %v1976
      %v1978 = vpop.f32.mrf.mxu0
      %1979 = vdwg.mxu0
      %v1980 = vadd.f32 %v1891, %v1962
      %v1981 = vadd.f32 %v1892, %v1967
      %v1982 = vadd.f32 %v1893, %v1972
      %v1983 = vadd.f32 %v1894, %v1977
      %v1984 = vld [vmem:[%s3] sm:$0xff]
      %v1985 = vld [vmem:[%s3 + $0x8] sm:$0xff]
      %v1986 = vld [vmem:[%s3 + $0x10] sm:$0xff]
      %v1987 = vld [vmem:[%s3 + $0x18] sm:$0xff]
      %1989 = vset.pattern.permute.xlu0 0
      %1990 = vperm.xlu0 %1989, %v1984
      %v1991 = vpop.permute.xlu0 %1990
      %1994 = vset.pattern.permute.xlu0 0
      %1995 = vperm.xlu0 %1994, %v1985
      %v1996 = vpop.permute.xlu0 %1995
      %1999 = vset.pattern.permute.xlu0 0
      %2000 = vperm.xlu0 %1999, %v1986
      %v2001 = vpop.permute.xlu0 %2000
      %2004 = vset.pattern.permute.xlu0 0
      %2005 = vperm.xlu0 %2004, %v1987
      %v2006 = vpop.permute.xlu0 %2005
      %v2008 = vadd.f32 %v1980, %v1991
      %v2009 = vadd.f32 %v1981, %v1996
      %v2010 = vadd.f32 %v1982, %v2001
      %v2011 = vadd.f32 %v1983, %v2006
      %v2012 = vmax.f32 %v2008, 0.0
      %v2013 = vmax.f32 %v2009, 0.0
      %v2014 = vmax.f32 %v2010, 0.0
      %v2015 = vmax.f32 %v2011, 0.0
      %s2016 = scalar_lea.vmem %s3, 32
      %v2017 = vld [vmem:[%s2016] sm:$0xff]
      %v2018 = vld [vmem:[%s2016 + $0x8] sm:$0xff]
      %v2019 = vld [vmem:[%s2016 + $0x10] sm:$0xff]
      %v2020 = vld [vmem:[%s2016 + $0x18] sm:$0xff]
      %2022 = vset.pattern.permute.xlu0 0
      %2023 = vperm.xlu0 %2022, %v2017
      %v2024 = vpop.permute.xlu0 %2023
      %2027 = vset.pattern.permute.xlu0 0
      %2028 = vperm.xlu0 %2027, %v2018
      %v2029 = vpop.permute.xlu0 %2028
      %2032 = vset.pattern.permute.xlu0 0
      %2033 = vperm.xlu0 %2032, %v2019
      %v2034 = vpop.permute.xlu0 %2033
      %2037 = vset.pattern.permute.xlu0 0
      %2038 = vperm.xlu0 %2037, %v2020
      %v2039 = vpop.permute.xlu0 %2038
      %v2041 = vmul.f32 %v2012, %v2024
      %v2042 = vmul.f32 %v2013, %v2029
      %v2043 = vmul.f32 %v2014, %v2034
      %v2044 = vmul.f32 %v2015, %v2039
      %s2045 = scalar_lea.vmem %s3, 64
      %v2046 = vld [vmem:[%s2045] sm:$0xff]
      %v2047 = vld [vmem:[%s2045 + $0x8] sm:$0xff]
      %v2048 = vld [vmem:[%s2045 + $0x10] sm:$0xff]
      %v2049 = vld [vmem:[%s2045 + $0x18] sm:$0xff]
      %2051 = vset.pattern.permute.xlu0 0
      %2052 = vperm.xlu0 %2051, %v2046
      %v2053 = vpop.permute.xlu0 %2052
      %2056 = vset.pattern.permute.xlu0 0
      %2057 = vperm.xlu0 %2056, %v2047
      %v2058 = vpop.permute.xlu0 %2057
      %2061 = vset.pattern.permute.xlu0 0
      %2062 = vperm.xlu0 %2061, %v2048
      %v2063 = vpop.permute.xlu0 %2062
      %2066 = vset.pattern.permute.xlu0 0
      %2067 = vperm.xlu0 %2066, %v2049
      %v2068 = vpop.permute.xlu0 %2067
      %v2070 = vadd.f32 %v2041, %v2053
      %v2071 = vadd.f32 %v2042, %v2058
      %v2072 = vadd.f32 %v2043, %v2063
      %v2073 = vadd.f32 %v2044, %v2068
      %v2075 = vsel %vm1079, %v1047, 0
      %v2078 = vsel %vm1079, %v1048, 0
      %v2081 = vsel %vm1079, %v1049, 0
      %v2084 = vsel %vm1079, %v1050, 0
      %2086 = vmatprep.subr.mxu0 0.0
      %2087 = vmatpush1.msra.mxu0 0.0
      %2088 = vmatprep.subr.mxu0 0.0
      %2089 = vmatpush1.msra.mxu0 0.0
      %2090 = vmatprep.subr.mxu0 0.0
      %2091 = vmatpush1.msra.mxu0 0.0
      %2092 = vmatprep.subr.mxu0 0.0
      %2093 = vmatpush1.msra.mxu0 0.0
      %2094 = vmatprep.subr.mxu0 0.0
      %2095 = vmatpush1.msra.mxu0 0.0
      %2096 = vmatprep.subr.mxu0 0.0
      %2097 = vmatpush1.msra.mxu0 0.0
      %2098 = vmatprep.subr.mxu0 0.0
      %2099 = vmatpush1.msra.mxu0 0.0
      %2100 = vmatprep.subr.mxu0 0.0
      %2101 = vmatpush1.msra.mxu0 0.0
      %2102 = vmatprep.subr.mxu0 0.0
      %2103 = vmatpush1.msra.mxu0 0.0
      %2104 = vmatprep.subr.mxu0 0.0
      %2105 = vmatpush1.msra.mxu0 0.0
      %2106 = vmatprep.subr.mxu0 0.0
      %2107 = vmatpush1.msra.mxu0 0.0
      %2108 = vmatprep.subr.mxu0 0.0
      %2109 = vmatpush1.msra.mxu0 0.0
      %2110 = vmatprep.subr.mxu0 0.0
      %2111 = vmatpush1.msra.mxu0 0.0
      %2112 = vmatprep.subr.mxu0 0.0
      %2113 = vmatpush1.msra.mxu0 0.0
      %2114 = vmatprep.subr.mxu0 0.0
      %2115 = vmatpush1.msra.mxu0 %v685
      %2116 = vmatprep.subr.mxu0 0.0
      %2117 = vmatpush1.msra.mxu0 %v684
      %2118 = vmatprep.subr.mxu0 0.0
      %2119 = vmatpush2.msra.mxu0 0.0
      %2120 = vmatprep.subr.mxu0 0.0
      %2121 = vmatpush2.msra.mxu0 0.0
      %2122 = vmatprep.subr.mxu0 0.0
      %2123 = vmatpush2.msra.mxu0 0.0
      %2124 = vmatprep.subr.mxu0 0.0
      %2125 = vmatpush2.msra.mxu0 0.0
      %2126 = vmatprep.subr.mxu0 0.0
      %2127 = vmatpush2.msra.mxu0 0.0
      %2128 = vmatprep.subr.mxu0 0.0
      %2129 = vmatpush2.msra.mxu0 0.0
      %2130 = vmatprep.subr.mxu0 0.0
      %2131 = vmatpush2.msra.mxu0 0.0
      %2132 = vmatprep.subr.mxu0 0.0
      %2133 = vmatpush2.msra.mxu0 0.0
      %2134 = vmatprep.subr.mxu0 0.0
      %2135 = vmatpush2.msra.mxu0 0.0
      %2136 = vmatprep.subr.mxu0 0.0
      %2137 = vmatpush2.msra.mxu0 0.0
      %2138 = vmatprep.subr.mxu0 0.0
      %2139 = vmatpush2.msra.mxu0 0.0
      %2140 = vmatprep.subr.mxu0 0.0
      %2141 = vmatpush2.msra.mxu0 0.0
      %2142 = vmatprep.subr.mxu0 0.0
      %2143 = vmatpush2.msra.mxu0 0.0
      %2144 = vmatprep.subr.mxu0 0.0
      %2145 = vmatpush2.msra.mxu0 0.0
      %2146 = vmatprep.subr.mxu0 0.0
      %2147 = vmatpush2.msra.mxu0 0.0
      %2148 = vmatprep.subr.mxu0 0.0
      %2149 = vmatpush2.msra.mxu0 0.0
      %2150 = vmatprep.mubr.f32.mxu0 0.0
      %2151 = vmatmul.mubr.f32.gmra.mxu0 %v2075
      %v2152 = vpop.f32.mrf.mxu0
      %v2153 = vadd.f32 %v2070, %v2152
      %v2154 = vpop.f32.mrf.mxu0
      %2155 = vmatprep.mubr.f32.mxu0 0.0
      %2156 = vmatmul.mubr.f32.gmra.mxu0 %v2078
      %v2157 = vpop.f32.mrf.mxu0
      %v2158 = vadd.f32 %v2071, %v2157
      %v2159 = vpop.f32.mrf.mxu0
      %2160 = vmatprep.mubr.f32.mxu0 0.0
      %2161 = vmatmul.mubr.f32.gmra.mxu0 %v2081
      %v2162 = vpop.f32.mrf.mxu0
      %v2163 = vadd.f32 %v2072, %v2162
      %v2164 = vpop.f32.mrf.mxu0
      %2165 = vmatprep.mubr.f32.mxu0 0.0
      %2166 = vmatmul.mubr.f32.gmra.mxu0 %v2084
      %v2167 = vpop.f32.mrf.mxu0
      %v2168 = vadd.f32 %v2073, %v2167
      %v2169 = vpop.f32.mrf.mxu0
      %2170 = vdwg.mxu0
      %v2171 = vld [vmem:[%s4] sm:$0xff]
      %v2172 = vld [vmem:[%s4 + $0x8] sm:$0xff]
      %v2173 = vld [vmem:[%s4 + $0x10] sm:$0xff]
      %v2174 = vld [vmem:[%s4 + $0x18] sm:$0xff]
      %v2175 = vld [vmem:[%s4 + $0x20] sm:$0xff]
      %v2176 = vld [vmem:[%s4 + $0x28] sm:$0xff]
      %v2177 = vld [vmem:[%s4 + $0x30] sm:$0xff]
      %v2178 = vld [vmem:[%s4 + $0x38] sm:$0xff]
      %v2179 = vld [vmem:[%s4 + $0x40] sm:$0xff]
      %v2180 = vld [vmem:[%s4 + $0x48] sm:$0xff]
      %v2181 = vld [vmem:[%s4 + $0x50] sm:$0xff]
      %v2182 = vld [vmem:[%s4 + $0x58] sm:$0xff]
      %v2183 = vld [vmem:[%s4 + $0x60] sm:$0xff]
      %v2184 = vld [vmem:[%s4 + $0x68] sm:$0xff]
      %v2185 = vld [vmem:[%s4 + $0x70] sm:$0xff]
      %v2186 = vld [vmem:[%s4 + $0x78] sm:$0xff]
      %v2187 = vld [vmem:[%s4 + $0x80] sm:$0xff]
      %v2188 = vld [vmem:[%s4 + $0x88] sm:$0xff]
      %v2189 = vld [vmem:[%s4 + $0x90] sm:$0xff]
      %v2190 = vld [vmem:[%s4 + $0x98] sm:$0xff]
      %v2191 = vld [vmem:[%s4 + $0xa0] sm:$0xff]
      %v2192 = vld [vmem:[%s4 + $0xa8] sm:$0xff]
      %v2193 = vld [vmem:[%s4 + $0xb0] sm:$0xff]
      %v2194 = vld [vmem:[%s4 + $0xb8] sm:$0xff]
      %v2195 = vld [vmem:[%s4 + $0xc0] sm:$0xff]
      %v2196 = vld [vmem:[%s4 + $0xc8] sm:$0xff]
      %v2197 = vld [vmem:[%s4 + $0xd0] sm:$0xff]
      %v2198 = vld [vmem:[%s4 + $0xd8] sm:$0xff]
      %v2200 = vsel %vm1079, %v2171, 0
      %v2203 = vsel %vm1079, %v2172, 0
      %v2206 = vsel %vm1079, %v2173, 0
      %v2209 = vsel %vm1079, %v2174, 0
      %v2212 = vsel %vm1079, %v2175, 0
      %v2215 = vsel %vm1079, %v2176, 0
      %v2218 = vsel %vm1079, %v2177, 0
      %v2221 = vsel %vm1079, %v2178, 0
      %v2224 = vsel %vm1079, %v2179, 0
      %v2227 = vsel %vm1079, %v2180, 0
      %v2230 = vsel %vm1079, %v2181, 0
      %v2233 = vsel %vm1079, %v2182, 0
      %v2236 = vsel %vm1079, %v2183, 0
      %v2239 = vsel %vm1079, %v2184, 0
      %v2242 = vsel %vm1079, %v2185, 0
      %v2245 = vsel %vm1079, %v2186, 0
      %v2248 = vsel %vm1079, %v2187, 0
      %v2251 = vsel %vm1079, %v2188, 0
      %v2254 = vsel %vm1079, %v2189, 0
      %v2257 = vsel %vm1079, %v2190, 0
      %v2260 = vsel %vm1079, %v2191, 0
      %v2263 = vsel %vm1079, %v2192, 0
      %v2266 = vsel %vm1079, %v2193, 0
      %v2269 = vsel %vm1079, %v2194, 0
      %v2272 = vsel %vm1079, %v2195, 0
      %v2275 = vsel %vm1079, %v2196, 0
      %v2278 = vsel %vm1079, %v2197, 0
      %v2281 = vsel %vm1079, %v2198, 0
      %2283 = vmatprep.subr.mxu0 0.0
      %2284 = vmatpush1.msra.mxu0 0.0
      %2285 = vmatprep.subr.mxu0 0.0
      %2286 = vmatpush1.msra.mxu0 0.0
      %2287 = vmatprep.subr.mxu0 0.0
      %2288 = vmatpush1.msra.mxu0 0.0
      %2289 = vmatprep.subr.mxu0 0.0
      %2290 = vmatpush1.msra.mxu0 0.0
      %2291 = vmatprep.subr.mxu0 0.0
      %2292 = vmatpush1.msra.mxu0 0.0
      %2293 = vmatprep.subr.mxu0 0.0
      %2294 = vmatpush1.msra.mxu0 0.0
      %2295 = vmatprep.subr.mxu0 0.0
      %2296 = vmatpush1.msra.mxu0 0.0
      %2297 = vmatprep.subr.mxu0 0.0
      %2298 = vmatpush1.msra.mxu0 0.0
      %2299 = vmatprep.subr.mxu0 0.0
      %2300 = vmatpush1.msra.mxu0 0.0
      %2301 = vmatprep.subr.mxu0 0.0
      %2302 = vmatpush1.msra.mxu0 0.0
      %2303 = vmatprep.subr.mxu0 0.0
      %2304 = vmatpush1.msra.mxu0 0.0
      %2305 = vmatprep.subr.mxu0 0.0
      %2306 = vmatpush1.msra.mxu0 0.0
      %2307 = vmatprep.subr.mxu0 0.0
      %2308 = vmatpush1.msra.mxu0 0.0
      %2309 = vmatprep.subr.mxu0 0.0
      %2310 = vmatpush1.msra.mxu0 0.0
      %2311 = vmatprep.subr.mxu0 0.0
      %2312 = vmatpush1.msra.mxu0 %v685
      %2313 = vmatprep.subr.mxu0 0.0
      %2314 = vmatpush1.msra.mxu0 %v684
      %2315 = vmatprep.subr.mxu0 0.0
      %2316 = vmatpush2.msra.mxu0 0.0
      %2317 = vmatprep.subr.mxu0 0.0
      %2318 = vmatpush2.msra.mxu0 0.0
      %2319 = vmatprep.subr.mxu0 0.0
      %2320 = vmatpush2.msra.mxu0 0.0
      %2321 = vmatprep.subr.mxu0 0.0
      %2322 = vmatpush2.msra.mxu0 0.0
      %2323 = vmatprep.subr.mxu0 0.0
      %2324 = vmatpush2.msra.mxu0 0.0
      %2325 = vmatprep.subr.mxu0 0.0
      %2326 = vmatpush2.msra.mxu0 0.0
      %2327 = vmatprep.subr.mxu0 0.0
      %2328 = vmatpush2.msra.mxu0 0.0
      %2329 = vmatprep.subr.mxu0 0.0
      %2330 = vmatpush2.msra.mxu0 0.0
      %2331 = vmatprep.subr.mxu0 0.0
      %2332 = vmatpush2.msra.mxu0 0.0
      %2333 = vmatprep.subr.mxu0 0.0
      %2334 = vmatpush2.msra.mxu0 0.0
      %2335 = vmatprep.subr.mxu0 0.0
      %2336 = vmatpush2.msra.mxu0 0.0
      %2337 = vmatprep.subr.mxu0 0.0
      %2338 = vmatpush2.msra.mxu0 0.0
      %2339 = vmatprep.subr.mxu0 0.0
      %2340 = vmatpush2.msra.mxu0 0.0
      %2341 = vmatprep.subr.mxu0 0.0
      %2342 = vmatpush2.msra.mxu0 0.0
      %2343 = vmatprep.subr.mxu0 0.0
      %2344 = vmatpush2.msra.mxu0 0.0
      %2345 = vmatprep.subr.mxu0 0.0
      %2346 = vmatpush2.msra.mxu0 0.0
      %2347 = vmatprep.mubr.f32.mxu0 0.0
      %2348 = vmatmul.mubr.f32.gmra.mxu0 %v2200
      %v2349 = vpop.f32.mrf.mxu0
      %v2350 = vadd.f32 0.0, %v2349
      %v2351 = vpop.f32.mrf.mxu0
      %2352 = vmatprep.mubr.f32.mxu0 0.0
      %2353 = vmatmul.mubr.f32.gmra.mxu0 %v2203
      %v2354 = vpop.f32.mrf.mxu0
      %v2355 = vadd.f32 0.0, %v2354
      %v2356 = vpop.f32.mrf.mxu0
      %2357 = vmatprep.mubr.f32.mxu0 0.0
      %2358 = vmatmul.mubr.f32.gmra.mxu0 %v2206
      %v2359 = vpop.f32.mrf.mxu0
      %v2360 = vadd.f32 0.0, %v2359
      %v2361 = vpop.f32.mrf.mxu0
      %2362 = vmatprep.mubr.f32.mxu0 0.0
      %2363 = vmatmul.mubr.f32.gmra.mxu0 %v2209
      %v2364 = vpop.f32.mrf.mxu0
      %v2365 = vadd.f32 0.0, %v2364
      %v2366 = vpop.f32.mrf.mxu0
      %2367 = vmatprep.mubr.f32.mxu0 0.0
      %2368 = vmatmul.mubr.f32.gmra.mxu0 %v2212
      %v2369 = vpop.f32.mrf.mxu0
      %v2370 = vadd.f32 0.0, %v2369
      %v2371 = vpop.f32.mrf.mxu0
      %2372 = vmatprep.mubr.f32.mxu0 0.0
      %2373 = vmatmul.mubr.f32.gmra.mxu0 %v2215
      %v2374 = vpop.f32.mrf.mxu0
      %v2375 = vadd.f32 0.0, %v2374
      %v2376 = vpop.f32.mrf.mxu0
      %2377 = vmatprep.mubr.f32.mxu0 0.0
      %2378 = vmatmul.mubr.f32.gmra.mxu0 %v2218
      %v2379 = vpop.f32.mrf.mxu0
      %v2380 = vadd.f32 0.0, %v2379
      %v2381 = vpop.f32.mrf.mxu0
      %2382 = vmatprep.mubr.f32.mxu0 0.0
      %2383 = vmatmul.mubr.f32.gmra.mxu0 %v2221
      %v2384 = vpop.f32.mrf.mxu0
      %v2385 = vadd.f32 0.0, %v2384
      %v2386 = vpop.f32.mrf.mxu0
      %2387 = vmatprep.mubr.f32.mxu0 0.0
      %2388 = vmatmul.mubr.f32.gmra.mxu0 %v2224
      %v2389 = vpop.f32.mrf.mxu0
      %v2390 = vadd.f32 0.0, %v2389
      %v2391 = vpop.f32.mrf.mxu0
      %2392 = vmatprep.mubr.f32.mxu0 0.0
      %2393 = vmatmul.mubr.f32.gmra.mxu0 %v2227
      %v2394 = vpop.f32.mrf.mxu0
      %v2395 = vadd.f32 0.0, %v2394
      %v2396 = vpop.f32.mrf.mxu0
      %2397 = vmatprep.mubr.f32.mxu0 0.0
      %2398 = vmatmul.mubr.f32.gmra.mxu0 %v2230
      %v2399 = vpop.f32.mrf.mxu0
      %v2400 = vadd.f32 0.0, %v2399
      %v2401 = vpop.f32.mrf.mxu0
      %2402 = vmatprep.mubr.f32.mxu0 0.0
      %2403 = vmatmul.mubr.f32.gmra.mxu0 %v2233
      %v2404 = vpop.f32.mrf.mxu0
      %v2405 = vadd.f32 0.0, %v2404
      %v2406 = vpop.f32.mrf.mxu0
      %2407 = vmatprep.mubr.f32.mxu0 0.0
      %2408 = vmatmul.mubr.f32.gmra.mxu0 %v2236
      %v2409 = vpop.f32.mrf.mxu0
      %v2410 = vadd.f32 0.0, %v2409
      %v2411 = vpop.f32.mrf.mxu0
      %2412 = vmatprep.mubr.f32.mxu0 0.0
      %2413 = vmatmul.mubr.f32.gmra.mxu0 %v2239
      %v2414 = vpop.f32.mrf.mxu0
      %v2415 = vadd.f32 0.0, %v2414
      %v2416 = vpop.f32.mrf.mxu0
      %2417 = vmatprep.mubr.f32.mxu0 0.0
      %2418 = vmatmul.mubr.f32.gmra.mxu0 %v2242
      %v2419 = vpop.f32.mrf.mxu0
      %v2420 = vadd.f32 0.0, %v2419
      %v2421 = vpop.f32.mrf.mxu0
      %2422 = vmatprep.mubr.f32.mxu0 0.0
      %2423 = vmatmul.mubr.f32.gmra.mxu0 %v2245
      %v2424 = vpop.f32.mrf.mxu0
      %v2425 = vadd.f32 0.0, %v2424
      %v2426 = vpop.f32.mrf.mxu0
      %2427 = vmatprep.mubr.f32.mxu0 0.0
      %2428 = vmatmul.mubr.f32.gmra.mxu0 %v2248
      %v2429 = vpop.f32.mrf.mxu0
      %v2430 = vadd.f32 0.0, %v2429
      %v2431 = vpop.f32.mrf.mxu0
      %2432 = vmatprep.mubr.f32.mxu0 0.0
      %2433 = vmatmul.mubr.f32.gmra.mxu0 %v2251
      %v2434 = vpop.f32.mrf.mxu0
      %v2435 = vadd.f32 0.0, %v2434
      %v2436 = vpop.f32.mrf.mxu0
      %2437 = vmatprep.mubr.f32.mxu0 0.0
      %2438 = vmatmul.mubr.f32.gmra.mxu0 %v2254
      %v2439 = vpop.f32.mrf.mxu0
      %v2440 = vadd.f32 0.0, %v2439
      %v2441 = vpop.f32.mrf.mxu0
      %2442 = vmatprep.mubr.f32.mxu0 0.0
      %2443 = vmatmul.mubr.f32.gmra.mxu0 %v2257
      %v2444 = vpop.f32.mrf.mxu0
      %v2445 = vadd.f32 0.0, %v2444
      %v2446 = vpop.f32.mrf.mxu0
      %2447 = vmatprep.mubr.f32.mxu0 0.0
      %2448 = vmatmul.mubr.f32.gmra.mxu0 %v2260
      %v2449 = vpop.f32.mrf.mxu0
      %v2450 = vadd.f32 0.0, %v2449
      %v2451 = vpop.f32.mrf.mxu0
      %2452 = vmatprep.mubr.f32.mxu0 0.0
      %2453 = vmatmul.mubr.f32.gmra.mxu0 %v2263
      %v2454 = vpop.f32.mrf.mxu0
      %v2455 = vadd.f32 0.0, %v2454
      %v2456 = vpop.f32.mrf.mxu0
      %2457 = vmatprep.mubr.f32.mxu0 0.0
      %2458 = vmatmul.mubr.f32.gmra.mxu0 %v2266
      %v2459 = vpop.f32.mrf.mxu0
      %v2460 = vadd.f32 0.0, %v2459
      %v2461 = vpop.f32.mrf.mxu0
      %2462 = vmatprep.mubr.f32.mxu0 0.0
      %2463 = vmatmul.mubr.f32.gmra.mxu0 %v2269
      %v2464 = vpop.f32.mrf.mxu0
      %v2465 = vadd.f32 0.0, %v2464
      %v2466 = vpop.f32.mrf.mxu0
      %2467 = vmatprep.mubr.f32.mxu0 0.0
      %2468 = vmatmul.mubr.f32.gmra.mxu0 %v2272
      %v2469 = vpop.f32.mrf.mxu0
      %v2470 = vadd.f32 0.0, %v2469
      %v2471 = vpop.f32.mrf.mxu0
      %2472 = vmatprep.mubr.f32.mxu0 0.0
      %2473 = vmatmul.mubr.f32.gmra.mxu0 %v2275
      %v2474 = vpop.f32.mrf.mxu0
      %v2475 = vadd.f32 0.0, %v2474
      %v2476 = vpop.f32.mrf.mxu0
      %2477 = vmatprep.mubr.f32.mxu0 0.0
      %2478 = vmatmul.mubr.f32.gmra.mxu0 %v2278
      %v2479 = vpop.f32.mrf.mxu0
      %v2480 = vadd.f32 0.0, %v2479
      %v2481 = vpop.f32.mrf.mxu0
      %2482 = vmatprep.mubr.f32.mxu0 0.0
      %2483 = vmatmul.mubr.f32.gmra.mxu0 %v2281
      %v2484 = vpop.f32.mrf.mxu0
      %v2485 = vadd.f32 0.0, %v2484
      %v2486 = vpop.f32.mrf.mxu0
      %2487 = vdwg.mxu0
      %2488 = vmatprep.subr.mxu0 0.0
      %2489 = vmatpush1.msra.mxu0 %v802
      %2490 = vmatprep.subr.mxu0 0.0
      %2491 = vmatpush1.msra.mxu0 %v801
      %2492 = vmatprep.subr.mxu0 0.0
      %2493 = vmatpush1.msra.mxu0 %v800
      %2494 = vmatprep.subr.mxu0 0.0
      %2495 = vmatpush1.msra.mxu0 %v799
      %2496 = vmatprep.subr.mxu0 0.0
      %2497 = vmatpush1.msra.mxu0 %v798
      %2498 = vmatprep.subr.mxu0 0.0
      %2499 = vmatpush1.msra.mxu0 %v797
      %2500 = vmatprep.subr.mxu0 0.0
      %2501 = vmatpush1.msra.mxu0 %v796
      %2502 = vmatprep.subr.mxu0 0.0
      %2503 = vmatpush1.msra.mxu0 %v795
      %2504 = vmatprep.subr.mxu0 0.0
      %2505 = vmatpush1.msra.mxu0 %v794
      %2506 = vmatprep.subr.mxu0 0.0
      %2507 = vmatpush1.msra.mxu0 %v793
      %2508 = vmatprep.subr.mxu0 0.0
      %2509 = vmatpush1.msra.mxu0 %v792
      %2510 = vmatprep.subr.mxu0 0.0
      %2511 = vmatpush1.msra.mxu0 %v791
      %2512 = vmatprep.subr.mxu0 0.0
      %2513 = vmatpush1.msra.mxu0 %v790
      %2514 = vmatprep.subr.mxu0 0.0
      %2515 = vmatpush1.msra.mxu0 %v789
      %2516 = vmatprep.subr.mxu0 0.0
      %2517 = vmatpush1.msra.mxu0 %v788
      %2518 = vmatprep.subr.mxu0 0.0
      %2519 = vmatpush1.msra.mxu0 %v787
      %2520 = vmatprep.subr.mxu0 0.0
      %2521 = vmatpush2.msra.mxu0 0.0
      %2522 = vmatprep.subr.mxu0 0.0
      %2523 = vmatpush2.msra.mxu0 0.0
      %2524 = vmatprep.subr.mxu0 0.0
      %2525 = vmatpush2.msra.mxu0 0.0
      %2526 = vmatprep.subr.mxu0 0.0
      %2527 = vmatpush2.msra.mxu0 0.0
      %2528 = vmatprep.subr.mxu0 0.0
      %2529 = vmatpush2.msra.mxu0 0.0
      %2530 = vmatprep.subr.mxu0 0.0
      %2531 = vmatpush2.msra.mxu0 0.0
      %2532 = vmatprep.subr.mxu0 0.0
      %2533 = vmatpush2.msra.mxu0 0.0
      %2534 = vmatprep.subr.mxu0 0.0
      %2535 = vmatpush2.msra.mxu0 0.0
      %2536 = vmatprep.subr.mxu0 0.0
      %2537 = vmatpush2.msra.mxu0 0.0
      %2538 = vmatprep.subr.mxu0 0.0
      %2539 = vmatpush2.msra.mxu0 0.0
      %2540 = vmatprep.subr.mxu0 0.0
      %2541 = vmatpush2.msra.mxu0 0.0
      %2542 = vmatprep.subr.mxu0 0.0
      %2543 = vmatpush2.msra.mxu0 0.0
      %2544 = vmatprep.subr.mxu0 0.0
      %2545 = vmatpush2.msra.mxu0 0.0
      %2546 = vmatprep.subr.mxu0 0.0
      %2547 = vmatpush2.msra.mxu0 0.0
      %2548 = vmatprep.subr.mxu0 0.0
      %2549 = vmatpush2.msra.mxu0 0.0
      %2550 = vmatprep.subr.mxu0 0.0
      %2551 = vmatpush2.msra.mxu0 0.0
      %2552 = vmatprep.mubr.f32.mxu0 0.0
      %2553 = vmatmul.mubr.f32.gmra.mxu0 %v2370
      %v2554 = vpop.f32.mrf.mxu0
      %v2555 = vadd.f32 0.0, %v2554
      %v2556 = vpop.f32.mrf.mxu0
      %2557 = vmatprep.mubr.f32.mxu0 0.0
      %2558 = vmatmul.mubr.f32.gmra.mxu0 %v2375
      %v2559 = vpop.f32.mrf.mxu0
      %v2560 = vadd.f32 0.0, %v2559
      %v2561 = vpop.f32.mrf.mxu0
      %2562 = vmatprep.mubr.f32.mxu0 0.0
      %2563 = vmatmul.mubr.f32.gmra.mxu0 %v2380
      %v2564 = vpop.f32.mrf.mxu0
      %v2565 = vadd.f32 0.0, %v2564
      %v2566 = vpop.f32.mrf.mxu0
      %2567 = vmatprep.mubr.f32.mxu0 0.0
      %2568 = vmatmul.mubr.f32.gmra.mxu0 %v2385
      %v2569 = vpop.f32.mrf.mxu0
      %v2570 = vadd.f32 0.0, %v2569
      %v2571 = vpop.f32.mrf.mxu0
      %2572 = vdwg.mxu0
      %2573 = vmatprep.subr.mxu0 0.0
      %2574 = vmatpush1.msra.mxu0 %v753
      %2575 = vmatprep.subr.mxu0 0.0
      %2576 = vmatpush1.msra.mxu0 %v752
      %2577 = vmatprep.subr.mxu0 0.0
      %2578 = vmatpush1.msra.mxu0 %v751
      %2579 = vmatprep.subr.mxu0 0.0
      %2580 = vmatpush1.msra.mxu0 %v750
      %2581 = vmatprep.subr.mxu0 0.0
      %2582 = vmatpush1.msra.mxu0 %v749
      %2583 = vmatprep.subr.mxu0 0.0
      %2584 = vmatpush1.msra.mxu0 %v748
      %2585 = vmatprep.subr.mxu0 0.0
      %2586 = vmatpush1.msra.mxu0 %v747
      %2587 = vmatprep.subr.mxu0 0.0
      %2588 = vmatpush1.msra.mxu0 %v746
      %2589 = vmatprep.subr.mxu0 0.0
      %2590 = vmatpush1.msra.mxu0 %v745
      %2591 = vmatprep.subr.mxu0 0.0
      %2592 = vmatpush1.msra.mxu0 %v744
      %2593 = vmatprep.subr.mxu0 0.0
      %2594 = vmatpush1.msra.mxu0 %v743
      %2595 = vmatprep.subr.mxu0 0.0
      %2596 = vmatpush1.msra.mxu0 %v742
      %2597 = vmatprep.subr.mxu0 0.0
      %2598 = vmatpush1.msra.mxu0 %v741
      %2599 = vmatprep.subr.mxu0 0.0
      %2600 = vmatpush1.msra.mxu0 %v740
      %2601 = vmatprep.subr.mxu0 0.0
      %2602 = vmatpush1.msra.mxu0 %v739
      %2603 = vmatprep.subr.mxu0 0.0
      %2604 = vmatpush1.msra.mxu0 %v738
      %2605 = vmatprep.subr.mxu0 0.0
      %2606 = vmatpush2.msra.mxu0 0.0
      %2607 = vmatprep.subr.mxu0 0.0
      %2608 = vmatpush2.msra.mxu0 0.0
      %2609 = vmatprep.subr.mxu0 0.0
      %2610 = vmatpush2.msra.mxu0 0.0
      %2611 = vmatprep.subr.mxu0 0.0
      %2612 = vmatpush2.msra.mxu0 0.0
      %2613 = vmatprep.subr.mxu0 0.0
      %2614 = vmatpush2.msra.mxu0 0.0
      %2615 = vmatprep.subr.mxu0 0.0
      %2616 = vmatpush2.msra.mxu0 0.0
      %2617 = vmatprep.subr.mxu0 0.0
      %2618 = vmatpush2.msra.mxu0 0.0
      %2619 = vmatprep.subr.mxu0 0.0
      %2620 = vmatpush2.msra.mxu0 0.0
      %2621 = vmatprep.subr.mxu0 0.0
      %2622 = vmatpush2.msra.mxu0 0.0
      %2623 = vmatprep.subr.mxu0 0.0
      %2624 = vmatpush2.msra.mxu0 0.0
      %2625 = vmatprep.subr.mxu0 0.0
      %2626 = vmatpush2.msra.mxu0 0.0
      %2627 = vmatprep.subr.mxu0 0.0
      %2628 = vmatpush2.msra.mxu0 0.0
      %2629 = vmatprep.subr.mxu0 0.0
      %2630 = vmatpush2.msra.mxu0 0.0
      %2631 = vmatprep.subr.mxu0 0.0
      %2632 = vmatpush2.msra.mxu0 0.0
      %2633 = vmatprep.subr.mxu0 0.0
      %2634 = vmatpush2.msra.mxu0 0.0
      %2635 = vmatprep.subr.mxu0 0.0
      %2636 = vmatpush2.msra.mxu0 0.0
      %2637 = vmatprep.mubr.f32.mxu0 0.0
      %2638 = vmatmul.mubr.f32.gmra.mxu0 %v2350
      %v2639 = vpop.f32.mrf.mxu0
      %v2640 = vadd.f32 %v2555, %v2639
      %v2641 = vpop.f32.mrf.mxu0
      %2642 = vmatprep.mubr.f32.mxu0 0.0
      %2643 = vmatmul.mubr.f32.gmra.mxu0 %v2355
      %v2644 = vpop.f32.mrf.mxu0
      %v2645 = vadd.f32 %v2560, %v2644
      %v2646 = vpop.f32.mrf.mxu0
      %2647 = vmatprep.mubr.f32.mxu0 0.0
      %2648 = vmatmul.mubr.f32.gmra.mxu0 %v2360
      %v2649 = vpop.f32.mrf.mxu0
      %v2650 = vadd.f32 %v2565, %v2649
      %v2651 = vpop.f32.mrf.mxu0
      %2652 = vmatprep.mubr.f32.mxu0 0.0
      %2653 = vmatmul.mubr.f32.gmra.mxu0 %v2365
      %v2654 = vpop.f32.mrf.mxu0
      %v2655 = vadd.f32 %v2570, %v2654
      %v2656 = vpop.f32.mrf.mxu0
      %2657 = vdwg.mxu0
      %2658 = vmatprep.subr.mxu0 0.0
      %2659 = vmatpush1.msra.mxu0 %v851
      %2660 = vmatprep.subr.mxu0 0.0
      %2661 = vmatpush1.msra.mxu0 %v850
      %2662 = vmatprep.subr.mxu0 0.0
      %2663 = vmatpush1.msra.mxu0 %v849
      %2664 = vmatprep.subr.mxu0 0.0
      %2665 = vmatpush1.msra.mxu0 %v848
      %2666 = vmatprep.subr.mxu0 0.0
      %2667 = vmatpush1.msra.mxu0 %v847
      %2668 = vmatprep.subr.mxu0 0.0
      %2669 = vmatpush1.msra.mxu0 %v846
      %2670 = vmatprep.subr.mxu0 0.0
      %2671 = vmatpush1.msra.mxu0 %v845
      %2672 = vmatprep.subr.mxu0 0.0
      %2673 = vmatpush1.msra.mxu0 %v844
      %2674 = vmatprep.subr.mxu0 0.0
      %2675 = vmatpush1.msra.mxu0 %v843
      %2676 = vmatprep.subr.mxu0 0.0
      %2677 = vmatpush1.msra.mxu0 %v842
      %2678 = vmatprep.subr.mxu0 0.0
      %2679 = vmatpush1.msra.mxu0 %v841
      %2680 = vmatprep.subr.mxu0 0.0
      %2681 = vmatpush1.msra.mxu0 %v840
      %2682 = vmatprep.subr.mxu0 0.0
      %2683 = vmatpush1.msra.mxu0 %v839
      %2684 = vmatprep.subr.mxu0 0.0
      %2685 = vmatpush1.msra.mxu0 %v838
      %2686 = vmatprep.subr.mxu0 0.0
      %2687 = vmatpush1.msra.mxu0 %v837
      %2688 = vmatprep.subr.mxu0 0.0
      %2689 = vmatpush1.msra.mxu0 %v836
      %2690 = vmatprep.subr.mxu0 0.0
      %2691 = vmatpush2.msra.mxu0 0.0
      %2692 = vmatprep.subr.mxu0 0.0
      %2693 = vmatpush2.msra.mxu0 0.0
      %2694 = vmatprep.subr.mxu0 0.0
      %2695 = vmatpush2.msra.mxu0 0.0
      %2696 = vmatprep.subr.mxu0 0.0
      %2697 = vmatpush2.msra.mxu0 0.0
      %2698 = vmatprep.subr.mxu0 0.0
      %2699 = vmatpush2.msra.mxu0 0.0
      %2700 = vmatprep.subr.mxu0 0.0
      %2701 = vmatpush2.msra.mxu0 0.0
      %2702 = vmatprep.subr.mxu0 0.0
      %2703 = vmatpush2.msra.mxu0 0.0
      %2704 = vmatprep.subr.mxu0 0.0
      %2705 = vmatpush2.msra.mxu0 0.0
      %2706 = vmatprep.subr.mxu0 0.0
      %2707 = vmatpush2.msra.mxu0 0.0
      %2708 = vmatprep.subr.mxu0 0.0
      %2709 = vmatpush2.msra.mxu0 0.0
      %2710 = vmatprep.subr.mxu0 0.0
      %2711 = vmatpush2.msra.mxu0 0.0
      %2712 = vmatprep.subr.mxu0 0.0
      %2713 = vmatpush2.msra.mxu0 0.0
      %2714 = vmatprep.subr.mxu0 0.0
      %2715 = vmatpush2.msra.mxu0 0.0
      %2716 = vmatprep.subr.mxu0 0.0
      %2717 = vmatpush2.msra.mxu0 0.0
      %2718 = vmatprep.subr.mxu0 0.0
      %2719 = vmatpush2.msra.mxu0 0.0
      %2720 = vmatprep.subr.mxu0 0.0
      %2721 = vmatpush2.msra.mxu0 0.0
      %2722 = vmatprep.mubr.f32.mxu0 0.0
      %2723 = vmatmul.mubr.f32.gmra.mxu0 %v2390
      %v2724 = vpop.f32.mrf.mxu0
      %v2725 = vadd.f32 0.0, %v2724
      %v2726 = vpop.f32.mrf.mxu0
      %2727 = vmatprep.mubr.f32.mxu0 0.0
      %2728 = vmatmul.mubr.f32.gmra.mxu0 %v2395
      %v2729 = vpop.f32.mrf.mxu0
      %v2730 = vadd.f32 0.0, %v2729
      %v2731 = vpop.f32.mrf.mxu0
      %2732 = vmatprep.mubr.f32.mxu0 0.0
      %2733 = vmatmul.mubr.f32.gmra.mxu0 %v2400
      %v2734 = vpop.f32.mrf.mxu0
      %v2735 = vadd.f32 0.0, %v2734
      %v2736 = vpop.f32.mrf.mxu0
      %2737 = vmatprep.mubr.f32.mxu0 0.0
      %2738 = vmatmul.mubr.f32.gmra.mxu0 %v2405
      %v2739 = vpop.f32.mrf.mxu0
      %v2740 = vadd.f32 0.0, %v2739
      %v2741 = vpop.f32.mrf.mxu0
      %2742 = vdwg.mxu0
      %v2743 = vadd.f32 %v2640, %v2725
      %v2744 = vadd.f32 %v2645, %v2730
      %v2745 = vadd.f32 %v2650, %v2735
      %v2746 = vadd.f32 %v2655, %v2740
      %2747 = vmatprep.subr.mxu0 0.0
      %2748 = vmatpush1.msra.mxu0 %v899
      %2749 = vmatprep.subr.mxu0 0.0
      %2750 = vmatpush1.msra.mxu0 %v898
      %2751 = vmatprep.subr.mxu0 0.0
      %2752 = vmatpush1.msra.mxu0 %v897
      %2753 = vmatprep.subr.mxu0 0.0
      %2754 = vmatpush1.msra.mxu0 %v896
      %2755 = vmatprep.subr.mxu0 0.0
      %2756 = vmatpush1.msra.mxu0 %v895
      %2757 = vmatprep.subr.mxu0 0.0
      %2758 = vmatpush1.msra.mxu0 %v894
      %2759 = vmatprep.subr.mxu0 0.0
      %2760 = vmatpush1.msra.mxu0 %v893
      %2761 = vmatprep.subr.mxu0 0.0
      %2762 = vmatpush1.msra.mxu0 %v892
      %2763 = vmatprep.subr.mxu0 0.0
      %2764 = vmatpush1.msra.mxu0 %v891
      %2765 = vmatprep.subr.mxu0 0.0
      %2766 = vmatpush1.msra.mxu0 %v890
      %2767 = vmatprep.subr.mxu0 0.0
      %2768 = vmatpush1.msra.mxu0 %v889
      %2769 = vmatprep.subr.mxu0 0.0
      %2770 = vmatpush1.msra.mxu0 %v888
      %2771 = vmatprep.subr.mxu0 0.0
      %2772 = vmatpush1.msra.mxu0 %v887
      %2773 = vmatprep.subr.mxu0 0.0
      %2774 = vmatpush1.msra.mxu0 %v886
      %2775 = vmatprep.subr.mxu0 0.0
      %2776 = vmatpush1.msra.mxu0 %v885
      %2777 = vmatprep.subr.mxu0 0.0
      %2778 = vmatpush1.msra.mxu0 %v884
      %2779 = vmatprep.subr.mxu0 0.0
      %2780 = vmatpush2.msra.mxu0 0.0
      %2781 = vmatprep.subr.mxu0 0.0
      %2782 = vmatpush2.msra.mxu0 0.0
      %2783 = vmatprep.subr.mxu0 0.0
      %2784 = vmatpush2.msra.mxu0 0.0
      %2785 = vmatprep.subr.mxu0 0.0
      %2786 = vmatpush2.msra.mxu0 0.0
      %2787 = vmatprep.subr.mxu0 0.0
      %2788 = vmatpush2.msra.mxu0 0.0
      %2789 = vmatprep.subr.mxu0 0.0
      %2790 = vmatpush2.msra.mxu0 0.0
      %2791 = vmatprep.subr.mxu0 0.0
      %2792 = vmatpush2.msra.mxu0 0.0
      %2793 = vmatprep.subr.mxu0 0.0
      %2794 = vmatpush2.msra.mxu0 0.0
      %2795 = vmatprep.subr.mxu0 0.0
      %2796 = vmatpush2.msra.mxu0 0.0
      %2797 = vmatprep.subr.mxu0 0.0
      %2798 = vmatpush2.msra.mxu0 0.0
      %2799 = vmatprep.subr.mxu0 0.0
      %2800 = vmatpush2.msra.mxu0 0.0
      %2801 = vmatprep.subr.mxu0 0.0
      %2802 = vmatpush2.msra.mxu0 0.0
      %2803 = vmatprep.subr.mxu0 0.0
      %2804 = vmatpush2.msra.mxu0 0.0
      %2805 = vmatprep.subr.mxu0 0.0
      %2806 = vmatpush2.msra.mxu0 0.0
      %2807 = vmatprep.subr.mxu0 0.0
      %2808 = vmatpush2.msra.mxu0 0.0
      %2809 = vmatprep.subr.mxu0 0.0
      %2810 = vmatpush2.msra.mxu0 0.0
      %2811 = vmatprep.mubr.f32.mxu0 0.0
      %2812 = vmatmul.mubr.f32.gmra.mxu0 %v2410
      %v2813 = vpop.f32.mrf.mxu0
      %v2814 = vadd.f32 0.0, %v2813
      %v2815 = vpop.f32.mrf.mxu0
      %2816 = vmatprep.mubr.f32.mxu0 0.0
      %2817 = vmatmul.mubr.f32.gmra.mxu0 %v2415
      %v2818 = vpop.f32.mrf.mxu0
      %v2819 = vadd.f32 0.0, %v2818
      %v2820 = vpop.f32.mrf.mxu0
      %2821 = vmatprep.mubr.f32.mxu0 0.0
      %2822 = vmatmul.mubr.f32.gmra.mxu0 %v2420
      %v2823 = vpop.f32.mrf.mxu0
      %v2824 = vadd.f32 0.0, %v2823
      %v2825 = vpop.f32.mrf.mxu0
      %2826 = vmatprep.mubr.f32.mxu0 0.0
      %2827 = vmatmul.mubr.f32.gmra.mxu0 %v2425
      %v2828 = vpop.f32.mrf.mxu0
      %v2829 = vadd.f32 0.0, %v2828
      %v2830 = vpop.f32.mrf.mxu0
      %2831 = vdwg.mxu0
      %v2832 = vadd.f32 %v2743, %v2814
      %v2833 = vadd.f32 %v2744, %v2819
      %v2834 = vadd.f32 %v2745, %v2824
      %v2835 = vadd.f32 %v2746, %v2829
      %2836 = vmatprep.subr.mxu0 0.0
      %2837 = vmatpush1.msra.mxu0 %v948
      %2838 = vmatprep.subr.mxu0 0.0
      %2839 = vmatpush1.msra.mxu0 %v947
      %2840 = vmatprep.subr.mxu0 0.0
      %2841 = vmatpush1.msra.mxu0 %v946
      %2842 = vmatprep.subr.mxu0 0.0
      %2843 = vmatpush1.msra.mxu0 %v945
      %2844 = vmatprep.subr.mxu0 0.0
      %2845 = vmatpush1.msra.mxu0 %v944
      %2846 = vmatprep.subr.mxu0 0.0
      %2847 = vmatpush1.msra.mxu0 %v943
      %2848 = vmatprep.subr.mxu0 0.0
      %2849 = vmatpush1.msra.mxu0 %v942
      %2850 = vmatprep.subr.mxu0 0.0
      %2851 = vmatpush1.msra.mxu0 %v941
      %2852 = vmatprep.subr.mxu0 0.0
      %2853 = vmatpush1.msra.mxu0 %v940
      %2854 = vmatprep.subr.mxu0 0.0
      %2855 = vmatpush1.msra.mxu0 %v939
      %2856 = vmatprep.subr.mxu0 0.0
      %2857 = vmatpush1.msra.mxu0 %v938
      %2858 = vmatprep.subr.mxu0 0.0
      %2859 = vmatpush1.msra.mxu0 %v937
      %2860 = vmatprep.subr.mxu0 0.0
      %2861 = vmatpush1.msra.mxu0 %v936
      %2862 = vmatprep.subr.mxu0 0.0
      %2863 = vmatpush1.msra.mxu0 %v935
      %2864 = vmatprep.subr.mxu0 0.0
      %2865 = vmatpush1.msra.mxu0 %v934
      %2866 = vmatprep.subr.mxu0 0.0
      %2867 = vmatpush1.msra.mxu0 %v933
      %2868 = vmatprep.subr.mxu0 0.0
      %2869 = vmatpush2.msra.mxu0 0.0
      %2870 = vmatprep.subr.mxu0 0.0
      %2871 = vmatpush2.msra.mxu0 0.0
      %2872 = vmatprep.subr.mxu0 0.0
      %2873 = vmatpush2.msra.mxu0 0.0
      %2874 = vmatprep.subr.mxu0 0.0
      %2875 = vmatpush2.msra.mxu0 0.0
      %2876 = vmatprep.subr.mxu0 0.0
      %2877 = vmatpush2.msra.mxu0 0.0
      %2878 = vmatprep.subr.mxu0 0.0
      %2879 = vmatpush2.msra.mxu0 0.0
      %2880 = vmatprep.subr.mxu0 0.0
      %2881 = vmatpush2.msra.mxu0 0.0
      %2882 = vmatprep.subr.mxu0 0.0
      %2883 = vmatpush2.msra.mxu0 0.0
      %2884 = vmatprep.subr.mxu0 0.0
      %2885 = vmatpush2.msra.mxu0 0.0
      %2886 = vmatprep.subr.mxu0 0.0
      %2887 = vmatpush2.msra.mxu0 0.0
      %2888 = vmatprep.subr.mxu0 0.0
      %2889 = vmatpush2.msra.mxu0 0.0
      %2890 = vmatprep.subr.mxu0 0.0
      %2891 = vmatpush2.msra.mxu0 0.0
      %2892 = vmatprep.subr.mxu0 0.0
      %2893 = vmatpush2.msra.mxu0 0.0
      %2894 = vmatprep.subr.mxu0 0.0
      %2895 = vmatpush2.msra.mxu0 0.0
      %2896 = vmatprep.subr.mxu0 0.0
      %2897 = vmatpush2.msra.mxu0 0.0
      %2898 = vmatprep.subr.mxu0 0.0
      %2899 = vmatpush2.msra.mxu0 0.0
      %2900 = vmatprep.mubr.f32.mxu0 0.0
      %2901 = vmatmul.mubr.f32.gmra.mxu0 %v2430
      %v2902 = vpop.f32.mrf.mxu0
      %v2903 = vadd.f32 0.0, %v2902
      %v2904 = vpop.f32.mrf.mxu0
      %2905 = vmatprep.mubr.f32.mxu0 0.0
      %2906 = vmatmul.mubr.f32.gmra.mxu0 %v2435
      %v2907 = vpop.f32.mrf.mxu0
      %v2908 = vadd.f32 0.0, %v2907
      %v2909 = vpop.f32.mrf.mxu0
      %2910 = vmatprep.mubr.f32.mxu0 0.0
      %2911 = vmatmul.mubr.f32.gmra.mxu0 %v2440
      %v2912 = vpop.f32.mrf.mxu0
      %v2913 = vadd.f32 0.0, %v2912
      %v2914 = vpop.f32.mrf.mxu0
      %2915 = vmatprep.mubr.f32.mxu0 0.0
      %2916 = vmatmul.mubr.f32.gmra.mxu0 %v2445
      %v2917 = vpop.f32.mrf.mxu0
      %v2918 = vadd.f32 0.0, %v2917
      %v2919 = vpop.f32.mrf.mxu0
      %2920 = vdwg.mxu0
      %v2921 = vadd.f32 %v2832, %v2903
      %v2922 = vadd.f32 %v2833, %v2908
      %v2923 = vadd.f32 %v2834, %v2913
      %v2924 = vadd.f32 %v2835, %v2918
      %2925 = vmatprep.subr.mxu0 0.0
      %2926 = vmatpush1.msra.mxu0 %v997
      %2927 = vmatprep.subr.mxu0 0.0
      %2928 = vmatpush1.msra.mxu0 %v996
      %2929 = vmatprep.subr.mxu0 0.0
      %2930 = vmatpush1.msra.mxu0 %v995
      %2931 = vmatprep.subr.mxu0 0.0
      %2932 = vmatpush1.msra.mxu0 %v994
      %2933 = vmatprep.subr.mxu0 0.0
      %2934 = vmatpush1.msra.mxu0 %v993
      %2935 = vmatprep.subr.mxu0 0.0
      %2936 = vmatpush1.msra.mxu0 %v992
      %2937 = vmatprep.subr.mxu0 0.0
      %2938 = vmatpush1.msra.mxu0 %v991
      %2939 = vmatprep.subr.mxu0 0.0
      %2940 = vmatpush1.msra.mxu0 %v990
      %2941 = vmatprep.subr.mxu0 0.0
      %2942 = vmatpush1.msra.mxu0 %v989
      %2943 = vmatprep.subr.mxu0 0.0
      %2944 = vmatpush1.msra.mxu0 %v988
      %2945 = vmatprep.subr.mxu0 0.0
      %2946 = vmatpush1.msra.mxu0 %v987
      %2947 = vmatprep.subr.mxu0 0.0
      %2948 = vmatpush1.msra.mxu0 %v986
      %2949 = vmatprep.subr.mxu0 0.0
      %2950 = vmatpush1.msra.mxu0 %v985
      %2951 = vmatprep.subr.mxu0 0.0
      %2952 = vmatpush1.msra.mxu0 %v984
      %2953 = vmatprep.subr.mxu0 0.0
      %2954 = vmatpush1.msra.mxu0 %v983
      %2955 = vmatprep.subr.mxu0 0.0
      %2956 = vmatpush1.msra.mxu0 %v982
      %2957 = vmatprep.subr.mxu0 0.0
      %2958 = vmatpush2.msra.mxu0 0.0
      %2959 = vmatprep.subr.mxu0 0.0
      %2960 = vmatpush2.msra.mxu0 0.0
      %2961 = vmatprep.subr.mxu0 0.0
      %2962 = vmatpush2.msra.mxu0 0.0
      %2963 = vmatprep.subr.mxu0 0.0
      %2964 = vmatpush2.msra.mxu0 0.0
      %2965 = vmatprep.subr.mxu0 0.0
      %2966 = vmatpush2.msra.mxu0 0.0
      %2967 = vmatprep.subr.mxu0 0.0
      %2968 = vmatpush2.msra.mxu0 0.0
      %2969 = vmatprep.subr.mxu0 0.0
      %2970 = vmatpush2.msra.mxu0 0.0
      %2971 = vmatprep.subr.mxu0 0.0
      %2972 = vmatpush2.msra.mxu0 0.0
      %2973 = vmatprep.subr.mxu0 0.0
      %2974 = vmatpush2.msra.mxu0 0.0
      %2975 = vmatprep.subr.mxu0 0.0
      %2976 = vmatpush2.msra.mxu0 0.0
      %2977 = vmatprep.subr.mxu0 0.0
      %2978 = vmatpush2.msra.mxu0 0.0
      %2979 = vmatprep.subr.mxu0 0.0
      %2980 = vmatpush2.msra.mxu0 0.0
      %2981 = vmatprep.subr.mxu0 0.0
      %2982 = vmatpush2.msra.mxu0 0.0
      %2983 = vmatprep.subr.mxu0 0.0
      %2984 = vmatpush2.msra.mxu0 0.0
      %2985 = vmatprep.subr.mxu0 0.0
      %2986 = vmatpush2.msra.mxu0 0.0
      %2987 = vmatprep.subr.mxu0 0.0
      %2988 = vmatpush2.msra.mxu0 0.0
      %2989 = vmatprep.mubr.f32.mxu0 0.0
      %2990 = vmatmul.mubr.f32.gmra.mxu0 %v2450
      %v2991 = vpop.f32.mrf.mxu0
      %v2992 = vadd.f32 0.0, %v2991
      %v2993 = vpop.f32.mrf.mxu0
      %2994 = vmatprep.mubr.f32.mxu0 0.0
      %2995 = vmatmul.mubr.f32.gmra.mxu0 %v2455
      %v2996 = vpop.f32.mrf.mxu0
      %v2997 = vadd.f32 0.0, %v2996
      %v2998 = vpop.f32.mrf.mxu0
      %2999 = vmatprep.mubr.f32.mxu0 0.0
      %3000 = vmatmul.mubr.f32.gmra.mxu0 %v2460
      %v3001 = vpop.f32.mrf.mxu0
      %v3002 = vadd.f32 0.0, %v3001
      %v3003 = vpop.f32.mrf.mxu0
      %3004 = vmatprep.mubr.f32.mxu0 0.0
      %3005 = vmatmul.mubr.f32.gmra.mxu0 %v2465
      %v3006 = vpop.f32.mrf.mxu0
      %v3007 = vadd.f32 0.0, %v3006
      %v3008 = vpop.f32.mrf.mxu0
      %3009 = vdwg.mxu0
      %v3010 = vadd.f32 %v2921, %v2992
      %v3011 = vadd.f32 %v2922, %v2997
      %v3012 = vadd.f32 %v2923, %v3002
      %v3013 = vadd.f32 %v2924, %v3007
      %3014 = vmatprep.subr.mxu0 0.0
      %3015 = vmatpush1.msra.mxu0 %v1046
      %3016 = vmatprep.subr.mxu0 0.0
      %3017 = vmatpush1.msra.mxu0 %v1045
      %3018 = vmatprep.subr.mxu0 0.0
      %3019 = vmatpush1.msra.mxu0 %v1044
      %3020 = vmatprep.subr.mxu0 0.0
      %3021 = vmatpush1.msra.mxu0 %v1043
      %3022 = vmatprep.subr.mxu0 0.0
      %3023 = vmatpush1.msra.mxu0 %v1042
      %3024 = vmatprep.subr.mxu0 0.0
      %3025 = vmatpush1.msra.mxu0 %v1041
      %3026 = vmatprep.subr.mxu0 0.0
      %3027 = vmatpush1.msra.mxu0 %v1040
      %3028 = vmatprep.subr.mxu0 0.0
      %3029 = vmatpush1.msra.mxu0 %v1039
      %3030 = vmatprep.subr.mxu0 0.0
      %3031 = vmatpush1.msra.mxu0 %v1038
      %3032 = vmatprep.subr.mxu0 0.0
      %3033 = vmatpush1.msra.mxu0 %v1037
      %3034 = vmatprep.subr.mxu0 0.0
      %3035 = vmatpush1.msra.mxu0 %v1036
      %3036 = vmatprep.subr.mxu0 0.0
      %3037 = vmatpush1.msra.mxu0 %v1035
      %3038 = vmatprep.subr.mxu0 0.0
      %3039 = vmatpush1.msra.mxu0 %v1034
      %3040 = vmatprep.subr.mxu0 0.0
      %3041 = vmatpush1.msra.mxu0 %v1033
      %3042 = vmatprep.subr.mxu0 0.0
      %3043 = vmatpush1.msra.mxu0 %v1032
      %3044 = vmatprep.subr.mxu0 0.0
      %3045 = vmatpush1.msra.mxu0 %v1031
      %3046 = vmatprep.subr.mxu0 0.0
      %3047 = vmatpush2.msra.mxu0 0.0
      %3048 = vmatprep.subr.mxu0 0.0
      %3049 = vmatpush2.msra.mxu0 0.0
      %3050 = vmatprep.subr.mxu0 0.0
      %3051 = vmatpush2.msra.mxu0 0.0
      %3052 = vmatprep.subr.mxu0 0.0
      %3053 = vmatpush2.msra.mxu0 0.0
      %3054 = vmatprep.subr.mxu0 0.0
      %3055 = vmatpush2.msra.mxu0 0.0
      %3056 = vmatprep.subr.mxu0 0.0
      %3057 = vmatpush2.msra.mxu0 0.0
      %3058 = vmatprep.subr.mxu0 0.0
      %3059 = vmatpush2.msra.mxu0 0.0
      %3060 = vmatprep.subr.mxu0 0.0
      %3061 = vmatpush2.msra.mxu0 0.0
      %3062 = vmatprep.subr.mxu0 0.0
      %3063 = vmatpush2.msra.mxu0 0.0
      %3064 = vmatprep.subr.mxu0 0.0
      %3065 = vmatpush2.msra.mxu0 0.0
      %3066 = vmatprep.subr.mxu0 0.0
      %3067 = vmatpush2.msra.mxu0 0.0
      %3068 = vmatprep.subr.mxu0 0.0
      %3069 = vmatpush2.msra.mxu0 0.0
      %3070 = vmatprep.subr.mxu0 0.0
      %3071 = vmatpush2.msra.mxu0 0.0
      %3072 = vmatprep.subr.mxu0 0.0
      %3073 = vmatpush2.msra.mxu0 0.0
      %3074 = vmatprep.subr.mxu0 0.0
      %3075 = vmatpush2.msra.mxu0 0.0
      %3076 = vmatprep.subr.mxu0 0.0
      %3077 = vmatpush2.msra.mxu0 0.0
      %3078 = vmatprep.mubr.f32.mxu0 0.0
      %3079 = vmatmul.mubr.f32.gmra.mxu0 %v2470
      %v3080 = vpop.f32.mrf.mxu0
      %v3081 = vadd.f32 0.0, %v3080
      %v3082 = vpop.f32.mrf.mxu0
      %3083 = vmatprep.mubr.f32.mxu0 0.0
      %3084 = vmatmul.mubr.f32.gmra.mxu0 %v2475
      %v3085 = vpop.f32.mrf.mxu0
      %v3086 = vadd.f32 0.0, %v3085
      %v3087 = vpop.f32.mrf.mxu0
      %3088 = vmatprep.mubr.f32.mxu0 0.0
      %3089 = vmatmul.mubr.f32.gmra.mxu0 %v2480
      %v3090 = vpop.f32.mrf.mxu0
      %v3091 = vadd.f32 0.0, %v3090
      %v3092 = vpop.f32.mrf.mxu0
      %3093 = vmatprep.mubr.f32.mxu0 0.0
      %3094 = vmatmul.mubr.f32.gmra.mxu0 %v2485
      %v3095 = vpop.f32.mrf.mxu0
      %v3096 = vadd.f32 0.0, %v3095
      %v3097 = vpop.f32.mrf.mxu0
      %3098 = vdwg.mxu0
      %v3099 = vadd.f32 %v3010, %v3081
      %v3100 = vadd.f32 %v3011, %v3086
      %v3101 = vadd.f32 %v3012, %v3091
      %v3102 = vadd.f32 %v3013, %v3096
      %v3103 = vld [vmem:[%s5] sm:$0xff]
      %v3104 = vld [vmem:[%s5 + $0x8] sm:$0xff]
      %v3105 = vld [vmem:[%s5 + $0x10] sm:$0xff]
      %v3106 = vld [vmem:[%s5 + $0x18] sm:$0xff]
      %3108 = vset.pattern.permute.xlu0 0
      %3109 = vperm.xlu0 %3108, %v3103
      %v3110 = vpop.permute.xlu0 %3109
      %3113 = vset.pattern.permute.xlu0 0
      %3114 = vperm.xlu0 %3113, %v3104
      %v3115 = vpop.permute.xlu0 %3114
      %3118 = vset.pattern.permute.xlu0 0
      %3119 = vperm.xlu0 %3118, %v3105
      %v3120 = vpop.permute.xlu0 %3119
      %3123 = vset.pattern.permute.xlu0 0
      %3124 = vperm.xlu0 %3123, %v3106
      %v3125 = vpop.permute.xlu0 %3124
      %v3127 = vadd.f32 %v3099, %v3110
      %v3128 = vadd.f32 %v3100, %v3115
      %v3129 = vadd.f32 %v3101, %v3120
      %v3130 = vadd.f32 %v3102, %v3125
      %v3131 = vmax.f32 %v3127, 0.0
      %v3132 = vmax.f32 %v3128, 0.0
      %v3133 = vmax.f32 %v3129, 0.0
      %v3134 = vmax.f32 %v3130, 0.0
      %s3135 = scalar_lea.vmem %s5, 32
      %v3136 = vld [vmem:[%s3135] sm:$0xff]
      %v3137 = vld [vmem:[%s3135 + $0x8] sm:$0xff]
      %v3138 = vld [vmem:[%s3135 + $0x10] sm:$0xff]
      %v3139 = vld [vmem:[%s3135 + $0x18] sm:$0xff]
      %3141 = vset.pattern.permute.xlu0 0
      %3142 = vperm.xlu0 %3141, %v3136
      %v3143 = vpop.permute.xlu0 %3142
      %3146 = vset.pattern.permute.xlu0 0
      %3147 = vperm.xlu0 %3146, %v3137
      %v3148 = vpop.permute.xlu0 %3147
      %3151 = vset.pattern.permute.xlu0 0
      %3152 = vperm.xlu0 %3151, %v3138
      %v3153 = vpop.permute.xlu0 %3152
      %3156 = vset.pattern.permute.xlu0 0
      %3157 = vperm.xlu0 %3156, %v3139
      %v3158 = vpop.permute.xlu0 %3157
      %v3160 = vmul.f32 %v3131, %v3143
      %v3161 = vmul.f32 %v3132, %v3148
      %v3162 = vmul.f32 %v3133, %v3153
      %v3163 = vmul.f32 %v3134, %v3158
      %s3164 = scalar_lea.vmem %s5, 64
      %v3165 = vld [vmem:[%s3164] sm:$0xff]
      %v3166 = vld [vmem:[%s3164 + $0x8] sm:$0xff]
      %v3167 = vld [vmem:[%s3164 + $0x10] sm:$0xff]
      %v3168 = vld [vmem:[%s3164 + $0x18] sm:$0xff]
      %3170 = vset.pattern.permute.xlu0 0
      %3171 = vperm.xlu0 %3170, %v3165
      %v3172 = vpop.permute.xlu0 %3171
      %3175 = vset.pattern.permute.xlu0 0
      %3176 = vperm.xlu0 %3175, %v3166
      %v3177 = vpop.permute.xlu0 %3176
      %3180 = vset.pattern.permute.xlu0 0
      %3181 = vperm.xlu0 %3180, %v3167
      %v3182 = vpop.permute.xlu0 %3181
      %3185 = vset.pattern.permute.xlu0 0
      %3186 = vperm.xlu0 %3185, %v3168
      %v3187 = vpop.permute.xlu0 %3186
      %v3189 = vadd.f32 %v3160, %v3172
      %v3190 = vadd.f32 %v3161, %v3177
      %v3191 = vadd.f32 %v3162, %v3182
      %v3192 = vadd.f32 %v3163, %v3187
      %v3193 = vadd.f32 %v2153, %v3189
      %v3194 = vadd.f32 %v2158, %v3190
      %v3195 = vadd.f32 %v2163, %v3191
      %v3196 = vadd.f32 %v2168, %v3192
      %v3197 = vld [vmem:[%s6] sm:$0xff]
      %v3198 = vld [vmem:[%s6 + $0x8] sm:$0xff]
      %v3199 = vld [vmem:[%s6 + $0x10] sm:$0xff]
      %v3200 = vld [vmem:[%s6 + $0x18] sm:$0xff]
      %v3201 = vld [vmem:[%s6 + $0x20] sm:$0xff]
      %v3202 = vld [vmem:[%s6 + $0x28] sm:$0xff]
      %v3203 = vld [vmem:[%s6 + $0x30] sm:$0xff]
      %v3204 = vld [vmem:[%s6 + $0x38] sm:$0xff]
      %v3205 = vld [vmem:[%s6 + $0x40] sm:$0xff]
      %v3206 = vld [vmem:[%s6 + $0x48] sm:$0xff]
      %v3207 = vld [vmem:[%s6 + $0x50] sm:$0xff]
      %v3208 = vld [vmem:[%s6 + $0x58] sm:$0xff]
      %v3209 = vld [vmem:[%s6 + $0x60] sm:$0xff]
      %v3210 = vld [vmem:[%s6 + $0x68] sm:$0xff]
      %v3211 = vld [vmem:[%s6 + $0x70] sm:$0xff]
      %v3212 = vld [vmem:[%s6 + $0x78] sm:$0xff]
      %v3213 = vld [vmem:[%s6 + $0x80] sm:$0xff]
      %v3214 = vld [vmem:[%s6 + $0x88] sm:$0xff]
      %v3215 = vld [vmem:[%s6 + $0x90] sm:$0xff]
      %v3216 = vld [vmem:[%s6 + $0x98] sm:$0xff]
      %v3217 = vld [vmem:[%s6 + $0xa0] sm:$0xff]
      %v3218 = vld [vmem:[%s6 + $0xa8] sm:$0xff]
      %v3219 = vld [vmem:[%s6 + $0xb0] sm:$0xff]
      %v3220 = vld [vmem:[%s6 + $0xb8] sm:$0xff]
      %v3221 = vld [vmem:[%s6 + $0xc0] sm:$0xff]
      %v3222 = vld [vmem:[%s6 + $0xc8] sm:$0xff]
      %v3223 = vld [vmem:[%s6 + $0xd0] sm:$0xff]
      %v3224 = vld [vmem:[%s6 + $0xd8] sm:$0xff]
      %v3226 = vsel %vm1079, %v3197, 0
      %v3229 = vsel %vm1079, %v3198, 0
      %v3232 = vsel %vm1079, %v3199, 0
      %v3235 = vsel %vm1079, %v3200, 0
      %v3238 = vsel %vm1079, %v3201, 0
      %v3241 = vsel %vm1079, %v3202, 0
      %v3244 = vsel %vm1079, %v3203, 0
      %v3247 = vsel %vm1079, %v3204, 0
      %v3250 = vsel %vm1079, %v3205, 0
      %v3253 = vsel %vm1079, %v3206, 0
      %v3256 = vsel %vm1079, %v3207, 0
      %v3259 = vsel %vm1079, %v3208, 0
      %v3262 = vsel %vm1079, %v3209, 0
      %v3265 = vsel %vm1079, %v3210, 0
      %v3268 = vsel %vm1079, %v3211, 0
      %v3271 = vsel %vm1079, %v3212, 0
      %v3274 = vsel %vm1079, %v3213, 0
      %v3277 = vsel %vm1079, %v3214, 0
      %v3280 = vsel %vm1079, %v3215, 0
      %v3283 = vsel %vm1079, %v3216, 0
      %v3286 = vsel %vm1079, %v3217, 0
      %v3289 = vsel %vm1079, %v3218, 0
      %v3292 = vsel %vm1079, %v3219, 0
      %v3295 = vsel %vm1079, %v3220, 0
      %v3298 = vsel %vm1079, %v3221, 0
      %v3301 = vsel %vm1079, %v3222, 0
      %v3304 = vsel %vm1079, %v3223, 0
      %v3307 = vsel %vm1079, %v3224, 0
      %3309 = vmatprep.subr.mxu0 0.0
      %3310 = vmatpush1.msra.mxu0 0.0
      %3311 = vmatprep.subr.mxu0 0.0
      %3312 = vmatpush1.msra.mxu0 0.0
      %3313 = vmatprep.subr.mxu0 0.0
      %3314 = vmatpush1.msra.mxu0 0.0
      %3315 = vmatprep.subr.mxu0 0.0
      %3316 = vmatpush1.msra.mxu0 0.0
      %3317 = vmatprep.subr.mxu0 0.0
      %3318 = vmatpush1.msra.mxu0 0.0
      %3319 = vmatprep.subr.mxu0 0.0
      %3320 = vmatpush1.msra.mxu0 0.0
      %3321 = vmatprep.subr.mxu0 0.0
      %3322 = vmatpush1.msra.mxu0 0.0
      %3323 = vmatprep.subr.mxu0 0.0
      %3324 = vmatpush1.msra.mxu0 0.0
      %3325 = vmatprep.subr.mxu0 0.0
      %3326 = vmatpush1.msra.mxu0 0.0
      %3327 = vmatprep.subr.mxu0 0.0
      %3328 = vmatpush1.msra.mxu0 0.0
      %3329 = vmatprep.subr.mxu0 0.0
      %3330 = vmatpush1.msra.mxu0 0.0
      %3331 = vmatprep.subr.mxu0 0.0
      %3332 = vmatpush1.msra.mxu0 0.0
      %3333 = vmatprep.subr.mxu0 0.0
      %3334 = vmatpush1.msra.mxu0 0.0
      %3335 = vmatprep.subr.mxu0 0.0
      %3336 = vmatpush1.msra.mxu0 0.0
      %3337 = vmatprep.subr.mxu0 0.0
      %3338 = vmatpush1.msra.mxu0 %v685
      %3339 = vmatprep.subr.mxu0 0.0
      %3340 = vmatpush1.msra.mxu0 %v684
      %3341 = vmatprep.subr.mxu0 0.0
      %3342 = vmatpush2.msra.mxu0 0.0
      %3343 = vmatprep.subr.mxu0 0.0
      %3344 = vmatpush2.msra.mxu0 0.0
      %3345 = vmatprep.subr.mxu0 0.0
      %3346 = vmatpush2.msra.mxu0 0.0
      %3347 = vmatprep.subr.mxu0 0.0
      %3348 = vmatpush2.msra.mxu0 0.0
      %3349 = vmatprep.subr.mxu0 0.0
      %3350 = vmatpush2.msra.mxu0 0.0
      %3351 = vmatprep.subr.mxu0 0.0
      %3352 = vmatpush2.msra.mxu0 0.0
      %3353 = vmatprep.subr.mxu0 0.0
      %3354 = vmatpush2.msra.mxu0 0.0
      %3355 = vmatprep.subr.mxu0 0.0
      %3356 = vmatpush2.msra.mxu0 0.0
      %3357 = vmatprep.subr.mxu0 0.0
      %3358 = vmatpush2.msra.mxu0 0.0
      %3359 = vmatprep.subr.mxu0 0.0
      %3360 = vmatpush2.msra.mxu0 0.0
      %3361 = vmatprep.subr.mxu0 0.0
      %3362 = vmatpush2.msra.mxu0 0.0
      %3363 = vmatprep.subr.mxu0 0.0
      %3364 = vmatpush2.msra.mxu0 0.0
      %3365 = vmatprep.subr.mxu0 0.0
      %3366 = vmatpush2.msra.mxu0 0.0
      %3367 = vmatprep.subr.mxu0 0.0
      %3368 = vmatpush2.msra.mxu0 0.0
      %3369 = vmatprep.subr.mxu0 0.0
      %3370 = vmatpush2.msra.mxu0 0.0
      %3371 = vmatprep.subr.mxu0 0.0
      %3372 = vmatpush2.msra.mxu0 0.0
      %3373 = vmatprep.mubr.f32.mxu0 0.0
      %3374 = vmatmul.mubr.f32.gmra.mxu0 %v3226
      %v3375 = vpop.f32.mrf.mxu0
      %v3376 = vadd.f32 0.0, %v3375
      %v3377 = vpop.f32.mrf.mxu0
      %3378 = vmatprep.mubr.f32.mxu0 0.0
      %3379 = vmatmul.mubr.f32.gmra.mxu0 %v3229
      %v3380 = vpop.f32.mrf.mxu0
      %v3381 = vadd.f32 0.0, %v3380
      %v3382 = vpop.f32.mrf.mxu0
      %3383 = vmatprep.mubr.f32.mxu0 0.0
      %3384 = vmatmul.mubr.f32.gmra.mxu0 %v3232
      %v3385 = vpop.f32.mrf.mxu0
      %v3386 = vadd.f32 0.0, %v3385
      %v3387 = vpop.f32.mrf.mxu0
      %3388 = vmatprep.mubr.f32.mxu0 0.0
      %3389 = vmatmul.mubr.f32.gmra.mxu0 %v3235
      %v3390 = vpop.f32.mrf.mxu0
      %v3391 = vadd.f32 0.0, %v3390
      %v3392 = vpop.f32.mrf.mxu0
      %3393 = vmatprep.mubr.f32.mxu0 0.0
      %3394 = vmatmul.mubr.f32.gmra.mxu0 %v3238
      %v3395 = vpop.f32.mrf.mxu0
      %v3396 = vadd.f32 0.0, %v3395
      %v3397 = vpop.f32.mrf.mxu0
      %3398 = vmatprep.mubr.f32.mxu0 0.0
      %3399 = vmatmul.mubr.f32.gmra.mxu0 %v3241
      %v3400 = vpop.f32.mrf.mxu0
      %v3401 = vadd.f32 0.0, %v3400
      %v3402 = vpop.f32.mrf.mxu0
      %3403 = vmatprep.mubr.f32.mxu0 0.0
      %3404 = vmatmul.mubr.f32.gmra.mxu0 %v3244
      %v3405 = vpop.f32.mrf.mxu0
      %v3406 = vadd.f32 0.0, %v3405
      %v3407 = vpop.f32.mrf.mxu0
      %3408 = vmatprep.mubr.f32.mxu0 0.0
      %3409 = vmatmul.mubr.f32.gmra.mxu0 %v3247
      %v3410 = vpop.f32.mrf.mxu0
      %v3411 = vadd.f32 0.0, %v3410
      %v3412 = vpop.f32.mrf.mxu0
      %3413 = vmatprep.mubr.f32.mxu0 0.0
      %3414 = vmatmul.mubr.f32.gmra.mxu0 %v3250
      %v3415 = vpop.f32.mrf.mxu0
      %v3416 = vadd.f32 0.0, %v3415
      %v3417 = vpop.f32.mrf.mxu0
      %3418 = vmatprep.mubr.f32.mxu0 0.0
      %3419 = vmatmul.mubr.f32.gmra.mxu0 %v3253
      %v3420 = vpop.f32.mrf.mxu0
      %v3421 = vadd.f32 0.0, %v3420
      %v3422 = vpop.f32.mrf.mxu0
      %3423 = vmatprep.mubr.f32.mxu0 0.0
      %3424 = vmatmul.mubr.f32.gmra.mxu0 %v3256
      %v3425 = vpop.f32.mrf.mxu0
      %v3426 = vadd.f32 0.0, %v3425
      %v3427 = vpop.f32.mrf.mxu0
      %3428 = vmatprep.mubr.f32.mxu0 0.0
      %3429 = vmatmul.mubr.f32.gmra.mxu0 %v3259
      %v3430 = vpop.f32.mrf.mxu0
      %v3431 = vadd.f32 0.0, %v3430
      %v3432 = vpop.f32.mrf.mxu0
      %3433 = vmatprep.mubr.f32.mxu0 0.0
      %3434 = vmatmul.mubr.f32.gmra.mxu0 %v3262
      %v3435 = vpop.f32.mrf.mxu0
      %v3436 = vadd.f32 0.0, %v3435
      %v3437 = vpop.f32.mrf.mxu0
      %3438 = vmatprep.mubr.f32.mxu0 0.0
      %3439 = vmatmul.mubr.f32.gmra.mxu0 %v3265
      %v3440 = vpop.f32.mrf.mxu0
      %v3441 = vadd.f32 0.0, %v3440
      %v3442 = vpop.f32.mrf.mxu0
      %3443 = vmatprep.mubr.f32.mxu0 0.0
      %3444 = vmatmul.mubr.f32.gmra.mxu0 %v3268
      %v3445 = vpop.f32.mrf.mxu0
      %v3446 = vadd.f32 0.0, %v3445
      %v3447 = vpop.f32.mrf.mxu0
      %3448 = vmatprep.mubr.f32.mxu0 0.0
      %3449 = vmatmul.mubr.f32.gmra.mxu0 %v3271
      %v3450 = vpop.f32.mrf.mxu0
      %v3451 = vadd.f32 0.0, %v3450
      %v3452 = vpop.f32.mrf.mxu0
      %3453 = vmatprep.mubr.f32.mxu0 0.0
      %3454 = vmatmul.mubr.f32.gmra.mxu0 %v3274
      %v3455 = vpop.f32.mrf.mxu0
      %v3456 = vadd.f32 0.0, %v3455
      %v3457 = vpop.f32.mrf.mxu0
      %3458 = vmatprep.mubr.f32.mxu0 0.0
      %3459 = vmatmul.mubr.f32.gmra.mxu0 %v3277
      %v3460 = vpop.f32.mrf.mxu0
      %v3461 = vadd.f32 0.0, %v3460
      %v3462 = vpop.f32.mrf.mxu0
      %3463 = vmatprep.mubr.f32.mxu0 0.0
      %3464 = vmatmul.mubr.f32.gmra.mxu0 %v3280
      %v3465 = vpop.f32.mrf.mxu0
      %v3466 = vadd.f32 0.0, %v3465
      %v3467 = vpop.f32.mrf.mxu0
      %3468 = vmatprep.mubr.f32.mxu0 0.0
      %3469 = vmatmul.mubr.f32.gmra.mxu0 %v3283
      %v3470 = vpop.f32.mrf.mxu0
      %v3471 = vadd.f32 0.0, %v3470
      %v3472 = vpop.f32.mrf.mxu0
      %3473 = vmatprep.mubr.f32.mxu0 0.0
      %3474 = vmatmul.mubr.f32.gmra.mxu0 %v3286
      %v3475 = vpop.f32.mrf.mxu0
      %v3476 = vadd.f32 0.0, %v3475
      %v3477 = vpop.f32.mrf.mxu0
      %3478 = vmatprep.mubr.f32.mxu0 0.0
      %3479 = vmatmul.mubr.f32.gmra.mxu0 %v3289
      %v3480 = vpop.f32.mrf.mxu0
      %v3481 = vadd.f32 0.0, %v3480
      %v3482 = vpop.f32.mrf.mxu0
      %3483 = vmatprep.mubr.f32.mxu0 0.0
      %3484 = vmatmul.mubr.f32.gmra.mxu0 %v3292
      %v3485 = vpop.f32.mrf.mxu0
      %v3486 = vadd.f32 0.0, %v3485
      %v3487 = vpop.f32.mrf.mxu0
      %3488 = vmatprep.mubr.f32.mxu0 0.0
      %3489 = vmatmul.mubr.f32.gmra.mxu0 %v3295
      %v3490 = vpop.f32.mrf.mxu0
      %v3491 = vadd.f32 0.0, %v3490
      %v3492 = vpop.f32.mrf.mxu0
      %3493 = vmatprep.mubr.f32.mxu0 0.0
      %3494 = vmatmul.mubr.f32.gmra.mxu0 %v3298
      %v3495 = vpop.f32.mrf.mxu0
      %v3496 = vadd.f32 0.0, %v3495
      %v3497 = vpop.f32.mrf.mxu0
      %3498 = vmatprep.mubr.f32.mxu0 0.0
      %3499 = vmatmul.mubr.f32.gmra.mxu0 %v3301
      %v3500 = vpop.f32.mrf.mxu0
      %v3501 = vadd.f32 0.0, %v3500
      %v3502 = vpop.f32.mrf.mxu0
      %3503 = vmatprep.mubr.f32.mxu0 0.0
      %3504 = vmatmul.mubr.f32.gmra.mxu0 %v3304
      %v3505 = vpop.f32.mrf.mxu0
      %v3506 = vadd.f32 0.0, %v3505
      %v3507 = vpop.f32.mrf.mxu0
      %3508 = vmatprep.mubr.f32.mxu0 0.0
      %3509 = vmatmul.mubr.f32.gmra.mxu0 %v3307
      %v3510 = vpop.f32.mrf.mxu0
      %v3511 = vadd.f32 0.0, %v3510
      %v3512 = vpop.f32.mrf.mxu0
      %3513 = vdwg.mxu0
      %3514 = vmatprep.subr.mxu0 0.0
      %3515 = vmatpush1.msra.mxu0 %v802
      %3516 = vmatprep.subr.mxu0 0.0
      %3517 = vmatpush1.msra.mxu0 %v801
      %3518 = vmatprep.subr.mxu0 0.0
      %3519 = vmatpush1.msra.mxu0 %v800
      %3520 = vmatprep.subr.mxu0 0.0
      %3521 = vmatpush1.msra.mxu0 %v799
      %3522 = vmatprep.subr.mxu0 0.0
      %3523 = vmatpush1.msra.mxu0 %v798
      %3524 = vmatprep.subr.mxu0 0.0
      %3525 = vmatpush1.msra.mxu0 %v797
      %3526 = vmatprep.subr.mxu0 0.0
      %3527 = vmatpush1.msra.mxu0 %v796
      %3528 = vmatprep.subr.mxu0 0.0
      %3529 = vmatpush1.msra.mxu0 %v795
      %3530 = vmatprep.subr.mxu0 0.0
      %3531 = vmatpush1.msra.mxu0 %v794
      %3532 = vmatprep.subr.mxu0 0.0
      %3533 = vmatpush1.msra.mxu0 %v793
      %3534 = vmatprep.subr.mxu0 0.0
      %3535 = vmatpush1.msra.mxu0 %v792
      %3536 = vmatprep.subr.mxu0 0.0
      %3537 = vmatpush1.msra.mxu0 %v791
      %3538 = vmatprep.subr.mxu0 0.0
      %3539 = vmatpush1.msra.mxu0 %v790
      %3540 = vmatprep.subr.mxu0 0.0
      %3541 = vmatpush1.msra.mxu0 %v789
      %3542 = vmatprep.subr.mxu0 0.0
      %3543 = vmatpush1.msra.mxu0 %v788
      %3544 = vmatprep.subr.mxu0 0.0
      %3545 = vmatpush1.msra.mxu0 %v787
      %3546 = vmatprep.subr.mxu0 0.0
      %3547 = vmatpush2.msra.mxu0 0.0
      %3548 = vmatprep.subr.mxu0 0.0
      %3549 = vmatpush2.msra.mxu0 0.0
      %3550 = vmatprep.subr.mxu0 0.0
      %3551 = vmatpush2.msra.mxu0 0.0
      %3552 = vmatprep.subr.mxu0 0.0
      %3553 = vmatpush2.msra.mxu0 0.0
      %3554 = vmatprep.subr.mxu0 0.0
      %3555 = vmatpush2.msra.mxu0 0.0
      %3556 = vmatprep.subr.mxu0 0.0
      %3557 = vmatpush2.msra.mxu0 0.0
      %3558 = vmatprep.subr.mxu0 0.0
      %3559 = vmatpush2.msra.mxu0 0.0
      %3560 = vmatprep.subr.mxu0 0.0
      %3561 = vmatpush2.msra.mxu0 0.0
      %3562 = vmatprep.subr.mxu0 0.0
      %3563 = vmatpush2.msra.mxu0 0.0
      %3564 = vmatprep.subr.mxu0 0.0
      %3565 = vmatpush2.msra.mxu0 0.0
      %3566 = vmatprep.subr.mxu0 0.0
      %3567 = vmatpush2.msra.mxu0 0.0
      %3568 = vmatprep.subr.mxu0 0.0
      %3569 = vmatpush2.msra.mxu0 0.0
      %3570 = vmatprep.subr.mxu0 0.0
      %3571 = vmatpush2.msra.mxu0 0.0
      %3572 = vmatprep.subr.mxu0 0.0
      %3573 = vmatpush2.msra.mxu0 0.0
      %3574 = vmatprep.subr.mxu0 0.0
      %3575 = vmatpush2.msra.mxu0 0.0
      %3576 = vmatprep.subr.mxu0 0.0
      %3577 = vmatpush2.msra.mxu0 0.0
      %3578 = vmatprep.mubr.f32.mxu0 0.0
      %3579 = vmatmul.mubr.f32.gmra.mxu0 %v3396
      %v3580 = vpop.f32.mrf.mxu0
      %v3581 = vadd.f32 0.0, %v3580
      %v3582 = vpop.f32.mrf.mxu0
      %3583 = vmatprep.mubr.f32.mxu0 0.0
      %3584 = vmatmul.mubr.f32.gmra.mxu0 %v3401
      %v3585 = vpop.f32.mrf.mxu0
      %v3586 = vadd.f32 0.0, %v3585
      %v3587 = vpop.f32.mrf.mxu0
      %3588 = vmatprep.mubr.f32.mxu0 0.0
      %3589 = vmatmul.mubr.f32.gmra.mxu0 %v3406
      %v3590 = vpop.f32.mrf.mxu0
      %v3591 = vadd.f32 0.0, %v3590
      %v3592 = vpop.f32.mrf.mxu0
      %3593 = vmatprep.mubr.f32.mxu0 0.0
      %3594 = vmatmul.mubr.f32.gmra.mxu0 %v3411
      %v3595 = vpop.f32.mrf.mxu0
      %v3596 = vadd.f32 0.0, %v3595
      %v3597 = vpop.f32.mrf.mxu0
      %3598 = vdwg.mxu0
      %3599 = vmatprep.subr.mxu0 0.0
      %3600 = vmatpush1.msra.mxu0 %v753
      %3601 = vmatprep.subr.mxu0 0.0
      %3602 = vmatpush1.msra.mxu0 %v752
      %3603 = vmatprep.subr.mxu0 0.0
      %3604 = vmatpush1.msra.mxu0 %v751
      %3605 = vmatprep.subr.mxu0 0.0
      %3606 = vmatpush1.msra.mxu0 %v750
      %3607 = vmatprep.subr.mxu0 0.0
      %3608 = vmatpush1.msra.mxu0 %v749
      %3609 = vmatprep.subr.mxu0 0.0
      %3610 = vmatpush1.msra.mxu0 %v748
      %3611 = vmatprep.subr.mxu0 0.0
      %3612 = vmatpush1.msra.mxu0 %v747
      %3613 = vmatprep.subr.mxu0 0.0
      %3614 = vmatpush1.msra.mxu0 %v746
      %3615 = vmatprep.subr.mxu0 0.0
      %3616 = vmatpush1.msra.mxu0 %v745
      %3617 = vmatprep.subr.mxu0 0.0
      %3618 = vmatpush1.msra.mxu0 %v744
      %3619 = vmatprep.subr.mxu0 0.0
      %3620 = vmatpush1.msra.mxu0 %v743
      %3621 = vmatprep.subr.mxu0 0.0
      %3622 = vmatpush1.msra.mxu0 %v742
      %3623 = vmatprep.subr.mxu0 0.0
      %3624 = vmatpush1.msra.mxu0 %v741
      %3625 = vmatprep.subr.mxu0 0.0
      %3626 = vmatpush1.msra.mxu0 %v740
      %3627 = vmatprep.subr.mxu0 0.0
      %3628 = vmatpush1.msra.mxu0 %v739
      %3629 = vmatprep.subr.mxu0 0.0
      %3630 = vmatpush1.msra.mxu0 %v738
      %3631 = vmatprep.subr.mxu0 0.0
      %3632 = vmatpush2.msra.mxu0 0.0
      %3633 = vmatprep.subr.mxu0 0.0
      %3634 = vmatpush2.msra.mxu0 0.0
      %3635 = vmatprep.subr.mxu0 0.0
      %3636 = vmatpush2.msra.mxu0 0.0
      %3637 = vmatprep.subr.mxu0 0.0
      %3638 = vmatpush2.msra.mxu0 0.0
      %3639 = vmatprep.subr.mxu0 0.0
      %3640 = vmatpush2.msra.mxu0 0.0
      %3641 = vmatprep.subr.mxu0 0.0
      %3642 = vmatpush2.msra.mxu0 0.0
      %3643 = vmatprep.subr.mxu0 0.0
      %3644 = vmatpush2.msra.mxu0 0.0
      %3645 = vmatprep.subr.mxu0 0.0
      %3646 = vmatpush2.msra.mxu0 0.0
      %3647 = vmatprep.subr.mxu0 0.0
      %3648 = vmatpush2.msra.mxu0 0.0
      %3649 = vmatprep.subr.mxu0 0.0
      %3650 = vmatpush2.msra.mxu0 0.0
      %3651 = vmatprep.subr.mxu0 0.0
      %3652 = vmatpush2.msra.mxu0 0.0
      %3653 = vmatprep.subr.mxu0 0.0
      %3654 = vmatpush2.msra.mxu0 0.0
      %3655 = vmatprep.subr.mxu0 0.0
      %3656 = vmatpush2.msra.mxu0 0.0
      %3657 = vmatprep.subr.mxu0 0.0
      %3658 = vmatpush2.msra.mxu0 0.0
      %3659 = vmatprep.subr.mxu0 0.0
      %3660 = vmatpush2.msra.mxu0 0.0
      %3661 = vmatprep.subr.mxu0 0.0
      %3662 = vmatpush2.msra.mxu0 0.0
      %3663 = vmatprep.mubr.f32.mxu0 0.0
      %3664 = vmatmul.mubr.f32.gmra.mxu0 %v3376
      %v3665 = vpop.f32.mrf.mxu0
      %v3666 = vadd.f32 %v3581, %v3665
      %v3667 = vpop.f32.mrf.mxu0
      %3668 = vmatprep.mubr.f32.mxu0 0.0
      %3669 = vmatmul.mubr.f32.gmra.mxu0 %v3381
      %v3670 = vpop.f32.mrf.mxu0
      %v3671 = vadd.f32 %v3586, %v3670
      %v3672 = vpop.f32.mrf.mxu0
      %3673 = vmatprep.mubr.f32.mxu0 0.0
      %3674 = vmatmul.mubr.f32.gmra.mxu0 %v3386
      %v3675 = vpop.f32.mrf.mxu0
      %v3676 = vadd.f32 %v3591, %v3675
      %v3677 = vpop.f32.mrf.mxu0
      %3678 = vmatprep.mubr.f32.mxu0 0.0
      %3679 = vmatmul.mubr.f32.gmra.mxu0 %v3391
      %v3680 = vpop.f32.mrf.mxu0
      %v3681 = vadd.f32 %v3596, %v3680
      %v3682 = vpop.f32.mrf.mxu0
      %3683 = vdwg.mxu0
      %3684 = vmatprep.subr.mxu0 0.0
      %3685 = vmatpush1.msra.mxu0 %v851
      %3686 = vmatprep.subr.mxu0 0.0
      %3687 = vmatpush1.msra.mxu0 %v850
      %3688 = vmatprep.subr.mxu0 0.0
      %3689 = vmatpush1.msra.mxu0 %v849
      %3690 = vmatprep.subr.mxu0 0.0
      %3691 = vmatpush1.msra.mxu0 %v848
      %3692 = vmatprep.subr.mxu0 0.0
      %3693 = vmatpush1.msra.mxu0 %v847
      %3694 = vmatprep.subr.mxu0 0.0
      %3695 = vmatpush1.msra.mxu0 %v846
      %3696 = vmatprep.subr.mxu0 0.0
      %3697 = vmatpush1.msra.mxu0 %v845
      %3698 = vmatprep.subr.mxu0 0.0
      %3699 = vmatpush1.msra.mxu0 %v844
      %3700 = vmatprep.subr.mxu0 0.0
      %3701 = vmatpush1.msra.mxu0 %v843
      %3702 = vmatprep.subr.mxu0 0.0
      %3703 = vmatpush1.msra.mxu0 %v842
      %3704 = vmatprep.subr.mxu0 0.0
      %3705 = vmatpush1.msra.mxu0 %v841
      %3706 = vmatprep.subr.mxu0 0.0
      %3707 = vmatpush1.msra.mxu0 %v840
      %3708 = vmatprep.subr.mxu0 0.0
      %3709 = vmatpush1.msra.mxu0 %v839
      %3710 = vmatprep.subr.mxu0 0.0
      %3711 = vmatpush1.msra.mxu0 %v838
      %3712 = vmatprep.subr.mxu0 0.0
      %3713 = vmatpush1.msra.mxu0 %v837
      %3714 = vmatprep.subr.mxu0 0.0
      %3715 = vmatpush1.msra.mxu0 %v836
      %3716 = vmatprep.subr.mxu0 0.0
      %3717 = vmatpush2.msra.mxu0 0.0
      %3718 = vmatprep.subr.mxu0 0.0
      %3719 = vmatpush2.msra.mxu0 0.0
      %3720 = vmatprep.subr.mxu0 0.0
      %3721 = vmatpush2.msra.mxu0 0.0
      %3722 = vmatprep.subr.mxu0 0.0
      %3723 = vmatpush2.msra.mxu0 0.0
      %3724 = vmatprep.subr.mxu0 0.0
      %3725 = vmatpush2.msra.mxu0 0.0
      %3726 = vmatprep.subr.mxu0 0.0
      %3727 = vmatpush2.msra.mxu0 0.0
      %3728 = vmatprep.subr.mxu0 0.0
      %3729 = vmatpush2.msra.mxu0 0.0
      %3730 = vmatprep.subr.mxu0 0.0
      %3731 = vmatpush2.msra.mxu0 0.0
      %3732 = vmatprep.subr.mxu0 0.0
      %3733 = vmatpush2.msra.mxu0 0.0
      %3734 = vmatprep.subr.mxu0 0.0
      %3735 = vmatpush2.msra.mxu0 0.0
      %3736 = vmatprep.subr.mxu0 0.0
      %3737 = vmatpush2.msra.mxu0 0.0
      %3738 = vmatprep.subr.mxu0 0.0
      %3739 = vmatpush2.msra.mxu0 0.0
      %3740 = vmatprep.subr.mxu0 0.0
      %3741 = vmatpush2.msra.mxu0 0.0
      %3742 = vmatprep.subr.mxu0 0.0
      %3743 = vmatpush2.msra.mxu0 0.0
      %3744 = vmatprep.subr.mxu0 0.0
      %3745 = vmatpush2.msra.mxu0 0.0
      %3746 = vmatprep.subr.mxu0 0.0
      %3747 = vmatpush2.msra.mxu0 0.0
      %3748 = vmatprep.mubr.f32.mxu0 0.0
      %3749 = vmatmul.mubr.f32.gmra.mxu0 %v3416
      %v3750 = vpop.f32.mrf.mxu0
      %v3751 = vadd.f32 0.0, %v3750
      %v3752 = vpop.f32.mrf.mxu0
      %3753 = vmatprep.mubr.f32.mxu0 0.0
      %3754 = vmatmul.mubr.f32.gmra.mxu0 %v3421
      %v3755 = vpop.f32.mrf.mxu0
      %v3756 = vadd.f32 0.0, %v3755
      %v3757 = vpop.f32.mrf.mxu0
      %3758 = vmatprep.mubr.f32.mxu0 0.0
      %3759 = vmatmul.mubr.f32.gmra.mxu0 %v3426
      %v3760 = vpop.f32.mrf.mxu0
      %v3761 = vadd.f32 0.0, %v3760
      %v3762 = vpop.f32.mrf.mxu0
      %3763 = vmatprep.mubr.f32.mxu0 0.0
      %3764 = vmatmul.mubr.f32.gmra.mxu0 %v3431
      %v3765 = vpop.f32.mrf.mxu0
      %v3766 = vadd.f32 0.0, %v3765
      %v3767 = vpop.f32.mrf.mxu0
      %3768 = vdwg.mxu0
      %v3769 = vadd.f32 %v3666, %v3751
      %v3770 = vadd.f32 %v3671, %v3756
      %v3771 = vadd.f32 %v3676, %v3761
      %v3772 = vadd.f32 %v3681, %v3766
      %3773 = vmatprep.subr.mxu0 0.0
      %3774 = vmatpush1.msra.mxu0 %v899
      %3775 = vmatprep.subr.mxu0 0.0
      %3776 = vmatpush1.msra.mxu0 %v898
      %3777 = vmatprep.subr.mxu0 0.0
      %3778 = vmatpush1.msra.mxu0 %v897
      %3779 = vmatprep.subr.mxu0 0.0
      %3780 = vmatpush1.msra.mxu0 %v896
      %3781 = vmatprep.subr.mxu0 0.0
      %3782 = vmatpush1.msra.mxu0 %v895
      %3783 = vmatprep.subr.mxu0 0.0
      %3784 = vmatpush1.msra.mxu0 %v894
      %3785 = vmatprep.subr.mxu0 0.0
      %3786 = vmatpush1.msra.mxu0 %v893
      %3787 = vmatprep.subr.mxu0 0.0
      %3788 = vmatpush1.msra.mxu0 %v892
      %3789 = vmatprep.subr.mxu0 0.0
      %3790 = vmatpush1.msra.mxu0 %v891
      %3791 = vmatprep.subr.mxu0 0.0
      %3792 = vmatpush1.msra.mxu0 %v890
      %3793 = vmatprep.subr.mxu0 0.0
      %3794 = vmatpush1.msra.mxu0 %v889
      %3795 = vmatprep.subr.mxu0 0.0
      %3796 = vmatpush1.msra.mxu0 %v888
      %3797 = vmatprep.subr.mxu0 0.0
      %3798 = vmatpush1.msra.mxu0 %v887
      %3799 = vmatprep.subr.mxu0 0.0
      %3800 = vmatpush1.msra.mxu0 %v886
      %3801 = vmatprep.subr.mxu0 0.0
      %3802 = vmatpush1.msra.mxu0 %v885
      %3803 = vmatprep.subr.mxu0 0.0
      %3804 = vmatpush1.msra.mxu0 %v884
      %3805 = vmatprep.subr.mxu0 0.0
      %3806 = vmatpush2.msra.mxu0 0.0
      %3807 = vmatprep.subr.mxu0 0.0
      %3808 = vmatpush2.msra.mxu0 0.0
      %3809 = vmatprep.subr.mxu0 0.0
      %3810 = vmatpush2.msra.mxu0 0.0
      %3811 = vmatprep.subr.mxu0 0.0
      %3812 = vmatpush2.msra.mxu0 0.0
      %3813 = vmatprep.subr.mxu0 0.0
      %3814 = vmatpush2.msra.mxu0 0.0
      %3815 = vmatprep.subr.mxu0 0.0
      %3816 = vmatpush2.msra.mxu0 0.0
      %3817 = vmatprep.subr.mxu0 0.0
      %3818 = vmatpush2.msra.mxu0 0.0
      %3819 = vmatprep.subr.mxu0 0.0
      %3820 = vmatpush2.msra.mxu0 0.0
      %3821 = vmatprep.subr.mxu0 0.0
      %3822 = vmatpush2.msra.mxu0 0.0
      %3823 = vmatprep.subr.mxu0 0.0
      %3824 = vmatpush2.msra.mxu0 0.0
      %3825 = vmatprep.subr.mxu0 0.0
      %3826 = vmatpush2.msra.mxu0 0.0
      %3827 = vmatprep.subr.mxu0 0.0
      %3828 = vmatpush2.msra.mxu0 0.0
      %3829 = vmatprep.subr.mxu0 0.0
      %3830 = vmatpush2.msra.mxu0 0.0
      %3831 = vmatprep.subr.mxu0 0.0
      %3832 = vmatpush2.msra.mxu0 0.0
      %3833 = vmatprep.subr.mxu0 0.0
      %3834 = vmatpush2.msra.mxu0 0.0
      %3835 = vmatprep.subr.mxu0 0.0
      %3836 = vmatpush2.msra.mxu0 0.0
      %3837 = vmatprep.mubr.f32.mxu0 0.0
      %3838 = vmatmul.mubr.f32.gmra.mxu0 %v3436
      %v3839 = vpop.f32.mrf.mxu0
      %v3840 = vadd.f32 0.0, %v3839
      %v3841 = vpop.f32.mrf.mxu0
      %3842 = vmatprep.mubr.f32.mxu0 0.0
      %3843 = vmatmul.mubr.f32.gmra.mxu0 %v3441
      %v3844 = vpop.f32.mrf.mxu0
      %v3845 = vadd.f32 0.0, %v3844
      %v3846 = vpop.f32.mrf.mxu0
      %3847 = vmatprep.mubr.f32.mxu0 0.0
      %3848 = vmatmul.mubr.f32.gmra.mxu0 %v3446
      %v3849 = vpop.f32.mrf.mxu0
      %v3850 = vadd.f32 0.0, %v3849
      %v3851 = vpop.f32.mrf.mxu0
      %3852 = vmatprep.mubr.f32.mxu0 0.0
      %3853 = vmatmul.mubr.f32.gmra.mxu0 %v3451
      %v3854 = vpop.f32.mrf.mxu0
      %v3855 = vadd.f32 0.0, %v3854
      %v3856 = vpop.f32.mrf.mxu0
      %3857 = vdwg.mxu0
      %v3858 = vadd.f32 %v3769, %v3840
      %v3859 = vadd.f32 %v3770, %v3845
      %v3860 = vadd.f32 %v3771, %v3850
      %v3861 = vadd.f32 %v3772, %v3855
      %3862 = vmatprep.subr.mxu0 0.0
      %3863 = vmatpush1.msra.mxu0 %v948
      %3864 = vmatprep.subr.mxu0 0.0
      %3865 = vmatpush1.msra.mxu0 %v947
      %3866 = vmatprep.subr.mxu0 0.0
      %3867 = vmatpush1.msra.mxu0 %v946
      %3868 = vmatprep.subr.mxu0 0.0
      %3869 = vmatpush1.msra.mxu0 %v945
      %3870 = vmatprep.subr.mxu0 0.0
      %3871 = vmatpush1.msra.mxu0 %v944
      %3872 = vmatprep.subr.mxu0 0.0
      %3873 = vmatpush1.msra.mxu0 %v943
      %3874 = vmatprep.subr.mxu0 0.0
      %3875 = vmatpush1.msra.mxu0 %v942
      %3876 = vmatprep.subr.mxu0 0.0
      %3877 = vmatpush1.msra.mxu0 %v941
      %3878 = vmatprep.subr.mxu0 0.0
      %3879 = vmatpush1.msra.mxu0 %v940
      %3880 = vmatprep.subr.mxu0 0.0
      %3881 = vmatpush1.msra.mxu0 %v939
      %3882 = vmatprep.subr.mxu0 0.0
      %3883 = vmatpush1.msra.mxu0 %v938
      %3884 = vmatprep.subr.mxu0 0.0
      %3885 = vmatpush1.msra.mxu0 %v937
      %3886 = vmatprep.subr.mxu0 0.0
      %3887 = vmatpush1.msra.mxu0 %v936
      %3888 = vmatprep.subr.mxu0 0.0
      %3889 = vmatpush1.msra.mxu0 %v935
      %3890 = vmatprep.subr.mxu0 0.0
      %3891 = vmatpush1.msra.mxu0 %v934
      %3892 = vmatprep.subr.mxu0 0.0
      %3893 = vmatpush1.msra.mxu0 %v933
      %3894 = vmatprep.subr.mxu0 0.0
      %3895 = vmatpush2.msra.mxu0 0.0
      %3896 = vmatprep.subr.mxu0 0.0
      %3897 = vmatpush2.msra.mxu0 0.0
      %3898 = vmatprep.subr.mxu0 0.0
      %3899 = vmatpush2.msra.mxu0 0.0
      %3900 = vmatprep.subr.mxu0 0.0
      %3901 = vmatpush2.msra.mxu0 0.0
      %3902 = vmatprep.subr.mxu0 0.0
      %3903 = vmatpush2.msra.mxu0 0.0
      %3904 = vmatprep.subr.mxu0 0.0
      %3905 = vmatpush2.msra.mxu0 0.0
      %3906 = vmatprep.subr.mxu0 0.0
      %3907 = vmatpush2.msra.mxu0 0.0
      %3908 = vmatprep.subr.mxu0 0.0
      %3909 = vmatpush2.msra.mxu0 0.0
      %3910 = vmatprep.subr.mxu0 0.0
      %3911 = vmatpush2.msra.mxu0 0.0
      %3912 = vmatprep.subr.mxu0 0.0
      %3913 = vmatpush2.msra.mxu0 0.0
      %3914 = vmatprep.subr.mxu0 0.0
      %3915 = vmatpush2.msra.mxu0 0.0
      %3916 = vmatprep.subr.mxu0 0.0
      %3917 = vmatpush2.msra.mxu0 0.0
      %3918 = vmatprep.subr.mxu0 0.0
      %3919 = vmatpush2.msra.mxu0 0.0
      %3920 = vmatprep.subr.mxu0 0.0
      %3921 = vmatpush2.msra.mxu0 0.0
      %3922 = vmatprep.subr.mxu0 0.0
      %3923 = vmatpush2.msra.mxu0 0.0
      %3924 = vmatprep.subr.mxu0 0.0
      %3925 = vmatpush2.msra.mxu0 0.0
      %3926 = vmatprep.mubr.f32.mxu0 0.0
      %3927 = vmatmul.mubr.f32.gmra.mxu0 %v3456
      %v3928 = vpop.f32.mrf.mxu0
      %v3929 = vadd.f32 0.0, %v3928
      %v3930 = vpop.f32.mrf.mxu0
      %3931 = vmatprep.mubr.f32.mxu0 0.0
      %3932 = vmatmul.mubr.f32.gmra.mxu0 %v3461
      %v3933 = vpop.f32.mrf.mxu0
      %v3934 = vadd.f32 0.0, %v3933
      %v3935 = vpop.f32.mrf.mxu0
      %3936 = vmatprep.mubr.f32.mxu0 0.0
      %3937 = vmatmul.mubr.f32.gmra.mxu0 %v3466
      %v3938 = vpop.f32.mrf.mxu0
      %v3939 = vadd.f32 0.0, %v3938
      %v3940 = vpop.f32.mrf.mxu0
      %3941 = vmatprep.mubr.f32.mxu0 0.0
      %3942 = vmatmul.mubr.f32.gmra.mxu0 %v3471
      %v3943 = vpop.f32.mrf.mxu0
      %v3944 = vadd.f32 0.0, %v3943
      %v3945 = vpop.f32.mrf.mxu0
      %3946 = vdwg.mxu0
      %v3947 = vadd.f32 %v3858, %v3929
      %v3948 = vadd.f32 %v3859, %v3934
      %v3949 = vadd.f32 %v3860, %v3939
      %v3950 = vadd.f32 %v3861, %v3944
      %3951 = vmatprep.subr.mxu0 0.0
      %3952 = vmatpush1.msra.mxu0 %v997
      %3953 = vmatprep.subr.mxu0 0.0
      %3954 = vmatpush1.msra.mxu0 %v996
      %3955 = vmatprep.subr.mxu0 0.0
      %3956 = vmatpush1.msra.mxu0 %v995
      %3957 = vmatprep.subr.mxu0 0.0
      %3958 = vmatpush1.msra.mxu0 %v994
      %3959 = vmatprep.subr.mxu0 0.0
      %3960 = vmatpush1.msra.mxu0 %v993
      %3961 = vmatprep.subr.mxu0 0.0
      %3962 = vmatpush1.msra.mxu0 %v992
      %3963 = vmatprep.subr.mxu0 0.0
      %3964 = vmatpush1.msra.mxu0 %v991
      %3965 = vmatprep.subr.mxu0 0.0
      %3966 = vmatpush1.msra.mxu0 %v990
      %3967 = vmatprep.subr.mxu0 0.0
      %3968 = vmatpush1.msra.mxu0 %v989
      %3969 = vmatprep.subr.mxu0 0.0
      %3970 = vmatpush1.msra.mxu0 %v988
      %3971 = vmatprep.subr.mxu0 0.0
      %3972 = vmatpush1.msra.mxu0 %v987
      %3973 = vmatprep.subr.mxu0 0.0
      %3974 = vmatpush1.msra.mxu0 %v986
      %3975 = vmatprep.subr.mxu0 0.0
      %3976 = vmatpush1.msra.mxu0 %v985
      %3977 = vmatprep.subr.mxu0 0.0
      %3978 = vmatpush1.msra.mxu0 %v984
      %3979 = vmatprep.subr.mxu0 0.0
      %3980 = vmatpush1.msra.mxu0 %v983
      %3981 = vmatprep.subr.mxu0 0.0
      %3982 = vmatpush1.msra.mxu0 %v982
      %3983 = vmatprep.subr.mxu0 0.0
      %3984 = vmatpush2.msra.mxu0 0.0
      %3985 = vmatprep.subr.mxu0 0.0
      %3986 = vmatpush2.msra.mxu0 0.0
      %3987 = vmatprep.subr.mxu0 0.0
      %3988 = vmatpush2.msra.mxu0 0.0
      %3989 = vmatprep.subr.mxu0 0.0
      %3990 = vmatpush2.msra.mxu0 0.0
      %3991 = vmatprep.subr.mxu0 0.0
      %3992 = vmatpush2.msra.mxu0 0.0
      %3993 = vmatprep.subr.mxu0 0.0
      %3994 = vmatpush2.msra.mxu0 0.0
      %3995 = vmatprep.subr.mxu0 0.0
      %3996 = vmatpush2.msra.mxu0 0.0
      %3997 = vmatprep.subr.mxu0 0.0
      %3998 = vmatpush2.msra.mxu0 0.0
      %3999 = vmatprep.subr.mxu0 0.0
      %4000 = vmatpush2.msra.mxu0 0.0
      %4001 = vmatprep.subr.mxu0 0.0
      %4002 = vmatpush2.msra.mxu0 0.0
      %4003 = vmatprep.subr.mxu0 0.0
      %4004 = vmatpush2.msra.mxu0 0.0
      %4005 = vmatprep.subr.mxu0 0.0
      %4006 = vmatpush2.msra.mxu0 0.0
      %4007 = vmatprep.subr.mxu0 0.0
      %4008 = vmatpush2.msra.mxu0 0.0
      %4009 = vmatprep.subr.mxu0 0.0
      %4010 = vmatpush2.msra.mxu0 0.0
      %4011 = vmatprep.subr.mxu0 0.0
      %4012 = vmatpush2.msra.mxu0 0.0
      %4013 = vmatprep.subr.mxu0 0.0
      %4014 = vmatpush2.msra.mxu0 0.0
      %4015 = vmatprep.mubr.f32.mxu0 0.0
      %4016 = vmatmul.mubr.f32.gmra.mxu0 %v3476
      %v4017 = vpop.f32.mrf.mxu0
      %v4018 = vadd.f32 0.0, %v4017
      %v4019 = vpop.f32.mrf.mxu0
      %4020 = vmatprep.mubr.f32.mxu0 0.0
      %4021 = vmatmul.mubr.f32.gmra.mxu0 %v3481
      %v4022 = vpop.f32.mrf.mxu0
      %v4023 = vadd.f32 0.0, %v4022
      %v4024 = vpop.f32.mrf.mxu0
      %4025 = vmatprep.mubr.f32.mxu0 0.0
      %4026 = vmatmul.mubr.f32.gmra.mxu0 %v3486
      %v4027 = vpop.f32.mrf.mxu0
      %v4028 = vadd.f32 0.0, %v4027
      %v4029 = vpop.f32.mrf.mxu0
      %4030 = vmatprep.mubr.f32.mxu0 0.0
      %4031 = vmatmul.mubr.f32.gmra.mxu0 %v3491
      %v4032 = vpop.f32.mrf.mxu0
      %v4033 = vadd.f32 0.0, %v4032
      %v4034 = vpop.f32.mrf.mxu0
      %4035 = vdwg.mxu0
      %v4036 = vadd.f32 %v3947, %v4018
      %v4037 = vadd.f32 %v3948, %v4023
      %v4038 = vadd.f32 %v3949, %v4028
      %v4039 = vadd.f32 %v3950, %v4033
      %4040 = vmatprep.subr.mxu0 0.0
      %4041 = vmatpush1.msra.mxu0 %v1046
      %4042 = vmatprep.subr.mxu0 0.0
      %4043 = vmatpush1.msra.mxu0 %v1045
      %4044 = vmatprep.subr.mxu0 0.0
      %4045 = vmatpush1.msra.mxu0 %v1044
      %4046 = vmatprep.subr.mxu0 0.0
      %4047 = vmatpush1.msra.mxu0 %v1043
      %4048 = vmatprep.subr.mxu0 0.0
      %4049 = vmatpush1.msra.mxu0 %v1042
      %4050 = vmatprep.subr.mxu0 0.0
      %4051 = vmatpush1.msra.mxu0 %v1041
      %4052 = vmatprep.subr.mxu0 0.0
      %4053 = vmatpush1.msra.mxu0 %v1040
      %4054 = vmatprep.subr.mxu0 0.0
      %4055 = vmatpush1.msra.mxu0 %v1039
      %4056 = vmatprep.subr.mxu0 0.0
      %4057 = vmatpush1.msra.mxu0 %v1038
      %4058 = vmatprep.subr.mxu0 0.0
      %4059 = vmatpush1.msra.mxu0 %v1037
      %4060 = vmatprep.subr.mxu0 0.0
      %4061 = vmatpush1.msra.mxu0 %v1036
      %4062 = vmatprep.subr.mxu0 0.0
      %4063 = vmatpush1.msra.mxu0 %v1035
      %4064 = vmatprep.subr.mxu0 0.0
      %4065 = vmatpush1.msra.mxu0 %v1034
      %4066 = vmatprep.subr.mxu0 0.0
      %4067 = vmatpush1.msra.mxu0 %v1033
      %4068 = vmatprep.subr.mxu0 0.0
      %4069 = vmatpush1.msra.mxu0 %v1032
      %4070 = vmatprep.subr.mxu0 0.0
      %4071 = vmatpush1.msra.mxu0 %v1031
      %4072 = vmatprep.subr.mxu0 0.0
      %4073 = vmatpush2.msra.mxu0 0.0
      %4074 = vmatprep.subr.mxu0 0.0
      %4075 = vmatpush2.msra.mxu0 0.0
      %4076 = vmatprep.subr.mxu0 0.0
      %4077 = vmatpush2.msra.mxu0 0.0
      %4078 = vmatprep.subr.mxu0 0.0
      %4079 = vmatpush2.msra.mxu0 0.0
      %4080 = vmatprep.subr.mxu0 0.0
      %4081 = vmatpush2.msra.mxu0 0.0
      %4082 = vmatprep.subr.mxu0 0.0
      %4083 = vmatpush2.msra.mxu0 0.0
      %4084 = vmatprep.subr.mxu0 0.0
      %4085 = vmatpush2.msra.mxu0 0.0
      %4086 = vmatprep.subr.mxu0 0.0
      %4087 = vmatpush2.msra.mxu0 0.0
      %4088 = vmatprep.subr.mxu0 0.0
      %4089 = vmatpush2.msra.mxu0 0.0
      %4090 = vmatprep.subr.mxu0 0.0
      %4091 = vmatpush2.msra.mxu0 0.0
      %4092 = vmatprep.subr.mxu0 0.0
      %4093 = vmatpush2.msra.mxu0 0.0
      %4094 = vmatprep.subr.mxu0 0.0
      %4095 = vmatpush2.msra.mxu0 0.0
      %4096 = vmatprep.subr.mxu0 0.0
      %4097 = vmatpush2.msra.mxu0 0.0
      %4098 = vmatprep.subr.mxu0 0.0
      %4099 = vmatpush2.msra.mxu0 0.0
      %4100 = vmatprep.subr.mxu0 0.0
      %4101 = vmatpush2.msra.mxu0 0.0
      %4102 = vmatprep.subr.mxu0 0.0
      %4103 = vmatpush2.msra.mxu0 0.0
      %4104 = vmatprep.mubr.f32.mxu0 0.0
      %4105 = vmatmul.mubr.f32.gmra.mxu0 %v3496
      %v4106 = vpop.f32.mrf.mxu0
      %v4107 = vadd.f32 0.0, %v4106
      %v4108 = vpop.f32.mrf.mxu0
      %4109 = vmatprep.mubr.f32.mxu0 0.0
      %4110 = vmatmul.mubr.f32.gmra.mxu0 %v3501
      %v4111 = vpop.f32.mrf.mxu0
      %v4112 = vadd.f32 0.0, %v4111
      %v4113 = vpop.f32.mrf.mxu0
      %4114 = vmatprep.mubr.f32.mxu0 0.0
      %4115 = vmatmul.mubr.f32.gmra.mxu0 %v3506
      %v4116 = vpop.f32.mrf.mxu0
      %v4117 = vadd.f32 0.0, %v4116
      %v4118 = vpop.f32.mrf.mxu0
      %4119 = vmatprep.mubr.f32.mxu0 0.0
      %4120 = vmatmul.mubr.f32.gmra.mxu0 %v3511
      %v4121 = vpop.f32.mrf.mxu0
      %v4122 = vadd.f32 0.0, %v4121
      %v4123 = vpop.f32.mrf.mxu0
      %4124 = vdwg.mxu0
      %v4125 = vadd.f32 %v4036, %v4107
      %v4126 = vadd.f32 %v4037, %v4112
      %v4127 = vadd.f32 %v4038, %v4117
      %v4128 = vadd.f32 %v4039, %v4122
      %v4129 = vld [vmem:[%s7] sm:$0xff]
      %v4130 = vld [vmem:[%s7 + $0x8] sm:$0xff]
      %v4131 = vld [vmem:[%s7 + $0x10] sm:$0xff]
      %v4132 = vld [vmem:[%s7 + $0x18] sm:$0xff]
      %4134 = vset.pattern.permute.xlu0 0
      %4135 = vperm.xlu0 %4134, %v4129
      %v4136 = vpop.permute.xlu0 %4135
      %4139 = vset.pattern.permute.xlu0 0
      %4140 = vperm.xlu0 %4139, %v4130
      %v4141 = vpop.permute.xlu0 %4140
      %4144 = vset.pattern.permute.xlu0 0
      %4145 = vperm.xlu0 %4144, %v4131
      %v4146 = vpop.permute.xlu0 %4145
      %4149 = vset.pattern.permute.xlu0 0
      %4150 = vperm.xlu0 %4149, %v4132
      %v4151 = vpop.permute.xlu0 %4150
      %v4153 = vadd.f32 %v4125, %v4136
      %v4154 = vadd.f32 %v4126, %v4141
      %v4155 = vadd.f32 %v4127, %v4146
      %v4156 = vadd.f32 %v4128, %v4151
      %v4157 = vmax.f32 %v4153, 0.0
      %v4158 = vmax.f32 %v4154, 0.0
      %v4159 = vmax.f32 %v4155, 0.0
      %v4160 = vmax.f32 %v4156, 0.0
      %s4161 = scalar_lea.vmem %s7, 32
      %v4162 = vld [vmem:[%s4161] sm:$0xff]
      %v4163 = vld [vmem:[%s4161 + $0x8] sm:$0xff]
      %v4164 = vld [vmem:[%s4161 + $0x10] sm:$0xff]
      %v4165 = vld [vmem:[%s4161 + $0x18] sm:$0xff]
      %4167 = vset.pattern.permute.xlu0 0
      %4168 = vperm.xlu0 %4167, %v4162
      %v4169 = vpop.permute.xlu0 %4168
      %4172 = vset.pattern.permute.xlu0 0
      %4173 = vperm.xlu0 %4172, %v4163
      %v4174 = vpop.permute.xlu0 %4173
      %4177 = vset.pattern.permute.xlu0 0
      %4178 = vperm.xlu0 %4177, %v4164
      %v4179 = vpop.permute.xlu0 %4178
      %4182 = vset.pattern.permute.xlu0 0
      %4183 = vperm.xlu0 %4182, %v4165
      %v4184 = vpop.permute.xlu0 %4183
      %v4186 = vmul.f32 %v4157, %v4169
      %v4187 = vmul.f32 %v4158, %v4174
      %v4188 = vmul.f32 %v4159, %v4179
      %v4189 = vmul.f32 %v4160, %v4184
      %s4190 = scalar_lea.vmem %s7, 64
      %v4191 = vld [vmem:[%s4190] sm:$0xff]
      %v4192 = vld [vmem:[%s4190 + $0x8] sm:$0xff]
      %v4193 = vld [vmem:[%s4190 + $0x10] sm:$0xff]
      %v4194 = vld [vmem:[%s4190 + $0x18] sm:$0xff]
      %4196 = vset.pattern.permute.xlu0 0
      %4197 = vperm.xlu0 %4196, %v4191
      %v4198 = vpop.permute.xlu0 %4197
      %4201 = vset.pattern.permute.xlu0 0
      %4202 = vperm.xlu0 %4201, %v4192
      %v4203 = vpop.permute.xlu0 %4202
      %4206 = vset.pattern.permute.xlu0 0
      %4207 = vperm.xlu0 %4206, %v4193
      %v4208 = vpop.permute.xlu0 %4207
      %4211 = vset.pattern.permute.xlu0 0
      %4212 = vperm.xlu0 %4211, %v4194
      %v4213 = vpop.permute.xlu0 %4212
      %v4215 = vadd.f32 %v4186, %v4198
      %v4216 = vadd.f32 %v4187, %v4203
      %v4217 = vadd.f32 %v4188, %v4208
      %v4218 = vadd.f32 %v4189, %v4213
      %v4219 = vadd.f32 %v3193, %v4215
      %v4220 = vadd.f32 %v3194, %v4216
      %v4221 = vadd.f32 %v3195, %v4217
      %v4222 = vadd.f32 %v3196, %v4218
      %4223 = vmatprep.subr.mxu0 0.0
      %4224 = vmatpush1.msra.mxu0 %v948
      %4225 = vmatprep.subr.mxu0 0.0
      %4226 = vmatpush1.msra.mxu0 %v947
      %4227 = vmatprep.subr.mxu0 0.0
      %4228 = vmatpush1.msra.mxu0 %v946
      %4229 = vmatprep.subr.mxu0 0.0
      %4230 = vmatpush1.msra.mxu0 %v945
      %4231 = vmatprep.subr.mxu0 0.0
      %4232 = vmatpush1.msra.mxu0 %v944
      %4233 = vmatprep.subr.mxu0 0.0
      %4234 = vmatpush1.msra.mxu0 %v943
      %4235 = vmatprep.subr.mxu0 0.0
      %4236 = vmatpush1.msra.mxu0 %v942
      %4237 = vmatprep.subr.mxu0 0.0
      %4238 = vmatpush1.msra.mxu0 %v941
      %4239 = vmatprep.subr.mxu0 0.0
      %4240 = vmatpush1.msra.mxu0 %v940
      %4241 = vmatprep.subr.mxu0 0.0
      %4242 = vmatpush1.msra.mxu0 %v939
      %4243 = vmatprep.subr.mxu0 0.0
      %4244 = vmatpush1.msra.mxu0 %v938
      %4245 = vmatprep.subr.mxu0 0.0
      %4246 = vmatpush1.msra.mxu0 %v937
      %4247 = vmatprep.subr.mxu0 0.0
      %4248 = vmatpush1.msra.mxu0 %v936
      %4249 = vmatprep.subr.mxu0 0.0
      %4250 = vmatpush1.msra.mxu0 %v935
      %4251 = vmatprep.subr.mxu0 0.0
      %4252 = vmatpush1.msra.mxu0 %v934
      %4253 = vmatprep.subr.mxu0 0.0
      %4254 = vmatpush1.msra.mxu0 %v933
      %4255 = vmatprep.subr.mxu0 0.0
      %4256 = vmatpush2.msra.mxu0 0.0
      %4257 = vmatprep.subr.mxu0 0.0
      %4258 = vmatpush2.msra.mxu0 0.0
      %4259 = vmatprep.subr.mxu0 0.0
      %4260 = vmatpush2.msra.mxu0 0.0
      %4261 = vmatprep.subr.mxu0 0.0
      %4262 = vmatpush2.msra.mxu0 0.0
      %4263 = vmatprep.subr.mxu0 0.0
      %4264 = vmatpush2.msra.mxu0 0.0
      %4265 = vmatprep.subr.mxu0 0.0
      %4266 = vmatpush2.msra.mxu0 0.0
      %4267 = vmatprep.subr.mxu0 0.0
      %4268 = vmatpush2.msra.mxu0 0.0
      %4269 = vmatprep.subr.mxu0 0.0
      %4270 = vmatpush2.msra.mxu0 0.0
      %4271 = vmatprep.subr.mxu0 0.0
      %4272 = vmatpush2.msra.mxu0 0.0
      %4273 = vmatprep.subr.mxu0 0.0
      %4274 = vmatpush2.msra.mxu0 0.0
      %4275 = vmatprep.subr.mxu0 0.0
      %4276 = vmatpush2.msra.mxu0 0.0
      %4277 = vmatprep.subr.mxu0 0.0
      %4278 = vmatpush2.msra.mxu0 0.0
      %4279 = vmatprep.subr.mxu0 0.0
      %4280 = vmatpush2.msra.mxu0 0.0
      %4281 = vmatprep.subr.mxu0 0.0
      %4282 = vmatpush2.msra.mxu0 0.0
      %4283 = vmatprep.subr.mxu0 0.0
      %4284 = vmatpush2.msra.mxu0 0.0
      %4285 = vmatprep.subr.mxu0 0.0
      %4286 = vmatpush2.msra.mxu0 0.0
      %4287 = vmatprep.mubr.f32.mxu0 0.0
      %4288 = vmatmul.mubr.f32.gmra.mxu0 %v4219
      %v4289 = vpop.f32.mrf.mxu0
      %v4290 = vadd.f32 0.0, %v4289
      %v4291 = vpop.f32.mrf.mxu0
      %4292 = vmatprep.mubr.f32.mxu0 0.0
      %4293 = vmatmul.mubr.f32.gmra.mxu0 %v4220
      %v4294 = vpop.f32.mrf.mxu0
      %v4295 = vadd.f32 0.0, %v4294
      %v4296 = vpop.f32.mrf.mxu0
      %4297 = vmatprep.mubr.f32.mxu0 0.0
      %4298 = vmatmul.mubr.f32.gmra.mxu0 %v4221
      %v4299 = vpop.f32.mrf.mxu0
      %v4300 = vadd.f32 0.0, %v4299
      %v4301 = vpop.f32.mrf.mxu0
      %4302 = vmatprep.mubr.f32.mxu0 0.0
      %4303 = vmatmul.mubr.f32.gmra.mxu0 %v4222
      %v4304 = vpop.f32.mrf.mxu0
      %v4305 = vadd.f32 0.0, %v4304
      %v4306 = vpop.f32.mrf.mxu0
      %4307 = vdwg.mxu0
      %v4308 = vmax.f32 %v4219, %v4290
      %v4309 = vmax.f32 %v4220, %v4295
      %v4310 = vmax.f32 %v4221, %v4300
      %v4311 = vmax.f32 %v4222, %v4305
      %4312 = vmatprep.subr.mxu0 0.0
      %4313 = vmatpush1.msra.mxu0 %v997
      %4314 = vmatprep.subr.mxu0 0.0
      %4315 = vmatpush1.msra.mxu0 %v996
      %4316 = vmatprep.subr.mxu0 0.0
      %4317 = vmatpush1.msra.mxu0 %v995
      %4318 = vmatprep.subr.mxu0 0.0
      %4319 = vmatpush1.msra.mxu0 %v994
      %4320 = vmatprep.subr.mxu0 0.0
      %4321 = vmatpush1.msra.mxu0 %v993
      %4322 = vmatprep.subr.mxu0 0.0
      %4323 = vmatpush1.msra.mxu0 %v992
      %4324 = vmatprep.subr.mxu0 0.0
      %4325 = vmatpush1.msra.mxu0 %v991
      %4326 = vmatprep.subr.mxu0 0.0
      %4327 = vmatpush1.msra.mxu0 %v990
      %4328 = vmatprep.subr.mxu0 0.0
      %4329 = vmatpush1.msra.mxu0 %v989
      %4330 = vmatprep.subr.mxu0 0.0
      %4331 = vmatpush1.msra.mxu0 %v988
      %4332 = vmatprep.subr.mxu0 0.0
      %4333 = vmatpush1.msra.mxu0 %v987
      %4334 = vmatprep.subr.mxu0 0.0
      %4335 = vmatpush1.msra.mxu0 %v986
      %4336 = vmatprep.subr.mxu0 0.0
      %4337 = vmatpush1.msra.mxu0 %v985
      %4338 = vmatprep.subr.mxu0 0.0
      %4339 = vmatpush1.msra.mxu0 %v984
      %4340 = vmatprep.subr.mxu0 0.0
      %4341 = vmatpush1.msra.mxu0 %v983
      %4342 = vmatprep.subr.mxu0 0.0
      %4343 = vmatpush1.msra.mxu0 %v982
      %4344 = vmatprep.subr.mxu0 0.0
      %4345 = vmatpush2.msra.mxu0 0.0
      %4346 = vmatprep.subr.mxu0 0.0
      %4347 = vmatpush2.msra.mxu0 0.0
      %4348 = vmatprep.subr.mxu0 0.0
      %4349 = vmatpush2.msra.mxu0 0.0
      %4350 = vmatprep.subr.mxu0 0.0
      %4351 = vmatpush2.msra.mxu0 0.0
      %4352 = vmatprep.subr.mxu0 0.0
      %4353 = vmatpush2.msra.mxu0 0.0
      %4354 = vmatprep.subr.mxu0 0.0
      %4355 = vmatpush2.msra.mxu0 0.0
      %4356 = vmatprep.subr.mxu0 0.0
      %4357 = vmatpush2.msra.mxu0 0.0
      %4358 = vmatprep.subr.mxu0 0.0
      %4359 = vmatpush2.msra.mxu0 0.0
      %4360 = vmatprep.subr.mxu0 0.0
      %4361 = vmatpush2.msra.mxu0 0.0
      %4362 = vmatprep.subr.mxu0 0.0
      %4363 = vmatpush2.msra.mxu0 0.0
      %4364 = vmatprep.subr.mxu0 0.0
      %4365 = vmatpush2.msra.mxu0 0.0
      %4366 = vmatprep.subr.mxu0 0.0
      %4367 = vmatpush2.msra.mxu0 0.0
      %4368 = vmatprep.subr.mxu0 0.0
      %4369 = vmatpush2.msra.mxu0 0.0
      %4370 = vmatprep.subr.mxu0 0.0
      %4371 = vmatpush2.msra.mxu0 0.0
      %4372 = vmatprep.subr.mxu0 0.0
      %4373 = vmatpush2.msra.mxu0 0.0
      %4374 = vmatprep.subr.mxu0 0.0
      %4375 = vmatpush2.msra.mxu0 0.0
      %4376 = vmatprep.mubr.f32.mxu0 0.0
      %4377 = vmatmul.mubr.f32.gmra.mxu0 %v4219
      %v4378 = vpop.f32.mrf.mxu0
      %v4379 = vadd.f32 0.0, %v4378
      %v4380 = vpop.f32.mrf.mxu0
      %4381 = vmatprep.mubr.f32.mxu0 0.0
      %4382 = vmatmul.mubr.f32.gmra.mxu0 %v4220
      %v4383 = vpop.f32.mrf.mxu0
      %v4384 = vadd.f32 0.0, %v4383
      %v4385 = vpop.f32.mrf.mxu0
      %4386 = vmatprep.mubr.f32.mxu0 0.0
      %4387 = vmatmul.mubr.f32.gmra.mxu0 %v4221
      %v4388 = vpop.f32.mrf.mxu0
      %v4389 = vadd.f32 0.0, %v4388
      %v4390 = vpop.f32.mrf.mxu0
      %4391 = vmatprep.mubr.f32.mxu0 0.0
      %4392 = vmatmul.mubr.f32.gmra.mxu0 %v4222
      %v4393 = vpop.f32.mrf.mxu0
      %v4394 = vadd.f32 0.0, %v4393
      %v4395 = vpop.f32.mrf.mxu0
      %4396 = vdwg.mxu0
      %v4397 = vmax.f32 %v4308, %v4379
      %v4398 = vmax.f32 %v4309, %v4384
      %v4399 = vmax.f32 %v4310, %v4389
      %v4400 = vmax.f32 %v4311, %v4394
      %4401 = vmatprep.subr.mxu0 0.0
      %4402 = vmatpush1.msra.mxu0 %v1046
      %4403 = vmatprep.subr.mxu0 0.0
      %4404 = vmatpush1.msra.mxu0 %v1045
      %4405 = vmatprep.subr.mxu0 0.0
      %4406 = vmatpush1.msra.mxu0 %v1044
      %4407 = vmatprep.subr.mxu0 0.0
      %4408 = vmatpush1.msra.mxu0 %v1043
      %4409 = vmatprep.subr.mxu0 0.0
      %4410 = vmatpush1.msra.mxu0 %v1042
      %4411 = vmatprep.subr.mxu0 0.0
      %4412 = vmatpush1.msra.mxu0 %v1041
      %4413 = vmatprep.subr.mxu0 0.0
      %4414 = vmatpush1.msra.mxu0 %v1040
      %4415 = vmatprep.subr.mxu0 0.0
      %4416 = vmatpush1.msra.mxu0 %v1039
      %4417 = vmatprep.subr.mxu0 0.0
      %4418 = vmatpush1.msra.mxu0 %v1038
      %4419 = vmatprep.subr.mxu0 0.0
      %4420 = vmatpush1.msra.mxu0 %v1037
      %4421 = vmatprep.subr.mxu0 0.0
      %4422 = vmatpush1.msra.mxu0 %v1036
      %4423 = vmatprep.subr.mxu0 0.0
      %4424 = vmatpush1.msra.mxu0 %v1035
      %4425 = vmatprep.subr.mxu0 0.0
      %4426 = vmatpush1.msra.mxu0 %v1034
      %4427 = vmatprep.subr.mxu0 0.0
      %4428 = vmatpush1.msra.mxu0 %v1033
      %4429 = vmatprep.subr.mxu0 0.0
      %4430 = vmatpush1.msra.mxu0 %v1032
      %4431 = vmatprep.subr.mxu0 0.0
      %4432 = vmatpush1.msra.mxu0 %v1031
      %4433 = vmatprep.subr.mxu0 0.0
      %4434 = vmatpush2.msra.mxu0 0.0
      %4435 = vmatprep.subr.mxu0 0.0
      %4436 = vmatpush2.msra.mxu0 0.0
      %4437 = vmatprep.subr.mxu0 0.0
      %4438 = vmatpush2.msra.mxu0 0.0
      %4439 = vmatprep.subr.mxu0 0.0
      %4440 = vmatpush2.msra.mxu0 0.0
      %4441 = vmatprep.subr.mxu0 0.0
      %4442 = vmatpush2.msra.mxu0 0.0
      %4443 = vmatprep.subr.mxu0 0.0
      %4444 = vmatpush2.msra.mxu0 0.0
      %4445 = vmatprep.subr.mxu0 0.0
      %4446 = vmatpush2.msra.mxu0 0.0
      %4447 = vmatprep.subr.mxu0 0.0
      %4448 = vmatpush2.msra.mxu0 0.0
      %4449 = vmatprep.subr.mxu0 0.0
      %4450 = vmatpush2.msra.mxu0 0.0
      %4451 = vmatprep.subr.mxu0 0.0
      %4452 = vmatpush2.msra.mxu0 0.0
      %4453 = vmatprep.subr.mxu0 0.0
      %4454 = vmatpush2.msra.mxu0 0.0
      %4455 = vmatprep.subr.mxu0 0.0
      %4456 = vmatpush2.msra.mxu0 0.0
      %4457 = vmatprep.subr.mxu0 0.0
      %4458 = vmatpush2.msra.mxu0 0.0
      %4459 = vmatprep.subr.mxu0 0.0
      %4460 = vmatpush2.msra.mxu0 0.0
      %4461 = vmatprep.subr.mxu0 0.0
      %4462 = vmatpush2.msra.mxu0 0.0
      %4463 = vmatprep.subr.mxu0 0.0
      %4464 = vmatpush2.msra.mxu0 0.0
      %4465 = vmatprep.mubr.f32.mxu0 0.0
      %4466 = vmatmul.mubr.f32.gmra.mxu0 %v4219
      %v4467 = vpop.f32.mrf.mxu0
      %v4468 = vadd.f32 0.0, %v4467
      %v4469 = vpop.f32.mrf.mxu0
      %4470 = vmatprep.mubr.f32.mxu0 0.0
      %4471 = vmatmul.mubr.f32.gmra.mxu0 %v4220
      %v4472 = vpop.f32.mrf.mxu0
      %v4473 = vadd.f32 0.0, %v4472
      %v4474 = vpop.f32.mrf.mxu0
      %4475 = vmatprep.mubr.f32.mxu0 0.0
      %4476 = vmatmul.mubr.f32.gmra.mxu0 %v4221
      %v4477 = vpop.f32.mrf.mxu0
      %v4478 = vadd.f32 0.0, %v4477
      %v4479 = vpop.f32.mrf.mxu0
      %4480 = vmatprep.mubr.f32.mxu0 0.0
      %4481 = vmatmul.mubr.f32.gmra.mxu0 %v4222
      %v4482 = vpop.f32.mrf.mxu0
      %v4483 = vadd.f32 0.0, %v4482
      %v4484 = vpop.f32.mrf.mxu0
      %4485 = vdwg.mxu0
      %v4486 = vmax.f32 %v4397, %v4468
      %v4487 = vmax.f32 %v4398, %v4473
      %v4488 = vmax.f32 %v4399, %v4478
      %v4489 = vmax.f32 %v4400, %v4483
      %v4490 = vmul.u32 %v704, 4
      %vm4491 = vcmp.eq.s32.totalorder %v687, %v4490
      %vm4492 = vcmp.eq.s32.totalorder %v688, %v4490
      %vm4493 = vcmp.eq.s32.totalorder %v689, %v4490
      %vm4494 = vcmp.eq.s32.totalorder %v690, %v4490
      %vm4495 = vcmp.eq.s32.totalorder %v691, %v4490
      %vm4496 = vcmp.eq.s32.totalorder %v692, %v4490
      %vm4497 = vcmp.eq.s32.totalorder %v693, %v4490
      %vm4498 = vcmp.eq.s32.totalorder %v694, %v4490
      %vm4499 = vcmp.eq.s32.totalorder %v695, %v4490
      %vm4500 = vcmp.eq.s32.totalorder %v696, %v4490
      %vm4501 = vcmp.eq.s32.totalorder %v697, %v4490
      %vm4502 = vcmp.eq.s32.totalorder %v698, %v4490
      %vm4503 = vcmp.eq.s32.totalorder %v699, %v4490
      %vm4504 = vcmp.eq.s32.totalorder %v700, %v4490
      %vm4505 = vcmp.eq.s32.totalorder %v701, %v4490
      %vm4506 = vcmp.eq.s32.totalorder %v702, %v4490
      %v4507 = vsel %vm4491, 1, 0
      %v4508 = vsel %vm4492, 1, 0
      %v4509 = vsel %vm4493, 1, 0
      %v4510 = vsel %vm4494, 1, 0
      %v4511 = vsel %vm4495, 1, 0
      %v4512 = vsel %vm4496, 1, 0
      %v4513 = vsel %vm4497, 1, 0
      %v4514 = vsel %vm4498, 1, 0
      %v4515 = vsel %vm4499, 1, 0
      %v4516 = vsel %vm4500, 1, 0
      %v4517 = vsel %vm4501, 1, 0
      %v4518 = vsel %vm4502, 1, 0
      %v4519 = vsel %vm4503, 1, 0
      %v4520 = vsel %vm4504, 1, 0
      %v4521 = vsel %vm4505, 1, 0
      %v4522 = vsel %vm4506, 1, 0
      %v4523 = vcvt.s32.f32 %v4507
      %v4524 = vcvt.s32.f32 %v4508
      %v4525 = vcvt.s32.f32 %v4509
      %v4526 = vcvt.s32.f32 %v4510
      %v4527 = vcvt.s32.f32 %v4511
      %v4528 = vcvt.s32.f32 %v4512
      %v4529 = vcvt.s32.f32 %v4513
      %v4530 = vcvt.s32.f32 %v4514
      %v4531 = vcvt.s32.f32 %v4515
      %v4532 = vcvt.s32.f32 %v4516
      %v4533 = vcvt.s32.f32 %v4517
      %v4534 = vcvt.s32.f32 %v4518
      %v4535 = vcvt.s32.f32 %v4519
      %v4536 = vcvt.s32.f32 %v4520
      %v4537 = vcvt.s32.f32 %v4521
      %v4538 = vcvt.s32.f32 %v4522
      %4539 = vmatprep.subr.mxu0 0.0
      %4540 = vmatpush1.msra.mxu0 %v4538
      %4541 = vmatprep.subr.mxu0 0.0
      %4542 = vmatpush1.msra.mxu0 %v4537
      %4543 = vmatprep.subr.mxu0 0.0
      %4544 = vmatpush1.msra.mxu0 %v4536
      %4545 = vmatprep.subr.mxu0 0.0
      %4546 = vmatpush1.msra.mxu0 %v4535
      %4547 = vmatprep.subr.mxu0 0.0
      %4548 = vmatpush1.msra.mxu0 %v4534
      %4549 = vmatprep.subr.mxu0 0.0
      %4550 = vmatpush1.msra.mxu0 %v4533
      %4551 = vmatprep.subr.mxu0 0.0
      %4552 = vmatpush1.msra.mxu0 %v4532
      %4553 = vmatprep.subr.mxu0 0.0
      %4554 = vmatpush1.msra.mxu0 %v4531
      %4555 = vmatprep.subr.mxu0 0.0
      %4556 = vmatpush1.msra.mxu0 %v4530
      %4557 = vmatprep.subr.mxu0 0.0
      %4558 = vmatpush1.msra.mxu0 %v4529
      %4559 = vmatprep.subr.mxu0 0.0
      %4560 = vmatpush1.msra.mxu0 %v4528
      %4561 = vmatprep.subr.mxu0 0.0
      %4562 = vmatpush1.msra.mxu0 %v4527
      %4563 = vmatprep.subr.mxu0 0.0
      %4564 = vmatpush1.msra.mxu0 %v4526
      %4565 = vmatprep.subr.mxu0 0.0
      %4566 = vmatpush1.msra.mxu0 %v4525
      %4567 = vmatprep.subr.mxu0 0.0
      %4568 = vmatpush1.msra.mxu0 %v4524
      %4569 = vmatprep.subr.mxu0 0.0
      %4570 = vmatpush1.msra.mxu0 %v4523
      %4571 = vmatprep.subr.mxu0 0.0
      %4572 = vmatpush2.msra.mxu0 0.0
      %4573 = vmatprep.subr.mxu0 0.0
      %4574 = vmatpush2.msra.mxu0 0.0
      %4575 = vmatprep.subr.mxu0 0.0
      %4576 = vmatpush2.msra.mxu0 0.0
      %4577 = vmatprep.subr.mxu0 0.0
      %4578 = vmatpush2.msra.mxu0 0.0
      %4579 = vmatprep.subr.mxu0 0.0
      %4580 = vmatpush2.msra.mxu0 0.0
      %4581 = vmatprep.subr.mxu0 0.0
      %4582 = vmatpush2.msra.mxu0 0.0
      %4583 = vmatprep.subr.mxu0 0.0
      %4584 = vmatpush2.msra.mxu0 0.0
      %4585 = vmatprep.subr.mxu0 0.0
      %4586 = vmatpush2.msra.mxu0 0.0
      %4587 = vmatprep.subr.mxu0 0.0
      %4588 = vmatpush2.msra.mxu0 0.0
      %4589 = vmatprep.subr.mxu0 0.0
      %4590 = vmatpush2.msra.mxu0 0.0
      %4591 = vmatprep.subr.mxu0 0.0
      %4592 = vmatpush2.msra.mxu0 0.0
      %4593 = vmatprep.subr.mxu0 0.0
      %4594 = vmatpush2.msra.mxu0 0.0
      %4595 = vmatprep.subr.mxu0 0.0
      %4596 = vmatpush2.msra.mxu0 0.0
      %4597 = vmatprep.subr.mxu0 0.0
      %4598 = vmatpush2.msra.mxu0 0.0
      %4599 = vmatprep.subr.mxu0 0.0
      %4600 = vmatpush2.msra.mxu0 0.0
      %4601 = vmatprep.subr.mxu0 0.0
      %4602 = vmatpush2.msra.mxu0 0.0
      %4603 = vmatprep.mubr.f32.mxu0 0.0
      %4604 = vmatmul.mubr.f32.gmra.mxu0 %v4486
      %v4605 = vpop.f32.mrf.mxu0
      %v4606 = vadd.f32 0.0, %v4605
      %v4607 = vpop.f32.mrf.mxu0
      %4608 = vmatprep.mubr.f32.mxu0 0.0
      %4609 = vmatmul.mubr.f32.gmra.mxu0 %v4487
      %v4610 = vpop.f32.mrf.mxu0
      %v4611 = vadd.f32 0.0, %v4610
      %v4612 = vpop.f32.mrf.mxu0
      %4613 = vmatprep.mubr.f32.mxu0 0.0
      %4614 = vmatmul.mubr.f32.gmra.mxu0 %v4488
      %v4615 = vpop.f32.mrf.mxu0
      %v4616 = vadd.f32 0.0, %v4615
      %v4617 = vpop.f32.mrf.mxu0
      %4618 = vmatprep.mubr.f32.mxu0 0.0
      %4619 = vmatmul.mubr.f32.gmra.mxu0 %v4489
      %v4620 = vpop.f32.mrf.mxu0
      %v4621 = vadd.f32 0.0, %v4620
      %v4622 = vpop.f32.mrf.mxu0
      %4623 = vdwg.mxu0
      %v4624 = vld [vmem:[%s8] sm:$0xff]
      %v4625 = vld [vmem:[%s8 + $0x8] sm:$0xff]
      %v4626 = vld [vmem:[%s8 + $0x10] sm:$0xff]
      %v4627 = vld [vmem:[%s8 + $0x18] sm:$0xff]
      %v4628 = vld [vmem:[%s9] sm:$0xff]
      %v4629 = vld [vmem:[%s9 + $0x8] sm:$0xff]
      %v4630 = vld [vmem:[%s9 + $0x10] sm:$0xff]
      %v4631 = vld [vmem:[%s9 + $0x18] sm:$0xff]
      %v4632 = vld [vmem:[%s9 + $0x20] sm:$0xff]
      %v4633 = vld [vmem:[%s9 + $0x28] sm:$0xff]
      %v4634 = vld [vmem:[%s9 + $0x30] sm:$0xff]
      %v4635 = vld [vmem:[%s9 + $0x38] sm:$0xff]
      %v4636 = vld [vmem:[%s9 + $0x40] sm:$0xff]
      %v4637 = vld [vmem:[%s9 + $0x48] sm:$0xff]
      %v4638 = vld [vmem:[%s9 + $0x50] sm:$0xff]
      %v4639 = vld [vmem:[%s9 + $0x58] sm:$0xff]
      %v4640 = vld [vmem:[%s9 + $0x60] sm:$0xff]
      %v4641 = vld [vmem:[%s9 + $0x68] sm:$0xff]
      %v4642 = vld [vmem:[%s9 + $0x70] sm:$0xff]
      %v4643 = vld [vmem:[%s9 + $0x78] sm:$0xff]
      %v4644 = vld [vmem:[%s9 + $0x80] sm:$0xff]
      %v4645 = vld [vmem:[%s9 + $0x88] sm:$0xff]
      %v4646 = vld [vmem:[%s9 + $0x90] sm:$0xff]
      %v4647 = vld [vmem:[%s9 + $0x98] sm:$0xff]
      %v4648 = vld [vmem:[%s9 + $0xa0] sm:$0xff]
      %v4649 = vld [vmem:[%s9 + $0xa8] sm:$0xff]
      %v4650 = vld [vmem:[%s9 + $0xb0] sm:$0xff]
      %v4651 = vld [vmem:[%s9 + $0xb8] sm:$0xff]
      %v4652 = vld [vmem:[%s9 + $0xc0] sm:$0xff]
      %v4653 = vld [vmem:[%s9 + $0xc8] sm:$0xff]
      %v4654 = vld [vmem:[%s9 + $0xd0] sm:$0xff]
      %v4655 = vld [vmem:[%s9 + $0xd8] sm:$0xff]
      %vm4656 = vcmask 261120
      %v4658 = vsel %vm4656, %v4628, 0
      %v4661 = vsel %vm4656, %v4629, 0
      %v4664 = vsel %vm4656, %v4630, 0
      %v4667 = vsel %vm4656, %v4631, 0
      %v4670 = vsel %vm4656, %v4632, 0
      %v4673 = vsel %vm4656, %v4633, 0
      %v4676 = vsel %vm4656, %v4634, 0
      %v4679 = vsel %vm4656, %v4635, 0
      %v4682 = vsel %vm4656, %v4636, 0
      %v4685 = vsel %vm4656, %v4637, 0
      %v4688 = vsel %vm4656, %v4638, 0
      %v4691 = vsel %vm4656, %v4639, 0
      %v4694 = vsel %vm4656, %v4640, 0
      %v4697 = vsel %vm4656, %v4641, 0
      %v4700 = vsel %vm4656, %v4642, 0
      %v4703 = vsel %vm4656, %v4643, 0
      %v4706 = vsel %vm4656, %v4644, 0
      %v4709 = vsel %vm4656, %v4645, 0
      %v4712 = vsel %vm4656, %v4646, 0
      %v4715 = vsel %vm4656, %v4647, 0
      %v4718 = vsel %vm4656, %v4648, 0
      %v4721 = vsel %vm4656, %v4649, 0
      %v4724 = vsel %vm4656, %v4650, 0
      %v4727 = vsel %vm4656, %v4651, 0
      %v4730 = vsel %vm4656, %v4652, 0
      %v4733 = vsel %vm4656, %v4653, 0
      %v4736 = vsel %vm4656, %v4654, 0
      %v4739 = vsel %vm4656, %v4655, 0
      %4741 = vmatprep.subr.mxu0 0.0
      %4742 = vmatpush1.msra.mxu0 0.0
      %4743 = vmatprep.subr.mxu0 0.0
      %4744 = vmatpush1.msra.mxu0 0.0
      %4745 = vmatprep.subr.mxu0 0.0
      %4746 = vmatpush1.msra.mxu0 0.0
      %4747 = vmatprep.subr.mxu0 0.0
      %4748 = vmatpush1.msra.mxu0 0.0
      %4749 = vmatprep.subr.mxu0 0.0
      %4750 = vmatpush1.msra.mxu0 0.0
      %4751 = vmatprep.subr.mxu0 0.0
      %4752 = vmatpush1.msra.mxu0 0.0
      %4753 = vmatprep.subr.mxu0 0.0
      %4754 = vmatpush1.msra.mxu0 0.0
      %4755 = vmatprep.subr.mxu0 0.0
      %4756 = vmatpush1.msra.mxu0 0.0
      %4757 = vmatprep.subr.mxu0 0.0
      %4758 = vmatpush1.msra.mxu0 0.0
      %4759 = vmatprep.subr.mxu0 0.0
      %4760 = vmatpush1.msra.mxu0 0.0
      %4761 = vmatprep.subr.mxu0 0.0
      %4762 = vmatpush1.msra.mxu0 0.0
      %4763 = vmatprep.subr.mxu0 0.0
      %4764 = vmatpush1.msra.mxu0 0.0
      %4765 = vmatprep.subr.mxu0 0.0
      %4766 = vmatpush1.msra.mxu0 %v4621
      %4767 = vmatprep.subr.mxu0 0.0
      %4768 = vmatpush1.msra.mxu0 %v4616
      %4769 = vmatprep.subr.mxu0 0.0
      %4770 = vmatpush1.msra.mxu0 %v4611
      %4771 = vmatprep.subr.mxu0 0.0
      %4772 = vmatpush1.msra.mxu0 %v4606
      %4773 = vmatprep.subr.mxu0 0.0
      %4774 = vmatpush2.msra.mxu0 0.0
      %4775 = vmatprep.subr.mxu0 0.0
      %4776 = vmatpush2.msra.mxu0 0.0
      %4777 = vmatprep.subr.mxu0 0.0
      %4778 = vmatpush2.msra.mxu0 0.0
      %4779 = vmatprep.subr.mxu0 0.0
      %4780 = vmatpush2.msra.mxu0 0.0
      %4781 = vmatprep.subr.mxu0 0.0
      %4782 = vmatpush2.msra.mxu0 0.0
      %4783 = vmatprep.subr.mxu0 0.0
      %4784 = vmatpush2.msra.mxu0 0.0
      %4785 = vmatprep.subr.mxu0 0.0
      %4786 = vmatpush2.msra.mxu0 0.0
      %4787 = vmatprep.subr.mxu0 0.0
      %4788 = vmatpush2.msra.mxu0 0.0
      %4789 = vmatprep.subr.mxu0 0.0
      %4790 = vmatpush2.msra.mxu0 0.0
      %4791 = vmatprep.subr.mxu0 0.0
      %4792 = vmatpush2.msra.mxu0 0.0
      %4793 = vmatprep.subr.mxu0 0.0
      %4794 = vmatpush2.msra.mxu0 0.0
      %4795 = vmatprep.subr.mxu0 0.0
      %4796 = vmatpush2.msra.mxu0 0.0
      %4797 = vmatprep.subr.mxu0 0.0
      %4798 = vmatpush2.msra.mxu0 0.0
      %4799 = vmatprep.subr.mxu0 0.0
      %4800 = vmatpush2.msra.mxu0 0.0
      %4801 = vmatprep.subr.mxu0 0.0
      %4802 = vmatpush2.msra.mxu0 0.0
      %4803 = vmatprep.subr.mxu0 0.0
      %4804 = vmatpush2.msra.mxu0 0.0
      %4805 = vmatprep.mubr.f32.mxu0 0.0
      %4806 = vmatmul.mubr.f32.gmra.mxu0 %v4658
      %v4807 = vpop.f32.mrf.mxu0
      %v4808 = vadd.f32 0.0, %v4807
      %v4809 = vpop.f32.mrf.mxu0
      %4810 = vmatprep.mubr.f32.mxu0 0.0
      %4811 = vmatmul.mubr.f32.gmra.mxu0 %v4661
      %v4812 = vpop.f32.mrf.mxu0
      %v4813 = vadd.f32 0.0, %v4812
      %v4814 = vpop.f32.mrf.mxu0
      %4815 = vmatprep.mubr.f32.mxu0 0.0
      %4816 = vmatmul.mubr.f32.gmra.mxu0 %v4664
      %v4817 = vpop.f32.mrf.mxu0
      %v4818 = vadd.f32 0.0, %v4817
      %v4819 = vpop.f32.mrf.mxu0
      %4820 = vmatprep.mubr.f32.mxu0 0.0
      %4821 = vmatmul.mubr.f32.gmra.mxu0 %v4667
      %v4822 = vpop.f32.mrf.mxu0
      %v4823 = vadd.f32 0.0, %v4822
      %v4824 = vpop.f32.mrf.mxu0
      %4825 = vmatprep.mubr.f32.mxu0 0.0
      %4826 = vmatmul.mubr.f32.gmra.mxu0 %v4670
      %v4827 = vpop.f32.mrf.mxu0
      %v4828 = vadd.f32 0.0, %v4827
      %v4829 = vpop.f32.mrf.mxu0
      %4830 = vmatprep.mubr.f32.mxu0 0.0
      %4831 = vmatmul.mubr.f32.gmra.mxu0 %v4673
      %v4832 = vpop.f32.mrf.mxu0
      %v4833 = vadd.f32 0.0, %v4832
      %v4834 = vpop.f32.mrf.mxu0
      %4835 = vmatprep.mubr.f32.mxu0 0.0
      %4836 = vmatmul.mubr.f32.gmra.mxu0 %v4676
      %v4837 = vpop.f32.mrf.mxu0
      %v4838 = vadd.f32 0.0, %v4837
      %v4839 = vpop.f32.mrf.mxu0
      %4840 = vmatprep.mubr.f32.mxu0 0.0
      %4841 = vmatmul.mubr.f32.gmra.mxu0 %v4679
      %v4842 = vpop.f32.mrf.mxu0
      %v4843 = vadd.f32 0.0, %v4842
      %v4844 = vpop.f32.mrf.mxu0
      %4845 = vmatprep.mubr.f32.mxu0 0.0
      %4846 = vmatmul.mubr.f32.gmra.mxu0 %v4682
      %v4847 = vpop.f32.mrf.mxu0
      %v4848 = vadd.f32 0.0, %v4847
      %v4849 = vpop.f32.mrf.mxu0
      %4850 = vmatprep.mubr.f32.mxu0 0.0
      %4851 = vmatmul.mubr.f32.gmra.mxu0 %v4685
      %v4852 = vpop.f32.mrf.mxu0
      %v4853 = vadd.f32 0.0, %v4852
      %v4854 = vpop.f32.mrf.mxu0
      %4855 = vmatprep.mubr.f32.mxu0 0.0
      %4856 = vmatmul.mubr.f32.gmra.mxu0 %v4688
      %v4857 = vpop.f32.mrf.mxu0
      %v4858 = vadd.f32 0.0, %v4857
      %v4859 = vpop.f32.mrf.mxu0
      %4860 = vmatprep.mubr.f32.mxu0 0.0
      %4861 = vmatmul.mubr.f32.gmra.mxu0 %v4691
      %v4862 = vpop.f32.mrf.mxu0
      %v4863 = vadd.f32 0.0, %v4862
      %v4864 = vpop.f32.mrf.mxu0
      %4865 = vmatprep.mubr.f32.mxu0 0.0
      %4866 = vmatmul.mubr.f32.gmra.mxu0 %v4694
      %v4867 = vpop.f32.mrf.mxu0
      %v4868 = vadd.f32 0.0, %v4867
      %v4869 = vpop.f32.mrf.mxu0
      %4870 = vmatprep.mubr.f32.mxu0 0.0
      %4871 = vmatmul.mubr.f32.gmra.mxu0 %v4697
      %v4872 = vpop.f32.mrf.mxu0
      %v4873 = vadd.f32 0.0, %v4872
      %v4874 = vpop.f32.mrf.mxu0
      %4875 = vmatprep.mubr.f32.mxu0 0.0
      %4876 = vmatmul.mubr.f32.gmra.mxu0 %v4700
      %v4877 = vpop.f32.mrf.mxu0
      %v4878 = vadd.f32 0.0, %v4877
      %v4879 = vpop.f32.mrf.mxu0
      %4880 = vmatprep.mubr.f32.mxu0 0.0
      %4881 = vmatmul.mubr.f32.gmra.mxu0 %v4703
      %v4882 = vpop.f32.mrf.mxu0
      %v4883 = vadd.f32 0.0, %v4882
      %v4884 = vpop.f32.mrf.mxu0
      %4885 = vmatprep.mubr.f32.mxu0 0.0
      %4886 = vmatmul.mubr.f32.gmra.mxu0 %v4706
      %v4887 = vpop.f32.mrf.mxu0
      %v4888 = vadd.f32 0.0, %v4887
      %v4889 = vpop.f32.mrf.mxu0
      %4890 = vmatprep.mubr.f32.mxu0 0.0
      %4891 = vmatmul.mubr.f32.gmra.mxu0 %v4709
      %v4892 = vpop.f32.mrf.mxu0
      %v4893 = vadd.f32 0.0, %v4892
      %v4894 = vpop.f32.mrf.mxu0
      %4895 = vmatprep.mubr.f32.mxu0 0.0
      %4896 = vmatmul.mubr.f32.gmra.mxu0 %v4712
      %v4897 = vpop.f32.mrf.mxu0
      %v4898 = vadd.f32 0.0, %v4897
      %v4899 = vpop.f32.mrf.mxu0
      %4900 = vmatprep.mubr.f32.mxu0 0.0
      %4901 = vmatmul.mubr.f32.gmra.mxu0 %v4715
      %v4902 = vpop.f32.mrf.mxu0
      %v4903 = vadd.f32 0.0, %v4902
      %v4904 = vpop.f32.mrf.mxu0
      %4905 = vmatprep.mubr.f32.mxu0 0.0
      %4906 = vmatmul.mubr.f32.gmra.mxu0 %v4718
      %v4907 = vpop.f32.mrf.mxu0
      %v4908 = vadd.f32 0.0, %v4907
      %v4909 = vpop.f32.mrf.mxu0
      %4910 = vmatprep.mubr.f32.mxu0 0.0
      %4911 = vmatmul.mubr.f32.gmra.mxu0 %v4721
      %v4912 = vpop.f32.mrf.mxu0
      %v4913 = vadd.f32 0.0, %v4912
      %v4914 = vpop.f32.mrf.mxu0
      %4915 = vmatprep.mubr.f32.mxu0 0.0
      %4916 = vmatmul.mubr.f32.gmra.mxu0 %v4724
      %v4917 = vpop.f32.mrf.mxu0
      %v4918 = vadd.f32 0.0, %v4917
      %v4919 = vpop.f32.mrf.mxu0
      %4920 = vmatprep.mubr.f32.mxu0 0.0
      %4921 = vmatmul.mubr.f32.gmra.mxu0 %v4727
      %v4922 = vpop.f32.mrf.mxu0
      %v4923 = vadd.f32 0.0, %v4922
      %v4924 = vpop.f32.mrf.mxu0
      %4925 = vmatprep.mubr.f32.mxu0 0.0
      %4926 = vmatmul.mubr.f32.gmra.mxu0 %v4730
      %v4927 = vpop.f32.mrf.mxu0
      %v4928 = vadd.f32 0.0, %v4927
      %v4929 = vpop.f32.mrf.mxu0
      %4930 = vmatprep.mubr.f32.mxu0 0.0
      %4931 = vmatmul.mubr.f32.gmra.mxu0 %v4733
      %v4932 = vpop.f32.mrf.mxu0
      %v4933 = vadd.f32 0.0, %v4932
      %v4934 = vpop.f32.mrf.mxu0
      %4935 = vmatprep.mubr.f32.mxu0 0.0
      %4936 = vmatmul.mubr.f32.gmra.mxu0 %v4736
      %v4937 = vpop.f32.mrf.mxu0
      %v4938 = vadd.f32 0.0, %v4937
      %v4939 = vpop.f32.mrf.mxu0
      %4940 = vmatprep.mubr.f32.mxu0 0.0
      %4941 = vmatmul.mubr.f32.gmra.mxu0 %v4739
      %v4942 = vpop.f32.mrf.mxu0
      %v4943 = vadd.f32 0.0, %v4942
      %v4944 = vpop.f32.mrf.mxu0
      %4945 = vdwg.mxu0
      %v4947 = vsel %vm4656, %v4828, 0
      %v4950 = vsel %vm4656, %v4833, 0
      %v4953 = vsel %vm4656, %v4838, 0
      %v4956 = vsel %vm4656, %v4843, 0
      %4958 = vmatprep.subr.mxu0 0.0
      %4959 = vmatpush1.msra.mxu0 0.0
      %4960 = vmatprep.subr.mxu0 0.0
      %4961 = vmatpush1.msra.mxu0 0.0
      %4962 = vmatprep.subr.mxu0 0.0
      %4963 = vmatpush1.msra.mxu0 0.0
      %4964 = vmatprep.subr.mxu0 0.0
      %4965 = vmatpush1.msra.mxu0 0.0
      %4966 = vmatprep.subr.mxu0 0.0
      %4967 = vmatpush1.msra.mxu0 0.0
      %4968 = vmatprep.subr.mxu0 0.0
      %4969 = vmatpush1.msra.mxu0 0.0
      %4970 = vmatprep.subr.mxu0 0.0
      %4971 = vmatpush1.msra.mxu0 0.0
      %4972 = vmatprep.subr.mxu0 0.0
      %4973 = vmatpush1.msra.mxu0 0.0
      %4974 = vmatprep.subr.mxu0 0.0
      %4975 = vmatpush1.msra.mxu0 0.0
      %4976 = vmatprep.subr.mxu0 0.0
      %4977 = vmatpush1.msra.mxu0 0.0
      %4978 = vmatprep.subr.mxu0 0.0
      %4979 = vmatpush1.msra.mxu0 0.0
      %4980 = vmatprep.subr.mxu0 0.0
      %4981 = vmatpush1.msra.mxu0 0.0
      %4982 = vmatprep.subr.mxu0 0.0
      %4983 = vmatpush1.msra.mxu0 %v790
      %4984 = vmatprep.subr.mxu0 0.0
      %4985 = vmatpush1.msra.mxu0 %v789
      %4986 = vmatprep.subr.mxu0 0.0
      %4987 = vmatpush1.msra.mxu0 %v788
      %4988 = vmatprep.subr.mxu0 0.0
      %4989 = vmatpush1.msra.mxu0 %v787
      %4990 = vmatprep.subr.mxu0 0.0
      %4991 = vmatpush2.msra.mxu0 0.0
      %4992 = vmatprep.subr.mxu0 0.0
      %4993 = vmatpush2.msra.mxu0 0.0
      %4994 = vmatprep.subr.mxu0 0.0
      %4995 = vmatpush2.msra.mxu0 0.0
      %4996 = vmatprep.subr.mxu0 0.0
      %4997 = vmatpush2.msra.mxu0 0.0
      %4998 = vmatprep.subr.mxu0 0.0
      %4999 = vmatpush2.msra.mxu0 0.0
      %5000 = vmatprep.subr.mxu0 0.0
      %5001 = vmatpush2.msra.mxu0 0.0
      %5002 = vmatprep.subr.mxu0 0.0
      %5003 = vmatpush2.msra.mxu0 0.0
      %5004 = vmatprep.subr.mxu0 0.0
      %5005 = vmatpush2.msra.mxu0 0.0
      %5006 = vmatprep.subr.mxu0 0.0
      %5007 = vmatpush2.msra.mxu0 0.0
      %5008 = vmatprep.subr.mxu0 0.0
      %5009 = vmatpush2.msra.mxu0 0.0
      %5010 = vmatprep.subr.mxu0 0.0
      %5011 = vmatpush2.msra.mxu0 0.0
      %5012 = vmatprep.subr.mxu0 0.0
      %5013 = vmatpush2.msra.mxu0 0.0
      %5014 = vmatprep.subr.mxu0 0.0
      %5015 = vmatpush2.msra.mxu0 0.0
      %5016 = vmatprep.subr.mxu0 0.0
      %5017 = vmatpush2.msra.mxu0 0.0
      %5018 = vmatprep.subr.mxu0 0.0
      %5019 = vmatpush2.msra.mxu0 0.0
      %5020 = vmatprep.subr.mxu0 0.0
      %5021 = vmatpush2.msra.mxu0 0.0
      %5022 = vmatprep.mubr.f32.mxu0 0.0
      %5023 = vmatmul.mubr.f32.gmra.mxu0 %v4947
      %v5024 = vpop.f32.mrf.mxu0
      %v5025 = vadd.f32 0.0, %v5024
      %v5026 = vpop.f32.mrf.mxu0
      %5027 = vmatprep.mubr.f32.mxu0 0.0
      %5028 = vmatmul.mubr.f32.gmra.mxu0 %v4950
      %v5029 = vpop.f32.mrf.mxu0
      %v5030 = vadd.f32 0.0, %v5029
      %v5031 = vpop.f32.mrf.mxu0
      %5032 = vmatprep.mubr.f32.mxu0 0.0
      %5033 = vmatmul.mubr.f32.gmra.mxu0 %v4953
      %v5034 = vpop.f32.mrf.mxu0
      %v5035 = vadd.f32 0.0, %v5034
      %v5036 = vpop.f32.mrf.mxu0
      %5037 = vmatprep.mubr.f32.mxu0 0.0
      %5038 = vmatmul.mubr.f32.gmra.mxu0 %v4956
      %v5039 = vpop.f32.mrf.mxu0
      %v5040 = vadd.f32 0.0, %v5039
      %v5041 = vpop.f32.mrf.mxu0
      %5042 = vdwg.mxu0
      %v5044 = vsel %vm4656, %v4808, 0
      %v5047 = vsel %vm4656, %v4813, 0
      %v5050 = vsel %vm4656, %v4818, 0
      %v5053 = vsel %vm4656, %v4823, 0
      %5055 = vmatprep.subr.mxu0 0.0
      %5056 = vmatpush1.msra.mxu0 0.0
      %5057 = vmatprep.subr.mxu0 0.0
      %5058 = vmatpush1.msra.mxu0 0.0
      %5059 = vmatprep.subr.mxu0 0.0
      %5060 = vmatpush1.msra.mxu0 0.0
      %5061 = vmatprep.subr.mxu0 0.0
      %5062 = vmatpush1.msra.mxu0 0.0
      %5063 = vmatprep.subr.mxu0 0.0
      %5064 = vmatpush1.msra.mxu0 0.0
      %5065 = vmatprep.subr.mxu0 0.0
      %5066 = vmatpush1.msra.mxu0 0.0
      %5067 = vmatprep.subr.mxu0 0.0
      %5068 = vmatpush1.msra.mxu0 0.0
      %5069 = vmatprep.subr.mxu0 0.0
      %5070 = vmatpush1.msra.mxu0 0.0
      %5071 = vmatprep.subr.mxu0 0.0
      %5072 = vmatpush1.msra.mxu0 0.0
      %5073 = vmatprep.subr.mxu0 0.0
      %5074 = vmatpush1.msra.mxu0 0.0
      %5075 = vmatprep.subr.mxu0 0.0
      %5076 = vmatpush1.msra.mxu0 0.0
      %5077 = vmatprep.subr.mxu0 0.0
      %5078 = vmatpush1.msra.mxu0 0.0
      %5079 = vmatprep.subr.mxu0 0.0
      %5080 = vmatpush1.msra.mxu0 %v741
      %5081 = vmatprep.subr.mxu0 0.0
      %5082 = vmatpush1.msra.mxu0 %v740
      %5083 = vmatprep.subr.mxu0 0.0
      %5084 = vmatpush1.msra.mxu0 %v739
      %5085 = vmatprep.subr.mxu0 0.0
      %5086 = vmatpush1.msra.mxu0 %v738
      %5087 = vmatprep.subr.mxu0 0.0
      %5088 = vmatpush2.msra.mxu0 0.0
      %5089 = vmatprep.subr.mxu0 0.0
      %5090 = vmatpush2.msra.mxu0 0.0
      %5091 = vmatprep.subr.mxu0 0.0
      %5092 = vmatpush2.msra.mxu0 0.0
      %5093 = vmatprep.subr.mxu0 0.0
      %5094 = vmatpush2.msra.mxu0 0.0
      %5095 = vmatprep.subr.mxu0 0.0
      %5096 = vmatpush2.msra.mxu0 0.0
      %5097 = vmatprep.subr.mxu0 0.0
      %5098 = vmatpush2.msra.mxu0 0.0
      %5099 = vmatprep.subr.mxu0 0.0
      %5100 = vmatpush2.msra.mxu0 0.0
      %5101 = vmatprep.subr.mxu0 0.0
      %5102 = vmatpush2.msra.mxu0 0.0
      %5103 = vmatprep.subr.mxu0 0.0
      %5104 = vmatpush2.msra.mxu0 0.0
      %5105 = vmatprep.subr.mxu0 0.0
      %5106 = vmatpush2.msra.mxu0 0.0
      %5107 = vmatprep.subr.mxu0 0.0
      %5108 = vmatpush2.msra.mxu0 0.0
      %5109 = vmatprep.subr.mxu0 0.0
      %5110 = vmatpush2.msra.mxu0 0.0
      %5111 = vmatprep.subr.mxu0 0.0
      %5112 = vmatpush2.msra.mxu0 0.0
      %5113 = vmatprep.subr.mxu0 0.0
      %5114 = vmatpush2.msra.mxu0 0.0
      %5115 = vmatprep.subr.mxu0 0.0
      %5116 = vmatpush2.msra.mxu0 0.0
      %5117 = vmatprep.subr.mxu0 0.0
      %5118 = vmatpush2.msra.mxu0 0.0
      %5119 = vmatprep.mubr.f32.mxu0 0.0
      %5120 = vmatmul.mubr.f32.gmra.mxu0 %v5044
      %v5121 = vpop.f32.mrf.mxu0
      %v5122 = vadd.f32 %v5025, %v5121
      %v5123 = vpop.f32.mrf.mxu0
      %5124 = vmatprep.mubr.f32.mxu0 0.0
      %5125 = vmatmul.mubr.f32.gmra.mxu0 %v5047
      %v5126 = vpop.f32.mrf.mxu0
      %v5127 = vadd.f32 %v5030, %v5126
      %v5128 = vpop.f32.mrf.mxu0
      %5129 = vmatprep.mubr.f32.mxu0 0.0
      %5130 = vmatmul.mubr.f32.gmra.mxu0 %v5050
      %v5131 = vpop.f32.mrf.mxu0
      %v5132 = vadd.f32 %v5035, %v5131
      %v5133 = vpop.f32.mrf.mxu0
      %5134 = vmatprep.mubr.f32.mxu0 0.0
      %5135 = vmatmul.mubr.f32.gmra.mxu0 %v5053
      %v5136 = vpop.f32.mrf.mxu0
      %v5137 = vadd.f32 %v5040, %v5136
      %v5138 = vpop.f32.mrf.mxu0
      %5139 = vdwg.mxu0
      %v5141 = vsel %vm4656, %v4848, 0
      %v5144 = vsel %vm4656, %v4853, 0
      %v5147 = vsel %vm4656, %v4858, 0
      %v5150 = vsel %vm4656, %v4863, 0
      %5152 = vmatprep.subr.mxu0 0.0
      %5153 = vmatpush1.msra.mxu0 0.0
      %5154 = vmatprep.subr.mxu0 0.0
      %5155 = vmatpush1.msra.mxu0 0.0
      %5156 = vmatprep.subr.mxu0 0.0
      %5157 = vmatpush1.msra.mxu0 0.0
      %5158 = vmatprep.subr.mxu0 0.0
      %5159 = vmatpush1.msra.mxu0 0.0
      %5160 = vmatprep.subr.mxu0 0.0
      %5161 = vmatpush1.msra.mxu0 0.0
      %5162 = vmatprep.subr.mxu0 0.0
      %5163 = vmatpush1.msra.mxu0 0.0
      %5164 = vmatprep.subr.mxu0 0.0
      %5165 = vmatpush1.msra.mxu0 0.0
      %5166 = vmatprep.subr.mxu0 0.0
      %5167 = vmatpush1.msra.mxu0 0.0
      %5168 = vmatprep.subr.mxu0 0.0
      %5169 = vmatpush1.msra.mxu0 0.0
      %5170 = vmatprep.subr.mxu0 0.0
      %5171 = vmatpush1.msra.mxu0 0.0
      %5172 = vmatprep.subr.mxu0 0.0
      %5173 = vmatpush1.msra.mxu0 0.0
      %5174 = vmatprep.subr.mxu0 0.0
      %5175 = vmatpush1.msra.mxu0 0.0
      %5176 = vmatprep.subr.mxu0 0.0
      %5177 = vmatpush1.msra.mxu0 %v839
      %5178 = vmatprep.subr.mxu0 0.0
      %5179 = vmatpush1.msra.mxu0 %v838
      %5180 = vmatprep.subr.mxu0 0.0
      %5181 = vmatpush1.msra.mxu0 %v837
      %5182 = vmatprep.subr.mxu0 0.0
      %5183 = vmatpush1.msra.mxu0 %v836
      %5184 = vmatprep.subr.mxu0 0.0
      %5185 = vmatpush2.msra.mxu0 0.0
      %5186 = vmatprep.subr.mxu0 0.0
      %5187 = vmatpush2.msra.mxu0 0.0
      %5188 = vmatprep.subr.mxu0 0.0
      %5189 = vmatpush2.msra.mxu0 0.0
      %5190 = vmatprep.subr.mxu0 0.0
      %5191 = vmatpush2.msra.mxu0 0.0
      %5192 = vmatprep.subr.mxu0 0.0
      %5193 = vmatpush2.msra.mxu0 0.0
      %5194 = vmatprep.subr.mxu0 0.0
      %5195 = vmatpush2.msra.mxu0 0.0
      %5196 = vmatprep.subr.mxu0 0.0
      %5197 = vmatpush2.msra.mxu0 0.0
      %5198 = vmatprep.subr.mxu0 0.0
      %5199 = vmatpush2.msra.mxu0 0.0
      %5200 = vmatprep.subr.mxu0 0.0
      %5201 = vmatpush2.msra.mxu0 0.0
      %5202 = vmatprep.subr.mxu0 0.0
      %5203 = vmatpush2.msra.mxu0 0.0
      %5204 = vmatprep.subr.mxu0 0.0
      %5205 = vmatpush2.msra.mxu0 0.0
      %5206 = vmatprep.subr.mxu0 0.0
      %5207 = vmatpush2.msra.mxu0 0.0
      %5208 = vmatprep.subr.mxu0 0.0
      %5209 = vmatpush2.msra.mxu0 0.0
      %5210 = vmatprep.subr.mxu0 0.0
      %5211 = vmatpush2.msra.mxu0 0.0
      %5212 = vmatprep.subr.mxu0 0.0
      %5213 = vmatpush2.msra.mxu0 0.0
      %5214 = vmatprep.subr.mxu0 0.0
      %5215 = vmatpush2.msra.mxu0 0.0
      %5216 = vmatprep.mubr.f32.mxu0 0.0
      %5217 = vmatmul.mubr.f32.gmra.mxu0 %v5141
      %v5218 = vpop.f32.mrf.mxu0
      %v5219 = vadd.f32 0.0, %v5218
      %v5220 = vpop.f32.mrf.mxu0
      %5221 = vmatprep.mubr.f32.mxu0 0.0
      %5222 = vmatmul.mubr.f32.gmra.mxu0 %v5144
      %v5223 = vpop.f32.mrf.mxu0
      %v5224 = vadd.f32 0.0, %v5223
      %v5225 = vpop.f32.mrf.mxu0
      %5226 = vmatprep.mubr.f32.mxu0 0.0
      %5227 = vmatmul.mubr.f32.gmra.mxu0 %v5147
      %v5228 = vpop.f32.mrf.mxu0
      %v5229 = vadd.f32 0.0, %v5228
      %v5230 = vpop.f32.mrf.mxu0
      %5231 = vmatprep.mubr.f32.mxu0 0.0
      %5232 = vmatmul.mubr.f32.gmra.mxu0 %v5150
      %v5233 = vpop.f32.mrf.mxu0
      %v5234 = vadd.f32 0.0, %v5233
      %v5235 = vpop.f32.mrf.mxu0
      %5236 = vdwg.mxu0
      %v5237 = vadd.f32 %v5122, %v5219
      %v5238 = vadd.f32 %v5127, %v5224
      %v5239 = vadd.f32 %v5132, %v5229
      %v5240 = vadd.f32 %v5137, %v5234
      %v5242 = vsel %vm4656, %v4868, 0
      %v5245 = vsel %vm4656, %v4873, 0
      %v5248 = vsel %vm4656, %v4878, 0
      %v5251 = vsel %vm4656, %v4883, 0
      %5253 = vmatprep.subr.mxu0 0.0
      %5254 = vmatpush1.msra.mxu0 0.0
      %5255 = vmatprep.subr.mxu0 0.0
      %5256 = vmatpush1.msra.mxu0 0.0
      %5257 = vmatprep.subr.mxu0 0.0
      %5258 = vmatpush1.msra.mxu0 0.0
      %5259 = vmatprep.subr.mxu0 0.0
      %5260 = vmatpush1.msra.mxu0 0.0
      %5261 = vmatprep.subr.mxu0 0.0
      %5262 = vmatpush1.msra.mxu0 0.0
      %5263 = vmatprep.subr.mxu0 0.0
      %5264 = vmatpush1.msra.mxu0 0.0
      %5265 = vmatprep.subr.mxu0 0.0
      %5266 = vmatpush1.msra.mxu0 0.0
      %5267 = vmatprep.subr.mxu0 0.0
      %5268 = vmatpush1.msra.mxu0 0.0
      %5269 = vmatprep.subr.mxu0 0.0
      %5270 = vmatpush1.msra.mxu0 0.0
      %5271 = vmatprep.subr.mxu0 0.0
      %5272 = vmatpush1.msra.mxu0 0.0
      %5273 = vmatprep.subr.mxu0 0.0
      %5274 = vmatpush1.msra.mxu0 0.0
      %5275 = vmatprep.subr.mxu0 0.0
      %5276 = vmatpush1.msra.mxu0 0.0
      %5277 = vmatprep.subr.mxu0 0.0
      %5278 = vmatpush1.msra.mxu0 %v887
      %5279 = vmatprep.subr.mxu0 0.0
      %5280 = vmatpush1.msra.mxu0 %v886
      %5281 = vmatprep.subr.mxu0 0.0
      %5282 = vmatpush1.msra.mxu0 %v885
      %5283 = vmatprep.subr.mxu0 0.0
      %5284 = vmatpush1.msra.mxu0 %v884
      %5285 = vmatprep.subr.mxu0 0.0
      %5286 = vmatpush2.msra.mxu0 0.0
      %5287 = vmatprep.subr.mxu0 0.0
      %5288 = vmatpush2.msra.mxu0 0.0
      %5289 = vmatprep.subr.mxu0 0.0
      %5290 = vmatpush2.msra.mxu0 0.0
      %5291 = vmatprep.subr.mxu0 0.0
      %5292 = vmatpush2.msra.mxu0 0.0
      %5293 = vmatprep.subr.mxu0 0.0
      %5294 = vmatpush2.msra.mxu0 0.0
      %5295 = vmatprep.subr.mxu0 0.0
      %5296 = vmatpush2.msra.mxu0 0.0
      %5297 = vmatprep.subr.mxu0 0.0
      %5298 = vmatpush2.msra.mxu0 0.0
      %5299 = vmatprep.subr.mxu0 0.0
      %5300 = vmatpush2.msra.mxu0 0.0
      %5301 = vmatprep.subr.mxu0 0.0
      %5302 = vmatpush2.msra.mxu0 0.0
      %5303 = vmatprep.subr.mxu0 0.0
      %5304 = vmatpush2.msra.mxu0 0.0
      %5305 = vmatprep.subr.mxu0 0.0
      %5306 = vmatpush2.msra.mxu0 0.0
      %5307 = vmatprep.subr.mxu0 0.0
      %5308 = vmatpush2.msra.mxu0 0.0
      %5309 = vmatprep.subr.mxu0 0.0
      %5310 = vmatpush2.msra.mxu0 0.0
      %5311 = vmatprep.subr.mxu0 0.0
      %5312 = vmatpush2.msra.mxu0 0.0
      %5313 = vmatprep.subr.mxu0 0.0
      %5314 = vmatpush2.msra.mxu0 0.0
      %5315 = vmatprep.subr.mxu0 0.0
      %5316 = vmatpush2.msra.mxu0 0.0
      %5317 = vmatprep.mubr.f32.mxu0 0.0
      %5318 = vmatmul.mubr.f32.gmra.mxu0 %v5242
      %v5319 = vpop.f32.mrf.mxu0
      %v5320 = vadd.f32 0.0, %v5319
      %v5321 = vpop.f32.mrf.mxu0
      %5322 = vmatprep.mubr.f32.mxu0 0.0
      %5323 = vmatmul.mubr.f32.gmra.mxu0 %v5245
      %v5324 = vpop.f32.mrf.mxu0
      %v5325 = vadd.f32 0.0, %v5324
      %v5326 = vpop.f32.mrf.mxu0
      %5327 = vmatprep.mubr.f32.mxu0 0.0
      %5328 = vmatmul.mubr.f32.gmra.mxu0 %v5248
      %v5329 = vpop.f32.mrf.mxu0
      %v5330 = vadd.f32 0.0, %v5329
      %v5331 = vpop.f32.mrf.mxu0
      %5332 = vmatprep.mubr.f32.mxu0 0.0
      %5333 = vmatmul.mubr.f32.gmra.mxu0 %v5251
      %v5334 = vpop.f32.mrf.mxu0
      %v5335 = vadd.f32 0.0, %v5334
      %v5336 = vpop.f32.mrf.mxu0
      %5337 = vdwg.mxu0
      %v5338 = vadd.f32 %v5237, %v5320
      %v5339 = vadd.f32 %v5238, %v5325
      %v5340 = vadd.f32 %v5239, %v5330
      %v5341 = vadd.f32 %v5240, %v5335
      %v5343 = vsel %vm4656, %v4888, 0
      %v5346 = vsel %vm4656, %v4893, 0
      %v5349 = vsel %vm4656, %v4898, 0
      %v5352 = vsel %vm4656, %v4903, 0
      %5354 = vmatprep.subr.mxu0 0.0
      %5355 = vmatpush1.msra.mxu0 0.0
      %5356 = vmatprep.subr.mxu0 0.0
      %5357 = vmatpush1.msra.mxu0 0.0
      %5358 = vmatprep.subr.mxu0 0.0
      %5359 = vmatpush1.msra.mxu0 0.0
      %5360 = vmatprep.subr.mxu0 0.0
      %5361 = vmatpush1.msra.mxu0 0.0
      %5362 = vmatprep.subr.mxu0 0.0
      %5363 = vmatpush1.msra.mxu0 0.0
      %5364 = vmatprep.subr.mxu0 0.0
      %5365 = vmatpush1.msra.mxu0 0.0
      %5366 = vmatprep.subr.mxu0 0.0
      %5367 = vmatpush1.msra.mxu0 0.0
      %5368 = vmatprep.subr.mxu0 0.0
      %5369 = vmatpush1.msra.mxu0 0.0
      %5370 = vmatprep.subr.mxu0 0.0
      %5371 = vmatpush1.msra.mxu0 0.0
      %5372 = vmatprep.subr.mxu0 0.0
      %5373 = vmatpush1.msra.mxu0 0.0
      %5374 = vmatprep.subr.mxu0 0.0
      %5375 = vmatpush1.msra.mxu0 0.0
      %5376 = vmatprep.subr.mxu0 0.0
      %5377 = vmatpush1.msra.mxu0 0.0
      %5378 = vmatprep.subr.mxu0 0.0
      %5379 = vmatpush1.msra.mxu0 %v936
      %5380 = vmatprep.subr.mxu0 0.0
      %5381 = vmatpush1.msra.mxu0 %v935
      %5382 = vmatprep.subr.mxu0 0.0
      %5383 = vmatpush1.msra.mxu0 %v934
      %5384 = vmatprep.subr.mxu0 0.0
      %5385 = vmatpush1.msra.mxu0 %v933
      %5386 = vmatprep.subr.mxu0 0.0
      %5387 = vmatpush2.msra.mxu0 0.0
      %5388 = vmatprep.subr.mxu0 0.0
      %5389 = vmatpush2.msra.mxu0 0.0
      %5390 = vmatprep.subr.mxu0 0.0
      %5391 = vmatpush2.msra.mxu0 0.0
      %5392 = vmatprep.subr.mxu0 0.0
      %5393 = vmatpush2.msra.mxu0 0.0
      %5394 = vmatprep.subr.mxu0 0.0
      %5395 = vmatpush2.msra.mxu0 0.0
      %5396 = vmatprep.subr.mxu0 0.0
      %5397 = vmatpush2.msra.mxu0 0.0
      %5398 = vmatprep.subr.mxu0 0.0
      %5399 = vmatpush2.msra.mxu0 0.0
      %5400 = vmatprep.subr.mxu0 0.0
      %5401 = vmatpush2.msra.mxu0 0.0
      %5402 = vmatprep.subr.mxu0 0.0
      %5403 = vmatpush2.msra.mxu0 0.0
      %5404 = vmatprep.subr.mxu0 0.0
      %5405 = vmatpush2.msra.mxu0 0.0
      %5406 = vmatprep.subr.mxu0 0.0
      %5407 = vmatpush2.msra.mxu0 0.0
      %5408 = vmatprep.subr.mxu0 0.0
      %5409 = vmatpush2.msra.mxu0 0.0
      %5410 = vmatprep.subr.mxu0 0.0
      %5411 = vmatpush2.msra.mxu0 0.0
      %5412 = vmatprep.subr.mxu0 0.0
      %5413 = vmatpush2.msra.mxu0 0.0
      %5414 = vmatprep.subr.mxu0 0.0
      %5415 = vmatpush2.msra.mxu0 0.0
      %5416 = vmatprep.subr.mxu0 0.0
      %5417 = vmatpush2.msra.mxu0 0.0
      %5418 = vmatprep.mubr.f32.mxu0 0.0
      %5419 = vmatmul.mubr.f32.gmra.mxu0 %v5343
      %v5420 = vpop.f32.mrf.mxu0
      %v5421 = vadd.f32 0.0, %v5420
      %v5422 = vpop.f32.mrf.mxu0
      %5423 = vmatprep.mubr.f32.mxu0 0.0
      %5424 = vmatmul.mubr.f32.gmra.mxu0 %v5346
      %v5425 = vpop.f32.mrf.mxu0
      %v5426 = vadd.f32 0.0, %v5425
      %v5427 = vpop.f32.mrf.mxu0
      %5428 = vmatprep.mubr.f32.mxu0 0.0
      %5429 = vmatmul.mubr.f32.gmra.mxu0 %v5349
      %v5430 = vpop.f32.mrf.mxu0
      %v5431 = vadd.f32 0.0, %v5430
      %v5432 = vpop.f32.mrf.mxu0
      %5433 = vmatprep.mubr.f32.mxu0 0.0
      %5434 = vmatmul.mubr.f32.gmra.mxu0 %v5352
      %v5435 = vpop.f32.mrf.mxu0
      %v5436 = vadd.f32 0.0, %v5435
      %v5437 = vpop.f32.mrf.mxu0
      %5438 = vdwg.mxu0
      %v5439 = vadd.f32 %v5338, %v5421
      %v5440 = vadd.f32 %v5339, %v5426
      %v5441 = vadd.f32 %v5340, %v5431
      %v5442 = vadd.f32 %v5341, %v5436
      %v5444 = vsel %vm4656, %v4908, 0
      %v5447 = vsel %vm4656, %v4913, 0
      %v5450 = vsel %vm4656, %v4918, 0
      %v5453 = vsel %vm4656, %v4923, 0
      %5455 = vmatprep.subr.mxu0 0.0
      %5456 = vmatpush1.msra.mxu0 0.0
      %5457 = vmatprep.subr.mxu0 0.0
      %5458 = vmatpush1.msra.mxu0 0.0
      %5459 = vmatprep.subr.mxu0 0.0
      %5460 = vmatpush1.msra.mxu0 0.0
      %5461 = vmatprep.subr.mxu0 0.0
      %5462 = vmatpush1.msra.mxu0 0.0
      %5463 = vmatprep.subr.mxu0 0.0
      %5464 = vmatpush1.msra.mxu0 0.0
      %5465 = vmatprep.subr.mxu0 0.0
      %5466 = vmatpush1.msra.mxu0 0.0
      %5467 = vmatprep.subr.mxu0 0.0
      %5468 = vmatpush1.msra.mxu0 0.0
      %5469 = vmatprep.subr.mxu0 0.0
      %5470 = vmatpush1.msra.mxu0 0.0
      %5471 = vmatprep.subr.mxu0 0.0
      %5472 = vmatpush1.msra.mxu0 0.0
      %5473 = vmatprep.subr.mxu0 0.0
      %5474 = vmatpush1.msra.mxu0 0.0
      %5475 = vmatprep.subr.mxu0 0.0
      %5476 = vmatpush1.msra.mxu0 0.0
      %5477 = vmatprep.subr.mxu0 0.0
      %5478 = vmatpush1.msra.mxu0 0.0
      %5479 = vmatprep.subr.mxu0 0.0
      %5480 = vmatpush1.msra.mxu0 %v985
      %5481 = vmatprep.subr.mxu0 0.0
      %5482 = vmatpush1.msra.mxu0 %v984
      %5483 = vmatprep.subr.mxu0 0.0
      %5484 = vmatpush1.msra.mxu0 %v983
      %5485 = vmatprep.subr.mxu0 0.0
      %5486 = vmatpush1.msra.mxu0 %v982
      %5487 = vmatprep.subr.mxu0 0.0
      %5488 = vmatpush2.msra.mxu0 0.0
      %5489 = vmatprep.subr.mxu0 0.0
      %5490 = vmatpush2.msra.mxu0 0.0
      %5491 = vmatprep.subr.mxu0 0.0
      %5492 = vmatpush2.msra.mxu0 0.0
      %5493 = vmatprep.subr.mxu0 0.0
      %5494 = vmatpush2.msra.mxu0 0.0
      %5495 = vmatprep.subr.mxu0 0.0
      %5496 = vmatpush2.msra.mxu0 0.0
      %5497 = vmatprep.subr.mxu0 0.0
      %5498 = vmatpush2.msra.mxu0 0.0
      %5499 = vmatprep.subr.mxu0 0.0
      %5500 = vmatpush2.msra.mxu0 0.0
      %5501 = vmatprep.subr.mxu0 0.0
      %5502 = vmatpush2.msra.mxu0 0.0
      %5503 = vmatprep.subr.mxu0 0.0
      %5504 = vmatpush2.msra.mxu0 0.0
      %5505 = vmatprep.subr.mxu0 0.0
      %5506 = vmatpush2.msra.mxu0 0.0
      %5507 = vmatprep.subr.mxu0 0.0
      %5508 = vmatpush2.msra.mxu0 0.0
      %5509 = vmatprep.subr.mxu0 0.0
      %5510 = vmatpush2.msra.mxu0 0.0
      %5511 = vmatprep.subr.mxu0 0.0
      %5512 = vmatpush2.msra.mxu0 0.0
      %5513 = vmatprep.subr.mxu0 0.0
      %5514 = vmatpush2.msra.mxu0 0.0
      %5515 = vmatprep.subr.mxu0 0.0
      %5516 = vmatpush2.msra.mxu0 0.0
      %5517 = vmatprep.subr.mxu0 0.0
      %5518 = vmatpush2.msra.mxu0 0.0
      %5519 = vmatprep.mubr.f32.mxu0 0.0
      %5520 = vmatmul.mubr.f32.gmra.mxu0 %v5444
      %v5521 = vpop.f32.mrf.mxu0
      %v5522 = vadd.f32 0.0, %v5521
      %v5523 = vpop.f32.mrf.mxu0
      %5524 = vmatprep.mubr.f32.mxu0 0.0
      %5525 = vmatmul.mubr.f32.gmra.mxu0 %v5447
      %v5526 = vpop.f32.mrf.mxu0
      %v5527 = vadd.f32 0.0, %v5526
      %v5528 = vpop.f32.mrf.mxu0
      %5529 = vmatprep.mubr.f32.mxu0 0.0
      %5530 = vmatmul.mubr.f32.gmra.mxu0 %v5450
      %v5531 = vpop.f32.mrf.mxu0
      %v5532 = vadd.f32 0.0, %v5531
      %v5533 = vpop.f32.mrf.mxu0
      %5534 = vmatprep.mubr.f32.mxu0 0.0
      %5535 = vmatmul.mubr.f32.gmra.mxu0 %v5453
      %v5536 = vpop.f32.mrf.mxu0
      %v5537 = vadd.f32 0.0, %v5536
      %v5538 = vpop.f32.mrf.mxu0
      %5539 = vdwg.mxu0
      %v5540 = vadd.f32 %v5439, %v5522
      %v5541 = vadd.f32 %v5440, %v5527
      %v5542 = vadd.f32 %v5441, %v5532
      %v5543 = vadd.f32 %v5442, %v5537
      %v5545 = vsel %vm4656, %v4928, 0
      %v5548 = vsel %vm4656, %v4933, 0
      %v5551 = vsel %vm4656, %v4938, 0
      %v5554 = vsel %vm4656, %v4943, 0
      %5556 = vmatprep.subr.mxu0 0.0
      %5557 = vmatpush1.msra.mxu0 0.0
      %5558 = vmatprep.subr.mxu0 0.0
      %5559 = vmatpush1.msra.mxu0 0.0
      %5560 = vmatprep.subr.mxu0 0.0
      %5561 = vmatpush1.msra.mxu0 0.0
      %5562 = vmatprep.subr.mxu0 0.0
      %5563 = vmatpush1.msra.mxu0 0.0
      %5564 = vmatprep.subr.mxu0 0.0
      %5565 = vmatpush1.msra.mxu0 0.0
      %5566 = vmatprep.subr.mxu0 0.0
      %5567 = vmatpush1.msra.mxu0 0.0
      %5568 = vmatprep.subr.mxu0 0.0
      %5569 = vmatpush1.msra.mxu0 0.0
      %5570 = vmatprep.subr.mxu0 0.0
      %5571 = vmatpush1.msra.mxu0 0.0
      %5572 = vmatprep.subr.mxu0 0.0
      %5573 = vmatpush1.msra.mxu0 0.0
      %5574 = vmatprep.subr.mxu0 0.0
      %5575 = vmatpush1.msra.mxu0 0.0
      %5576 = vmatprep.subr.mxu0 0.0
      %5577 = vmatpush1.msra.mxu0 0.0
      %5578 = vmatprep.subr.mxu0 0.0
      %5579 = vmatpush1.msra.mxu0 0.0
      %5580 = vmatprep.subr.mxu0 0.0
      %5581 = vmatpush1.msra.mxu0 %v1034
      %5582 = vmatprep.subr.mxu0 0.0
      %5583 = vmatpush1.msra.mxu0 %v1033
      %5584 = vmatprep.subr.mxu0 0.0
      %5585 = vmatpush1.msra.mxu0 %v1032
      %5586 = vmatprep.subr.mxu0 0.0
      %5587 = vmatpush1.msra.mxu0 %v1031
      %5588 = vmatprep.subr.mxu0 0.0
      %5589 = vmatpush2.msra.mxu0 0.0
      %5590 = vmatprep.subr.mxu0 0.0
      %5591 = vmatpush2.msra.mxu0 0.0
      %5592 = vmatprep.subr.mxu0 0.0
      %5593 = vmatpush2.msra.mxu0 0.0
      %5594 = vmatprep.subr.mxu0 0.0
      %5595 = vmatpush2.msra.mxu0 0.0
      %5596 = vmatprep.subr.mxu0 0.0
      %5597 = vmatpush2.msra.mxu0 0.0
      %5598 = vmatprep.subr.mxu0 0.0
      %5599 = vmatpush2.msra.mxu0 0.0
      %5600 = vmatprep.subr.mxu0 0.0
      %5601 = vmatpush2.msra.mxu0 0.0
      %5602 = vmatprep.subr.mxu0 0.0
      %5603 = vmatpush2.msra.mxu0 0.0
      %5604 = vmatprep.subr.mxu0 0.0
      %5605 = vmatpush2.msra.mxu0 0.0
      %5606 = vmatprep.subr.mxu0 0.0
      %5607 = vmatpush2.msra.mxu0 0.0
      %5608 = vmatprep.subr.mxu0 0.0
      %5609 = vmatpush2.msra.mxu0 0.0
      %5610 = vmatprep.subr.mxu0 0.0
      %5611 = vmatpush2.msra.mxu0 0.0
      %5612 = vmatprep.subr.mxu0 0.0
      %5613 = vmatpush2.msra.mxu0 0.0
      %5614 = vmatprep.subr.mxu0 0.0
      %5615 = vmatpush2.msra.mxu0 0.0
      %5616 = vmatprep.subr.mxu0 0.0
      %5617 = vmatpush2.msra.mxu0 0.0
      %5618 = vmatprep.subr.mxu0 0.0
      %5619 = vmatpush2.msra.mxu0 0.0
      %5620 = vmatprep.mubr.f32.mxu0 0.0
      %5621 = vmatmul.mubr.f32.gmra.mxu0 %v5545
      %v5622 = vpop.f32.mrf.mxu0
      %v5623 = vadd.f32 0.0, %v5622
      %v5624 = vpop.f32.mrf.mxu0
      %5625 = vmatprep.mubr.f32.mxu0 0.0
      %5626 = vmatmul.mubr.f32.gmra.mxu0 %v5548
      %v5627 = vpop.f32.mrf.mxu0
      %v5628 = vadd.f32 0.0, %v5627
      %v5629 = vpop.f32.mrf.mxu0
      %5630 = vmatprep.mubr.f32.mxu0 0.0
      %5631 = vmatmul.mubr.f32.gmra.mxu0 %v5551
      %v5632 = vpop.f32.mrf.mxu0
      %v5633 = vadd.f32 0.0, %v5632
      %v5634 = vpop.f32.mrf.mxu0
      %5635 = vmatprep.mubr.f32.mxu0 0.0
      %5636 = vmatmul.mubr.f32.gmra.mxu0 %v5554
      %v5637 = vpop.f32.mrf.mxu0
      %v5638 = vadd.f32 0.0, %v5637
      %v5639 = vpop.f32.mrf.mxu0
      %5640 = vdwg.mxu0
      %v5641 = vadd.f32 %v5540, %v5623
      %v5642 = vadd.f32 %v5541, %v5628
      %v5643 = vadd.f32 %v5542, %v5633
      %v5644 = vadd.f32 %v5543, %v5638
      %v5645 = vld [vmem:[%s10] sm:$0xff]
      %v5646 = vld [vmem:[%s10 + $0x8] sm:$0xff]
      %v5647 = vld [vmem:[%s10 + $0x10] sm:$0xff]
      %v5648 = vld [vmem:[%s10 + $0x18] sm:$0xff]
      %5650 = vset.pattern.permute.xlu0 0
      %5651 = vperm.xlu0 %5650, %v5645
      %v5652 = vpop.permute.xlu0 %5651
      %5655 = vset.pattern.permute.xlu0 0
      %5656 = vperm.xlu0 %5655, %v5646
      %v5657 = vpop.permute.xlu0 %5656
      %5660 = vset.pattern.permute.xlu0 0
      %5661 = vperm.xlu0 %5660, %v5647
      %v5662 = vpop.permute.xlu0 %5661
      %5665 = vset.pattern.permute.xlu0 0
      %5666 = vperm.xlu0 %5665, %v5648
      %v5667 = vpop.permute.xlu0 %5666
      %v5669 = vadd.f32 %v5641, %v5652
      %v5670 = vadd.f32 %v5642, %v5657
      %v5671 = vadd.f32 %v5643, %v5662
      %v5672 = vadd.f32 %v5644, %v5667
      %v5673 = vmax.f32 %v5669, 0.0
      %v5674 = vmax.f32 %v5670, 0.0
      %v5675 = vmax.f32 %v5671, 0.0
      %v5676 = vmax.f32 %v5672, 0.0
      %s5677 = scalar_lea.vmem %s10, 32
      %v5678 = vld [vmem:[%s5677] sm:$0xff]
      %v5679 = vld [vmem:[%s5677 + $0x8] sm:$0xff]
      %v5680 = vld [vmem:[%s5677 + $0x10] sm:$0xff]
      %v5681 = vld [vmem:[%s5677 + $0x18] sm:$0xff]
      %5683 = vset.pattern.permute.xlu0 0
      %5684 = vperm.xlu0 %5683, %v5678
      %v5685 = vpop.permute.xlu0 %5684
      %5688 = vset.pattern.permute.xlu0 0
      %5689 = vperm.xlu0 %5688, %v5679
      %v5690 = vpop.permute.xlu0 %5689
      %5693 = vset.pattern.permute.xlu0 0
      %5694 = vperm.xlu0 %5693, %v5680
      %v5695 = vpop.permute.xlu0 %5694
      %5698 = vset.pattern.permute.xlu0 0
      %5699 = vperm.xlu0 %5698, %v5681
      %v5700 = vpop.permute.xlu0 %5699
      %v5702 = vmul.f32 %v5673, %v5685
      %v5703 = vmul.f32 %v5674, %v5690
      %v5704 = vmul.f32 %v5675, %v5695
      %v5705 = vmul.f32 %v5676, %v5700
      %s5706 = scalar_lea.vmem %s10, 64
      %v5707 = vld [vmem:[%s5706] sm:$0xff]
      %v5708 = vld [vmem:[%s5706 + $0x8] sm:$0xff]
      %v5709 = vld [vmem:[%s5706 + $0x10] sm:$0xff]
      %v5710 = vld [vmem:[%s5706 + $0x18] sm:$0xff]
      %5712 = vset.pattern.permute.xlu0 0
      %5713 = vperm.xlu0 %5712, %v5707
      %v5714 = vpop.permute.xlu0 %5713
      %5717 = vset.pattern.permute.xlu0 0
      %5718 = vperm.xlu0 %5717, %v5708
      %v5719 = vpop.permute.xlu0 %5718
      %5722 = vset.pattern.permute.xlu0 0
      %5723 = vperm.xlu0 %5722, %v5709
      %v5724 = vpop.permute.xlu0 %5723
      %5727 = vset.pattern.permute.xlu0 0
      %5728 = vperm.xlu0 %5727, %v5710
      %v5729 = vpop.permute.xlu0 %5728
      %v5731 = vadd.f32 %v5702, %v5714
      %v5732 = vadd.f32 %v5703, %v5719
      %v5733 = vadd.f32 %v5704, %v5724
      %v5734 = vadd.f32 %v5705, %v5729
      %v5735 = vld [vmem:[%s11] sm:$0xff]
      %v5736 = vld [vmem:[%s11 + $0x8] sm:$0xff]
      %v5737 = vld [vmem:[%s11 + $0x10] sm:$0xff]
      %v5738 = vld [vmem:[%s11 + $0x18] sm:$0xff]
      %v5739 = vld [vmem:[%s11 + $0x20] sm:$0xff]
      %v5740 = vld [vmem:[%s11 + $0x28] sm:$0xff]
      %v5741 = vld [vmem:[%s11 + $0x30] sm:$0xff]
      %v5742 = vld [vmem:[%s11 + $0x38] sm:$0xff]
      %v5743 = vld [vmem:[%s11 + $0x40] sm:$0xff]
      %v5744 = vld [vmem:[%s11 + $0x48] sm:$0xff]
      %v5745 = vld [vmem:[%s11 + $0x50] sm:$0xff]
      %v5746 = vld [vmem:[%s11 + $0x58] sm:$0xff]
      %v5747 = vld [vmem:[%s11 + $0x60] sm:$0xff]
      %v5748 = vld [vmem:[%s11 + $0x68] sm:$0xff]
      %v5749 = vld [vmem:[%s11 + $0x70] sm:$0xff]
      %v5750 = vld [vmem:[%s11 + $0x78] sm:$0xff]
      %v5751 = vld [vmem:[%s11 + $0x80] sm:$0xff]
      %v5752 = vld [vmem:[%s11 + $0x88] sm:$0xff]
      %v5753 = vld [vmem:[%s11 + $0x90] sm:$0xff]
      %v5754 = vld [vmem:[%s11 + $0x98] sm:$0xff]
      %v5755 = vld [vmem:[%s11 + $0xa0] sm:$0xff]
      %v5756 = vld [vmem:[%s11 + $0xa8] sm:$0xff]
      %v5757 = vld [vmem:[%s11 + $0xb0] sm:$0xff]
      %v5758 = vld [vmem:[%s11 + $0xb8] sm:$0xff]
      %v5759 = vld [vmem:[%s11 + $0xc0] sm:$0xff]
      %v5760 = vld [vmem:[%s11 + $0xc8] sm:$0xff]
      %v5761 = vld [vmem:[%s11 + $0xd0] sm:$0xff]
      %v5762 = vld [vmem:[%s11 + $0xd8] sm:$0xff]
      %v5764 = vsel %vm4656, %v5735, 0
      %v5767 = vsel %vm4656, %v5736, 0
      %v5770 = vsel %vm4656, %v5737, 0
      %v5773 = vsel %vm4656, %v5738, 0
      %v5776 = vsel %vm4656, %v5739, 0
      %v5779 = vsel %vm4656, %v5740, 0
      %v5782 = vsel %vm4656, %v5741, 0
      %v5785 = vsel %vm4656, %v5742, 0
      %v5788 = vsel %vm4656, %v5743, 0
      %v5791 = vsel %vm4656, %v5744, 0
      %v5794 = vsel %vm4656, %v5745, 0
      %v5797 = vsel %vm4656, %v5746, 0
      %v5800 = vsel %vm4656, %v5747, 0
      %v5803 = vsel %vm4656, %v5748, 0
      %v5806 = vsel %vm4656, %v5749, 0
      %v5809 = vsel %vm4656, %v5750, 0
      %v5812 = vsel %vm4656, %v5751, 0
      %v5815 = vsel %vm4656, %v5752, 0
      %v5818 = vsel %vm4656, %v5753, 0
      %v5821 = vsel %vm4656, %v5754, 0
      %v5824 = vsel %vm4656, %v5755, 0
      %v5827 = vsel %vm4656, %v5756, 0
      %v5830 = vsel %vm4656, %v5757, 0
      %v5833 = vsel %vm4656, %v5758, 0
      %v5836 = vsel %vm4656, %v5759, 0
      %v5839 = vsel %vm4656, %v5760, 0
      %v5842 = vsel %vm4656, %v5761, 0
      %v5845 = vsel %vm4656, %v5762, 0
      %5847 = vmatprep.subr.mxu0 0.0
      %5848 = vmatpush1.msra.mxu0 0.0
      %5849 = vmatprep.subr.mxu0 0.0
      %5850 = vmatpush1.msra.mxu0 0.0
      %5851 = vmatprep.subr.mxu0 0.0
      %5852 = vmatpush1.msra.mxu0 0.0
      %5853 = vmatprep.subr.mxu0 0.0
      %5854 = vmatpush1.msra.mxu0 0.0
      %5855 = vmatprep.subr.mxu0 0.0
      %5856 = vmatpush1.msra.mxu0 0.0
      %5857 = vmatprep.subr.mxu0 0.0
      %5858 = vmatpush1.msra.mxu0 0.0
      %5859 = vmatprep.subr.mxu0 0.0
      %5860 = vmatpush1.msra.mxu0 0.0
      %5861 = vmatprep.subr.mxu0 0.0
      %5862 = vmatpush1.msra.mxu0 0.0
      %5863 = vmatprep.subr.mxu0 0.0
      %5864 = vmatpush1.msra.mxu0 0.0
      %5865 = vmatprep.subr.mxu0 0.0
      %5866 = vmatpush1.msra.mxu0 0.0
      %5867 = vmatprep.subr.mxu0 0.0
      %5868 = vmatpush1.msra.mxu0 0.0
      %5869 = vmatprep.subr.mxu0 0.0
      %5870 = vmatpush1.msra.mxu0 0.0
      %5871 = vmatprep.subr.mxu0 0.0
      %5872 = vmatpush1.msra.mxu0 %v5734
      %5873 = vmatprep.subr.mxu0 0.0
      %5874 = vmatpush1.msra.mxu0 %v5733
      %5875 = vmatprep.subr.mxu0 0.0
      %5876 = vmatpush1.msra.mxu0 %v5732
      %5877 = vmatprep.subr.mxu0 0.0
      %5878 = vmatpush1.msra.mxu0 %v5731
      %5879 = vmatprep.subr.mxu0 0.0
      %5880 = vmatpush2.msra.mxu0 0.0
      %5881 = vmatprep.subr.mxu0 0.0
      %5882 = vmatpush2.msra.mxu0 0.0
      %5883 = vmatprep.subr.mxu0 0.0
      %5884 = vmatpush2.msra.mxu0 0.0
      %5885 = vmatprep.subr.mxu0 0.0
      %5886 = vmatpush2.msra.mxu0 0.0
      %5887 = vmatprep.subr.mxu0 0.0
      %5888 = vmatpush2.msra.mxu0 0.0
      %5889 = vmatprep.subr.mxu0 0.0
      %5890 = vmatpush2.msra.mxu0 0.0
      %5891 = vmatprep.subr.mxu0 0.0
      %5892 = vmatpush2.msra.mxu0 0.0
      %5893 = vmatprep.subr.mxu0 0.0
      %5894 = vmatpush2.msra.mxu0 0.0
      %5895 = vmatprep.subr.mxu0 0.0
      %5896 = vmatpush2.msra.mxu0 0.0
      %5897 = vmatprep.subr.mxu0 0.0
      %5898 = vmatpush2.msra.mxu0 0.0
      %5899 = vmatprep.subr.mxu0 0.0
      %5900 = vmatpush2.msra.mxu0 0.0
      %5901 = vmatprep.subr.mxu0 0.0
      %5902 = vmatpush2.msra.mxu0 0.0
      %5903 = vmatprep.subr.mxu0 0.0
      %5904 = vmatpush2.msra.mxu0 0.0
      %5905 = vmatprep.subr.mxu0 0.0
      %5906 = vmatpush2.msra.mxu0 0.0
      %5907 = vmatprep.subr.mxu0 0.0
      %5908 = vmatpush2.msra.mxu0 0.0
      %5909 = vmatprep.subr.mxu0 0.0
      %5910 = vmatpush2.msra.mxu0 0.0
      %5911 = vmatprep.mubr.f32.mxu0 0.0
      %5912 = vmatmul.mubr.f32.gmra.mxu0 %v5764
      %v5913 = vpop.f32.mrf.mxu0
      %v5914 = vadd.f32 0.0, %v5913
      %v5915 = vpop.f32.mrf.mxu0
      %5916 = vmatprep.mubr.f32.mxu0 0.0
      %5917 = vmatmul.mubr.f32.gmra.mxu0 %v5767
      %v5918 = vpop.f32.mrf.mxu0
      %v5919 = vadd.f32 0.0, %v5918
      %v5920 = vpop.f32.mrf.mxu0
      %5921 = vmatprep.mubr.f32.mxu0 0.0
      %5922 = vmatmul.mubr.f32.gmra.mxu0 %v5770
      %v5923 = vpop.f32.mrf.mxu0
      %v5924 = vadd.f32 0.0, %v5923
      %v5925 = vpop.f32.mrf.mxu0
      %5926 = vmatprep.mubr.f32.mxu0 0.0
      %5927 = vmatmul.mubr.f32.gmra.mxu0 %v5773
      %v5928 = vpop.f32.mrf.mxu0
      %v5929 = vadd.f32 0.0, %v5928
      %v5930 = vpop.f32.mrf.mxu0
      %5931 = vmatprep.mubr.f32.mxu0 0.0
      %5932 = vmatmul.mubr.f32.gmra.mxu0 %v5776
      %v5933 = vpop.f32.mrf.mxu0
      %v5934 = vadd.f32 0.0, %v5933
      %v5935 = vpop.f32.mrf.mxu0
      %5936 = vmatprep.mubr.f32.mxu0 0.0
      %5937 = vmatmul.mubr.f32.gmra.mxu0 %v5779
      %v5938 = vpop.f32.mrf.mxu0
      %v5939 = vadd.f32 0.0, %v5938
      %v5940 = vpop.f32.mrf.mxu0
      %5941 = vmatprep.mubr.f32.mxu0 0.0
      %5942 = vmatmul.mubr.f32.gmra.mxu0 %v5782
      %v5943 = vpop.f32.mrf.mxu0
      %v5944 = vadd.f32 0.0, %v5943
      %v5945 = vpop.f32.mrf.mxu0
      %5946 = vmatprep.mubr.f32.mxu0 0.0
      %5947 = vmatmul.mubr.f32.gmra.mxu0 %v5785
      %v5948 = vpop.f32.mrf.mxu0
      %v5949 = vadd.f32 0.0, %v5948
      %v5950 = vpop.f32.mrf.mxu0
      %5951 = vmatprep.mubr.f32.mxu0 0.0
      %5952 = vmatmul.mubr.f32.gmra.mxu0 %v5788
      %v5953 = vpop.f32.mrf.mxu0
      %v5954 = vadd.f32 0.0, %v5953
      %v5955 = vpop.f32.mrf.mxu0
      %5956 = vmatprep.mubr.f32.mxu0 0.0
      %5957 = vmatmul.mubr.f32.gmra.mxu0 %v5791
      %v5958 = vpop.f32.mrf.mxu0
      %v5959 = vadd.f32 0.0, %v5958
      %v5960 = vpop.f32.mrf.mxu0
      %5961 = vmatprep.mubr.f32.mxu0 0.0
      %5962 = vmatmul.mubr.f32.gmra.mxu0 %v5794
      %v5963 = vpop.f32.mrf.mxu0
      %v5964 = vadd.f32 0.0, %v5963
      %v5965 = vpop.f32.mrf.mxu0
      %5966 = vmatprep.mubr.f32.mxu0 0.0
      %5967 = vmatmul.mubr.f32.gmra.mxu0 %v5797
      %v5968 = vpop.f32.mrf.mxu0
      %v5969 = vadd.f32 0.0, %v5968
      %v5970 = vpop.f32.mrf.mxu0
      %5971 = vmatprep.mubr.f32.mxu0 0.0
      %5972 = vmatmul.mubr.f32.gmra.mxu0 %v5800
      %v5973 = vpop.f32.mrf.mxu0
      %v5974 = vadd.f32 0.0, %v5973
      %v5975 = vpop.f32.mrf.mxu0
      %5976 = vmatprep.mubr.f32.mxu0 0.0
      %5977 = vmatmul.mubr.f32.gmra.mxu0 %v5803
      %v5978 = vpop.f32.mrf.mxu0
      %v5979 = vadd.f32 0.0, %v5978
      %v5980 = vpop.f32.mrf.mxu0
      %5981 = vmatprep.mubr.f32.mxu0 0.0
      %5982 = vmatmul.mubr.f32.gmra.mxu0 %v5806
      %v5983 = vpop.f32.mrf.mxu0
      %v5984 = vadd.f32 0.0, %v5983
      %v5985 = vpop.f32.mrf.mxu0
      %5986 = vmatprep.mubr.f32.mxu0 0.0
      %5987 = vmatmul.mubr.f32.gmra.mxu0 %v5809
      %v5988 = vpop.f32.mrf.mxu0
      %v5989 = vadd.f32 0.0, %v5988
      %v5990 = vpop.f32.mrf.mxu0
      %5991 = vmatprep.mubr.f32.mxu0 0.0
      %5992 = vmatmul.mubr.f32.gmra.mxu0 %v5812
      %v5993 = vpop.f32.mrf.mxu0
      %v5994 = vadd.f32 0.0, %v5993
      %v5995 = vpop.f32.mrf.mxu0
      %5996 = vmatprep.mubr.f32.mxu0 0.0
      %5997 = vmatmul.mubr.f32.gmra.mxu0 %v5815
      %v5998 = vpop.f32.mrf.mxu0
      %v5999 = vadd.f32 0.0, %v5998
      %v6000 = vpop.f32.mrf.mxu0
      %6001 = vmatprep.mubr.f32.mxu0 0.0
      %6002 = vmatmul.mubr.f32.gmra.mxu0 %v5818
      %v6003 = vpop.f32.mrf.mxu0
      %v6004 = vadd.f32 0.0, %v6003
      %v6005 = vpop.f32.mrf.mxu0
      %6006 = vmatprep.mubr.f32.mxu0 0.0
      %6007 = vmatmul.mubr.f32.gmra.mxu0 %v5821
      %v6008 = vpop.f32.mrf.mxu0
      %v6009 = vadd.f32 0.0, %v6008
      %v6010 = vpop.f32.mrf.mxu0
      %6011 = vmatprep.mubr.f32.mxu0 0.0
      %6012 = vmatmul.mubr.f32.gmra.mxu0 %v5824
      %v6013 = vpop.f32.mrf.mxu0
      %v6014 = vadd.f32 0.0, %v6013
      %v6015 = vpop.f32.mrf.mxu0
      %6016 = vmatprep.mubr.f32.mxu0 0.0
      %6017 = vmatmul.mubr.f32.gmra.mxu0 %v5827
      %v6018 = vpop.f32.mrf.mxu0
      %v6019 = vadd.f32 0.0, %v6018
      %v6020 = vpop.f32.mrf.mxu0
      %6021 = vmatprep.mubr.f32.mxu0 0.0
      %6022 = vmatmul.mubr.f32.gmra.mxu0 %v5830
      %v6023 = vpop.f32.mrf.mxu0
      %v6024 = vadd.f32 0.0, %v6023
      %v6025 = vpop.f32.mrf.mxu0
      %6026 = vmatprep.mubr.f32.mxu0 0.0
      %6027 = vmatmul.mubr.f32.gmra.mxu0 %v5833
      %v6028 = vpop.f32.mrf.mxu0
      %v6029 = vadd.f32 0.0, %v6028
      %v6030 = vpop.f32.mrf.mxu0
      %6031 = vmatprep.mubr.f32.mxu0 0.0
      %6032 = vmatmul.mubr.f32.gmra.mxu0 %v5836
      %v6033 = vpop.f32.mrf.mxu0
      %v6034 = vadd.f32 0.0, %v6033
      %v6035 = vpop.f32.mrf.mxu0
      %6036 = vmatprep.mubr.f32.mxu0 0.0
      %6037 = vmatmul.mubr.f32.gmra.mxu0 %v5839
      %v6038 = vpop.f32.mrf.mxu0
      %v6039 = vadd.f32 0.0, %v6038
      %v6040 = vpop.f32.mrf.mxu0
      %6041 = vmatprep.mubr.f32.mxu0 0.0
      %6042 = vmatmul.mubr.f32.gmra.mxu0 %v5842
      %v6043 = vpop.f32.mrf.mxu0
      %v6044 = vadd.f32 0.0, %v6043
      %v6045 = vpop.f32.mrf.mxu0
      %6046 = vmatprep.mubr.f32.mxu0 0.0
      %6047 = vmatmul.mubr.f32.gmra.mxu0 %v5845
      %v6048 = vpop.f32.mrf.mxu0
      %v6049 = vadd.f32 0.0, %v6048
      %v6050 = vpop.f32.mrf.mxu0
      %6051 = vdwg.mxu0
      %v6053 = vsel %vm4656, %v5934, 0
      %v6056 = vsel %vm4656, %v5939, 0
      %v6059 = vsel %vm4656, %v5944, 0
      %v6062 = vsel %vm4656, %v5949, 0
      %6064 = vmatprep.subr.mxu0 0.0
      %6065 = vmatpush1.msra.mxu0 0.0
      %6066 = vmatprep.subr.mxu0 0.0
      %6067 = vmatpush1.msra.mxu0 0.0
      %6068 = vmatprep.subr.mxu0 0.0
      %6069 = vmatpush1.msra.mxu0 0.0
      %6070 = vmatprep.subr.mxu0 0.0
      %6071 = vmatpush1.msra.mxu0 0.0
      %6072 = vmatprep.subr.mxu0 0.0
      %6073 = vmatpush1.msra.mxu0 0.0
      %6074 = vmatprep.subr.mxu0 0.0
      %6075 = vmatpush1.msra.mxu0 0.0
      %6076 = vmatprep.subr.mxu0 0.0
      %6077 = vmatpush1.msra.mxu0 0.0
      %6078 = vmatprep.subr.mxu0 0.0
      %6079 = vmatpush1.msra.mxu0 0.0
      %6080 = vmatprep.subr.mxu0 0.0
      %6081 = vmatpush1.msra.mxu0 0.0
      %6082 = vmatprep.subr.mxu0 0.0
      %6083 = vmatpush1.msra.mxu0 0.0
      %6084 = vmatprep.subr.mxu0 0.0
      %6085 = vmatpush1.msra.mxu0 0.0
      %6086 = vmatprep.subr.mxu0 0.0
      %6087 = vmatpush1.msra.mxu0 0.0
      %6088 = vmatprep.subr.mxu0 0.0
      %6089 = vmatpush1.msra.mxu0 %v790
      %6090 = vmatprep.subr.mxu0 0.0
      %6091 = vmatpush1.msra.mxu0 %v789
      %6092 = vmatprep.subr.mxu0 0.0
      %6093 = vmatpush1.msra.mxu0 %v788
      %6094 = vmatprep.subr.mxu0 0.0
      %6095 = vmatpush1.msra.mxu0 %v787
      %6096 = vmatprep.subr.mxu0 0.0
      %6097 = vmatpush2.msra.mxu0 0.0
      %6098 = vmatprep.subr.mxu0 0.0
      %6099 = vmatpush2.msra.mxu0 0.0
      %6100 = vmatprep.subr.mxu0 0.0
      %6101 = vmatpush2.msra.mxu0 0.0
      %6102 = vmatprep.subr.mxu0 0.0
      %6103 = vmatpush2.msra.mxu0 0.0
      %6104 = vmatprep.subr.mxu0 0.0
      %6105 = vmatpush2.msra.mxu0 0.0
      %6106 = vmatprep.subr.mxu0 0.0
      %6107 = vmatpush2.msra.mxu0 0.0
      %6108 = vmatprep.subr.mxu0 0.0
      %6109 = vmatpush2.msra.mxu0 0.0
      %6110 = vmatprep.subr.mxu0 0.0
      %6111 = vmatpush2.msra.mxu0 0.0
      %6112 = vmatprep.subr.mxu0 0.0
      %6113 = vmatpush2.msra.mxu0 0.0
      %6114 = vmatprep.subr.mxu0 0.0
      %6115 = vmatpush2.msra.mxu0 0.0
      %6116 = vmatprep.subr.mxu0 0.0
      %6117 = vmatpush2.msra.mxu0 0.0
      %6118 = vmatprep.subr.mxu0 0.0
      %6119 = vmatpush2.msra.mxu0 0.0
      %6120 = vmatprep.subr.mxu0 0.0
      %6121 = vmatpush2.msra.mxu0 0.0
      %6122 = vmatprep.subr.mxu0 0.0
      %6123 = vmatpush2.msra.mxu0 0.0
      %6124 = vmatprep.subr.mxu0 0.0
      %6125 = vmatpush2.msra.mxu0 0.0
      %6126 = vmatprep.subr.mxu0 0.0
      %6127 = vmatpush2.msra.mxu0 0.0
      %6128 = vmatprep.mubr.f32.mxu0 0.0
      %6129 = vmatmul.mubr.f32.gmra.mxu0 %v6053
      %v6130 = vpop.f32.mrf.mxu0
      %v6131 = vadd.f32 0.0, %v6130
      %v6132 = vpop.f32.mrf.mxu0
      %6133 = vmatprep.mubr.f32.mxu0 0.0
      %6134 = vmatmul.mubr.f32.gmra.mxu0 %v6056
      %v6135 = vpop.f32.mrf.mxu0
      %v6136 = vadd.f32 0.0, %v6135
      %v6137 = vpop.f32.mrf.mxu0
      %6138 = vmatprep.mubr.f32.mxu0 0.0
      %6139 = vmatmul.mubr.f32.gmra.mxu0 %v6059
      %v6140 = vpop.f32.mrf.mxu0
      %v6141 = vadd.f32 0.0, %v6140
      %v6142 = vpop.f32.mrf.mxu0
      %6143 = vmatprep.mubr.f32.mxu0 0.0
      %6144 = vmatmul.mubr.f32.gmra.mxu0 %v6062
      %v6145 = vpop.f32.mrf.mxu0
      %v6146 = vadd.f32 0.0, %v6145
      %v6147 = vpop.f32.mrf.mxu0
      %6148 = vdwg.mxu0
      %v6150 = vsel %vm4656, %v5914, 0
      %v6153 = vsel %vm4656, %v5919, 0
      %v6156 = vsel %vm4656, %v5924, 0
      %v6159 = vsel %vm4656, %v5929, 0
      %6161 = vmatprep.subr.mxu0 0.0
      %6162 = vmatpush1.msra.mxu0 0.0
      %6163 = vmatprep.subr.mxu0 0.0
      %6164 = vmatpush1.msra.mxu0 0.0
      %6165 = vmatprep.subr.mxu0 0.0
      %6166 = vmatpush1.msra.mxu0 0.0
      %6167 = vmatprep.subr.mxu0 0.0
      %6168 = vmatpush1.msra.mxu0 0.0
      %6169 = vmatprep.subr.mxu0 0.0
      %6170 = vmatpush1.msra.mxu0 0.0
      %6171 = vmatprep.subr.mxu0 0.0
      %6172 = vmatpush1.msra.mxu0 0.0
      %6173 = vmatprep.subr.mxu0 0.0
      %6174 = vmatpush1.msra.mxu0 0.0
      %6175 = vmatprep.subr.mxu0 0.0
      %6176 = vmatpush1.msra.mxu0 0.0
      %6177 = vmatprep.subr.mxu0 0.0
      %6178 = vmatpush1.msra.mxu0 0.0
      %6179 = vmatprep.subr.mxu0 0.0
      %6180 = vmatpush1.msra.mxu0 0.0
      %6181 = vmatprep.subr.mxu0 0.0
      %6182 = vmatpush1.msra.mxu0 0.0
      %6183 = vmatprep.subr.mxu0 0.0
      %6184 = vmatpush1.msra.mxu0 0.0
      %6185 = vmatprep.subr.mxu0 0.0
      %6186 = vmatpush1.msra.mxu0 %v741
      %6187 = vmatprep.subr.mxu0 0.0
      %6188 = vmatpush1.msra.mxu0 %v740
      %6189 = vmatprep.subr.mxu0 0.0
      %6190 = vmatpush1.msra.mxu0 %v739
      %6191 = vmatprep.subr.mxu0 0.0
      %6192 = vmatpush1.msra.mxu0 %v738
      %6193 = vmatprep.subr.mxu0 0.0
      %6194 = vmatpush2.msra.mxu0 0.0
      %6195 = vmatprep.subr.mxu0 0.0
      %6196 = vmatpush2.msra.mxu0 0.0
      %6197 = vmatprep.subr.mxu0 0.0
      %6198 = vmatpush2.msra.mxu0 0.0
      %6199 = vmatprep.subr.mxu0 0.0
      %6200 = vmatpush2.msra.mxu0 0.0
      %6201 = vmatprep.subr.mxu0 0.0
      %6202 = vmatpush2.msra.mxu0 0.0
      %6203 = vmatprep.subr.mxu0 0.0
      %6204 = vmatpush2.msra.mxu0 0.0
      %6205 = vmatprep.subr.mxu0 0.0
      %6206 = vmatpush2.msra.mxu0 0.0
      %6207 = vmatprep.subr.mxu0 0.0
      %6208 = vmatpush2.msra.mxu0 0.0
      %6209 = vmatprep.subr.mxu0 0.0
      %6210 = vmatpush2.msra.mxu0 0.0
      %6211 = vmatprep.subr.mxu0 0.0
      %6212 = vmatpush2.msra.mxu0 0.0
      %6213 = vmatprep.subr.mxu0 0.0
      %6214 = vmatpush2.msra.mxu0 0.0
      %6215 = vmatprep.subr.mxu0 0.0
      %6216 = vmatpush2.msra.mxu0 0.0
      %6217 = vmatprep.subr.mxu0 0.0
      %6218 = vmatpush2.msra.mxu0 0.0
      %6219 = vmatprep.subr.mxu0 0.0
      %6220 = vmatpush2.msra.mxu0 0.0
      %6221 = vmatprep.subr.mxu0 0.0
      %6222 = vmatpush2.msra.mxu0 0.0
      %6223 = vmatprep.subr.mxu0 0.0
      %6224 = vmatpush2.msra.mxu0 0.0
      %6225 = vmatprep.mubr.f32.mxu0 0.0
      %6226 = vmatmul.mubr.f32.gmra.mxu0 %v6150
      %v6227 = vpop.f32.mrf.mxu0
      %v6228 = vadd.f32 %v6131, %v6227
      %v6229 = vpop.f32.mrf.mxu0
      %6230 = vmatprep.mubr.f32.mxu0 0.0
      %6231 = vmatmul.mubr.f32.gmra.mxu0 %v6153
      %v6232 = vpop.f32.mrf.mxu0
      %v6233 = vadd.f32 %v6136, %v6232
      %v6234 = vpop.f32.mrf.mxu0
      %6235 = vmatprep.mubr.f32.mxu0 0.0
      %6236 = vmatmul.mubr.f32.gmra.mxu0 %v6156
      %v6237 = vpop.f32.mrf.mxu0
      %v6238 = vadd.f32 %v6141, %v6237
      %v6239 = vpop.f32.mrf.mxu0
      %6240 = vmatprep.mubr.f32.mxu0 0.0
      %6241 = vmatmul.mubr.f32.gmra.mxu0 %v6159
      %v6242 = vpop.f32.mrf.mxu0
      %v6243 = vadd.f32 %v6146, %v6242
      %v6244 = vpop.f32.mrf.mxu0
      %6245 = vdwg.mxu0
      %v6247 = vsel %vm4656, %v5954, 0
      %v6250 = vsel %vm4656, %v5959, 0
      %v6253 = vsel %vm4656, %v5964, 0
      %v6256 = vsel %vm4656, %v5969, 0
      %6258 = vmatprep.subr.mxu0 0.0
      %6259 = vmatpush1.msra.mxu0 0.0
      %6260 = vmatprep.subr.mxu0 0.0
      %6261 = vmatpush1.msra.mxu0 0.0
      %6262 = vmatprep.subr.mxu0 0.0
      %6263 = vmatpush1.msra.mxu0 0.0
      %6264 = vmatprep.subr.mxu0 0.0
      %6265 = vmatpush1.msra.mxu0 0.0
      %6266 = vmatprep.subr.mxu0 0.0
      %6267 = vmatpush1.msra.mxu0 0.0
      %6268 = vmatprep.subr.mxu0 0.0
      %6269 = vmatpush1.msra.mxu0 0.0
      %6270 = vmatprep.subr.mxu0 0.0
      %6271 = vmatpush1.msra.mxu0 0.0
      %6272 = vmatprep.subr.mxu0 0.0
      %6273 = vmatpush1.msra.mxu0 0.0
      %6274 = vmatprep.subr.mxu0 0.0
      %6275 = vmatpush1.msra.mxu0 0.0
      %6276 = vmatprep.subr.mxu0 0.0
      %6277 = vmatpush1.msra.mxu0 0.0
      %6278 = vmatprep.subr.mxu0 0.0
      %6279 = vmatpush1.msra.mxu0 0.0
      %6280 = vmatprep.subr.mxu0 0.0
      %6281 = vmatpush1.msra.mxu0 0.0
      %6282 = vmatprep.subr.mxu0 0.0
      %6283 = vmatpush1.msra.mxu0 %v839
      %6284 = vmatprep.subr.mxu0 0.0
      %6285 = vmatpush1.msra.mxu0 %v838
      %6286 = vmatprep.subr.mxu0 0.0
      %6287 = vmatpush1.msra.mxu0 %v837
      %6288 = vmatprep.subr.mxu0 0.0
      %6289 = vmatpush1.msra.mxu0 %v836
      %6290 = vmatprep.subr.mxu0 0.0
      %6291 = vmatpush2.msra.mxu0 0.0
      %6292 = vmatprep.subr.mxu0 0.0
      %6293 = vmatpush2.msra.mxu0 0.0
      %6294 = vmatprep.subr.mxu0 0.0
      %6295 = vmatpush2.msra.mxu0 0.0
      %6296 = vmatprep.subr.mxu0 0.0
      %6297 = vmatpush2.msra.mxu0 0.0
      %6298 = vmatprep.subr.mxu0 0.0
      %6299 = vmatpush2.msra.mxu0 0.0
      %6300 = vmatprep.subr.mxu0 0.0
      %6301 = vmatpush2.msra.mxu0 0.0
      %6302 = vmatprep.subr.mxu0 0.0
      %6303 = vmatpush2.msra.mxu0 0.0
      %6304 = vmatprep.subr.mxu0 0.0
      %6305 = vmatpush2.msra.mxu0 0.0
      %6306 = vmatprep.subr.mxu0 0.0
      %6307 = vmatpush2.msra.mxu0 0.0
      %6308 = vmatprep.subr.mxu0 0.0
      %6309 = vmatpush2.msra.mxu0 0.0
      %6310 = vmatprep.subr.mxu0 0.0
      %6311 = vmatpush2.msra.mxu0 0.0
      %6312 = vmatprep.subr.mxu0 0.0
      %6313 = vmatpush2.msra.mxu0 0.0
      %6314 = vmatprep.subr.mxu0 0.0
      %6315 = vmatpush2.msra.mxu0 0.0
      %6316 = vmatprep.subr.mxu0 0.0
      %6317 = vmatpush2.msra.mxu0 0.0
      %6318 = vmatprep.subr.mxu0 0.0
      %6319 = vmatpush2.msra.mxu0 0.0
      %6320 = vmatprep.subr.mxu0 0.0
      %6321 = vmatpush2.msra.mxu0 0.0
      %6322 = vmatprep.mubr.f32.mxu0 0.0
      %6323 = vmatmul.mubr.f32.gmra.mxu0 %v6247
      %v6324 = vpop.f32.mrf.mxu0
      %v6325 = vadd.f32 0.0, %v6324
      %v6326 = vpop.f32.mrf.mxu0
      %6327 = vmatprep.mubr.f32.mxu0 0.0
      %6328 = vmatmul.mubr.f32.gmra.mxu0 %v6250
      %v6329 = vpop.f32.mrf.mxu0
      %v6330 = vadd.f32 0.0, %v6329
      %v6331 = vpop.f32.mrf.mxu0
      %6332 = vmatprep.mubr.f32.mxu0 0.0
      %6333 = vmatmul.mubr.f32.gmra.mxu0 %v6253
      %v6334 = vpop.f32.mrf.mxu0
      %v6335 = vadd.f32 0.0, %v6334
      %v6336 = vpop.f32.mrf.mxu0
      %6337 = vmatprep.mubr.f32.mxu0 0.0
      %6338 = vmatmul.mubr.f32.gmra.mxu0 %v6256
      %v6339 = vpop.f32.mrf.mxu0
      %v6340 = vadd.f32 0.0, %v6339
      %v6341 = vpop.f32.mrf.mxu0
      %6342 = vdwg.mxu0
      %v6343 = vadd.f32 %v6228, %v6325
      %v6344 = vadd.f32 %v6233, %v6330
      %v6345 = vadd.f32 %v6238, %v6335
      %v6346 = vadd.f32 %v6243, %v6340
      %v6348 = vsel %vm4656, %v5974, 0
      %v6351 = vsel %vm4656, %v5979, 0
      %v6354 = vsel %vm4656, %v5984, 0
      %v6357 = vsel %vm4656, %v5989, 0
      %6359 = vmatprep.subr.mxu0 0.0
      %6360 = vmatpush1.msra.mxu0 0.0
      %6361 = vmatprep.subr.mxu0 0.0
      %6362 = vmatpush1.msra.mxu0 0.0
      %6363 = vmatprep.subr.mxu0 0.0
      %6364 = vmatpush1.msra.mxu0 0.0
      %6365 = vmatprep.subr.mxu0 0.0
      %6366 = vmatpush1.msra.mxu0 0.0
      %6367 = vmatprep.subr.mxu0 0.0
      %6368 = vmatpush1.msra.mxu0 0.0
      %6369 = vmatprep.subr.mxu0 0.0
      %6370 = vmatpush1.msra.mxu0 0.0
      %6371 = vmatprep.subr.mxu0 0.0
      %6372 = vmatpush1.msra.mxu0 0.0
      %6373 = vmatprep.subr.mxu0 0.0
      %6374 = vmatpush1.msra.mxu0 0.0
      %6375 = vmatprep.subr.mxu0 0.0
      %6376 = vmatpush1.msra.mxu0 0.0
      %6377 = vmatprep.subr.mxu0 0.0
      %6378 = vmatpush1.msra.mxu0 0.0
      %6379 = vmatprep.subr.mxu0 0.0
      %6380 = vmatpush1.msra.mxu0 0.0
      %6381 = vmatprep.subr.mxu0 0.0
      %6382 = vmatpush1.msra.mxu0 0.0
      %6383 = vmatprep.subr.mxu0 0.0
      %6384 = vmatpush1.msra.mxu0 %v887
      %6385 = vmatprep.subr.mxu0 0.0
      %6386 = vmatpush1.msra.mxu0 %v886
      %6387 = vmatprep.subr.mxu0 0.0
      %6388 = vmatpush1.msra.mxu0 %v885
      %6389 = vmatprep.subr.mxu0 0.0
      %6390 = vmatpush1.msra.mxu0 %v884
      %6391 = vmatprep.subr.mxu0 0.0
      %6392 = vmatpush2.msra.mxu0 0.0
      %6393 = vmatprep.subr.mxu0 0.0
      %6394 = vmatpush2.msra.mxu0 0.0
      %6395 = vmatprep.subr.mxu0 0.0
      %6396 = vmatpush2.msra.mxu0 0.0
      %6397 = vmatprep.subr.mxu0 0.0
      %6398 = vmatpush2.msra.mxu0 0.0
      %6399 = vmatprep.subr.mxu0 0.0
      %6400 = vmatpush2.msra.mxu0 0.0
      %6401 = vmatprep.subr.mxu0 0.0
      %6402 = vmatpush2.msra.mxu0 0.0
      %6403 = vmatprep.subr.mxu0 0.0
      %6404 = vmatpush2.msra.mxu0 0.0
      %6405 = vmatprep.subr.mxu0 0.0
      %6406 = vmatpush2.msra.mxu0 0.0
      %6407 = vmatprep.subr.mxu0 0.0
      %6408 = vmatpush2.msra.mxu0 0.0
      %6409 = vmatprep.subr.mxu0 0.0
      %6410 = vmatpush2.msra.mxu0 0.0
      %6411 = vmatprep.subr.mxu0 0.0
      %6412 = vmatpush2.msra.mxu0 0.0
      %6413 = vmatprep.subr.mxu0 0.0
      %6414 = vmatpush2.msra.mxu0 0.0
      %6415 = vmatprep.subr.mxu0 0.0
      %6416 = vmatpush2.msra.mxu0 0.0
      %6417 = vmatprep.subr.mxu0 0.0
      %6418 = vmatpush2.msra.mxu0 0.0
      %6419 = vmatprep.subr.mxu0 0.0
      %6420 = vmatpush2.msra.mxu0 0.0
      %6421 = vmatprep.subr.mxu0 0.0
      %6422 = vmatpush2.msra.mxu0 0.0
      %6423 = vmatprep.mubr.f32.mxu0 0.0
      %6424 = vmatmul.mubr.f32.gmra.mxu0 %v6348
      %v6425 = vpop.f32.mrf.mxu0
      %v6426 = vadd.f32 0.0, %v6425
      %v6427 = vpop.f32.mrf.mxu0
      %6428 = vmatprep.mubr.f32.mxu0 0.0
      %6429 = vmatmul.mubr.f32.gmra.mxu0 %v6351
      %v6430 = vpop.f32.mrf.mxu0
      %v6431 = vadd.f32 0.0, %v6430
      %v6432 = vpop.f32.mrf.mxu0
      %6433 = vmatprep.mubr.f32.mxu0 0.0
      %6434 = vmatmul.mubr.f32.gmra.mxu0 %v6354
      %v6435 = vpop.f32.mrf.mxu0
      %v6436 = vadd.f32 0.0, %v6435
      %v6437 = vpop.f32.mrf.mxu0
      %6438 = vmatprep.mubr.f32.mxu0 0.0
      %6439 = vmatmul.mubr.f32.gmra.mxu0 %v6357
      %v6440 = vpop.f32.mrf.mxu0
      %v6441 = vadd.f32 0.0, %v6440
      %v6442 = vpop.f32.mrf.mxu0
      %6443 = vdwg.mxu0
      %v6444 = vadd.f32 %v6343, %v6426
      %v6445 = vadd.f32 %v6344, %v6431
      %v6446 = vadd.f32 %v6345, %v6436
      %v6447 = vadd.f32 %v6346, %v6441
      %v6449 = vsel %vm4656, %v5994, 0
      %v6452 = vsel %vm4656, %v5999, 0
      %v6455 = vsel %vm4656, %v6004, 0
      %v6458 = vsel %vm4656, %v6009, 0
      %6460 = vmatprep.subr.mxu0 0.0
      %6461 = vmatpush1.msra.mxu0 0.0
      %6462 = vmatprep.subr.mxu0 0.0
      %6463 = vmatpush1.msra.mxu0 0.0
      %6464 = vmatprep.subr.mxu0 0.0
      %6465 = vmatpush1.msra.mxu0 0.0
      %6466 = vmatprep.subr.mxu0 0.0
      %6467 = vmatpush1.msra.mxu0 0.0
      %6468 = vmatprep.subr.mxu0 0.0
      %6469 = vmatpush1.msra.mxu0 0.0
      %6470 = vmatprep.subr.mxu0 0.0
      %6471 = vmatpush1.msra.mxu0 0.0
      %6472 = vmatprep.subr.mxu0 0.0
      %6473 = vmatpush1.msra.mxu0 0.0
      %6474 = vmatprep.subr.mxu0 0.0
      %6475 = vmatpush1.msra.mxu0 0.0
      %6476 = vmatprep.subr.mxu0 0.0
      %6477 = vmatpush1.msra.mxu0 0.0
      %6478 = vmatprep.subr.mxu0 0.0
      %6479 = vmatpush1.msra.mxu0 0.0
      %6480 = vmatprep.subr.mxu0 0.0
      %6481 = vmatpush1.msra.mxu0 0.0
      %6482 = vmatprep.subr.mxu0 0.0
      %6483 = vmatpush1.msra.mxu0 0.0
      %6484 = vmatprep.subr.mxu0 0.0
      %6485 = vmatpush1.msra.mxu0 %v936
      %6486 = vmatprep.subr.mxu0 0.0
      %6487 = vmatpush1.msra.mxu0 %v935
      %6488 = vmatprep.subr.mxu0 0.0
      %6489 = vmatpush1.msra.mxu0 %v934
      %6490 = vmatprep.subr.mxu0 0.0
      %6491 = vmatpush1.msra.mxu0 %v933
      %6492 = vmatprep.subr.mxu0 0.0
      %6493 = vmatpush2.msra.mxu0 0.0
      %6494 = vmatprep.subr.mxu0 0.0
      %6495 = vmatpush2.msra.mxu0 0.0
      %6496 = vmatprep.subr.mxu0 0.0
      %6497 = vmatpush2.msra.mxu0 0.0
      %6498 = vmatprep.subr.mxu0 0.0
      %6499 = vmatpush2.msra.mxu0 0.0
      %6500 = vmatprep.subr.mxu0 0.0
      %6501 = vmatpush2.msra.mxu0 0.0
      %6502 = vmatprep.subr.mxu0 0.0
      %6503 = vmatpush2.msra.mxu0 0.0
      %6504 = vmatprep.subr.mxu0 0.0
      %6505 = vmatpush2.msra.mxu0 0.0
      %6506 = vmatprep.subr.mxu0 0.0
      %6507 = vmatpush2.msra.mxu0 0.0
      %6508 = vmatprep.subr.mxu0 0.0
      %6509 = vmatpush2.msra.mxu0 0.0
      %6510 = vmatprep.subr.mxu0 0.0
      %6511 = vmatpush2.msra.mxu0 0.0
      %6512 = vmatprep.subr.mxu0 0.0
      %6513 = vmatpush2.msra.mxu0 0.0
      %6514 = vmatprep.subr.mxu0 0.0
      %6515 = vmatpush2.msra.mxu0 0.0
      %6516 = vmatprep.subr.mxu0 0.0
      %6517 = vmatpush2.msra.mxu0 0.0
      %6518 = vmatprep.subr.mxu0 0.0
      %6519 = vmatpush2.msra.mxu0 0.0
      %6520 = vmatprep.subr.mxu0 0.0
      %6521 = vmatpush2.msra.mxu0 0.0
      %6522 = vmatprep.subr.mxu0 0.0
      %6523 = vmatpush2.msra.mxu0 0.0
      %6524 = vmatprep.mubr.f32.mxu0 0.0
      %6525 = vmatmul.mubr.f32.gmra.mxu0 %v6449
      %v6526 = vpop.f32.mrf.mxu0
      %v6527 = vadd.f32 0.0, %v6526
      %v6528 = vpop.f32.mrf.mxu0
      %6529 = vmatprep.mubr.f32.mxu0 0.0
      %6530 = vmatmul.mubr.f32.gmra.mxu0 %v6452
      %v6531 = vpop.f32.mrf.mxu0
      %v6532 = vadd.f32 0.0, %v6531
      %v6533 = vpop.f32.mrf.mxu0
      %6534 = vmatprep.mubr.f32.mxu0 0.0
      %6535 = vmatmul.mubr.f32.gmra.mxu0 %v6455
      %v6536 = vpop.f32.mrf.mxu0
      %v6537 = vadd.f32 0.0, %v6536
      %v6538 = vpop.f32.mrf.mxu0
      %6539 = vmatprep.mubr.f32.mxu0 0.0
      %6540 = vmatmul.mubr.f32.gmra.mxu0 %v6458
      %v6541 = vpop.f32.mrf.mxu0
      %v6542 = vadd.f32 0.0, %v6541
      %v6543 = vpop.f32.mrf.mxu0
      %6544 = vdwg.mxu0
      %v6545 = vadd.f32 %v6444, %v6527
      %v6546 = vadd.f32 %v6445, %v6532
      %v6547 = vadd.f32 %v6446, %v6537
      %v6548 = vadd.f32 %v6447, %v6542
      %v6550 = vsel %vm4656, %v6014, 0
      %v6553 = vsel %vm4656, %v6019, 0
      %v6556 = vsel %vm4656, %v6024, 0
      %v6559 = vsel %vm4656, %v6029, 0
      %6561 = vmatprep.subr.mxu0 0.0
      %6562 = vmatpush1.msra.mxu0 0.0
      %6563 = vmatprep.subr.mxu0 0.0
      %6564 = vmatpush1.msra.mxu0 0.0
      %6565 = vmatprep.subr.mxu0 0.0
      %6566 = vmatpush1.msra.mxu0 0.0
      %6567 = vmatprep.subr.mxu0 0.0
      %6568 = vmatpush1.msra.mxu0 0.0
      %6569 = vmatprep.subr.mxu0 0.0
      %6570 = vmatpush1.msra.mxu0 0.0
      %6571 = vmatprep.subr.mxu0 0.0
      %6572 = vmatpush1.msra.mxu0 0.0
      %6573 = vmatprep.subr.mxu0 0.0
      %6574 = vmatpush1.msra.mxu0 0.0
      %6575 = vmatprep.subr.mxu0 0.0
      %6576 = vmatpush1.msra.mxu0 0.0
      %6577 = vmatprep.subr.mxu0 0.0
      %6578 = vmatpush1.msra.mxu0 0.0
      %6579 = vmatprep.subr.mxu0 0.0
      %6580 = vmatpush1.msra.mxu0 0.0
      %6581 = vmatprep.subr.mxu0 0.0
      %6582 = vmatpush1.msra.mxu0 0.0
      %6583 = vmatprep.subr.mxu0 0.0
      %6584 = vmatpush1.msra.mxu0 0.0
      %6585 = vmatprep.subr.mxu0 0.0
      %6586 = vmatpush1.msra.mxu0 %v985
      %6587 = vmatprep.subr.mxu0 0.0
      %6588 = vmatpush1.msra.mxu0 %v984
      %6589 = vmatprep.subr.mxu0 0.0
      %6590 = vmatpush1.msra.mxu0 %v983
      %6591 = vmatprep.subr.mxu0 0.0
      %6592 = vmatpush1.msra.mxu0 %v982
      %6593 = vmatprep.subr.mxu0 0.0
      %6594 = vmatpush2.msra.mxu0 0.0
      %6595 = vmatprep.subr.mxu0 0.0
      %6596 = vmatpush2.msra.mxu0 0.0
      %6597 = vmatprep.subr.mxu0 0.0
      %6598 = vmatpush2.msra.mxu0 0.0
      %6599 = vmatprep.subr.mxu0 0.0
      %6600 = vmatpush2.msra.mxu0 0.0
      %6601 = vmatprep.subr.mxu0 0.0
      %6602 = vmatpush2.msra.mxu0 0.0
      %6603 = vmatprep.subr.mxu0 0.0
      %6604 = vmatpush2.msra.mxu0 0.0
      %6605 = vmatprep.subr.mxu0 0.0
      %6606 = vmatpush2.msra.mxu0 0.0
      %6607 = vmatprep.subr.mxu0 0.0
      %6608 = vmatpush2.msra.mxu0 0.0
      %6609 = vmatprep.subr.mxu0 0.0
      %6610 = vmatpush2.msra.mxu0 0.0
      %6611 = vmatprep.subr.mxu0 0.0
      %6612 = vmatpush2.msra.mxu0 0.0
      %6613 = vmatprep.subr.mxu0 0.0
      %6614 = vmatpush2.msra.mxu0 0.0
      %6615 = vmatprep.subr.mxu0 0.0
      %6616 = vmatpush2.msra.mxu0 0.0
      %6617 = vmatprep.subr.mxu0 0.0
      %6618 = vmatpush2.msra.mxu0 0.0
      %6619 = vmatprep.subr.mxu0 0.0
      %6620 = vmatpush2.msra.mxu0 0.0
      %6621 = vmatprep.subr.mxu0 0.0
      %6622 = vmatpush2.msra.mxu0 0.0
      %6623 = vmatprep.subr.mxu0 0.0
      %6624 = vmatpush2.msra.mxu0 0.0
      %6625 = vmatprep.mubr.f32.mxu0 0.0
      %6626 = vmatmul.mubr.f32.gmra.mxu0 %v6550
      %v6627 = vpop.f32.mrf.mxu0
      %v6628 = vadd.f32 0.0, %v6627
      %v6629 = vpop.f32.mrf.mxu0
      %6630 = vmatprep.mubr.f32.mxu0 0.0
      %6631 = vmatmul.mubr.f32.gmra.mxu0 %v6553
      %v6632 = vpop.f32.mrf.mxu0
      %v6633 = vadd.f32 0.0, %v6632
      %v6634 = vpop.f32.mrf.mxu0
      %6635 = vmatprep.mubr.f32.mxu0 0.0
      %6636 = vmatmul.mubr.f32.gmra.mxu0 %v6556
      %v6637 = vpop.f32.mrf.mxu0
      %v6638 = vadd.f32 0.0, %v6637
      %v6639 = vpop.f32.mrf.mxu0
      %6640 = vmatprep.mubr.f32.mxu0 0.0
      %6641 = vmatmul.mubr.f32.gmra.mxu0 %v6559
      %v6642 = vpop.f32.mrf.mxu0
      %v6643 = vadd.f32 0.0, %v6642
      %v6644 = vpop.f32.mrf.mxu0
      %6645 = vdwg.mxu0
      %v6646 = vadd.f32 %v6545, %v6628
      %v6647 = vadd.f32 %v6546, %v6633
      %v6648 = vadd.f32 %v6547, %v6638
      %v6649 = vadd.f32 %v6548, %v6643
      %v6651 = vsel %vm4656, %v6034, 0
      %v6654 = vsel %vm4656, %v6039, 0
      %v6657 = vsel %vm4656, %v6044, 0
      %v6660 = vsel %vm4656, %v6049, 0
      %6662 = vmatprep.subr.mxu0 0.0
      %6663 = vmatpush1.msra.mxu0 0.0
      %6664 = vmatprep.subr.mxu0 0.0
      %6665 = vmatpush1.msra.mxu0 0.0
      %6666 = vmatprep.subr.mxu0 0.0
      %6667 = vmatpush1.msra.mxu0 0.0
      %6668 = vmatprep.subr.mxu0 0.0
      %6669 = vmatpush1.msra.mxu0 0.0
      %6670 = vmatprep.subr.mxu0 0.0
      %6671 = vmatpush1.msra.mxu0 0.0
      %6672 = vmatprep.subr.mxu0 0.0
      %6673 = vmatpush1.msra.mxu0 0.0
      %6674 = vmatprep.subr.mxu0 0.0
      %6675 = vmatpush1.msra.mxu0 0.0
      %6676 = vmatprep.subr.mxu0 0.0
      %6677 = vmatpush1.msra.mxu0 0.0
      %6678 = vmatprep.subr.mxu0 0.0
      %6679 = vmatpush1.msra.mxu0 0.0
      %6680 = vmatprep.subr.mxu0 0.0
      %6681 = vmatpush1.msra.mxu0 0.0
      %6682 = vmatprep.subr.mxu0 0.0
      %6683 = vmatpush1.msra.mxu0 0.0
      %6684 = vmatprep.subr.mxu0 0.0
      %6685 = vmatpush1.msra.mxu0 0.0
      %6686 = vmatprep.subr.mxu0 0.0
      %6687 = vmatpush1.msra.mxu0 %v1034
      %6688 = vmatprep.subr.mxu0 0.0
      %6689 = vmatpush1.msra.mxu0 %v1033
      %6690 = vmatprep.subr.mxu0 0.0
      %6691 = vmatpush1.msra.mxu0 %v1032
      %6692 = vmatprep.subr.mxu0 0.0
      %6693 = vmatpush1.msra.mxu0 %v1031
      %6694 = vmatprep.subr.mxu0 0.0
      %6695 = vmatpush2.msra.mxu0 0.0
      %6696 = vmatprep.subr.mxu0 0.0
      %6697 = vmatpush2.msra.mxu0 0.0
      %6698 = vmatprep.subr.mxu0 0.0
      %6699 = vmatpush2.msra.mxu0 0.0
      %6700 = vmatprep.subr.mxu0 0.0
      %6701 = vmatpush2.msra.mxu0 0.0
      %6702 = vmatprep.subr.mxu0 0.0
      %6703 = vmatpush2.msra.mxu0 0.0
      %6704 = vmatprep.subr.mxu0 0.0
      %6705 = vmatpush2.msra.mxu0 0.0
      %6706 = vmatprep.subr.mxu0 0.0
      %6707 = vmatpush2.msra.mxu0 0.0
      %6708 = vmatprep.subr.mxu0 0.0
      %6709 = vmatpush2.msra.mxu0 0.0
      %6710 = vmatprep.subr.mxu0 0.0
      %6711 = vmatpush2.msra.mxu0 0.0
      %6712 = vmatprep.subr.mxu0 0.0
      %6713 = vmatpush2.msra.mxu0 0.0
      %6714 = vmatprep.subr.mxu0 0.0
      %6715 = vmatpush2.msra.mxu0 0.0
      %6716 = vmatprep.subr.mxu0 0.0
      %6717 = vmatpush2.msra.mxu0 0.0
      %6718 = vmatprep.subr.mxu0 0.0
      %6719 = vmatpush2.msra.mxu0 0.0
      %6720 = vmatprep.subr.mxu0 0.0
      %6721 = vmatpush2.msra.mxu0 0.0
      %6722 = vmatprep.subr.mxu0 0.0
      %6723 = vmatpush2.msra.mxu0 0.0
      %6724 = vmatprep.subr.mxu0 0.0
      %6725 = vmatpush2.msra.mxu0 0.0
      %6726 = vmatprep.mubr.f32.mxu0 0.0
      %6727 = vmatmul.mubr.f32.gmra.mxu0 %v6651
      %v6728 = vpop.f32.mrf.mxu0
      %v6729 = vadd.f32 0.0, %v6728
      %v6730 = vpop.f32.mrf.mxu0
      %6731 = vmatprep.mubr.f32.mxu0 0.0
      %6732 = vmatmul.mubr.f32.gmra.mxu0 %v6654
      %v6733 = vpop.f32.mrf.mxu0
      %v6734 = vadd.f32 0.0, %v6733
      %v6735 = vpop.f32.mrf.mxu0
      %6736 = vmatprep.mubr.f32.mxu0 0.0
      %6737 = vmatmul.mubr.f32.gmra.mxu0 %v6657
      %v6738 = vpop.f32.mrf.mxu0
      %v6739 = vadd.f32 0.0, %v6738
      %v6740 = vpop.f32.mrf.mxu0
      %6741 = vmatprep.mubr.f32.mxu0 0.0
      %6742 = vmatmul.mubr.f32.gmra.mxu0 %v6660
      %v6743 = vpop.f32.mrf.mxu0
      %v6744 = vadd.f32 0.0, %v6743
      %v6745 = vpop.f32.mrf.mxu0
      %6746 = vdwg.mxu0
      %v6747 = vadd.f32 %v6646, %v6729
      %v6748 = vadd.f32 %v6647, %v6734
      %v6749 = vadd.f32 %v6648, %v6739
      %v6750 = vadd.f32 %v6649, %v6744
      %v6751 = vld [vmem:[%s12] sm:$0xff]
      %v6752 = vld [vmem:[%s12 + $0x8] sm:$0xff]
      %v6753 = vld [vmem:[%s12 + $0x10] sm:$0xff]
      %v6754 = vld [vmem:[%s12 + $0x18] sm:$0xff]
      %6756 = vset.pattern.permute.xlu0 0
      %6757 = vperm.xlu0 %6756, %v6751
      %v6758 = vpop.permute.xlu0 %6757
      %6761 = vset.pattern.permute.xlu0 0
      %6762 = vperm.xlu0 %6761, %v6752
      %v6763 = vpop.permute.xlu0 %6762
      %6766 = vset.pattern.permute.xlu0 0
      %6767 = vperm.xlu0 %6766, %v6753
      %v6768 = vpop.permute.xlu0 %6767
      %6771 = vset.pattern.permute.xlu0 0
      %6772 = vperm.xlu0 %6771, %v6754
      %v6773 = vpop.permute.xlu0 %6772
      %v6775 = vadd.f32 %v6747, %v6758
      %v6776 = vadd.f32 %v6748, %v6763
      %v6777 = vadd.f32 %v6749, %v6768
      %v6778 = vadd.f32 %v6750, %v6773
      %v6779 = vmax.f32 %v6775, 0.0
      %v6780 = vmax.f32 %v6776, 0.0
      %v6781 = vmax.f32 %v6777, 0.0
      %v6782 = vmax.f32 %v6778, 0.0
      %s6783 = scalar_lea.vmem %s12, 32
      %v6784 = vld [vmem:[%s6783] sm:$0xff]
      %v6785 = vld [vmem:[%s6783 + $0x8] sm:$0xff]
      %v6786 = vld [vmem:[%s6783 + $0x10] sm:$0xff]
      %v6787 = vld [vmem:[%s6783 + $0x18] sm:$0xff]
      %6789 = vset.pattern.permute.xlu0 0
      %6790 = vperm.xlu0 %6789, %v6784
      %v6791 = vpop.permute.xlu0 %6790
      %6794 = vset.pattern.permute.xlu0 0
      %6795 = vperm.xlu0 %6794, %v6785
      %v6796 = vpop.permute.xlu0 %6795
      %6799 = vset.pattern.permute.xlu0 0
      %6800 = vperm.xlu0 %6799, %v6786
      %v6801 = vpop.permute.xlu0 %6800
      %6804 = vset.pattern.permute.xlu0 0
      %6805 = vperm.xlu0 %6804, %v6787
      %v6806 = vpop.permute.xlu0 %6805
      %v6808 = vmul.f32 %v6779, %v6791
      %v6809 = vmul.f32 %v6780, %v6796
      %v6810 = vmul.f32 %v6781, %v6801
      %v6811 = vmul.f32 %v6782, %v6806
      %s6812 = scalar_lea.vmem %s12, 64
      %v6813 = vld [vmem:[%s6812] sm:$0xff]
      %v6814 = vld [vmem:[%s6812 + $0x8] sm:$0xff]
      %v6815 = vld [vmem:[%s6812 + $0x10] sm:$0xff]
      %v6816 = vld [vmem:[%s6812 + $0x18] sm:$0xff]
      %6818 = vset.pattern.permute.xlu0 0
      %6819 = vperm.xlu0 %6818, %v6813
      %v6820 = vpop.permute.xlu0 %6819
      %6823 = vset.pattern.permute.xlu0 0
      %6824 = vperm.xlu0 %6823, %v6814
      %v6825 = vpop.permute.xlu0 %6824
      %6828 = vset.pattern.permute.xlu0 0
      %6829 = vperm.xlu0 %6828, %v6815
      %v6830 = vpop.permute.xlu0 %6829
      %6833 = vset.pattern.permute.xlu0 0
      %6834 = vperm.xlu0 %6833, %v6816
      %v6835 = vpop.permute.xlu0 %6834
      %v6837 = vadd.f32 %v6808, %v6820
      %v6838 = vadd.f32 %v6809, %v6825
      %v6839 = vadd.f32 %v6810, %v6830
      %v6840 = vadd.f32 %v6811, %v6835
      %v6842 = vsel %vm4656, %v4624, 0
      %v6845 = vsel %vm4656, %v4625, 0
      %v6848 = vsel %vm4656, %v4626, 0
      %v6851 = vsel %vm4656, %v4627, 0
      %6853 = vmatprep.subr.mxu0 0.0
      %6854 = vmatpush1.msra.mxu0 0.0
      %6855 = vmatprep.subr.mxu0 0.0
      %6856 = vmatpush1.msra.mxu0 0.0
      %6857 = vmatprep.subr.mxu0 0.0
      %6858 = vmatpush1.msra.mxu0 0.0
      %6859 = vmatprep.subr.mxu0 0.0
      %6860 = vmatpush1.msra.mxu0 0.0
      %6861 = vmatprep.subr.mxu0 0.0
      %6862 = vmatpush1.msra.mxu0 0.0
      %6863 = vmatprep.subr.mxu0 0.0
      %6864 = vmatpush1.msra.mxu0 0.0
      %6865 = vmatprep.subr.mxu0 0.0
      %6866 = vmatpush1.msra.mxu0 0.0
      %6867 = vmatprep.subr.mxu0 0.0
      %6868 = vmatpush1.msra.mxu0 0.0
      %6869 = vmatprep.subr.mxu0 0.0
      %6870 = vmatpush1.msra.mxu0 0.0
      %6871 = vmatprep.subr.mxu0 0.0
      %6872 = vmatpush1.msra.mxu0 0.0
      %6873 = vmatprep.subr.mxu0 0.0
      %6874 = vmatpush1.msra.mxu0 0.0
      %6875 = vmatprep.subr.mxu0 0.0
      %6876 = vmatpush1.msra.mxu0 0.0
      %6877 = vmatprep.subr.mxu0 0.0
      %6878 = vmatpush1.msra.mxu0 %v4621
      %6879 = vmatprep.subr.mxu0 0.0
      %6880 = vmatpush1.msra.mxu0 %v4616
      %6881 = vmatprep.subr.mxu0 0.0
      %6882 = vmatpush1.msra.mxu0 %v4611
      %6883 = vmatprep.subr.mxu0 0.0
      %6884 = vmatpush1.msra.mxu0 %v4606
      %6885 = vmatprep.subr.mxu0 0.0
      %6886 = vmatpush2.msra.mxu0 0.0
      %6887 = vmatprep.subr.mxu0 0.0
      %6888 = vmatpush2.msra.mxu0 0.0
      %6889 = vmatprep.subr.mxu0 0.0
      %6890 = vmatpush2.msra.mxu0 0.0
      %6891 = vmatprep.subr.mxu0 0.0
      %6892 = vmatpush2.msra.mxu0 0.0
      %6893 = vmatprep.subr.mxu0 0.0
      %6894 = vmatpush2.msra.mxu0 0.0
      %6895 = vmatprep.subr.mxu0 0.0
      %6896 = vmatpush2.msra.mxu0 0.0
      %6897 = vmatprep.subr.mxu0 0.0
      %6898 = vmatpush2.msra.mxu0 0.0
      %6899 = vmatprep.subr.mxu0 0.0
      %6900 = vmatpush2.msra.mxu0 0.0
      %6901 = vmatprep.subr.mxu0 0.0
      %6902 = vmatpush2.msra.mxu0 0.0
      %6903 = vmatprep.subr.mxu0 0.0
      %6904 = vmatpush2.msra.mxu0 0.0
      %6905 = vmatprep.subr.mxu0 0.0
      %6906 = vmatpush2.msra.mxu0 0.0
      %6907 = vmatprep.subr.mxu0 0.0
      %6908 = vmatpush2.msra.mxu0 0.0
      %6909 = vmatprep.subr.mxu0 0.0
      %6910 = vmatpush2.msra.mxu0 0.0
      %6911 = vmatprep.subr.mxu0 0.0
      %6912 = vmatpush2.msra.mxu0 0.0
      %6913 = vmatprep.subr.mxu0 0.0
      %6914 = vmatpush2.msra.mxu0 0.0
      %6915 = vmatprep.subr.mxu0 0.0
      %6916 = vmatpush2.msra.mxu0 0.0
      %6917 = vmatprep.mubr.f32.mxu0 0.0
      %6918 = vmatmul.mubr.f32.gmra.mxu0 %v6842
      %v6919 = vpop.f32.mrf.mxu0
      %v6920 = vadd.f32 %v6837, %v6919
      %v6921 = vpop.f32.mrf.mxu0
      %6922 = vmatprep.mubr.f32.mxu0 0.0
      %6923 = vmatmul.mubr.f32.gmra.mxu0 %v6845
      %v6924 = vpop.f32.mrf.mxu0
      %v6925 = vadd.f32 %v6838, %v6924
      %v6926 = vpop.f32.mrf.mxu0
      %6927 = vmatprep.mubr.f32.mxu0 0.0
      %6928 = vmatmul.mubr.f32.gmra.mxu0 %v6848
      %v6929 = vpop.f32.mrf.mxu0
      %v6930 = vadd.f32 %v6839, %v6929
      %v6931 = vpop.f32.mrf.mxu0
      %6932 = vmatprep.mubr.f32.mxu0 0.0
      %6933 = vmatmul.mubr.f32.gmra.mxu0 %v6851
      %v6934 = vpop.f32.mrf.mxu0
      %v6935 = vadd.f32 %v6840, %v6934
      %v6936 = vpop.f32.mrf.mxu0
      %6937 = vdwg.mxu0
      %v6938 = vld [vmem:[%s13] sm:$0xff]
      %v6939 = vld [vmem:[%s13 + $0x8] sm:$0xff]
      %v6940 = vld [vmem:[%s13 + $0x10] sm:$0xff]
      %v6941 = vld [vmem:[%s13 + $0x18] sm:$0xff]
      %v6942 = vld [vmem:[%s13 + $0x20] sm:$0xff]
      %v6943 = vld [vmem:[%s13 + $0x28] sm:$0xff]
      %v6944 = vld [vmem:[%s13 + $0x30] sm:$0xff]
      %v6945 = vld [vmem:[%s13 + $0x38] sm:$0xff]
      %v6946 = vld [vmem:[%s13 + $0x40] sm:$0xff]
      %v6947 = vld [vmem:[%s13 + $0x48] sm:$0xff]
      %v6948 = vld [vmem:[%s13 + $0x50] sm:$0xff]
      %v6949 = vld [vmem:[%s13 + $0x58] sm:$0xff]
      %v6950 = vld [vmem:[%s13 + $0x60] sm:$0xff]
      %v6951 = vld [vmem:[%s13 + $0x68] sm:$0xff]
      %v6952 = vld [vmem:[%s13 + $0x70] sm:$0xff]
      %v6953 = vld [vmem:[%s13 + $0x78] sm:$0xff]
      %v6954 = vld [vmem:[%s13 + $0x80] sm:$0xff]
      %v6955 = vld [vmem:[%s13 + $0x88] sm:$0xff]
      %v6956 = vld [vmem:[%s13 + $0x90] sm:$0xff]
      %v6957 = vld [vmem:[%s13 + $0x98] sm:$0xff]
      %v6958 = vld [vmem:[%s13 + $0xa0] sm:$0xff]
      %v6959 = vld [vmem:[%s13 + $0xa8] sm:$0xff]
      %v6960 = vld [vmem:[%s13 + $0xb0] sm:$0xff]
      %v6961 = vld [vmem:[%s13 + $0xb8] sm:$0xff]
      %v6962 = vld [vmem:[%s13 + $0xc0] sm:$0xff]
      %v6963 = vld [vmem:[%s13 + $0xc8] sm:$0xff]
      %v6964 = vld [vmem:[%s13 + $0xd0] sm:$0xff]
      %v6965 = vld [vmem:[%s13 + $0xd8] sm:$0xff]
      %v6967 = vsel %vm4656, %v6938, 0
      %v6970 = vsel %vm4656, %v6939, 0
      %v6973 = vsel %vm4656, %v6940, 0
      %v6976 = vsel %vm4656, %v6941, 0
      %v6979 = vsel %vm4656, %v6942, 0
      %v6982 = vsel %vm4656, %v6943, 0
      %v6985 = vsel %vm4656, %v6944, 0
      %v6988 = vsel %vm4656, %v6945, 0
      %v6991 = vsel %vm4656, %v6946, 0
      %v6994 = vsel %vm4656, %v6947, 0
      %v6997 = vsel %vm4656, %v6948, 0
      %v7000 = vsel %vm4656, %v6949, 0
      %v7003 = vsel %vm4656, %v6950, 0
      %v7006 = vsel %vm4656, %v6951, 0
      %v7009 = vsel %vm4656, %v6952, 0
      %v7012 = vsel %vm4656, %v6953, 0
      %v7015 = vsel %vm4656, %v6954, 0
      %v7018 = vsel %vm4656, %v6955, 0
      %v7021 = vsel %vm4656, %v6956, 0
      %v7024 = vsel %vm4656, %v6957, 0
      %v7027 = vsel %vm4656, %v6958, 0
      %v7030 = vsel %vm4656, %v6959, 0
      %v7033 = vsel %vm4656, %v6960, 0
      %v7036 = vsel %vm4656, %v6961, 0
      %v7039 = vsel %vm4656, %v6962, 0
      %v7042 = vsel %vm4656, %v6963, 0
      %v7045 = vsel %vm4656, %v6964, 0
      %v7048 = vsel %vm4656, %v6965, 0
      %7050 = vmatprep.subr.mxu0 0.0
      %7051 = vmatpush1.msra.mxu0 0.0
      %7052 = vmatprep.subr.mxu0 0.0
      %7053 = vmatpush1.msra.mxu0 0.0
      %7054 = vmatprep.subr.mxu0 0.0
      %7055 = vmatpush1.msra.mxu0 0.0
      %7056 = vmatprep.subr.mxu0 0.0
      %7057 = vmatpush1.msra.mxu0 0.0
      %7058 = vmatprep.subr.mxu0 0.0
      %7059 = vmatpush1.msra.mxu0 0.0
      %7060 = vmatprep.subr.mxu0 0.0
      %7061 = vmatpush1.msra.mxu0 0.0
      %7062 = vmatprep.subr.mxu0 0.0
      %7063 = vmatpush1.msra.mxu0 0.0
      %7064 = vmatprep.subr.mxu0 0.0
      %7065 = vmatpush1.msra.mxu0 0.0
      %7066 = vmatprep.subr.mxu0 0.0
      %7067 = vmatpush1.msra.mxu0 0.0
      %7068 = vmatprep.subr.mxu0 0.0
      %7069 = vmatpush1.msra.mxu0 0.0
      %7070 = vmatprep.subr.mxu0 0.0
      %7071 = vmatpush1.msra.mxu0 0.0
      %7072 = vmatprep.subr.mxu0 0.0
      %7073 = vmatpush1.msra.mxu0 0.0
      %7074 = vmatprep.subr.mxu0 0.0
      %7075 = vmatpush1.msra.mxu0 %v4621
      %7076 = vmatprep.subr.mxu0 0.0
      %7077 = vmatpush1.msra.mxu0 %v4616
      %7078 = vmatprep.subr.mxu0 0.0
      %7079 = vmatpush1.msra.mxu0 %v4611
      %7080 = vmatprep.subr.mxu0 0.0
      %7081 = vmatpush1.msra.mxu0 %v4606
      %7082 = vmatprep.subr.mxu0 0.0
      %7083 = vmatpush2.msra.mxu0 0.0
      %7084 = vmatprep.subr.mxu0 0.0
      %7085 = vmatpush2.msra.mxu0 0.0
      %7086 = vmatprep.subr.mxu0 0.0
      %7087 = vmatpush2.msra.mxu0 0.0
      %7088 = vmatprep.subr.mxu0 0.0
      %7089 = vmatpush2.msra.mxu0 0.0
      %7090 = vmatprep.subr.mxu0 0.0
      %7091 = vmatpush2.msra.mxu0 0.0
      %7092 = vmatprep.subr.mxu0 0.0
      %7093 = vmatpush2.msra.mxu0 0.0
      %7094 = vmatprep.subr.mxu0 0.0
      %7095 = vmatpush2.msra.mxu0 0.0
      %7096 = vmatprep.subr.mxu0 0.0
      %7097 = vmatpush2.msra.mxu0 0.0
      %7098 = vmatprep.subr.mxu0 0.0
      %7099 = vmatpush2.msra.mxu0 0.0
      %7100 = vmatprep.subr.mxu0 0.0
      %7101 = vmatpush2.msra.mxu0 0.0
      %7102 = vmatprep.subr.mxu0 0.0
      %7103 = vmatpush2.msra.mxu0 0.0
      %7104 = vmatprep.subr.mxu0 0.0
      %7105 = vmatpush2.msra.mxu0 0.0
      %7106 = vmatprep.subr.mxu0 0.0
      %7107 = vmatpush2.msra.mxu0 0.0
      %7108 = vmatprep.subr.mxu0 0.0
      %7109 = vmatpush2.msra.mxu0 0.0
      %7110 = vmatprep.subr.mxu0 0.0
      %7111 = vmatpush2.msra.mxu0 0.0
      %7112 = vmatprep.subr.mxu0 0.0
      %7113 = vmatpush2.msra.mxu0 0.0
      %7114 = vmatprep.mubr.f32.mxu0 0.0
      %7115 = vmatmul.mubr.f32.gmra.mxu0 %v6967
      %v7116 = vpop.f32.mrf.mxu0
      %v7117 = vadd.f32 0.0, %v7116
      %v7118 = vpop.f32.mrf.mxu0
      %7119 = vmatprep.mubr.f32.mxu0 0.0
      %7120 = vmatmul.mubr.f32.gmra.mxu0 %v6970
      %v7121 = vpop.f32.mrf.mxu0
      %v7122 = vadd.f32 0.0, %v7121
      %v7123 = vpop.f32.mrf.mxu0
      %7124 = vmatprep.mubr.f32.mxu0 0.0
      %7125 = vmatmul.mubr.f32.gmra.mxu0 %v6973
      %v7126 = vpop.f32.mrf.mxu0
      %v7127 = vadd.f32 0.0, %v7126
      %v7128 = vpop.f32.mrf.mxu0
      %7129 = vmatprep.mubr.f32.mxu0 0.0
      %7130 = vmatmul.mubr.f32.gmra.mxu0 %v6976
      %v7131 = vpop.f32.mrf.mxu0
      %v7132 = vadd.f32 0.0, %v7131
      %v7133 = vpop.f32.mrf.mxu0
      %7134 = vmatprep.mubr.f32.mxu0 0.0
      %7135 = vmatmul.mubr.f32.gmra.mxu0 %v6979
      %v7136 = vpop.f32.mrf.mxu0
      %v7137 = vadd.f32 0.0, %v7136
      %v7138 = vpop.f32.mrf.mxu0
      %7139 = vmatprep.mubr.f32.mxu0 0.0
      %7140 = vmatmul.mubr.f32.gmra.mxu0 %v6982
      %v7141 = vpop.f32.mrf.mxu0
      %v7142 = vadd.f32 0.0, %v7141
      %v7143 = vpop.f32.mrf.mxu0
      %7144 = vmatprep.mubr.f32.mxu0 0.0
      %7145 = vmatmul.mubr.f32.gmra.mxu0 %v6985
      %v7146 = vpop.f32.mrf.mxu0
      %v7147 = vadd.f32 0.0, %v7146
      %v7148 = vpop.f32.mrf.mxu0
      %7149 = vmatprep.mubr.f32.mxu0 0.0
      %7150 = vmatmul.mubr.f32.gmra.mxu0 %v6988
      %v7151 = vpop.f32.mrf.mxu0
      %v7152 = vadd.f32 0.0, %v7151
      %v7153 = vpop.f32.mrf.mxu0
      %7154 = vmatprep.mubr.f32.mxu0 0.0
      %7155 = vmatmul.mubr.f32.gmra.mxu0 %v6991
      %v7156 = vpop.f32.mrf.mxu0
      %v7157 = vadd.f32 0.0, %v7156
      %v7158 = vpop.f32.mrf.mxu0
      %7159 = vmatprep.mubr.f32.mxu0 0.0
      %7160 = vmatmul.mubr.f32.gmra.mxu0 %v6994
      %v7161 = vpop.f32.mrf.mxu0
      %v7162 = vadd.f32 0.0, %v7161
      %v7163 = vpop.f32.mrf.mxu0
      %7164 = vmatprep.mubr.f32.mxu0 0.0
      %7165 = vmatmul.mubr.f32.gmra.mxu0 %v6997
      %v7166 = vpop.f32.mrf.mxu0
      %v7167 = vadd.f32 0.0, %v7166
      %v7168 = vpop.f32.mrf.mxu0
      %7169 = vmatprep.mubr.f32.mxu0 0.0
      %7170 = vmatmul.mubr.f32.gmra.mxu0 %v7000
      %v7171 = vpop.f32.mrf.mxu0
      %v7172 = vadd.f32 0.0, %v7171
      %v7173 = vpop.f32.mrf.mxu0
      %7174 = vmatprep.mubr.f32.mxu0 0.0
      %7175 = vmatmul.mubr.f32.gmra.mxu0 %v7003
      %v7176 = vpop.f32.mrf.mxu0
      %v7177 = vadd.f32 0.0, %v7176
      %v7178 = vpop.f32.mrf.mxu0
      %7179 = vmatprep.mubr.f32.mxu0 0.0
      %7180 = vmatmul.mubr.f32.gmra.mxu0 %v7006
      %v7181 = vpop.f32.mrf.mxu0
      %v7182 = vadd.f32 0.0, %v7181
      %v7183 = vpop.f32.mrf.mxu0
      %7184 = vmatprep.mubr.f32.mxu0 0.0
      %7185 = vmatmul.mubr.f32.gmra.mxu0 %v7009
      %v7186 = vpop.f32.mrf.mxu0
      %v7187 = vadd.f32 0.0, %v7186
      %v7188 = vpop.f32.mrf.mxu0
      %7189 = vmatprep.mubr.f32.mxu0 0.0
      %7190 = vmatmul.mubr.f32.gmra.mxu0 %v7012
      %v7191 = vpop.f32.mrf.mxu0
      %v7192 = vadd.f32 0.0, %v7191
      %v7193 = vpop.f32.mrf.mxu0
      %7194 = vmatprep.mubr.f32.mxu0 0.0
      %7195 = vmatmul.mubr.f32.gmra.mxu0 %v7015
      %v7196 = vpop.f32.mrf.mxu0
      %v7197 = vadd.f32 0.0, %v7196
      %v7198 = vpop.f32.mrf.mxu0
      %7199 = vmatprep.mubr.f32.mxu0 0.0
      %7200 = vmatmul.mubr.f32.gmra.mxu0 %v7018
      %v7201 = vpop.f32.mrf.mxu0
      %v7202 = vadd.f32 0.0, %v7201
      %v7203 = vpop.f32.mrf.mxu0
      %7204 = vmatprep.mubr.f32.mxu0 0.0
      %7205 = vmatmul.mubr.f32.gmra.mxu0 %v7021
      %v7206 = vpop.f32.mrf.mxu0
      %v7207 = vadd.f32 0.0, %v7206
      %v7208 = vpop.f32.mrf.mxu0
      %7209 = vmatprep.mubr.f32.mxu0 0.0
      %7210 = vmatmul.mubr.f32.gmra.mxu0 %v7024
      %v7211 = vpop.f32.mrf.mxu0
      %v7212 = vadd.f32 0.0, %v7211
      %v7213 = vpop.f32.mrf.mxu0
      %7214 = vmatprep.mubr.f32.mxu0 0.0
      %7215 = vmatmul.mubr.f32.gmra.mxu0 %v7027
      %v7216 = vpop.f32.mrf.mxu0
      %v7217 = vadd.f32 0.0, %v7216
      %v7218 = vpop.f32.mrf.mxu0
      %7219 = vmatprep.mubr.f32.mxu0 0.0
      %7220 = vmatmul.mubr.f32.gmra.mxu0 %v7030
      %v7221 = vpop.f32.mrf.mxu0
      %v7222 = vadd.f32 0.0, %v7221
      %v7223 = vpop.f32.mrf.mxu0
      %7224 = vmatprep.mubr.f32.mxu0 0.0
      %7225 = vmatmul.mubr.f32.gmra.mxu0 %v7033
      %v7226 = vpop.f32.mrf.mxu0
      %v7227 = vadd.f32 0.0, %v7226
      %v7228 = vpop.f32.mrf.mxu0
      %7229 = vmatprep.mubr.f32.mxu0 0.0
      %7230 = vmatmul.mubr.f32.gmra.mxu0 %v7036
      %v7231 = vpop.f32.mrf.mxu0
      %v7232 = vadd.f32 0.0, %v7231
      %v7233 = vpop.f32.mrf.mxu0
      %7234 = vmatprep.mubr.f32.mxu0 0.0
      %7235 = vmatmul.mubr.f32.gmra.mxu0 %v7039
      %v7236 = vpop.f32.mrf.mxu0
      %v7237 = vadd.f32 0.0, %v7236
      %v7238 = vpop.f32.mrf.mxu0
      %7239 = vmatprep.mubr.f32.mxu0 0.0
      %7240 = vmatmul.mubr.f32.gmra.mxu0 %v7042
      %v7241 = vpop.f32.mrf.mxu0
      %v7242 = vadd.f32 0.0, %v7241
      %v7243 = vpop.f32.mrf.mxu0
      %7244 = vmatprep.mubr.f32.mxu0 0.0
      %7245 = vmatmul.mubr.f32.gmra.mxu0 %v7045
      %v7246 = vpop.f32.mrf.mxu0
      %v7247 = vadd.f32 0.0, %v7246
      %v7248 = vpop.f32.mrf.mxu0
      %7249 = vmatprep.mubr.f32.mxu0 0.0
      %7250 = vmatmul.mubr.f32.gmra.mxu0 %v7048
      %v7251 = vpop.f32.mrf.mxu0
      %v7252 = vadd.f32 0.0, %v7251
      %v7253 = vpop.f32.mrf.mxu0
      %7254 = vdwg.mxu0
      %v7256 = vsel %vm4656, %v7137, 0
      %v7259 = vsel %vm4656, %v7142, 0
      %v7262 = vsel %vm4656, %v7147, 0
      %v7265 = vsel %vm4656, %v7152, 0
      %7267 = vmatprep.subr.mxu0 0.0
      %7268 = vmatpush1.msra.mxu0 0.0
      %7269 = vmatprep.subr.mxu0 0.0
      %7270 = vmatpush1.msra.mxu0 0.0
      %7271 = vmatprep.subr.mxu0 0.0
      %7272 = vmatpush1.msra.mxu0 0.0
      %7273 = vmatprep.subr.mxu0 0.0
      %7274 = vmatpush1.msra.mxu0 0.0
      %7275 = vmatprep.subr.mxu0 0.0
      %7276 = vmatpush1.msra.mxu0 0.0
      %7277 = vmatprep.subr.mxu0 0.0
      %7278 = vmatpush1.msra.mxu0 0.0
      %7279 = vmatprep.subr.mxu0 0.0
      %7280 = vmatpush1.msra.mxu0 0.0
      %7281 = vmatprep.subr.mxu0 0.0
      %7282 = vmatpush1.msra.mxu0 0.0
      %7283 = vmatprep.subr.mxu0 0.0
      %7284 = vmatpush1.msra.mxu0 0.0
      %7285 = vmatprep.subr.mxu0 0.0
      %7286 = vmatpush1.msra.mxu0 0.0
      %7287 = vmatprep.subr.mxu0 0.0
      %7288 = vmatpush1.msra.mxu0 0.0
      %7289 = vmatprep.subr.mxu0 0.0
      %7290 = vmatpush1.msra.mxu0 0.0
      %7291 = vmatprep.subr.mxu0 0.0
      %7292 = vmatpush1.msra.mxu0 %v790
      %7293 = vmatprep.subr.mxu0 0.0
      %7294 = vmatpush1.msra.mxu0 %v789
      %7295 = vmatprep.subr.mxu0 0.0
      %7296 = vmatpush1.msra.mxu0 %v788
      %7297 = vmatprep.subr.mxu0 0.0
      %7298 = vmatpush1.msra.mxu0 %v787
      %7299 = vmatprep.subr.mxu0 0.0
      %7300 = vmatpush2.msra.mxu0 0.0
      %7301 = vmatprep.subr.mxu0 0.0
      %7302 = vmatpush2.msra.mxu0 0.0
      %7303 = vmatprep.subr.mxu0 0.0
      %7304 = vmatpush2.msra.mxu0 0.0
      %7305 = vmatprep.subr.mxu0 0.0
      %7306 = vmatpush2.msra.mxu0 0.0
      %7307 = vmatprep.subr.mxu0 0.0
      %7308 = vmatpush2.msra.mxu0 0.0
      %7309 = vmatprep.subr.mxu0 0.0
      %7310 = vmatpush2.msra.mxu0 0.0
      %7311 = vmatprep.subr.mxu0 0.0
      %7312 = vmatpush2.msra.mxu0 0.0
      %7313 = vmatprep.subr.mxu0 0.0
      %7314 = vmatpush2.msra.mxu0 0.0
      %7315 = vmatprep.subr.mxu0 0.0
      %7316 = vmatpush2.msra.mxu0 0.0
      %7317 = vmatprep.subr.mxu0 0.0
      %7318 = vmatpush2.msra.mxu0 0.0
      %7319 = vmatprep.subr.mxu0 0.0
      %7320 = vmatpush2.msra.mxu0 0.0
      %7321 = vmatprep.subr.mxu0 0.0
      %7322 = vmatpush2.msra.mxu0 0.0
      %7323 = vmatprep.subr.mxu0 0.0
      %7324 = vmatpush2.msra.mxu0 0.0
      %7325 = vmatprep.subr.mxu0 0.0
      %7326 = vmatpush2.msra.mxu0 0.0
      %7327 = vmatprep.subr.mxu0 0.0
      %7328 = vmatpush2.msra.mxu0 0.0
      %7329 = vmatprep.subr.mxu0 0.0
      %7330 = vmatpush2.msra.mxu0 0.0
      %7331 = vmatprep.mubr.f32.mxu0 0.0
      %7332 = vmatmul.mubr.f32.gmra.mxu0 %v7256
      %v7333 = vpop.f32.mrf.mxu0
      %v7334 = vadd.f32 0.0, %v7333
      %v7335 = vpop.f32.mrf.mxu0
      %7336 = vmatprep.mubr.f32.mxu0 0.0
      %7337 = vmatmul.mubr.f32.gmra.mxu0 %v7259
      %v7338 = vpop.f32.mrf.mxu0
      %v7339 = vadd.f32 0.0, %v7338
      %v7340 = vpop.f32.mrf.mxu0
      %7341 = vmatprep.mubr.f32.mxu0 0.0
      %7342 = vmatmul.mubr.f32.gmra.mxu0 %v7262
      %v7343 = vpop.f32.mrf.mxu0
      %v7344 = vadd.f32 0.0, %v7343
      %v7345 = vpop.f32.mrf.mxu0
      %7346 = vmatprep.mubr.f32.mxu0 0.0
      %7347 = vmatmul.mubr.f32.gmra.mxu0 %v7265
      %v7348 = vpop.f32.mrf.mxu0
      %v7349 = vadd.f32 0.0, %v7348
      %v7350 = vpop.f32.mrf.mxu0
      %7351 = vdwg.mxu0
      %v7353 = vsel %vm4656, %v7117, 0
      %v7356 = vsel %vm4656, %v7122, 0
      %v7359 = vsel %vm4656, %v7127, 0
      %v7362 = vsel %vm4656, %v7132, 0
      %7364 = vmatprep.subr.mxu0 0.0
      %7365 = vmatpush1.msra.mxu0 0.0
      %7366 = vmatprep.subr.mxu0 0.0
      %7367 = vmatpush1.msra.mxu0 0.0
      %7368 = vmatprep.subr.mxu0 0.0
      %7369 = vmatpush1.msra.mxu0 0.0
      %7370 = vmatprep.subr.mxu0 0.0
      %7371 = vmatpush1.msra.mxu0 0.0
      %7372 = vmatprep.subr.mxu0 0.0
      %7373 = vmatpush1.msra.mxu0 0.0
      %7374 = vmatprep.subr.mxu0 0.0
      %7375 = vmatpush1.msra.mxu0 0.0
      %7376 = vmatprep.subr.mxu0 0.0
      %7377 = vmatpush1.msra.mxu0 0.0
      %7378 = vmatprep.subr.mxu0 0.0
      %7379 = vmatpush1.msra.mxu0 0.0
      %7380 = vmatprep.subr.mxu0 0.0
      %7381 = vmatpush1.msra.mxu0 0.0
      %7382 = vmatprep.subr.mxu0 0.0
      %7383 = vmatpush1.msra.mxu0 0.0
      %7384 = vmatprep.subr.mxu0 0.0
      %7385 = vmatpush1.msra.mxu0 0.0
      %7386 = vmatprep.subr.mxu0 0.0
      %7387 = vmatpush1.msra.mxu0 0.0
      %7388 = vmatprep.subr.mxu0 0.0
      %7389 = vmatpush1.msra.mxu0 %v741
      %7390 = vmatprep.subr.mxu0 0.0
      %7391 = vmatpush1.msra.mxu0 %v740
      %7392 = vmatprep.subr.mxu0 0.0
      %7393 = vmatpush1.msra.mxu0 %v739
      %7394 = vmatprep.subr.mxu0 0.0
      %7395 = vmatpush1.msra.mxu0 %v738
      %7396 = vmatprep.subr.mxu0 0.0
      %7397 = vmatpush2.msra.mxu0 0.0
      %7398 = vmatprep.subr.mxu0 0.0
      %7399 = vmatpush2.msra.mxu0 0.0
      %7400 = vmatprep.subr.mxu0 0.0
      %7401 = vmatpush2.msra.mxu0 0.0
      %7402 = vmatprep.subr.mxu0 0.0
      %7403 = vmatpush2.msra.mxu0 0.0
      %7404 = vmatprep.subr.mxu0 0.0
      %7405 = vmatpush2.msra.mxu0 0.0
      %7406 = vmatprep.subr.mxu0 0.0
      %7407 = vmatpush2.msra.mxu0 0.0
      %7408 = vmatprep.subr.mxu0 0.0
      %7409 = vmatpush2.msra.mxu0 0.0
      %7410 = vmatprep.subr.mxu0 0.0
      %7411 = vmatpush2.msra.mxu0 0.0
      %7412 = vmatprep.subr.mxu0 0.0
      %7413 = vmatpush2.msra.mxu0 0.0
      %7414 = vmatprep.subr.mxu0 0.0
      %7415 = vmatpush2.msra.mxu0 0.0
      %7416 = vmatprep.subr.mxu0 0.0
      %7417 = vmatpush2.msra.mxu0 0.0
      %7418 = vmatprep.subr.mxu0 0.0
      %7419 = vmatpush2.msra.mxu0 0.0
      %7420 = vmatprep.subr.mxu0 0.0
      %7421 = vmatpush2.msra.mxu0 0.0
      %7422 = vmatprep.subr.mxu0 0.0
      %7423 = vmatpush2.msra.mxu0 0.0
      %7424 = vmatprep.subr.mxu0 0.0
      %7425 = vmatpush2.msra.mxu0 0.0
      %7426 = vmatprep.subr.mxu0 0.0
      %7427 = vmatpush2.msra.mxu0 0.0
      %7428 = vmatprep.mubr.f32.mxu0 0.0
      %7429 = vmatmul.mubr.f32.gmra.mxu0 %v7353
      %v7430 = vpop.f32.mrf.mxu0
      %v7431 = vadd.f32 %v7334, %v7430
      %v7432 = vpop.f32.mrf.mxu0
      %7433 = vmatprep.mubr.f32.mxu0 0.0
      %7434 = vmatmul.mubr.f32.gmra.mxu0 %v7356
      %v7435 = vpop.f32.mrf.mxu0
      %v7436 = vadd.f32 %v7339, %v7435
      %v7437 = vpop.f32.mrf.mxu0
      %7438 = vmatprep.mubr.f32.mxu0 0.0
      %7439 = vmatmul.mubr.f32.gmra.mxu0 %v7359
      %v7440 = vpop.f32.mrf.mxu0
      %v7441 = vadd.f32 %v7344, %v7440
      %v7442 = vpop.f32.mrf.mxu0
      %7443 = vmatprep.mubr.f32.mxu0 0.0
      %7444 = vmatmul.mubr.f32.gmra.mxu0 %v7362
      %v7445 = vpop.f32.mrf.mxu0
      %v7446 = vadd.f32 %v7349, %v7445
      %v7447 = vpop.f32.mrf.mxu0
      %7448 = vdwg.mxu0
      %v7450 = vsel %vm4656, %v7157, 0
      %v7453 = vsel %vm4656, %v7162, 0
      %v7456 = vsel %vm4656, %v7167, 0
      %v7459 = vsel %vm4656, %v7172, 0
      %7461 = vmatprep.subr.mxu0 0.0
      %7462 = vmatpush1.msra.mxu0 0.0
      %7463 = vmatprep.subr.mxu0 0.0
      %7464 = vmatpush1.msra.mxu0 0.0
      %7465 = vmatprep.subr.mxu0 0.0
      %7466 = vmatpush1.msra.mxu0 0.0
      %7467 = vmatprep.subr.mxu0 0.0
      %7468 = vmatpush1.msra.mxu0 0.0
      %7469 = vmatprep.subr.mxu0 0.0
      %7470 = vmatpush1.msra.mxu0 0.0
      %7471 = vmatprep.subr.mxu0 0.0
      %7472 = vmatpush1.msra.mxu0 0.0
      %7473 = vmatprep.subr.mxu0 0.0
      %7474 = vmatpush1.msra.mxu0 0.0
      %7475 = vmatprep.subr.mxu0 0.0
      %7476 = vmatpush1.msra.mxu0 0.0
      %7477 = vmatprep.subr.mxu0 0.0
      %7478 = vmatpush1.msra.mxu0 0.0
      %7479 = vmatprep.subr.mxu0 0.0
      %7480 = vmatpush1.msra.mxu0 0.0
      %7481 = vmatprep.subr.mxu0 0.0
      %7482 = vmatpush1.msra.mxu0 0.0
      %7483 = vmatprep.subr.mxu0 0.0
      %7484 = vmatpush1.msra.mxu0 0.0
      %7485 = vmatprep.subr.mxu0 0.0
      %7486 = vmatpush1.msra.mxu0 %v839
      %7487 = vmatprep.subr.mxu0 0.0
      %7488 = vmatpush1.msra.mxu0 %v838
      %7489 = vmatprep.subr.mxu0 0.0
      %7490 = vmatpush1.msra.mxu0 %v837
      %7491 = vmatprep.subr.mxu0 0.0
      %7492 = vmatpush1.msra.mxu0 %v836
      %7493 = vmatprep.subr.mxu0 0.0
      %7494 = vmatpush2.msra.mxu0 0.0
      %7495 = vmatprep.subr.mxu0 0.0
      %7496 = vmatpush2.msra.mxu0 0.0
      %7497 = vmatprep.subr.mxu0 0.0
      %7498 = vmatpush2.msra.mxu0 0.0
      %7499 = vmatprep.subr.mxu0 0.0
      %7500 = vmatpush2.msra.mxu0 0.0
      %7501 = vmatprep.subr.mxu0 0.0
      %7502 = vmatpush2.msra.mxu0 0.0
      %7503 = vmatprep.subr.mxu0 0.0
      %7504 = vmatpush2.msra.mxu0 0.0
      %7505 = vmatprep.subr.mxu0 0.0
      %7506 = vmatpush2.msra.mxu0 0.0
      %7507 = vmatprep.subr.mxu0 0.0
      %7508 = vmatpush2.msra.mxu0 0.0
      %7509 = vmatprep.subr.mxu0 0.0
      %7510 = vmatpush2.msra.mxu0 0.0
      %7511 = vmatprep.subr.mxu0 0.0
      %7512 = vmatpush2.msra.mxu0 0.0
      %7513 = vmatprep.subr.mxu0 0.0
      %7514 = vmatpush2.msra.mxu0 0.0
      %7515 = vmatprep.subr.mxu0 0.0
      %7516 = vmatpush2.msra.mxu0 0.0
      %7517 = vmatprep.subr.mxu0 0.0
      %7518 = vmatpush2.msra.mxu0 0.0
      %7519 = vmatprep.subr.mxu0 0.0
      %7520 = vmatpush2.msra.mxu0 0.0
      %7521 = vmatprep.subr.mxu0 0.0
      %7522 = vmatpush2.msra.mxu0 0.0
      %7523 = vmatprep.subr.mxu0 0.0
      %7524 = vmatpush2.msra.mxu0 0.0
      %7525 = vmatprep.mubr.f32.mxu0 0.0
      %7526 = vmatmul.mubr.f32.gmra.mxu0 %v7450
      %v7527 = vpop.f32.mrf.mxu0
      %v7528 = vadd.f32 0.0, %v7527
      %v7529 = vpop.f32.mrf.mxu0
      %7530 = vmatprep.mubr.f32.mxu0 0.0
      %7531 = vmatmul.mubr.f32.gmra.mxu0 %v7453
      %v7532 = vpop.f32.mrf.mxu0
      %v7533 = vadd.f32 0.0, %v7532
      %v7534 = vpop.f32.mrf.mxu0
      %7535 = vmatprep.mubr.f32.mxu0 0.0
      %7536 = vmatmul.mubr.f32.gmra.mxu0 %v7456
      %v7537 = vpop.f32.mrf.mxu0
      %v7538 = vadd.f32 0.0, %v7537
      %v7539 = vpop.f32.mrf.mxu0
      %7540 = vmatprep.mubr.f32.mxu0 0.0
      %7541 = vmatmul.mubr.f32.gmra.mxu0 %v7459
      %v7542 = vpop.f32.mrf.mxu0
      %v7543 = vadd.f32 0.0, %v7542
      %v7544 = vpop.f32.mrf.mxu0
      %7545 = vdwg.mxu0
      %v7546 = vadd.f32 %v7431, %v7528
      %v7547 = vadd.f32 %v7436, %v7533
      %v7548 = vadd.f32 %v7441, %v7538
      %v7549 = vadd.f32 %v7446, %v7543
      %v7551 = vsel %vm4656, %v7177, 0
      %v7554 = vsel %vm4656, %v7182, 0
      %v7557 = vsel %vm4656, %v7187, 0
      %v7560 = vsel %vm4656, %v7192, 0
      %7562 = vmatprep.subr.mxu0 0.0
      %7563 = vmatpush1.msra.mxu0 0.0
      %7564 = vmatprep.subr.mxu0 0.0
      %7565 = vmatpush1.msra.mxu0 0.0
      %7566 = vmatprep.subr.mxu0 0.0
      %7567 = vmatpush1.msra.mxu0 0.0
      %7568 = vmatprep.subr.mxu0 0.0
      %7569 = vmatpush1.msra.mxu0 0.0
      %7570 = vmatprep.subr.mxu0 0.0
      %7571 = vmatpush1.msra.mxu0 0.0
      %7572 = vmatprep.subr.mxu0 0.0
      %7573 = vmatpush1.msra.mxu0 0.0
      %7574 = vmatprep.subr.mxu0 0.0
      %7575 = vmatpush1.msra.mxu0 0.0
      %7576 = vmatprep.subr.mxu0 0.0
      %7577 = vmatpush1.msra.mxu0 0.0
      %7578 = vmatprep.subr.mxu0 0.0
      %7579 = vmatpush1.msra.mxu0 0.0
      %7580 = vmatprep.subr.mxu0 0.0
      %7581 = vmatpush1.msra.mxu0 0.0
      %7582 = vmatprep.subr.mxu0 0.0
      %7583 = vmatpush1.msra.mxu0 0.0
      %7584 = vmatprep.subr.mxu0 0.0
      %7585 = vmatpush1.msra.mxu0 0.0
      %7586 = vmatprep.subr.mxu0 0.0
      %7587 = vmatpush1.msra.mxu0 %v887
      %7588 = vmatprep.subr.mxu0 0.0
      %7589 = vmatpush1.msra.mxu0 %v886
      %7590 = vmatprep.subr.mxu0 0.0
      %7591 = vmatpush1.msra.mxu0 %v885
      %7592 = vmatprep.subr.mxu0 0.0
      %7593 = vmatpush1.msra.mxu0 %v884
      %7594 = vmatprep.subr.mxu0 0.0
      %7595 = vmatpush2.msra.mxu0 0.0
      %7596 = vmatprep.subr.mxu0 0.0
      %7597 = vmatpush2.msra.mxu0 0.0
      %7598 = vmatprep.subr.mxu0 0.0
      %7599 = vmatpush2.msra.mxu0 0.0
      %7600 = vmatprep.subr.mxu0 0.0
      %7601 = vmatpush2.msra.mxu0 0.0
      %7602 = vmatprep.subr.mxu0 0.0
      %7603 = vmatpush2.msra.mxu0 0.0
      %7604 = vmatprep.subr.mxu0 0.0
      %7605 = vmatpush2.msra.mxu0 0.0
      %7606 = vmatprep.subr.mxu0 0.0
      %7607 = vmatpush2.msra.mxu0 0.0
      %7608 = vmatprep.subr.mxu0 0.0
      %7609 = vmatpush2.msra.mxu0 0.0
      %7610 = vmatprep.subr.mxu0 0.0
      %7611 = vmatpush2.msra.mxu0 0.0
      %7612 = vmatprep.subr.mxu0 0.0
      %7613 = vmatpush2.msra.mxu0 0.0
      %7614 = vmatprep.subr.mxu0 0.0
      %7615 = vmatpush2.msra.mxu0 0.0
      %7616 = vmatprep.subr.mxu0 0.0
      %7617 = vmatpush2.msra.mxu0 0.0
      %7618 = vmatprep.subr.mxu0 0.0
      %7619 = vmatpush2.msra.mxu0 0.0
      %7620 = vmatprep.subr.mxu0 0.0
      %7621 = vmatpush2.msra.mxu0 0.0
      %7622 = vmatprep.subr.mxu0 0.0
      %7623 = vmatpush2.msra.mxu0 0.0
      %7624 = vmatprep.subr.mxu0 0.0
      %7625 = vmatpush2.msra.mxu0 0.0
      %7626 = vmatprep.mubr.f32.mxu0 0.0
      %7627 = vmatmul.mubr.f32.gmra.mxu0 %v7551
      %v7628 = vpop.f32.mrf.mxu0
      %v7629 = vadd.f32 0.0, %v7628
      %v7630 = vpop.f32.mrf.mxu0
      %7631 = vmatprep.mubr.f32.mxu0 0.0
      %7632 = vmatmul.mubr.f32.gmra.mxu0 %v7554
      %v7633 = vpop.f32.mrf.mxu0
      %v7634 = vadd.f32 0.0, %v7633
      %v7635 = vpop.f32.mrf.mxu0
      %7636 = vmatprep.mubr.f32.mxu0 0.0
      %7637 = vmatmul.mubr.f32.gmra.mxu0 %v7557
      %v7638 = vpop.f32.mrf.mxu0
      %v7639 = vadd.f32 0.0, %v7638
      %v7640 = vpop.f32.mrf.mxu0
      %7641 = vmatprep.mubr.f32.mxu0 0.0
      %7642 = vmatmul.mubr.f32.gmra.mxu0 %v7560
      %v7643 = vpop.f32.mrf.mxu0
      %v7644 = vadd.f32 0.0, %v7643
      %v7645 = vpop.f32.mrf.mxu0
      %7646 = vdwg.mxu0
      %v7647 = vadd.f32 %v7546, %v7629
      %v7648 = vadd.f32 %v7547, %v7634
      %v7649 = vadd.f32 %v7548, %v7639
      %v7650 = vadd.f32 %v7549, %v7644
      %v7652 = vsel %vm4656, %v7197, 0
      %v7655 = vsel %vm4656, %v7202, 0
      %v7658 = vsel %vm4656, %v7207, 0
      %v7661 = vsel %vm4656, %v7212, 0
      %7663 = vmatprep.subr.mxu0 0.0
      %7664 = vmatpush1.msra.mxu0 0.0
      %7665 = vmatprep.subr.mxu0 0.0
      %7666 = vmatpush1.msra.mxu0 0.0
      %7667 = vmatprep.subr.mxu0 0.0
      %7668 = vmatpush1.msra.mxu0 0.0
      %7669 = vmatprep.subr.mxu0 0.0
      %7670 = vmatpush1.msra.mxu0 0.0
      %7671 = vmatprep.subr.mxu0 0.0
      %7672 = vmatpush1.msra.mxu0 0.0
      %7673 = vmatprep.subr.mxu0 0.0
      %7674 = vmatpush1.msra.mxu0 0.0
      %7675 = vmatprep.subr.mxu0 0.0
      %7676 = vmatpush1.msra.mxu0 0.0
      %7677 = vmatprep.subr.mxu0 0.0
      %7678 = vmatpush1.msra.mxu0 0.0
      %7679 = vmatprep.subr.mxu0 0.0
      %7680 = vmatpush1.msra.mxu0 0.0
      %7681 = vmatprep.subr.mxu0 0.0
      %7682 = vmatpush1.msra.mxu0 0.0
      %7683 = vmatprep.subr.mxu0 0.0
      %7684 = vmatpush1.msra.mxu0 0.0
      %7685 = vmatprep.subr.mxu0 0.0
      %7686 = vmatpush1.msra.mxu0 0.0
      %7687 = vmatprep.subr.mxu0 0.0
      %7688 = vmatpush1.msra.mxu0 %v936
      %7689 = vmatprep.subr.mxu0 0.0
      %7690 = vmatpush1.msra.mxu0 %v935
      %7691 = vmatprep.subr.mxu0 0.0
      %7692 = vmatpush1.msra.mxu0 %v934
      %7693 = vmatprep.subr.mxu0 0.0
      %7694 = vmatpush1.msra.mxu0 %v933
      %7695 = vmatprep.subr.mxu0 0.0
      %7696 = vmatpush2.msra.mxu0 0.0
      %7697 = vmatprep.subr.mxu0 0.0
      %7698 = vmatpush2.msra.mxu0 0.0
      %7699 = vmatprep.subr.mxu0 0.0
      %7700 = vmatpush2.msra.mxu0 0.0
      %7701 = vmatprep.subr.mxu0 0.0
      %7702 = vmatpush2.msra.mxu0 0.0
      %7703 = vmatprep.subr.mxu0 0.0
      %7704 = vmatpush2.msra.mxu0 0.0
      %7705 = vmatprep.subr.mxu0 0.0
      %7706 = vmatpush2.msra.mxu0 0.0
      %7707 = vmatprep.subr.mxu0 0.0
      %7708 = vmatpush2.msra.mxu0 0.0
      %7709 = vmatprep.subr.mxu0 0.0
      %7710 = vmatpush2.msra.mxu0 0.0
      %7711 = vmatprep.subr.mxu0 0.0
      %7712 = vmatpush2.msra.mxu0 0.0
      %7713 = vmatprep.subr.mxu0 0.0
      %7714 = vmatpush2.msra.mxu0 0.0
      %7715 = vmatprep.subr.mxu0 0.0
      %7716 = vmatpush2.msra.mxu0 0.0
      %7717 = vmatprep.subr.mxu0 0.0
      %7718 = vmatpush2.msra.mxu0 0.0
      %7719 = vmatprep.subr.mxu0 0.0
      %7720 = vmatpush2.msra.mxu0 0.0
      %7721 = vmatprep.subr.mxu0 0.0
      %7722 = vmatpush2.msra.mxu0 0.0
      %7723 = vmatprep.subr.mxu0 0.0
      %7724 = vmatpush2.msra.mxu0 0.0
      %7725 = vmatprep.subr.mxu0 0.0
      %7726 = vmatpush2.msra.mxu0 0.0
      %7727 = vmatprep.mubr.f32.mxu0 0.0
      %7728 = vmatmul.mubr.f32.gmra.mxu0 %v7652
      %v7729 = vpop.f32.mrf.mxu0
      %v7730 = vadd.f32 0.0, %v7729
      %v7731 = vpop.f32.mrf.mxu0
      %7732 = vmatprep.mubr.f32.mxu0 0.0
      %7733 = vmatmul.mubr.f32.gmra.mxu0 %v7655
      %v7734 = vpop.f32.mrf.mxu0
      %v7735 = vadd.f32 0.0, %v7734
      %v7736 = vpop.f32.mrf.mxu0
      %7737 = vmatprep.mubr.f32.mxu0 0.0
      %7738 = vmatmul.mubr.f32.gmra.mxu0 %v7658
      %v7739 = vpop.f32.mrf.mxu0
      %v7740 = vadd.f32 0.0, %v7739
      %v7741 = vpop.f32.mrf.mxu0
      %7742 = vmatprep.mubr.f32.mxu0 0.0
      %7743 = vmatmul.mubr.f32.gmra.mxu0 %v7661
      %v7744 = vpop.f32.mrf.mxu0
      %v7745 = vadd.f32 0.0, %v7744
      %v7746 = vpop.f32.mrf.mxu0
      %7747 = vdwg.mxu0
      %v7748 = vadd.f32 %v7647, %v7730
      %v7749 = vadd.f32 %v7648, %v7735
      %v7750 = vadd.f32 %v7649, %v7740
      %v7751 = vadd.f32 %v7650, %v7745
      %v7753 = vsel %vm4656, %v7217, 0
      %v7756 = vsel %vm4656, %v7222, 0
      %v7759 = vsel %vm4656, %v7227, 0
      %v7762 = vsel %vm4656, %v7232, 0
      %7764 = vmatprep.subr.mxu0 0.0
      %7765 = vmatpush1.msra.mxu0 0.0
      %7766 = vmatprep.subr.mxu0 0.0
      %7767 = vmatpush1.msra.mxu0 0.0
      %7768 = vmatprep.subr.mxu0 0.0
      %7769 = vmatpush1.msra.mxu0 0.0
      %7770 = vmatprep.subr.mxu0 0.0
      %7771 = vmatpush1.msra.mxu0 0.0
      %7772 = vmatprep.subr.mxu0 0.0
      %7773 = vmatpush1.msra.mxu0 0.0
      %7774 = vmatprep.subr.mxu0 0.0
      %7775 = vmatpush1.msra.mxu0 0.0
      %7776 = vmatprep.subr.mxu0 0.0
      %7777 = vmatpush1.msra.mxu0 0.0
      %7778 = vmatprep.subr.mxu0 0.0
      %7779 = vmatpush1.msra.mxu0 0.0
      %7780 = vmatprep.subr.mxu0 0.0
      %7781 = vmatpush1.msra.mxu0 0.0
      %7782 = vmatprep.subr.mxu0 0.0
      %7783 = vmatpush1.msra.mxu0 0.0
      %7784 = vmatprep.subr.mxu0 0.0
      %7785 = vmatpush1.msra.mxu0 0.0
      %7786 = vmatprep.subr.mxu0 0.0
      %7787 = vmatpush1.msra.mxu0 0.0
      %7788 = vmatprep.subr.mxu0 0.0
      %7789 = vmatpush1.msra.mxu0 %v985
      %7790 = vmatprep.subr.mxu0 0.0
      %7791 = vmatpush1.msra.mxu0 %v984
      %7792 = vmatprep.subr.mxu0 0.0
      %7793 = vmatpush1.msra.mxu0 %v983
      %7794 = vmatprep.subr.mxu0 0.0
      %7795 = vmatpush1.msra.mxu0 %v982
      %7796 = vmatprep.subr.mxu0 0.0
      %7797 = vmatpush2.msra.mxu0 0.0
      %7798 = vmatprep.subr.mxu0 0.0
      %7799 = vmatpush2.msra.mxu0 0.0
      %7800 = vmatprep.subr.mxu0 0.0
      %7801 = vmatpush2.msra.mxu0 0.0
      %7802 = vmatprep.subr.mxu0 0.0
      %7803 = vmatpush2.msra.mxu0 0.0
      %7804 = vmatprep.subr.mxu0 0.0
      %7805 = vmatpush2.msra.mxu0 0.0
      %7806 = vmatprep.subr.mxu0 0.0
      %7807 = vmatpush2.msra.mxu0 0.0
      %7808 = vmatprep.subr.mxu0 0.0
      %7809 = vmatpush2.msra.mxu0 0.0
      %7810 = vmatprep.subr.mxu0 0.0
      %7811 = vmatpush2.msra.mxu0 0.0
      %7812 = vmatprep.subr.mxu0 0.0
      %7813 = vmatpush2.msra.mxu0 0.0
      %7814 = vmatprep.subr.mxu0 0.0
      %7815 = vmatpush2.msra.mxu0 0.0
      %7816 = vmatprep.subr.mxu0 0.0
      %7817 = vmatpush2.msra.mxu0 0.0
      %7818 = vmatprep.subr.mxu0 0.0
      %7819 = vmatpush2.msra.mxu0 0.0
      %7820 = vmatprep.subr.mxu0 0.0
      %7821 = vmatpush2.msra.mxu0 0.0
      %7822 = vmatprep.subr.mxu0 0.0
      %7823 = vmatpush2.msra.mxu0 0.0
      %7824 = vmatprep.subr.mxu0 0.0
      %7825 = vmatpush2.msra.mxu0 0.0
      %7826 = vmatprep.subr.mxu0 0.0
      %7827 = vmatpush2.msra.mxu0 0.0
      %7828 = vmatprep.mubr.f32.mxu0 0.0
      %7829 = vmatmul.mubr.f32.gmra.mxu0 %v7753
      %v7830 = vpop.f32.mrf.mxu0
      %v7831 = vadd.f32 0.0, %v7830
      %v7832 = vpop.f32.mrf.mxu0
      %7833 = vmatprep.mubr.f32.mxu0 0.0
      %7834 = vmatmul.mubr.f32.gmra.mxu0 %v7756
      %v7835 = vpop.f32.mrf.mxu0
      %v7836 = vadd.f32 0.0, %v7835
      %v7837 = vpop.f32.mrf.mxu0
      %7838 = vmatprep.mubr.f32.mxu0 0.0
      %7839 = vmatmul.mubr.f32.gmra.mxu0 %v7759
      %v7840 = vpop.f32.mrf.mxu0
      %v7841 = vadd.f32 0.0, %v7840
      %v7842 = vpop.f32.mrf.mxu0
      %7843 = vmatprep.mubr.f32.mxu0 0.0
      %7844 = vmatmul.mubr.f32.gmra.mxu0 %v7762
      %v7845 = vpop.f32.mrf.mxu0
      %v7846 = vadd.f32 0.0, %v7845
      %v7847 = vpop.f32.mrf.mxu0
      %7848 = vdwg.mxu0
      %v7849 = vadd.f32 %v7748, %v7831
      %v7850 = vadd.f32 %v7749, %v7836
      %v7851 = vadd.f32 %v7750, %v7841
      %v7852 = vadd.f32 %v7751, %v7846
      %v7854 = vsel %vm4656, %v7237, 0
      %v7857 = vsel %vm4656, %v7242, 0
      %v7860 = vsel %vm4656, %v7247, 0
      %v7863 = vsel %vm4656, %v7252, 0
      %7865 = vmatprep.subr.mxu0 0.0
      %7866 = vmatpush1.msra.mxu0 0.0
      %7867 = vmatprep.subr.mxu0 0.0
      %7868 = vmatpush1.msra.mxu0 0.0
      %7869 = vmatprep.subr.mxu0 0.0
      %7870 = vmatpush1.msra.mxu0 0.0
      %7871 = vmatprep.subr.mxu0 0.0
      %7872 = vmatpush1.msra.mxu0 0.0
      %7873 = vmatprep.subr.mxu0 0.0
      %7874 = vmatpush1.msra.mxu0 0.0
      %7875 = vmatprep.subr.mxu0 0.0
      %7876 = vmatpush1.msra.mxu0 0.0
      %7877 = vmatprep.subr.mxu0 0.0
      %7878 = vmatpush1.msra.mxu0 0.0
      %7879 = vmatprep.subr.mxu0 0.0
      %7880 = vmatpush1.msra.mxu0 0.0
      %7881 = vmatprep.subr.mxu0 0.0
      %7882 = vmatpush1.msra.mxu0 0.0
      %7883 = vmatprep.subr.mxu0 0.0
      %7884 = vmatpush1.msra.mxu0 0.0
      %7885 = vmatprep.subr.mxu0 0.0
      %7886 = vmatpush1.msra.mxu0 0.0
      %7887 = vmatprep.subr.mxu0 0.0
      %7888 = vmatpush1.msra.mxu0 0.0
      %7889 = vmatprep.subr.mxu0 0.0
      %7890 = vmatpush1.msra.mxu0 %v1034
      %7891 = vmatprep.subr.mxu0 0.0
      %7892 = vmatpush1.msra.mxu0 %v1033
      %7893 = vmatprep.subr.mxu0 0.0
      %7894 = vmatpush1.msra.mxu0 %v1032
      %7895 = vmatprep.subr.mxu0 0.0
      %7896 = vmatpush1.msra.mxu0 %v1031
      %7897 = vmatprep.subr.mxu0 0.0
      %7898 = vmatpush2.msra.mxu0 0.0
      %7899 = vmatprep.subr.mxu0 0.0
      %7900 = vmatpush2.msra.mxu0 0.0
      %7901 = vmatprep.subr.mxu0 0.0
      %7902 = vmatpush2.msra.mxu0 0.0
      %7903 = vmatprep.subr.mxu0 0.0
      %7904 = vmatpush2.msra.mxu0 0.0
      %7905 = vmatprep.subr.mxu0 0.0
      %7906 = vmatpush2.msra.mxu0 0.0
      %7907 = vmatprep.subr.mxu0 0.0
      %7908 = vmatpush2.msra.mxu0 0.0
      %7909 = vmatprep.subr.mxu0 0.0
      %7910 = vmatpush2.msra.mxu0 0.0
      %7911 = vmatprep.subr.mxu0 0.0
      %7912 = vmatpush2.msra.mxu0 0.0
      %7913 = vmatprep.subr.mxu0 0.0
      %7914 = vmatpush2.msra.mxu0 0.0
      %7915 = vmatprep.subr.mxu0 0.0
      %7916 = vmatpush2.msra.mxu0 0.0
      %7917 = vmatprep.subr.mxu0 0.0
      %7918 = vmatpush2.msra.mxu0 0.0
      %7919 = vmatprep.subr.mxu0 0.0
      %7920 = vmatpush2.msra.mxu0 0.0
      %7921 = vmatprep.subr.mxu0 0.0
      %7922 = vmatpush2.msra.mxu0 0.0
      %7923 = vmatprep.subr.mxu0 0.0
      %7924 = vmatpush2.msra.mxu0 0.0
      %7925 = vmatprep.subr.mxu0 0.0
      %7926 = vmatpush2.msra.mxu0 0.0
      %7927 = vmatprep.subr.mxu0 0.0
      %7928 = vmatpush2.msra.mxu0 0.0
      %7929 = vmatprep.mubr.f32.mxu0 0.0
      %7930 = vmatmul.mubr.f32.gmra.mxu0 %v7854
      %v7931 = vpop.f32.mrf.mxu0
      %v7932 = vadd.f32 0.0, %v7931
      %v7933 = vpop.f32.mrf.mxu0
      %7934 = vmatprep.mubr.f32.mxu0 0.0
      %7935 = vmatmul.mubr.f32.gmra.mxu0 %v7857
      %v7936 = vpop.f32.mrf.mxu0
      %v7937 = vadd.f32 0.0, %v7936
      %v7938 = vpop.f32.mrf.mxu0
      %7939 = vmatprep.mubr.f32.mxu0 0.0
      %7940 = vmatmul.mubr.f32.gmra.mxu0 %v7860
      %v7941 = vpop.f32.mrf.mxu0
      %v7942 = vadd.f32 0.0, %v7941
      %v7943 = vpop.f32.mrf.mxu0
      %7944 = vmatprep.mubr.f32.mxu0 0.0
      %7945 = vmatmul.mubr.f32.gmra.mxu0 %v7863
      %v7946 = vpop.f32.mrf.mxu0
      %v7947 = vadd.f32 0.0, %v7946
      %v7948 = vpop.f32.mrf.mxu0
      %7949 = vdwg.mxu0
      %v7950 = vadd.f32 %v7849, %v7932
      %v7951 = vadd.f32 %v7850, %v7937
      %v7952 = vadd.f32 %v7851, %v7942
      %v7953 = vadd.f32 %v7852, %v7947
      %v7954 = vld [vmem:[%s14] sm:$0xff]
      %v7955 = vld [vmem:[%s14 + $0x8] sm:$0xff]
      %v7956 = vld [vmem:[%s14 + $0x10] sm:$0xff]
      %v7957 = vld [vmem:[%s14 + $0x18] sm:$0xff]
      %7959 = vset.pattern.permute.xlu0 0
      %7960 = vperm.xlu0 %7959, %v7954
      %v7961 = vpop.permute.xlu0 %7960
      %7964 = vset.pattern.permute.xlu0 0
      %7965 = vperm.xlu0 %7964, %v7955
      %v7966 = vpop.permute.xlu0 %7965
      %7969 = vset.pattern.permute.xlu0 0
      %7970 = vperm.xlu0 %7969, %v7956
      %v7971 = vpop.permute.xlu0 %7970
      %7974 = vset.pattern.permute.xlu0 0
      %7975 = vperm.xlu0 %7974, %v7957
      %v7976 = vpop.permute.xlu0 %7975
      %v7978 = vadd.f32 %v7950, %v7961
      %v7979 = vadd.f32 %v7951, %v7966
      %v7980 = vadd.f32 %v7952, %v7971
      %v7981 = vadd.f32 %v7953, %v7976
      %v7982 = vmax.f32 %v7978, 0.0
      %v7983 = vmax.f32 %v7979, 0.0
      %v7984 = vmax.f32 %v7980, 0.0
      %v7985 = vmax.f32 %v7981, 0.0
      %s7986 = scalar_lea.vmem %s14, 32
      %v7987 = vld [vmem:[%s7986] sm:$0xff]
      %v7988 = vld [vmem:[%s7986 + $0x8] sm:$0xff]
      %v7989 = vld [vmem:[%s7986 + $0x10] sm:$0xff]
      %v7990 = vld [vmem:[%s7986 + $0x18] sm:$0xff]
      %7992 = vset.pattern.permute.xlu0 0
      %7993 = vperm.xlu0 %7992, %v7987
      %v7994 = vpop.permute.xlu0 %7993
      %7997 = vset.pattern.permute.xlu0 0
      %7998 = vperm.xlu0 %7997, %v7988
      %v7999 = vpop.permute.xlu0 %7998
      %8002 = vset.pattern.permute.xlu0 0
      %8003 = vperm.xlu0 %8002, %v7989
      %v8004 = vpop.permute.xlu0 %8003
      %8007 = vset.pattern.permute.xlu0 0
      %8008 = vperm.xlu0 %8007, %v7990
      %v8009 = vpop.permute.xlu0 %8008
      %v8011 = vmul.f32 %v7982, %v7994
      %v8012 = vmul.f32 %v7983, %v7999
      %v8013 = vmul.f32 %v7984, %v8004
      %v8014 = vmul.f32 %v7985, %v8009
      %s8015 = scalar_lea.vmem %s14, 64
      %v8016 = vld [vmem:[%s8015] sm:$0xff]
      %v8017 = vld [vmem:[%s8015 + $0x8] sm:$0xff]
      %v8018 = vld [vmem:[%s8015 + $0x10] sm:$0xff]
      %v8019 = vld [vmem:[%s8015 + $0x18] sm:$0xff]
      %8021 = vset.pattern.permute.xlu0 0
      %8022 = vperm.xlu0 %8021, %v8016
      %v8023 = vpop.permute.xlu0 %8022
      %8026 = vset.pattern.permute.xlu0 0
      %8027 = vperm.xlu0 %8026, %v8017
      %v8028 = vpop.permute.xlu0 %8027
      %8031 = vset.pattern.permute.xlu0 0
      %8032 = vperm.xlu0 %8031, %v8018
      %v8033 = vpop.permute.xlu0 %8032
      %8036 = vset.pattern.permute.xlu0 0
      %8037 = vperm.xlu0 %8036, %v8019
      %v8038 = vpop.permute.xlu0 %8037
      %v8040 = vadd.f32 %v8011, %v8023
      %v8041 = vadd.f32 %v8012, %v8028
      %v8042 = vadd.f32 %v8013, %v8033
      %v8043 = vadd.f32 %v8014, %v8038
      %v8044 = vld [vmem:[%s15] sm:$0xff]
      %v8045 = vld [vmem:[%s15 + $0x8] sm:$0xff]
      %v8046 = vld [vmem:[%s15 + $0x10] sm:$0xff]
      %v8047 = vld [vmem:[%s15 + $0x18] sm:$0xff]
      %v8048 = vld [vmem:[%s15 + $0x20] sm:$0xff]
      %v8049 = vld [vmem:[%s15 + $0x28] sm:$0xff]
      %v8050 = vld [vmem:[%s15 + $0x30] sm:$0xff]
      %v8051 = vld [vmem:[%s15 + $0x38] sm:$0xff]
      %v8052 = vld [vmem:[%s15 + $0x40] sm:$0xff]
      %v8053 = vld [vmem:[%s15 + $0x48] sm:$0xff]
      %v8054 = vld [vmem:[%s15 + $0x50] sm:$0xff]
      %v8055 = vld [vmem:[%s15 + $0x58] sm:$0xff]
      %v8056 = vld [vmem:[%s15 + $0x60] sm:$0xff]
      %v8057 = vld [vmem:[%s15 + $0x68] sm:$0xff]
      %v8058 = vld [vmem:[%s15 + $0x70] sm:$0xff]
      %v8059 = vld [vmem:[%s15 + $0x78] sm:$0xff]
      %v8060 = vld [vmem:[%s15 + $0x80] sm:$0xff]
      %v8061 = vld [vmem:[%s15 + $0x88] sm:$0xff]
      %v8062 = vld [vmem:[%s15 + $0x90] sm:$0xff]
      %v8063 = vld [vmem:[%s15 + $0x98] sm:$0xff]
      %v8064 = vld [vmem:[%s15 + $0xa0] sm:$0xff]
      %v8065 = vld [vmem:[%s15 + $0xa8] sm:$0xff]
      %v8066 = vld [vmem:[%s15 + $0xb0] sm:$0xff]
      %v8067 = vld [vmem:[%s15 + $0xb8] sm:$0xff]
      %v8068 = vld [vmem:[%s15 + $0xc0] sm:$0xff]
      %v8069 = vld [vmem:[%s15 + $0xc8] sm:$0xff]
      %v8070 = vld [vmem:[%s15 + $0xd0] sm:$0xff]
      %v8071 = vld [vmem:[%s15 + $0xd8] sm:$0xff]
      %v8073 = vsel %vm4656, %v8044, 0
      %v8076 = vsel %vm4656, %v8045, 0
      %v8079 = vsel %vm4656, %v8046, 0
      %v8082 = vsel %vm4656, %v8047, 0
      %v8085 = vsel %vm4656, %v8048, 0
      %v8088 = vsel %vm4656, %v8049, 0
      %v8091 = vsel %vm4656, %v8050, 0
      %v8094 = vsel %vm4656, %v8051, 0
      %v8097 = vsel %vm4656, %v8052, 0
      %v8100 = vsel %vm4656, %v8053, 0
      %v8103 = vsel %vm4656, %v8054, 0
      %v8106 = vsel %vm4656, %v8055, 0
      %v8109 = vsel %vm4656, %v8056, 0
      %v8112 = vsel %vm4656, %v8057, 0
      %v8115 = vsel %vm4656, %v8058, 0
      %v8118 = vsel %vm4656, %v8059, 0
      %v8121 = vsel %vm4656, %v8060, 0
      %v8124 = vsel %vm4656, %v8061, 0
      %v8127 = vsel %vm4656, %v8062, 0
      %v8130 = vsel %vm4656, %v8063, 0
      %v8133 = vsel %vm4656, %v8064, 0
      %v8136 = vsel %vm4656, %v8065, 0
      %v8139 = vsel %vm4656, %v8066, 0
      %v8142 = vsel %vm4656, %v8067, 0
      %v8145 = vsel %vm4656, %v8068, 0
      %v8148 = vsel %vm4656, %v8069, 0
      %v8151 = vsel %vm4656, %v8070, 0
      %v8154 = vsel %vm4656, %v8071, 0
      %8156 = vmatprep.subr.mxu0 0.0
      %8157 = vmatpush1.msra.mxu0 0.0
      %8158 = vmatprep.subr.mxu0 0.0
      %8159 = vmatpush1.msra.mxu0 0.0
      %8160 = vmatprep.subr.mxu0 0.0
      %8161 = vmatpush1.msra.mxu0 0.0
      %8162 = vmatprep.subr.mxu0 0.0
      %8163 = vmatpush1.msra.mxu0 0.0
      %8164 = vmatprep.subr.mxu0 0.0
      %8165 = vmatpush1.msra.mxu0 0.0
      %8166 = vmatprep.subr.mxu0 0.0
      %8167 = vmatpush1.msra.mxu0 0.0
      %8168 = vmatprep.subr.mxu0 0.0
      %8169 = vmatpush1.msra.mxu0 0.0
      %8170 = vmatprep.subr.mxu0 0.0
      %8171 = vmatpush1.msra.mxu0 0.0
      %8172 = vmatprep.subr.mxu0 0.0
      %8173 = vmatpush1.msra.mxu0 0.0
      %8174 = vmatprep.subr.mxu0 0.0
      %8175 = vmatpush1.msra.mxu0 0.0
      %8176 = vmatprep.subr.mxu0 0.0
      %8177 = vmatpush1.msra.mxu0 0.0
      %8178 = vmatprep.subr.mxu0 0.0
      %8179 = vmatpush1.msra.mxu0 0.0
      %8180 = vmatprep.subr.mxu0 0.0
      %8181 = vmatpush1.msra.mxu0 %v8043
      %8182 = vmatprep.subr.mxu0 0.0
      %8183 = vmatpush1.msra.mxu0 %v8042
      %8184 = vmatprep.subr.mxu0 0.0
      %8185 = vmatpush1.msra.mxu0 %v8041
      %8186 = vmatprep.subr.mxu0 0.0
      %8187 = vmatpush1.msra.mxu0 %v8040
      %8188 = vmatprep.subr.mxu0 0.0
      %8189 = vmatpush2.msra.mxu0 0.0
      %8190 = vmatprep.subr.mxu0 0.0
      %8191 = vmatpush2.msra.mxu0 0.0
      %8192 = vmatprep.subr.mxu0 0.0
      %8193 = vmatpush2.msra.mxu0 0.0
      %8194 = vmatprep.subr.mxu0 0.0
      %8195 = vmatpush2.msra.mxu0 0.0
      %8196 = vmatprep.subr.mxu0 0.0
      %8197 = vmatpush2.msra.mxu0 0.0
      %8198 = vmatprep.subr.mxu0 0.0
      %8199 = vmatpush2.msra.mxu0 0.0
      %8200 = vmatprep.subr.mxu0 0.0
      %8201 = vmatpush2.msra.mxu0 0.0
      %8202 = vmatprep.subr.mxu0 0.0
      %8203 = vmatpush2.msra.mxu0 0.0
      %8204 = vmatprep.subr.mxu0 0.0
      %8205 = vmatpush2.msra.mxu0 0.0
      %8206 = vmatprep.subr.mxu0 0.0
      %8207 = vmatpush2.msra.mxu0 0.0
      %8208 = vmatprep.subr.mxu0 0.0
      %8209 = vmatpush2.msra.mxu0 0.0
      %8210 = vmatprep.subr.mxu0 0.0
      %8211 = vmatpush2.msra.mxu0 0.0
      %8212 = vmatprep.subr.mxu0 0.0
      %8213 = vmatpush2.msra.mxu0 0.0
      %8214 = vmatprep.subr.mxu0 0.0
      %8215 = vmatpush2.msra.mxu0 0.0
      %8216 = vmatprep.subr.mxu0 0.0
      %8217 = vmatpush2.msra.mxu0 0.0
      %8218 = vmatprep.subr.mxu0 0.0
      %8219 = vmatpush2.msra.mxu0 0.0
      %8220 = vmatprep.mubr.f32.mxu0 0.0
      %8221 = vmatmul.mubr.f32.gmra.mxu0 %v8073
      %v8222 = vpop.f32.mrf.mxu0
      %v8223 = vadd.f32 0.0, %v8222
      %v8224 = vpop.f32.mrf.mxu0
      %8225 = vmatprep.mubr.f32.mxu0 0.0
      %8226 = vmatmul.mubr.f32.gmra.mxu0 %v8076
      %v8227 = vpop.f32.mrf.mxu0
      %v8228 = vadd.f32 0.0, %v8227
      %v8229 = vpop.f32.mrf.mxu0
      %8230 = vmatprep.mubr.f32.mxu0 0.0
      %8231 = vmatmul.mubr.f32.gmra.mxu0 %v8079
      %v8232 = vpop.f32.mrf.mxu0
      %v8233 = vadd.f32 0.0, %v8232
      %v8234 = vpop.f32.mrf.mxu0
      %8235 = vmatprep.mubr.f32.mxu0 0.0
      %8236 = vmatmul.mubr.f32.gmra.mxu0 %v8082
      %v8237 = vpop.f32.mrf.mxu0
      %v8238 = vadd.f32 0.0, %v8237
      %v8239 = vpop.f32.mrf.mxu0
      %8240 = vmatprep.mubr.f32.mxu0 0.0
      %8241 = vmatmul.mubr.f32.gmra.mxu0 %v8085
      %v8242 = vpop.f32.mrf.mxu0
      %v8243 = vadd.f32 0.0, %v8242
      %v8244 = vpop.f32.mrf.mxu0
      %8245 = vmatprep.mubr.f32.mxu0 0.0
      %8246 = vmatmul.mubr.f32.gmra.mxu0 %v8088
      %v8247 = vpop.f32.mrf.mxu0
      %v8248 = vadd.f32 0.0, %v8247
      %v8249 = vpop.f32.mrf.mxu0
      %8250 = vmatprep.mubr.f32.mxu0 0.0
      %8251 = vmatmul.mubr.f32.gmra.mxu0 %v8091
      %v8252 = vpop.f32.mrf.mxu0
      %v8253 = vadd.f32 0.0, %v8252
      %v8254 = vpop.f32.mrf.mxu0
      %8255 = vmatprep.mubr.f32.mxu0 0.0
      %8256 = vmatmul.mubr.f32.gmra.mxu0 %v8094
      %v8257 = vpop.f32.mrf.mxu0
      %v8258 = vadd.f32 0.0, %v8257
      %v8259 = vpop.f32.mrf.mxu0
      %8260 = vmatprep.mubr.f32.mxu0 0.0
      %8261 = vmatmul.mubr.f32.gmra.mxu0 %v8097
      %v8262 = vpop.f32.mrf.mxu0
      %v8263 = vadd.f32 0.0, %v8262
      %v8264 = vpop.f32.mrf.mxu0
      %8265 = vmatprep.mubr.f32.mxu0 0.0
      %8266 = vmatmul.mubr.f32.gmra.mxu0 %v8100
      %v8267 = vpop.f32.mrf.mxu0
      %v8268 = vadd.f32 0.0, %v8267
      %v8269 = vpop.f32.mrf.mxu0
      %8270 = vmatprep.mubr.f32.mxu0 0.0
      %8271 = vmatmul.mubr.f32.gmra.mxu0 %v8103
      %v8272 = vpop.f32.mrf.mxu0
      %v8273 = vadd.f32 0.0, %v8272
      %v8274 = vpop.f32.mrf.mxu0
      %8275 = vmatprep.mubr.f32.mxu0 0.0
      %8276 = vmatmul.mubr.f32.gmra.mxu0 %v8106
      %v8277 = vpop.f32.mrf.mxu0
      %v8278 = vadd.f32 0.0, %v8277
      %v8279 = vpop.f32.mrf.mxu0
      %8280 = vmatprep.mubr.f32.mxu0 0.0
      %8281 = vmatmul.mubr.f32.gmra.mxu0 %v8109
      %v8282 = vpop.f32.mrf.mxu0
      %v8283 = vadd.f32 0.0, %v8282
      %v8284 = vpop.f32.mrf.mxu0
      %8285 = vmatprep.mubr.f32.mxu0 0.0
      %8286 = vmatmul.mubr.f32.gmra.mxu0 %v8112
      %v8287 = vpop.f32.mrf.mxu0
      %v8288 = vadd.f32 0.0, %v8287
      %v8289 = vpop.f32.mrf.mxu0
      %8290 = vmatprep.mubr.f32.mxu0 0.0
      %8291 = vmatmul.mubr.f32.gmra.mxu0 %v8115
      %v8292 = vpop.f32.mrf.mxu0
      %v8293 = vadd.f32 0.0, %v8292
      %v8294 = vpop.f32.mrf.mxu0
      %8295 = vmatprep.mubr.f32.mxu0 0.0
      %8296 = vmatmul.mubr.f32.gmra.mxu0 %v8118
      %v8297 = vpop.f32.mrf.mxu0
      %v8298 = vadd.f32 0.0, %v8297
      %v8299 = vpop.f32.mrf.mxu0
      %8300 = vmatprep.mubr.f32.mxu0 0.0
      %8301 = vmatmul.mubr.f32.gmra.mxu0 %v8121
      %v8302 = vpop.f32.mrf.mxu0
      %v8303 = vadd.f32 0.0, %v8302
      %v8304 = vpop.f32.mrf.mxu0
      %8305 = vmatprep.mubr.f32.mxu0 0.0
      %8306 = vmatmul.mubr.f32.gmra.mxu0 %v8124
      %v8307 = vpop.f32.mrf.mxu0
      %v8308 = vadd.f32 0.0, %v8307
      %v8309 = vpop.f32.mrf.mxu0
      %8310 = vmatprep.mubr.f32.mxu0 0.0
      %8311 = vmatmul.mubr.f32.gmra.mxu0 %v8127
      %v8312 = vpop.f32.mrf.mxu0
      %v8313 = vadd.f32 0.0, %v8312
      %v8314 = vpop.f32.mrf.mxu0
      %8315 = vmatprep.mubr.f32.mxu0 0.0
      %8316 = vmatmul.mubr.f32.gmra.mxu0 %v8130
      %v8317 = vpop.f32.mrf.mxu0
      %v8318 = vadd.f32 0.0, %v8317
      %v8319 = vpop.f32.mrf.mxu0
      %8320 = vmatprep.mubr.f32.mxu0 0.0
      %8321 = vmatmul.mubr.f32.gmra.mxu0 %v8133
      %v8322 = vpop.f32.mrf.mxu0
      %v8323 = vadd.f32 0.0, %v8322
      %v8324 = vpop.f32.mrf.mxu0
      %8325 = vmatprep.mubr.f32.mxu0 0.0
      %8326 = vmatmul.mubr.f32.gmra.mxu0 %v8136
      %v8327 = vpop.f32.mrf.mxu0
      %v8328 = vadd.f32 0.0, %v8327
      %v8329 = vpop.f32.mrf.mxu0
      %8330 = vmatprep.mubr.f32.mxu0 0.0
      %8331 = vmatmul.mubr.f32.gmra.mxu0 %v8139
      %v8332 = vpop.f32.mrf.mxu0
      %v8333 = vadd.f32 0.0, %v8332
      %v8334 = vpop.f32.mrf.mxu0
      %8335 = vmatprep.mubr.f32.mxu0 0.0
      %8336 = vmatmul.mubr.f32.gmra.mxu0 %v8142
      %v8337 = vpop.f32.mrf.mxu0
      %v8338 = vadd.f32 0.0, %v8337
      %v8339 = vpop.f32.mrf.mxu0
      %8340 = vmatprep.mubr.f32.mxu0 0.0
      %8341 = vmatmul.mubr.f32.gmra.mxu0 %v8145
      %v8342 = vpop.f32.mrf.mxu0
      %v8343 = vadd.f32 0.0, %v8342
      %v8344 = vpop.f32.mrf.mxu0
      %8345 = vmatprep.mubr.f32.mxu0 0.0
      %8346 = vmatmul.mubr.f32.gmra.mxu0 %v8148
      %v8347 = vpop.f32.mrf.mxu0
      %v8348 = vadd.f32 0.0, %v8347
      %v8349 = vpop.f32.mrf.mxu0
      %8350 = vmatprep.mubr.f32.mxu0 0.0
      %8351 = vmatmul.mubr.f32.gmra.mxu0 %v8151
      %v8352 = vpop.f32.mrf.mxu0
      %v8353 = vadd.f32 0.0, %v8352
      %v8354 = vpop.f32.mrf.mxu0
      %8355 = vmatprep.mubr.f32.mxu0 0.0
      %8356 = vmatmul.mubr.f32.gmra.mxu0 %v8154
      %v8357 = vpop.f32.mrf.mxu0
      %v8358 = vadd.f32 0.0, %v8357
      %v8359 = vpop.f32.mrf.mxu0
      %8360 = vdwg.mxu0
      %v8362 = vsel %vm4656, %v8243, 0
      %v8365 = vsel %vm4656, %v8248, 0
      %v8368 = vsel %vm4656, %v8253, 0
      %v8371 = vsel %vm4656, %v8258, 0
      %8373 = vmatprep.subr.mxu0 0.0
      %8374 = vmatpush1.msra.mxu0 0.0
      %8375 = vmatprep.subr.mxu0 0.0
      %8376 = vmatpush1.msra.mxu0 0.0
      %8377 = vmatprep.subr.mxu0 0.0
      %8378 = vmatpush1.msra.mxu0 0.0
      %8379 = vmatprep.subr.mxu0 0.0
      %8380 = vmatpush1.msra.mxu0 0.0
      %8381 = vmatprep.subr.mxu0 0.0
      %8382 = vmatpush1.msra.mxu0 0.0
      %8383 = vmatprep.subr.mxu0 0.0
      %8384 = vmatpush1.msra.mxu0 0.0
      %8385 = vmatprep.subr.mxu0 0.0
      %8386 = vmatpush1.msra.mxu0 0.0
      %8387 = vmatprep.subr.mxu0 0.0
      %8388 = vmatpush1.msra.mxu0 0.0
      %8389 = vmatprep.subr.mxu0 0.0
      %8390 = vmatpush1.msra.mxu0 0.0
      %8391 = vmatprep.subr.mxu0 0.0
      %8392 = vmatpush1.msra.mxu0 0.0
      %8393 = vmatprep.subr.mxu0 0.0
      %8394 = vmatpush1.msra.mxu0 0.0
      %8395 = vmatprep.subr.mxu0 0.0
      %8396 = vmatpush1.msra.mxu0 0.0
      %8397 = vmatprep.subr.mxu0 0.0
      %8398 = vmatpush1.msra.mxu0 %v790
      %8399 = vmatprep.subr.mxu0 0.0
      %8400 = vmatpush1.msra.mxu0 %v789
      %8401 = vmatprep.subr.mxu0 0.0
      %8402 = vmatpush1.msra.mxu0 %v788
      %8403 = vmatprep.subr.mxu0 0.0
      %8404 = vmatpush1.msra.mxu0 %v787
      %8405 = vmatprep.subr.mxu0 0.0
      %8406 = vmatpush2.msra.mxu0 0.0
      %8407 = vmatprep.subr.mxu0 0.0
      %8408 = vmatpush2.msra.mxu0 0.0
      %8409 = vmatprep.subr.mxu0 0.0
      %8410 = vmatpush2.msra.mxu0 0.0
      %8411 = vmatprep.subr.mxu0 0.0
      %8412 = vmatpush2.msra.mxu0 0.0
      %8413 = vmatprep.subr.mxu0 0.0
      %8414 = vmatpush2.msra.mxu0 0.0
      %8415 = vmatprep.subr.mxu0 0.0
      %8416 = vmatpush2.msra.mxu0 0.0
      %8417 = vmatprep.subr.mxu0 0.0
      %8418 = vmatpush2.msra.mxu0 0.0
      %8419 = vmatprep.subr.mxu0 0.0
      %8420 = vmatpush2.msra.mxu0 0.0
      %8421 = vmatprep.subr.mxu0 0.0
      %8422 = vmatpush2.msra.mxu0 0.0
      %8423 = vmatprep.subr.mxu0 0.0
      %8424 = vmatpush2.msra.mxu0 0.0
      %8425 = vmatprep.subr.mxu0 0.0
      %8426 = vmatpush2.msra.mxu0 0.0
      %8427 = vmatprep.subr.mxu0 0.0
      %8428 = vmatpush2.msra.mxu0 0.0
      %8429 = vmatprep.subr.mxu0 0.0
      %8430 = vmatpush2.msra.mxu0 0.0
      %8431 = vmatprep.subr.mxu0 0.0
      %8432 = vmatpush2.msra.mxu0 0.0
      %8433 = vmatprep.subr.mxu0 0.0
      %8434 = vmatpush2.msra.mxu0 0.0
      %8435 = vmatprep.subr.mxu0 0.0
      %8436 = vmatpush2.msra.mxu0 0.0
      %8437 = vmatprep.mubr.f32.mxu0 0.0
      %8438 = vmatmul.mubr.f32.gmra.mxu0 %v8362
      %v8439 = vpop.f32.mrf.mxu0
      %v8440 = vadd.f32 0.0, %v8439
      %v8441 = vpop.f32.mrf.mxu0
      %8442 = vmatprep.mubr.f32.mxu0 0.0
      %8443 = vmatmul.mubr.f32.gmra.mxu0 %v8365
      %v8444 = vpop.f32.mrf.mxu0
      %v8445 = vadd.f32 0.0, %v8444
      %v8446 = vpop.f32.mrf.mxu0
      %8447 = vmatprep.mubr.f32.mxu0 0.0
      %8448 = vmatmul.mubr.f32.gmra.mxu0 %v8368
      %v8449 = vpop.f32.mrf.mxu0
      %v8450 = vadd.f32 0.0, %v8449
      %v8451 = vpop.f32.mrf.mxu0
      %8452 = vmatprep.mubr.f32.mxu0 0.0
      %8453 = vmatmul.mubr.f32.gmra.mxu0 %v8371
      %v8454 = vpop.f32.mrf.mxu0
      %v8455 = vadd.f32 0.0, %v8454
      %v8456 = vpop.f32.mrf.mxu0
      %8457 = vdwg.mxu0
      %v8459 = vsel %vm4656, %v8223, 0
      %v8462 = vsel %vm4656, %v8228, 0
      %v8465 = vsel %vm4656, %v8233, 0
      %v8468 = vsel %vm4656, %v8238, 0
      %8470 = vmatprep.subr.mxu0 0.0
      %8471 = vmatpush1.msra.mxu0 0.0
      %8472 = vmatprep.subr.mxu0 0.0
      %8473 = vmatpush1.msra.mxu0 0.0
      %8474 = vmatprep.subr.mxu0 0.0
      %8475 = vmatpush1.msra.mxu0 0.0
      %8476 = vmatprep.subr.mxu0 0.0
      %8477 = vmatpush1.msra.mxu0 0.0
      %8478 = vmatprep.subr.mxu0 0.0
      %8479 = vmatpush1.msra.mxu0 0.0
      %8480 = vmatprep.subr.mxu0 0.0
      %8481 = vmatpush1.msra.mxu0 0.0
      %8482 = vmatprep.subr.mxu0 0.0
      %8483 = vmatpush1.msra.mxu0 0.0
      %8484 = vmatprep.subr.mxu0 0.0
      %8485 = vmatpush1.msra.mxu0 0.0
      %8486 = vmatprep.subr.mxu0 0.0
      %8487 = vmatpush1.msra.mxu0 0.0
      %8488 = vmatprep.subr.mxu0 0.0
      %8489 = vmatpush1.msra.mxu0 0.0
      %8490 = vmatprep.subr.mxu0 0.0
      %8491 = vmatpush1.msra.mxu0 0.0
      %8492 = vmatprep.subr.mxu0 0.0
      %8493 = vmatpush1.msra.mxu0 0.0
      %8494 = vmatprep.subr.mxu0 0.0
      %8495 = vmatpush1.msra.mxu0 %v741
      %8496 = vmatprep.subr.mxu0 0.0
      %8497 = vmatpush1.msra.mxu0 %v740
      %8498 = vmatprep.subr.mxu0 0.0
      %8499 = vmatpush1.msra.mxu0 %v739
      %8500 = vmatprep.subr.mxu0 0.0
      %8501 = vmatpush1.msra.mxu0 %v738
      %8502 = vmatprep.subr.mxu0 0.0
      %8503 = vmatpush2.msra.mxu0 0.0
      %8504 = vmatprep.subr.mxu0 0.0
      %8505 = vmatpush2.msra.mxu0 0.0
      %8506 = vmatprep.subr.mxu0 0.0
      %8507 = vmatpush2.msra.mxu0 0.0
      %8508 = vmatprep.subr.mxu0 0.0
      %8509 = vmatpush2.msra.mxu0 0.0
      %8510 = vmatprep.subr.mxu0 0.0
      %8511 = vmatpush2.msra.mxu0 0.0
      %8512 = vmatprep.subr.mxu0 0.0
      %8513 = vmatpush2.msra.mxu0 0.0
      %8514 = vmatprep.subr.mxu0 0.0
      %8515 = vmatpush2.msra.mxu0 0.0
      %8516 = vmatprep.subr.mxu0 0.0
      %8517 = vmatpush2.msra.mxu0 0.0
      %8518 = vmatprep.subr.mxu0 0.0
      %8519 = vmatpush2.msra.mxu0 0.0
      %8520 = vmatprep.subr.mxu0 0.0
      %8521 = vmatpush2.msra.mxu0 0.0
      %8522 = vmatprep.subr.mxu0 0.0
      %8523 = vmatpush2.msra.mxu0 0.0
      %8524 = vmatprep.subr.mxu0 0.0
      %8525 = vmatpush2.msra.mxu0 0.0
      %8526 = vmatprep.subr.mxu0 0.0
      %8527 = vmatpush2.msra.mxu0 0.0
      %8528 = vmatprep.subr.mxu0 0.0
      %8529 = vmatpush2.msra.mxu0 0.0
      %8530 = vmatprep.subr.mxu0 0.0
      %8531 = vmatpush2.msra.mxu0 0.0
      %8532 = vmatprep.subr.mxu0 0.0
      %8533 = vmatpush2.msra.mxu0 0.0
      %8534 = vmatprep.mubr.f32.mxu0 0.0
      %8535 = vmatmul.mubr.f32.gmra.mxu0 %v8459
      %v8536 = vpop.f32.mrf.mxu0
      %v8537 = vadd.f32 %v8440, %v8536
      %v8538 = vpop.f32.mrf.mxu0
      %8539 = vmatprep.mubr.f32.mxu0 0.0
      %8540 = vmatmul.mubr.f32.gmra.mxu0 %v8462
      %v8541 = vpop.f32.mrf.mxu0
      %v8542 = vadd.f32 %v8445, %v8541
      %v8543 = vpop.f32.mrf.mxu0
      %8544 = vmatprep.mubr.f32.mxu0 0.0
      %8545 = vmatmul.mubr.f32.gmra.mxu0 %v8465
      %v8546 = vpop.f32.mrf.mxu0
      %v8547 = vadd.f32 %v8450, %v8546
      %v8548 = vpop.f32.mrf.mxu0
      %8549 = vmatprep.mubr.f32.mxu0 0.0
      %8550 = vmatmul.mubr.f32.gmra.mxu0 %v8468
      %v8551 = vpop.f32.mrf.mxu0
      %v8552 = vadd.f32 %v8455, %v8551
      %v8553 = vpop.f32.mrf.mxu0
      %8554 = vdwg.mxu0
      %v8556 = vsel %vm4656, %v8263, 0
      %v8559 = vsel %vm4656, %v8268, 0
      %v8562 = vsel %vm4656, %v8273, 0
      %v8565 = vsel %vm4656, %v8278, 0
      %8567 = vmatprep.subr.mxu0 0.0
      %8568 = vmatpush1.msra.mxu0 0.0
      %8569 = vmatprep.subr.mxu0 0.0
      %8570 = vmatpush1.msra.mxu0 0.0
      %8571 = vmatprep.subr.mxu0 0.0
      %8572 = vmatpush1.msra.mxu0 0.0
      %8573 = vmatprep.subr.mxu0 0.0
      %8574 = vmatpush1.msra.mxu0 0.0
      %8575 = vmatprep.subr.mxu0 0.0
      %8576 = vmatpush1.msra.mxu0 0.0
      %8577 = vmatprep.subr.mxu0 0.0
      %8578 = vmatpush1.msra.mxu0 0.0
      %8579 = vmatprep.subr.mxu0 0.0
      %8580 = vmatpush1.msra.mxu0 0.0
      %8581 = vmatprep.subr.mxu0 0.0
      %8582 = vmatpush1.msra.mxu0 0.0
      %8583 = vmatprep.subr.mxu0 0.0
      %8584 = vmatpush1.msra.mxu0 0.0
      %8585 = vmatprep.subr.mxu0 0.0
      %8586 = vmatpush1.msra.mxu0 0.0
      %8587 = vmatprep.subr.mxu0 0.0
      %8588 = vmatpush1.msra.mxu0 0.0
      %8589 = vmatprep.subr.mxu0 0.0
      %8590 = vmatpush1.msra.mxu0 0.0
      %8591 = vmatprep.subr.mxu0 0.0
      %8592 = vmatpush1.msra.mxu0 %v839
      %8593 = vmatprep.subr.mxu0 0.0
      %8594 = vmatpush1.msra.mxu0 %v838
      %8595 = vmatprep.subr.mxu0 0.0
      %8596 = vmatpush1.msra.mxu0 %v837
      %8597 = vmatprep.subr.mxu0 0.0
      %8598 = vmatpush1.msra.mxu0 %v836
      %8599 = vmatprep.subr.mxu0 0.0
      %8600 = vmatpush2.msra.mxu0 0.0
      %8601 = vmatprep.subr.mxu0 0.0
      %8602 = vmatpush2.msra.mxu0 0.0
      %8603 = vmatprep.subr.mxu0 0.0
      %8604 = vmatpush2.msra.mxu0 0.0
      %8605 = vmatprep.subr.mxu0 0.0
      %8606 = vmatpush2.msra.mxu0 0.0
      %8607 = vmatprep.subr.mxu0 0.0
      %8608 = vmatpush2.msra.mxu0 0.0
      %8609 = vmatprep.subr.mxu0 0.0
      %8610 = vmatpush2.msra.mxu0 0.0
      %8611 = vmatprep.subr.mxu0 0.0
      %8612 = vmatpush2.msra.mxu0 0.0
      %8613 = vmatprep.subr.mxu0 0.0
      %8614 = vmatpush2.msra.mxu0 0.0
      %8615 = vmatprep.subr.mxu0 0.0
      %8616 = vmatpush2.msra.mxu0 0.0
      %8617 = vmatprep.subr.mxu0 0.0
      %8618 = vmatpush2.msra.mxu0 0.0
      %8619 = vmatprep.subr.mxu0 0.0
      %8620 = vmatpush2.msra.mxu0 0.0
      %8621 = vmatprep.subr.mxu0 0.0
      %8622 = vmatpush2.msra.mxu0 0.0
      %8623 = vmatprep.subr.mxu0 0.0
      %8624 = vmatpush2.msra.mxu0 0.0
      %8625 = vmatprep.subr.mxu0 0.0
      %8626 = vmatpush2.msra.mxu0 0.0
      %8627 = vmatprep.subr.mxu0 0.0
      %8628 = vmatpush2.msra.mxu0 0.0
      %8629 = vmatprep.subr.mxu0 0.0
      %8630 = vmatpush2.msra.mxu0 0.0
      %8631 = vmatprep.mubr.f32.mxu0 0.0
      %8632 = vmatmul.mubr.f32.gmra.mxu0 %v8556
      %v8633 = vpop.f32.mrf.mxu0
      %v8634 = vadd.f32 0.0, %v8633
      %v8635 = vpop.f32.mrf.mxu0
      %8636 = vmatprep.mubr.f32.mxu0 0.0
      %8637 = vmatmul.mubr.f32.gmra.mxu0 %v8559
      %v8638 = vpop.f32.mrf.mxu0
      %v8639 = vadd.f32 0.0, %v8638
      %v8640 = vpop.f32.mrf.mxu0
      %8641 = vmatprep.mubr.f32.mxu0 0.0
      %8642 = vmatmul.mubr.f32.gmra.mxu0 %v8562
      %v8643 = vpop.f32.mrf.mxu0
      %v8644 = vadd.f32 0.0, %v8643
      %v8645 = vpop.f32.mrf.mxu0
      %8646 = vmatprep.mubr.f32.mxu0 0.0
      %8647 = vmatmul.mubr.f32.gmra.mxu0 %v8565
      %v8648 = vpop.f32.mrf.mxu0
      %v8649 = vadd.f32 0.0, %v8648
      %v8650 = vpop.f32.mrf.mxu0
      %8651 = vdwg.mxu0
      %v8652 = vadd.f32 %v8537, %v8634
      %v8653 = vadd.f32 %v8542, %v8639
      %v8654 = vadd.f32 %v8547, %v8644
      %v8655 = vadd.f32 %v8552, %v8649
      %v8657 = vsel %vm4656, %v8283, 0
      %v8660 = vsel %vm4656, %v8288, 0
      %v8663 = vsel %vm4656, %v8293, 0
      %v8666 = vsel %vm4656, %v8298, 0
      %8668 = vmatprep.subr.mxu0 0.0
      %8669 = vmatpush1.msra.mxu0 0.0
      %8670 = vmatprep.subr.mxu0 0.0
      %8671 = vmatpush1.msra.mxu0 0.0
      %8672 = vmatprep.subr.mxu0 0.0
      %8673 = vmatpush1.msra.mxu0 0.0
      %8674 = vmatprep.subr.mxu0 0.0
      %8675 = vmatpush1.msra.mxu0 0.0
      %8676 = vmatprep.subr.mxu0 0.0
      %8677 = vmatpush1.msra.mxu0 0.0
      %8678 = vmatprep.subr.mxu0 0.0
      %8679 = vmatpush1.msra.mxu0 0.0
      %8680 = vmatprep.subr.mxu0 0.0
      %8681 = vmatpush1.msra.mxu0 0.0
      %8682 = vmatprep.subr.mxu0 0.0
      %8683 = vmatpush1.msra.mxu0 0.0
      %8684 = vmatprep.subr.mxu0 0.0
      %8685 = vmatpush1.msra.mxu0 0.0
      %8686 = vmatprep.subr.mxu0 0.0
      %8687 = vmatpush1.msra.mxu0 0.0
      %8688 = vmatprep.subr.mxu0 0.0
      %8689 = vmatpush1.msra.mxu0 0.0
      %8690 = vmatprep.subr.mxu0 0.0
      %8691 = vmatpush1.msra.mxu0 0.0
      %8692 = vmatprep.subr.mxu0 0.0
      %8693 = vmatpush1.msra.mxu0 %v887
      %8694 = vmatprep.subr.mxu0 0.0
      %8695 = vmatpush1.msra.mxu0 %v886
      %8696 = vmatprep.subr.mxu0 0.0
      %8697 = vmatpush1.msra.mxu0 %v885
      %8698 = vmatprep.subr.mxu0 0.0
      %8699 = vmatpush1.msra.mxu0 %v884
      %8700 = vmatprep.subr.mxu0 0.0
      %8701 = vmatpush2.msra.mxu0 0.0
      %8702 = vmatprep.subr.mxu0 0.0
      %8703 = vmatpush2.msra.mxu0 0.0
      %8704 = vmatprep.subr.mxu0 0.0
      %8705 = vmatpush2.msra.mxu0 0.0
      %8706 = vmatprep.subr.mxu0 0.0
      %8707 = vmatpush2.msra.mxu0 0.0
      %8708 = vmatprep.subr.mxu0 0.0
      %8709 = vmatpush2.msra.mxu0 0.0
      %8710 = vmatprep.subr.mxu0 0.0
      %8711 = vmatpush2.msra.mxu0 0.0
      %8712 = vmatprep.subr.mxu0 0.0
      %8713 = vmatpush2.msra.mxu0 0.0
      %8714 = vmatprep.subr.mxu0 0.0
      %8715 = vmatpush2.msra.mxu0 0.0
      %8716 = vmatprep.subr.mxu0 0.0
      %8717 = vmatpush2.msra.mxu0 0.0
      %8718 = vmatprep.subr.mxu0 0.0
      %8719 = vmatpush2.msra.mxu0 0.0
      %8720 = vmatprep.subr.mxu0 0.0
      %8721 = vmatpush2.msra.mxu0 0.0
      %8722 = vmatprep.subr.mxu0 0.0
      %8723 = vmatpush2.msra.mxu0 0.0
      %8724 = vmatprep.subr.mxu0 0.0
      %8725 = vmatpush2.msra.mxu0 0.0
      %8726 = vmatprep.subr.mxu0 0.0
      %8727 = vmatpush2.msra.mxu0 0.0
      %8728 = vmatprep.subr.mxu0 0.0
      %8729 = vmatpush2.msra.mxu0 0.0
      %8730 = vmatprep.subr.mxu0 0.0
      %8731 = vmatpush2.msra.mxu0 0.0
      %8732 = vmatprep.mubr.f32.mxu0 0.0
      %8733 = vmatmul.mubr.f32.gmra.mxu0 %v8657
      %v8734 = vpop.f32.mrf.mxu0
      %v8735 = vadd.f32 0.0, %v8734
      %v8736 = vpop.f32.mrf.mxu0
      %8737 = vmatprep.mubr.f32.mxu0 0.0
      %8738 = vmatmul.mubr.f32.gmra.mxu0 %v8660
      %v8739 = vpop.f32.mrf.mxu0
      %v8740 = vadd.f32 0.0, %v8739
      %v8741 = vpop.f32.mrf.mxu0
      %8742 = vmatprep.mubr.f32.mxu0 0.0
      %8743 = vmatmul.mubr.f32.gmra.mxu0 %v8663
      %v8744 = vpop.f32.mrf.mxu0
      %v8745 = vadd.f32 0.0, %v8744
      %v8746 = vpop.f32.mrf.mxu0
      %8747 = vmatprep.mubr.f32.mxu0 0.0
      %8748 = vmatmul.mubr.f32.gmra.mxu0 %v8666
      %v8749 = vpop.f32.mrf.mxu0
      %v8750 = vadd.f32 0.0, %v8749
      %v8751 = vpop.f32.mrf.mxu0
      %8752 = vdwg.mxu0
      %v8753 = vadd.f32 %v8652, %v8735
      %v8754 = vadd.f32 %v8653, %v8740
      %v8755 = vadd.f32 %v8654, %v8745
      %v8756 = vadd.f32 %v8655, %v8750
      %v8758 = vsel %vm4656, %v8303, 0
      %v8761 = vsel %vm4656, %v8308, 0
      %v8764 = vsel %vm4656, %v8313, 0
      %v8767 = vsel %vm4656, %v8318, 0
      %8769 = vmatprep.subr.mxu0 0.0
      %8770 = vmatpush1.msra.mxu0 0.0
      %8771 = vmatprep.subr.mxu0 0.0
      %8772 = vmatpush1.msra.mxu0 0.0
      %8773 = vmatprep.subr.mxu0 0.0
      %8774 = vmatpush1.msra.mxu0 0.0
      %8775 = vmatprep.subr.mxu0 0.0
      %8776 = vmatpush1.msra.mxu0 0.0
      %8777 = vmatprep.subr.mxu0 0.0
      %8778 = vmatpush1.msra.mxu0 0.0
      %8779 = vmatprep.subr.mxu0 0.0
      %8780 = vmatpush1.msra.mxu0 0.0
      %8781 = vmatprep.subr.mxu0 0.0
      %8782 = vmatpush1.msra.mxu0 0.0
      %8783 = vmatprep.subr.mxu0 0.0
      %8784 = vmatpush1.msra.mxu0 0.0
      %8785 = vmatprep.subr.mxu0 0.0
      %8786 = vmatpush1.msra.mxu0 0.0
      %8787 = vmatprep.subr.mxu0 0.0
      %8788 = vmatpush1.msra.mxu0 0.0
      %8789 = vmatprep.subr.mxu0 0.0
      %8790 = vmatpush1.msra.mxu0 0.0
      %8791 = vmatprep.subr.mxu0 0.0
      %8792 = vmatpush1.msra.mxu0 0.0
      %8793 = vmatprep.subr.mxu0 0.0
      %8794 = vmatpush1.msra.mxu0 %v936
      %8795 = vmatprep.subr.mxu0 0.0
      %8796 = vmatpush1.msra.mxu0 %v935
      %8797 = vmatprep.subr.mxu0 0.0
      %8798 = vmatpush1.msra.mxu0 %v934
      %8799 = vmatprep.subr.mxu0 0.0
      %8800 = vmatpush1.msra.mxu0 %v933
      %8801 = vmatprep.subr.mxu0 0.0
      %8802 = vmatpush2.msra.mxu0 0.0
      %8803 = vmatprep.subr.mxu0 0.0
      %8804 = vmatpush2.msra.mxu0 0.0
      %8805 = vmatprep.subr.mxu0 0.0
      %8806 = vmatpush2.msra.mxu0 0.0
      %8807 = vmatprep.subr.mxu0 0.0
      %8808 = vmatpush2.msra.mxu0 0.0
      %8809 = vmatprep.subr.mxu0 0.0
      %8810 = vmatpush2.msra.mxu0 0.0
      %8811 = vmatprep.subr.mxu0 0.0
      %8812 = vmatpush2.msra.mxu0 0.0
      %8813 = vmatprep.subr.mxu0 0.0
      %8814 = vmatpush2.msra.mxu0 0.0
      %8815 = vmatprep.subr.mxu0 0.0
      %8816 = vmatpush2.msra.mxu0 0.0
      %8817 = vmatprep.subr.mxu0 0.0
      %8818 = vmatpush2.msra.mxu0 0.0
      %8819 = vmatprep.subr.mxu0 0.0
      %8820 = vmatpush2.msra.mxu0 0.0
      %8821 = vmatprep.subr.mxu0 0.0
      %8822 = vmatpush2.msra.mxu0 0.0
      %8823 = vmatprep.subr.mxu0 0.0
      %8824 = vmatpush2.msra.mxu0 0.0
      %8825 = vmatprep.subr.mxu0 0.0
      %8826 = vmatpush2.msra.mxu0 0.0
      %8827 = vmatprep.subr.mxu0 0.0
      %8828 = vmatpush2.msra.mxu0 0.0
      %8829 = vmatprep.subr.mxu0 0.0
      %8830 = vmatpush2.msra.mxu0 0.0
      %8831 = vmatprep.subr.mxu0 0.0
      %8832 = vmatpush2.msra.mxu0 0.0
      %8833 = vmatprep.mubr.f32.mxu0 0.0
      %8834 = vmatmul.mubr.f32.gmra.mxu0 %v8758
      %v8835 = vpop.f32.mrf.mxu0
      %v8836 = vadd.f32 0.0, %v8835
      %v8837 = vpop.f32.mrf.mxu0
      %8838 = vmatprep.mubr.f32.mxu0 0.0
      %8839 = vmatmul.mubr.f32.gmra.mxu0 %v8761
      %v8840 = vpop.f32.mrf.mxu0
      %v8841 = vadd.f32 0.0, %v8840
      %v8842 = vpop.f32.mrf.mxu0
      %8843 = vmatprep.mubr.f32.mxu0 0.0
      %8844 = vmatmul.mubr.f32.gmra.mxu0 %v8764
      %v8845 = vpop.f32.mrf.mxu0
      %v8846 = vadd.f32 0.0, %v8845
      %v8847 = vpop.f32.mrf.mxu0
      %8848 = vmatprep.mubr.f32.mxu0 0.0
      %8849 = vmatmul.mubr.f32.gmra.mxu0 %v8767
      %v8850 = vpop.f32.mrf.mxu0
      %v8851 = vadd.f32 0.0, %v8850
      %v8852 = vpop.f32.mrf.mxu0
      %8853 = vdwg.mxu0
      %v8854 = vadd.f32 %v8753, %v8836
      %v8855 = vadd.f32 %v8754, %v8841
      %v8856 = vadd.f32 %v8755, %v8846
      %v8857 = vadd.f32 %v8756, %v8851
      %v8859 = vsel %vm4656, %v8323, 0
      %v8862 = vsel %vm4656, %v8328, 0
      %v8865 = vsel %vm4656, %v8333, 0
      %v8868 = vsel %vm4656, %v8338, 0
      %8870 = vmatprep.subr.mxu0 0.0
      %8871 = vmatpush1.msra.mxu0 0.0
      %8872 = vmatprep.subr.mxu0 0.0
      %8873 = vmatpush1.msra.mxu0 0.0
      %8874 = vmatprep.subr.mxu0 0.0
      %8875 = vmatpush1.msra.mxu0 0.0
      %8876 = vmatprep.subr.mxu0 0.0
      %8877 = vmatpush1.msra.mxu0 0.0
      %8878 = vmatprep.subr.mxu0 0.0
      %8879 = vmatpush1.msra.mxu0 0.0
      %8880 = vmatprep.subr.mxu0 0.0
      %8881 = vmatpush1.msra.mxu0 0.0
      %8882 = vmatprep.subr.mxu0 0.0
      %8883 = vmatpush1.msra.mxu0 0.0
      %8884 = vmatprep.subr.mxu0 0.0
      %8885 = vmatpush1.msra.mxu0 0.0
      %8886 = vmatprep.subr.mxu0 0.0
      %8887 = vmatpush1.msra.mxu0 0.0
      %8888 = vmatprep.subr.mxu0 0.0
      %8889 = vmatpush1.msra.mxu0 0.0
      %8890 = vmatprep.subr.mxu0 0.0
      %8891 = vmatpush1.msra.mxu0 0.0
      %8892 = vmatprep.subr.mxu0 0.0
      %8893 = vmatpush1.msra.mxu0 0.0
      %8894 = vmatprep.subr.mxu0 0.0
      %8895 = vmatpush1.msra.mxu0 %v985
      %8896 = vmatprep.subr.mxu0 0.0
      %8897 = vmatpush1.msra.mxu0 %v984
      %8898 = vmatprep.subr.mxu0 0.0
      %8899 = vmatpush1.msra.mxu0 %v983
      %8900 = vmatprep.subr.mxu0 0.0
      %8901 = vmatpush1.msra.mxu0 %v982
      %8902 = vmatprep.subr.mxu0 0.0
      %8903 = vmatpush2.msra.mxu0 0.0
      %8904 = vmatprep.subr.mxu0 0.0
      %8905 = vmatpush2.msra.mxu0 0.0
      %8906 = vmatprep.subr.mxu0 0.0
      %8907 = vmatpush2.msra.mxu0 0.0
      %8908 = vmatprep.subr.mxu0 0.0
      %8909 = vmatpush2.msra.mxu0 0.0
      %8910 = vmatprep.subr.mxu0 0.0
      %8911 = vmatpush2.msra.mxu0 0.0
      %8912 = vmatprep.subr.mxu0 0.0
      %8913 = vmatpush2.msra.mxu0 0.0
      %8914 = vmatprep.subr.mxu0 0.0
      %8915 = vmatpush2.msra.mxu0 0.0
      %8916 = vmatprep.subr.mxu0 0.0
      %8917 = vmatpush2.msra.mxu0 0.0
      %8918 = vmatprep.subr.mxu0 0.0
      %8919 = vmatpush2.msra.mxu0 0.0
      %8920 = vmatprep.subr.mxu0 0.0
      %8921 = vmatpush2.msra.mxu0 0.0
      %8922 = vmatprep.subr.mxu0 0.0
      %8923 = vmatpush2.msra.mxu0 0.0
      %8924 = vmatprep.subr.mxu0 0.0
      %8925 = vmatpush2.msra.mxu0 0.0
      %8926 = vmatprep.subr.mxu0 0.0
      %8927 = vmatpush2.msra.mxu0 0.0
      %8928 = vmatprep.subr.mxu0 0.0
      %8929 = vmatpush2.msra.mxu0 0.0
      %8930 = vmatprep.subr.mxu0 0.0
      %8931 = vmatpush2.msra.mxu0 0.0
      %8932 = vmatprep.subr.mxu0 0.0
      %8933 = vmatpush2.msra.mxu0 0.0
      %8934 = vmatprep.mubr.f32.mxu0 0.0
      %8935 = vmatmul.mubr.f32.gmra.mxu0 %v8859
      %v8936 = vpop.f32.mrf.mxu0
      %v8937 = vadd.f32 0.0, %v8936
      %v8938 = vpop.f32.mrf.mxu0
      %8939 = vmatprep.mubr.f32.mxu0 0.0
      %8940 = vmatmul.mubr.f32.gmra.mxu0 %v8862
      %v8941 = vpop.f32.mrf.mxu0
      %v8942 = vadd.f32 0.0, %v8941
      %v8943 = vpop.f32.mrf.mxu0
      %8944 = vmatprep.mubr.f32.mxu0 0.0
      %8945 = vmatmul.mubr.f32.gmra.mxu0 %v8865
      %v8946 = vpop.f32.mrf.mxu0
      %v8947 = vadd.f32 0.0, %v8946
      %v8948 = vpop.f32.mrf.mxu0
      %8949 = vmatprep.mubr.f32.mxu0 0.0
      %8950 = vmatmul.mubr.f32.gmra.mxu0 %v8868
      %v8951 = vpop.f32.mrf.mxu0
      %v8952 = vadd.f32 0.0, %v8951
      %v8953 = vpop.f32.mrf.mxu0
      %8954 = vdwg.mxu0
      %v8955 = vadd.f32 %v8854, %v8937
      %v8956 = vadd.f32 %v8855, %v8942
      %v8957 = vadd.f32 %v8856, %v8947
      %v8958 = vadd.f32 %v8857, %v8952
      %v8960 = vsel %vm4656, %v8343, 0
      %v8963 = vsel %vm4656, %v8348, 0
      %v8966 = vsel %vm4656, %v8353, 0
      %v8969 = vsel %vm4656, %v8358, 0
      %8971 = vmatprep.subr.mxu0 0.0
      %8972 = vmatpush1.msra.mxu0 0.0
      %8973 = vmatprep.subr.mxu0 0.0
      %8974 = vmatpush1.msra.mxu0 0.0
      %8975 = vmatprep.subr.mxu0 0.0
      %8976 = vmatpush1.msra.mxu0 0.0
      %8977 = vmatprep.subr.mxu0 0.0
      %8978 = vmatpush1.msra.mxu0 0.0
      %8979 = vmatprep.subr.mxu0 0.0
      %8980 = vmatpush1.msra.mxu0 0.0
      %8981 = vmatprep.subr.mxu0 0.0
      %8982 = vmatpush1.msra.mxu0 0.0
      %8983 = vmatprep.subr.mxu0 0.0
      %8984 = vmatpush1.msra.mxu0 0.0
      %8985 = vmatprep.subr.mxu0 0.0
      %8986 = vmatpush1.msra.mxu0 0.0
      %8987 = vmatprep.subr.mxu0 0.0
      %8988 = vmatpush1.msra.mxu0 0.0
      %8989 = vmatprep.subr.mxu0 0.0
      %8990 = vmatpush1.msra.mxu0 0.0
      %8991 = vmatprep.subr.mxu0 0.0
      %8992 = vmatpush1.msra.mxu0 0.0
      %8993 = vmatprep.subr.mxu0 0.0
      %8994 = vmatpush1.msra.mxu0 0.0
      %8995 = vmatprep.subr.mxu0 0.0
      %8996 = vmatpush1.msra.mxu0 %v1034
      %8997 = vmatprep.subr.mxu0 0.0
      %8998 = vmatpush1.msra.mxu0 %v1033
      %8999 = vmatprep.subr.mxu0 0.0
      %9000 = vmatpush1.msra.mxu0 %v1032
      %9001 = vmatprep.subr.mxu0 0.0
      %9002 = vmatpush1.msra.mxu0 %v1031
      %9003 = vmatprep.subr.mxu0 0.0
      %9004 = vmatpush2.msra.mxu0 0.0
      %9005 = vmatprep.subr.mxu0 0.0
      %9006 = vmatpush2.msra.mxu0 0.0
      %9007 = vmatprep.subr.mxu0 0.0
      %9008 = vmatpush2.msra.mxu0 0.0
      %9009 = vmatprep.subr.mxu0 0.0
      %9010 = vmatpush2.msra.mxu0 0.0
      %9011 = vmatprep.subr.mxu0 0.0
      %9012 = vmatpush2.msra.mxu0 0.0
      %9013 = vmatprep.subr.mxu0 0.0
      %9014 = vmatpush2.msra.mxu0 0.0
      %9015 = vmatprep.subr.mxu0 0.0
      %9016 = vmatpush2.msra.mxu0 0.0
      %9017 = vmatprep.subr.mxu0 0.0
      %9018 = vmatpush2.msra.mxu0 0.0
      %9019 = vmatprep.subr.mxu0 0.0
      %9020 = vmatpush2.msra.mxu0 0.0
      %9021 = vmatprep.subr.mxu0 0.0
      %9022 = vmatpush2.msra.mxu0 0.0
      %9023 = vmatprep.subr.mxu0 0.0
      %9024 = vmatpush2.msra.mxu0 0.0
      %9025 = vmatprep.subr.mxu0 0.0
      %9026 = vmatpush2.msra.mxu0 0.0
      %9027 = vmatprep.subr.mxu0 0.0
      %9028 = vmatpush2.msra.mxu0 0.0
      %9029 = vmatprep.subr.mxu0 0.0
      %9030 = vmatpush2.msra.mxu0 0.0
      %9031 = vmatprep.subr.mxu0 0.0
      %9032 = vmatpush2.msra.mxu0 0.0
      %9033 = vmatprep.subr.mxu0 0.0
      %9034 = vmatpush2.msra.mxu0 0.0
      %9035 = vmatprep.mubr.f32.mxu0 0.0
      %9036 = vmatmul.mubr.f32.gmra.mxu0 %v8960
      %v9037 = vpop.f32.mrf.mxu0
      %v9038 = vadd.f32 0.0, %v9037
      %v9039 = vpop.f32.mrf.mxu0
      %9040 = vmatprep.mubr.f32.mxu0 0.0
      %9041 = vmatmul.mubr.f32.gmra.mxu0 %v8963
      %v9042 = vpop.f32.mrf.mxu0
      %v9043 = vadd.f32 0.0, %v9042
      %v9044 = vpop.f32.mrf.mxu0
      %9045 = vmatprep.mubr.f32.mxu0 0.0
      %9046 = vmatmul.mubr.f32.gmra.mxu0 %v8966
      %v9047 = vpop.f32.mrf.mxu0
      %v9048 = vadd.f32 0.0, %v9047
      %v9049 = vpop.f32.mrf.mxu0
      %9050 = vmatprep.mubr.f32.mxu0 0.0
      %9051 = vmatmul.mubr.f32.gmra.mxu0 %v8969
      %v9052 = vpop.f32.mrf.mxu0
      %v9053 = vadd.f32 0.0, %v9052
      %v9054 = vpop.f32.mrf.mxu0
      %9055 = vdwg.mxu0
      %v9056 = vadd.f32 %v8955, %v9038
      %v9057 = vadd.f32 %v8956, %v9043
      %v9058 = vadd.f32 %v8957, %v9048
      %v9059 = vadd.f32 %v8958, %v9053
      %v9060 = vld [vmem:[%s16] sm:$0xff]
      %v9061 = vld [vmem:[%s16 + $0x8] sm:$0xff]
      %v9062 = vld [vmem:[%s16 + $0x10] sm:$0xff]
      %v9063 = vld [vmem:[%s16 + $0x18] sm:$0xff]
      %9065 = vset.pattern.permute.xlu0 0
      %9066 = vperm.xlu0 %9065, %v9060
      %v9067 = vpop.permute.xlu0 %9066
      %9070 = vset.pattern.permute.xlu0 0
      %9071 = vperm.xlu0 %9070, %v9061
      %v9072 = vpop.permute.xlu0 %9071
      %9075 = vset.pattern.permute.xlu0 0
      %9076 = vperm.xlu0 %9075, %v9062
      %v9077 = vpop.permute.xlu0 %9076
      %9080 = vset.pattern.permute.xlu0 0
      %9081 = vperm.xlu0 %9080, %v9063
      %v9082 = vpop.permute.xlu0 %9081
      %v9084 = vadd.f32 %v9056, %v9067
      %v9085 = vadd.f32 %v9057, %v9072
      %v9086 = vadd.f32 %v9058, %v9077
      %v9087 = vadd.f32 %v9059, %v9082
      %v9088 = vmax.f32 %v9084, 0.0
      %v9089 = vmax.f32 %v9085, 0.0
      %v9090 = vmax.f32 %v9086, 0.0
      %v9091 = vmax.f32 %v9087, 0.0
      %s9092 = scalar_lea.vmem %s16, 32
      %v9093 = vld [vmem:[%s9092] sm:$0xff]
      %v9094 = vld [vmem:[%s9092 + $0x8] sm:$0xff]
      %v9095 = vld [vmem:[%s9092 + $0x10] sm:$0xff]
      %v9096 = vld [vmem:[%s9092 + $0x18] sm:$0xff]
      %9098 = vset.pattern.permute.xlu0 0
      %9099 = vperm.xlu0 %9098, %v9093
      %v9100 = vpop.permute.xlu0 %9099
      %9103 = vset.pattern.permute.xlu0 0
      %9104 = vperm.xlu0 %9103, %v9094
      %v9105 = vpop.permute.xlu0 %9104
      %9108 = vset.pattern.permute.xlu0 0
      %9109 = vperm.xlu0 %9108, %v9095
      %v9110 = vpop.permute.xlu0 %9109
      %9113 = vset.pattern.permute.xlu0 0
      %9114 = vperm.xlu0 %9113, %v9096
      %v9115 = vpop.permute.xlu0 %9114
      %v9117 = vmul.f32 %v9088, %v9100
      %v9118 = vmul.f32 %v9089, %v9105
      %v9119 = vmul.f32 %v9090, %v9110
      %v9120 = vmul.f32 %v9091, %v9115
      %s9121 = scalar_lea.vmem %s16, 64
      %v9122 = vld [vmem:[%s9121] sm:$0xff]
      %v9123 = vld [vmem:[%s9121 + $0x8] sm:$0xff]
      %v9124 = vld [vmem:[%s9121 + $0x10] sm:$0xff]
      %v9125 = vld [vmem:[%s9121 + $0x18] sm:$0xff]
      %9127 = vset.pattern.permute.xlu0 0
      %9128 = vperm.xlu0 %9127, %v9122
      %v9129 = vpop.permute.xlu0 %9128
      %9132 = vset.pattern.permute.xlu0 0
      %9133 = vperm.xlu0 %9132, %v9123
      %v9134 = vpop.permute.xlu0 %9133
      %9137 = vset.pattern.permute.xlu0 0
      %9138 = vperm.xlu0 %9137, %v9124
      %v9139 = vpop.permute.xlu0 %9138
      %9142 = vset.pattern.permute.xlu0 0
      %9143 = vperm.xlu0 %9142, %v9125
      %v9144 = vpop.permute.xlu0 %9143
      %v9146 = vadd.f32 %v9117, %v9129
      %v9147 = vadd.f32 %v9118, %v9134
      %v9148 = vadd.f32 %v9119, %v9139
      %v9149 = vadd.f32 %v9120, %v9144
      %v9150 = vadd.f32 %v6920, %v9146
      %v9151 = vadd.f32 %v6925, %v9147
      %v9152 = vadd.f32 %v6930, %v9148
      %v9153 = vadd.f32 %v6935, %v9149
      %v9154 = vld [vmem:[%s17] sm:$0xff]
      %v9155 = vld [vmem:[%s17 + $0x8] sm:$0xff]
      %v9156 = vld [vmem:[%s17 + $0x10] sm:$0xff]
      %v9157 = vld [vmem:[%s17 + $0x18] sm:$0xff]
      %v9158 = vld [vmem:[%s17 + $0x20] sm:$0xff]
      %v9159 = vld [vmem:[%s17 + $0x28] sm:$0xff]
      %v9160 = vld [vmem:[%s17 + $0x30] sm:$0xff]
      %v9161 = vld [vmem:[%s17 + $0x38] sm:$0xff]
      %v9162 = vld [vmem:[%s17 + $0x40] sm:$0xff]
      %v9163 = vld [vmem:[%s17 + $0x48] sm:$0xff]
      %v9164 = vld [vmem:[%s17 + $0x50] sm:$0xff]
      %v9165 = vld [vmem:[%s17 + $0x58] sm:$0xff]
      %v9166 = vld [vmem:[%s17 + $0x60] sm:$0xff]
      %v9167 = vld [vmem:[%s17 + $0x68] sm:$0xff]
      %v9168 = vld [vmem:[%s17 + $0x70] sm:$0xff]
      %v9169 = vld [vmem:[%s17 + $0x78] sm:$0xff]
      %v9170 = vld [vmem:[%s17 + $0x80] sm:$0xff]
      %v9171 = vld [vmem:[%s17 + $0x88] sm:$0xff]
      %v9172 = vld [vmem:[%s17 + $0x90] sm:$0xff]
      %v9173 = vld [vmem:[%s17 + $0x98] sm:$0xff]
      %v9174 = vld [vmem:[%s17 + $0xa0] sm:$0xff]
      %v9175 = vld [vmem:[%s17 + $0xa8] sm:$0xff]
      %v9176 = vld [vmem:[%s17 + $0xb0] sm:$0xff]
      %v9177 = vld [vmem:[%s17 + $0xb8] sm:$0xff]
      %v9178 = vld [vmem:[%s17 + $0xc0] sm:$0xff]
      %v9179 = vld [vmem:[%s17 + $0xc8] sm:$0xff]
      %v9180 = vld [vmem:[%s17 + $0xd0] sm:$0xff]
      %v9181 = vld [vmem:[%s17 + $0xd8] sm:$0xff]
      %v9183 = vsel %vm4656, %v9154, 0
      %v9186 = vsel %vm4656, %v9155, 0
      %v9189 = vsel %vm4656, %v9156, 0
      %v9192 = vsel %vm4656, %v9157, 0
      %v9195 = vsel %vm4656, %v9158, 0
      %v9198 = vsel %vm4656, %v9159, 0
      %v9201 = vsel %vm4656, %v9160, 0
      %v9204 = vsel %vm4656, %v9161, 0
      %v9207 = vsel %vm4656, %v9162, 0
      %v9210 = vsel %vm4656, %v9163, 0
      %v9213 = vsel %vm4656, %v9164, 0
      %v9216 = vsel %vm4656, %v9165, 0
      %v9219 = vsel %vm4656, %v9166, 0
      %v9222 = vsel %vm4656, %v9167, 0
      %v9225 = vsel %vm4656, %v9168, 0
      %v9228 = vsel %vm4656, %v9169, 0
      %v9231 = vsel %vm4656, %v9170, 0
      %v9234 = vsel %vm4656, %v9171, 0
      %v9237 = vsel %vm4656, %v9172, 0
      %v9240 = vsel %vm4656, %v9173, 0
      %v9243 = vsel %vm4656, %v9174, 0
      %v9246 = vsel %vm4656, %v9175, 0
      %v9249 = vsel %vm4656, %v9176, 0
      %v9252 = vsel %vm4656, %v9177, 0
      %v9255 = vsel %vm4656, %v9178, 0
      %v9258 = vsel %vm4656, %v9179, 0
      %v9261 = vsel %vm4656, %v9180, 0
      %v9264 = vsel %vm4656, %v9181, 0
      %9266 = vmatprep.subr.mxu0 0.0
      %9267 = vmatpush1.msra.mxu0 0.0
      %9268 = vmatprep.subr.mxu0 0.0
      %9269 = vmatpush1.msra.mxu0 0.0
      %9270 = vmatprep.subr.mxu0 0.0
      %9271 = vmatpush1.msra.mxu0 0.0
      %9272 = vmatprep.subr.mxu0 0.0
      %9273 = vmatpush1.msra.mxu0 0.0
      %9274 = vmatprep.subr.mxu0 0.0
      %9275 = vmatpush1.msra.mxu0 0.0
      %9276 = vmatprep.subr.mxu0 0.0
      %9277 = vmatpush1.msra.mxu0 0.0
      %9278 = vmatprep.subr.mxu0 0.0
      %9279 = vmatpush1.msra.mxu0 0.0
      %9280 = vmatprep.subr.mxu0 0.0
      %9281 = vmatpush1.msra.mxu0 0.0
      %9282 = vmatprep.subr.mxu0 0.0
      %9283 = vmatpush1.msra.mxu0 0.0
      %9284 = vmatprep.subr.mxu0 0.0
      %9285 = vmatpush1.msra.mxu0 0.0
      %9286 = vmatprep.subr.mxu0 0.0
      %9287 = vmatpush1.msra.mxu0 0.0
      %9288 = vmatprep.subr.mxu0 0.0
      %9289 = vmatpush1.msra.mxu0 0.0
      %9290 = vmatprep.subr.mxu0 0.0
      %9291 = vmatpush1.msra.mxu0 %v4621
      %9292 = vmatprep.subr.mxu0 0.0
      %9293 = vmatpush1.msra.mxu0 %v4616
      %9294 = vmatprep.subr.mxu0 0.0
      %9295 = vmatpush1.msra.mxu0 %v4611
      %9296 = vmatprep.subr.mxu0 0.0
      %9297 = vmatpush1.msra.mxu0 %v4606
      %9298 = vmatprep.subr.mxu0 0.0
      %9299 = vmatpush2.msra.mxu0 0.0
      %9300 = vmatprep.subr.mxu0 0.0
      %9301 = vmatpush2.msra.mxu0 0.0
      %9302 = vmatprep.subr.mxu0 0.0
      %9303 = vmatpush2.msra.mxu0 0.0
      %9304 = vmatprep.subr.mxu0 0.0
      %9305 = vmatpush2.msra.mxu0 0.0
      %9306 = vmatprep.subr.mxu0 0.0
      %9307 = vmatpush2.msra.mxu0 0.0
      %9308 = vmatprep.subr.mxu0 0.0
      %9309 = vmatpush2.msra.mxu0 0.0
      %9310 = vmatprep.subr.mxu0 0.0
      %9311 = vmatpush2.msra.mxu0 0.0
      %9312 = vmatprep.subr.mxu0 0.0
      %9313 = vmatpush2.msra.mxu0 0.0
      %9314 = vmatprep.subr.mxu0 0.0
      %9315 = vmatpush2.msra.mxu0 0.0
      %9316 = vmatprep.subr.mxu0 0.0
      %9317 = vmatpush2.msra.mxu0 0.0
      %9318 = vmatprep.subr.mxu0 0.0
      %9319 = vmatpush2.msra.mxu0 0.0
      %9320 = vmatprep.subr.mxu0 0.0
      %9321 = vmatpush2.msra.mxu0 0.0
      %9322 = vmatprep.subr.mxu0 0.0
      %9323 = vmatpush2.msra.mxu0 0.0
      %9324 = vmatprep.subr.mxu0 0.0
      %9325 = vmatpush2.msra.mxu0 0.0
      %9326 = vmatprep.subr.mxu0 0.0
      %9327 = vmatpush2.msra.mxu0 0.0
      %9328 = vmatprep.subr.mxu0 0.0
      %9329 = vmatpush2.msra.mxu0 0.0
      %9330 = vmatprep.mubr.f32.mxu0 0.0
      %9331 = vmatmul.mubr.f32.gmra.mxu0 %v9183
      %v9332 = vpop.f32.mrf.mxu0
      %v9333 = vadd.f32 0.0, %v9332
      %v9334 = vpop.f32.mrf.mxu0
      %9335 = vmatprep.mubr.f32.mxu0 0.0
      %9336 = vmatmul.mubr.f32.gmra.mxu0 %v9186
      %v9337 = vpop.f32.mrf.mxu0
      %v9338 = vadd.f32 0.0, %v9337
      %v9339 = vpop.f32.mrf.mxu0
      %9340 = vmatprep.mubr.f32.mxu0 0.0
      %9341 = vmatmul.mubr.f32.gmra.mxu0 %v9189
      %v9342 = vpop.f32.mrf.mxu0
      %v9343 = vadd.f32 0.0, %v9342
      %v9344 = vpop.f32.mrf.mxu0
      %9345 = vmatprep.mubr.f32.mxu0 0.0
      %9346 = vmatmul.mubr.f32.gmra.mxu0 %v9192
      %v9347 = vpop.f32.mrf.mxu0
      %v9348 = vadd.f32 0.0, %v9347
      %v9349 = vpop.f32.mrf.mxu0
      %9350 = vmatprep.mubr.f32.mxu0 0.0
      %9351 = vmatmul.mubr.f32.gmra.mxu0 %v9195
      %v9352 = vpop.f32.mrf.mxu0
      %v9353 = vadd.f32 0.0, %v9352
      %v9354 = vpop.f32.mrf.mxu0
      %9355 = vmatprep.mubr.f32.mxu0 0.0
      %9356 = vmatmul.mubr.f32.gmra.mxu0 %v9198
      %v9357 = vpop.f32.mrf.mxu0
      %v9358 = vadd.f32 0.0, %v9357
      %v9359 = vpop.f32.mrf.mxu0
      %9360 = vmatprep.mubr.f32.mxu0 0.0
      %9361 = vmatmul.mubr.f32.gmra.mxu0 %v9201
      %v9362 = vpop.f32.mrf.mxu0
      %v9363 = vadd.f32 0.0, %v9362
      %v9364 = vpop.f32.mrf.mxu0
      %9365 = vmatprep.mubr.f32.mxu0 0.0
      %9366 = vmatmul.mubr.f32.gmra.mxu0 %v9204
      %v9367 = vpop.f32.mrf.mxu0
      %v9368 = vadd.f32 0.0, %v9367
      %v9369 = vpop.f32.mrf.mxu0
      %9370 = vmatprep.mubr.f32.mxu0 0.0
      %9371 = vmatmul.mubr.f32.gmra.mxu0 %v9207
      %v9372 = vpop.f32.mrf.mxu0
      %v9373 = vadd.f32 0.0, %v9372
      %v9374 = vpop.f32.mrf.mxu0
      %9375 = vmatprep.mubr.f32.mxu0 0.0
      %9376 = vmatmul.mubr.f32.gmra.mxu0 %v9210
      %v9377 = vpop.f32.mrf.mxu0
      %v9378 = vadd.f32 0.0, %v9377
      %v9379 = vpop.f32.mrf.mxu0
      %9380 = vmatprep.mubr.f32.mxu0 0.0
      %9381 = vmatmul.mubr.f32.gmra.mxu0 %v9213
      %v9382 = vpop.f32.mrf.mxu0
      %v9383 = vadd.f32 0.0, %v9382
      %v9384 = vpop.f32.mrf.mxu0
      %9385 = vmatprep.mubr.f32.mxu0 0.0
      %9386 = vmatmul.mubr.f32.gmra.mxu0 %v9216
      %v9387 = vpop.f32.mrf.mxu0
      %v9388 = vadd.f32 0.0, %v9387
      %v9389 = vpop.f32.mrf.mxu0
      %9390 = vmatprep.mubr.f32.mxu0 0.0
      %9391 = vmatmul.mubr.f32.gmra.mxu0 %v9219
      %v9392 = vpop.f32.mrf.mxu0
      %v9393 = vadd.f32 0.0, %v9392
      %v9394 = vpop.f32.mrf.mxu0
      %9395 = vmatprep.mubr.f32.mxu0 0.0
      %9396 = vmatmul.mubr.f32.gmra.mxu0 %v9222
      %v9397 = vpop.f32.mrf.mxu0
      %v9398 = vadd.f32 0.0, %v9397
      %v9399 = vpop.f32.mrf.mxu0
      %9400 = vmatprep.mubr.f32.mxu0 0.0
      %9401 = vmatmul.mubr.f32.gmra.mxu0 %v9225
      %v9402 = vpop.f32.mrf.mxu0
      %v9403 = vadd.f32 0.0, %v9402
      %v9404 = vpop.f32.mrf.mxu0
      %9405 = vmatprep.mubr.f32.mxu0 0.0
      %9406 = vmatmul.mubr.f32.gmra.mxu0 %v9228
      %v9407 = vpop.f32.mrf.mxu0
      %v9408 = vadd.f32 0.0, %v9407
      %v9409 = vpop.f32.mrf.mxu0
      %9410 = vmatprep.mubr.f32.mxu0 0.0
      %9411 = vmatmul.mubr.f32.gmra.mxu0 %v9231
      %v9412 = vpop.f32.mrf.mxu0
      %v9413 = vadd.f32 0.0, %v9412
      %v9414 = vpop.f32.mrf.mxu0
      %9415 = vmatprep.mubr.f32.mxu0 0.0
      %9416 = vmatmul.mubr.f32.gmra.mxu0 %v9234
      %v9417 = vpop.f32.mrf.mxu0
      %v9418 = vadd.f32 0.0, %v9417
      %v9419 = vpop.f32.mrf.mxu0
      %9420 = vmatprep.mubr.f32.mxu0 0.0
      %9421 = vmatmul.mubr.f32.gmra.mxu0 %v9237
      %v9422 = vpop.f32.mrf.mxu0
      %v9423 = vadd.f32 0.0, %v9422
      %v9424 = vpop.f32.mrf.mxu0
      %9425 = vmatprep.mubr.f32.mxu0 0.0
      %9426 = vmatmul.mubr.f32.gmra.mxu0 %v9240
      %v9427 = vpop.f32.mrf.mxu0
      %v9428 = vadd.f32 0.0, %v9427
      %v9429 = vpop.f32.mrf.mxu0
      %9430 = vmatprep.mubr.f32.mxu0 0.0
      %9431 = vmatmul.mubr.f32.gmra.mxu0 %v9243
      %v9432 = vpop.f32.mrf.mxu0
      %v9433 = vadd.f32 0.0, %v9432
      %v9434 = vpop.f32.mrf.mxu0
      %9435 = vmatprep.mubr.f32.mxu0 0.0
      %9436 = vmatmul.mubr.f32.gmra.mxu0 %v9246
      %v9437 = vpop.f32.mrf.mxu0
      %v9438 = vadd.f32 0.0, %v9437
      %v9439 = vpop.f32.mrf.mxu0
      %9440 = vmatprep.mubr.f32.mxu0 0.0
      %9441 = vmatmul.mubr.f32.gmra.mxu0 %v9249
      %v9442 = vpop.f32.mrf.mxu0
      %v9443 = vadd.f32 0.0, %v9442
      %v9444 = vpop.f32.mrf.mxu0
      %9445 = vmatprep.mubr.f32.mxu0 0.0
      %9446 = vmatmul.mubr.f32.gmra.mxu0 %v9252
      %v9447 = vpop.f32.mrf.mxu0
      %v9448 = vadd.f32 0.0, %v9447
      %v9449 = vpop.f32.mrf.mxu0
      %9450 = vmatprep.mubr.f32.mxu0 0.0
      %9451 = vmatmul.mubr.f32.gmra.mxu0 %v9255
      %v9452 = vpop.f32.mrf.mxu0
      %v9453 = vadd.f32 0.0, %v9452
      %v9454 = vpop.f32.mrf.mxu0
      %9455 = vmatprep.mubr.f32.mxu0 0.0
      %9456 = vmatmul.mubr.f32.gmra.mxu0 %v9258
      %v9457 = vpop.f32.mrf.mxu0
      %v9458 = vadd.f32 0.0, %v9457
      %v9459 = vpop.f32.mrf.mxu0
      %9460 = vmatprep.mubr.f32.mxu0 0.0
      %9461 = vmatmul.mubr.f32.gmra.mxu0 %v9261
      %v9462 = vpop.f32.mrf.mxu0
      %v9463 = vadd.f32 0.0, %v9462
      %v9464 = vpop.f32.mrf.mxu0
      %9465 = vmatprep.mubr.f32.mxu0 0.0
      %9466 = vmatmul.mubr.f32.gmra.mxu0 %v9264
      %v9467 = vpop.f32.mrf.mxu0
      %v9468 = vadd.f32 0.0, %v9467
      %v9469 = vpop.f32.mrf.mxu0
      %9470 = vdwg.mxu0
      %v9472 = vsel %vm4656, %v9353, 0
      %v9475 = vsel %vm4656, %v9358, 0
      %v9478 = vsel %vm4656, %v9363, 0
      %v9481 = vsel %vm4656, %v9368, 0
      %9483 = vmatprep.subr.mxu0 0.0
      %9484 = vmatpush1.msra.mxu0 0.0
      %9485 = vmatprep.subr.mxu0 0.0
      %9486 = vmatpush1.msra.mxu0 0.0
      %9487 = vmatprep.subr.mxu0 0.0
      %9488 = vmatpush1.msra.mxu0 0.0
      %9489 = vmatprep.subr.mxu0 0.0
      %9490 = vmatpush1.msra.mxu0 0.0
      %9491 = vmatprep.subr.mxu0 0.0
      %9492 = vmatpush1.msra.mxu0 0.0
      %9493 = vmatprep.subr.mxu0 0.0
      %9494 = vmatpush1.msra.mxu0 0.0
      %9495 = vmatprep.subr.mxu0 0.0
      %9496 = vmatpush1.msra.mxu0 0.0
      %9497 = vmatprep.subr.mxu0 0.0
      %9498 = vmatpush1.msra.mxu0 0.0
      %9499 = vmatprep.subr.mxu0 0.0
      %9500 = vmatpush1.msra.mxu0 0.0
      %9501 = vmatprep.subr.mxu0 0.0
      %9502 = vmatpush1.msra.mxu0 0.0
      %9503 = vmatprep.subr.mxu0 0.0
      %9504 = vmatpush1.msra.mxu0 0.0
      %9505 = vmatprep.subr.mxu0 0.0
      %9506 = vmatpush1.msra.mxu0 0.0
      %9507 = vmatprep.subr.mxu0 0.0
      %9508 = vmatpush1.msra.mxu0 %v790
      %9509 = vmatprep.subr.mxu0 0.0
      %9510 = vmatpush1.msra.mxu0 %v789
      %9511 = vmatprep.subr.mxu0 0.0
      %9512 = vmatpush1.msra.mxu0 %v788
      %9513 = vmatprep.subr.mxu0 0.0
      %9514 = vmatpush1.msra.mxu0 %v787
      %9515 = vmatprep.subr.mxu0 0.0
      %9516 = vmatpush2.msra.mxu0 0.0
      %9517 = vmatprep.subr.mxu0 0.0
      %9518 = vmatpush2.msra.mxu0 0.0
      %9519 = vmatprep.subr.mxu0 0.0
      %9520 = vmatpush2.msra.mxu0 0.0
      %9521 = vmatprep.subr.mxu0 0.0
      %9522 = vmatpush2.msra.mxu0 0.0
      %9523 = vmatprep.subr.mxu0 0.0
      %9524 = vmatpush2.msra.mxu0 0.0
      %9525 = vmatprep.subr.mxu0 0.0
      %9526 = vmatpush2.msra.mxu0 0.0
      %9527 = vmatprep.subr.mxu0 0.0
      %9528 = vmatpush2.msra.mxu0 0.0
      %9529 = vmatprep.subr.mxu0 0.0
      %9530 = vmatpush2.msra.mxu0 0.0
      %9531 = vmatprep.subr.mxu0 0.0
      %9532 = vmatpush2.msra.mxu0 0.0
      %9533 = vmatprep.subr.mxu0 0.0
      %9534 = vmatpush2.msra.mxu0 0.0
      %9535 = vmatprep.subr.mxu0 0.0
      %9536 = vmatpush2.msra.mxu0 0.0
      %9537 = vmatprep.subr.mxu0 0.0
      %9538 = vmatpush2.msra.mxu0 0.0
      %9539 = vmatprep.subr.mxu0 0.0
      %9540 = vmatpush2.msra.mxu0 0.0
      %9541 = vmatprep.subr.mxu0 0.0
      %9542 = vmatpush2.msra.mxu0 0.0
      %9543 = vmatprep.subr.mxu0 0.0
      %9544 = vmatpush2.msra.mxu0 0.0
      %9545 = vmatprep.subr.mxu0 0.0
      %9546 = vmatpush2.msra.mxu0 0.0
      %9547 = vmatprep.mubr.f32.mxu0 0.0
      %9548 = vmatmul.mubr.f32.gmra.mxu0 %v9472
      %v9549 = vpop.f32.mrf.mxu0
      %v9550 = vadd.f32 0.0, %v9549
      %v9551 = vpop.f32.mrf.mxu0
      %9552 = vmatprep.mubr.f32.mxu0 0.0
      %9553 = vmatmul.mubr.f32.gmra.mxu0 %v9475
      %v9554 = vpop.f32.mrf.mxu0
      %v9555 = vadd.f32 0.0, %v9554
      %v9556 = vpop.f32.mrf.mxu0
      %9557 = vmatprep.mubr.f32.mxu0 0.0
      %9558 = vmatmul.mubr.f32.gmra.mxu0 %v9478
      %v9559 = vpop.f32.mrf.mxu0
      %v9560 = vadd.f32 0.0, %v9559
      %v9561 = vpop.f32.mrf.mxu0
      %9562 = vmatprep.mubr.f32.mxu0 0.0
      %9563 = vmatmul.mubr.f32.gmra.mxu0 %v9481
      %v9564 = vpop.f32.mrf.mxu0
      %v9565 = vadd.f32 0.0, %v9564
      %v9566 = vpop.f32.mrf.mxu0
      %9567 = vdwg.mxu0
      %v9569 = vsel %vm4656, %v9333, 0
      %v9572 = vsel %vm4656, %v9338, 0
      %v9575 = vsel %vm4656, %v9343, 0
      %v9578 = vsel %vm4656, %v9348, 0
      %9580 = vmatprep.subr.mxu0 0.0
      %9581 = vmatpush1.msra.mxu0 0.0
      %9582 = vmatprep.subr.mxu0 0.0
      %9583 = vmatpush1.msra.mxu0 0.0
      %9584 = vmatprep.subr.mxu0 0.0
      %9585 = vmatpush1.msra.mxu0 0.0
      %9586 = vmatprep.subr.mxu0 0.0
      %9587 = vmatpush1.msra.mxu0 0.0
      %9588 = vmatprep.subr.mxu0 0.0
      %9589 = vmatpush1.msra.mxu0 0.0
      %9590 = vmatprep.subr.mxu0 0.0
      %9591 = vmatpush1.msra.mxu0 0.0
      %9592 = vmatprep.subr.mxu0 0.0
      %9593 = vmatpush1.msra.mxu0 0.0
      %9594 = vmatprep.subr.mxu0 0.0
      %9595 = vmatpush1.msra.mxu0 0.0
      %9596 = vmatprep.subr.mxu0 0.0
      %9597 = vmatpush1.msra.mxu0 0.0
      %9598 = vmatprep.subr.mxu0 0.0
      %9599 = vmatpush1.msra.mxu0 0.0
      %9600 = vmatprep.subr.mxu0 0.0
      %9601 = vmatpush1.msra.mxu0 0.0
      %9602 = vmatprep.subr.mxu0 0.0
      %9603 = vmatpush1.msra.mxu0 0.0
      %9604 = vmatprep.subr.mxu0 0.0
      %9605 = vmatpush1.msra.mxu0 %v741
      %9606 = vmatprep.subr.mxu0 0.0
      %9607 = vmatpush1.msra.mxu0 %v740
      %9608 = vmatprep.subr.mxu0 0.0
      %9609 = vmatpush1.msra.mxu0 %v739
      %9610 = vmatprep.subr.mxu0 0.0
      %9611 = vmatpush1.msra.mxu0 %v738
      %9612 = vmatprep.subr.mxu0 0.0
      %9613 = vmatpush2.msra.mxu0 0.0
      %9614 = vmatprep.subr.mxu0 0.0
      %9615 = vmatpush2.msra.mxu0 0.0
      %9616 = vmatprep.subr.mxu0 0.0
      %9617 = vmatpush2.msra.mxu0 0.0
      %9618 = vmatprep.subr.mxu0 0.0
      %9619 = vmatpush2.msra.mxu0 0.0
      %9620 = vmatprep.subr.mxu0 0.0
      %9621 = vmatpush2.msra.mxu0 0.0
      %9622 = vmatprep.subr.mxu0 0.0
      %9623 = vmatpush2.msra.mxu0 0.0
      %9624 = vmatprep.subr.mxu0 0.0
      %9625 = vmatpush2.msra.mxu0 0.0
      %9626 = vmatprep.subr.mxu0 0.0
      %9627 = vmatpush2.msra.mxu0 0.0
      %9628 = vmatprep.subr.mxu0 0.0
      %9629 = vmatpush2.msra.mxu0 0.0
      %9630 = vmatprep.subr.mxu0 0.0
      %9631 = vmatpush2.msra.mxu0 0.0
      %9632 = vmatprep.subr.mxu0 0.0
      %9633 = vmatpush2.msra.mxu0 0.0
      %9634 = vmatprep.subr.mxu0 0.0
      %9635 = vmatpush2.msra.mxu0 0.0
      %9636 = vmatprep.subr.mxu0 0.0
      %9637 = vmatpush2.msra.mxu0 0.0
      %9638 = vmatprep.subr.mxu0 0.0
      %9639 = vmatpush2.msra.mxu0 0.0
      %9640 = vmatprep.subr.mxu0 0.0
      %9641 = vmatpush2.msra.mxu0 0.0
      %9642 = vmatprep.subr.mxu0 0.0
      %9643 = vmatpush2.msra.mxu0 0.0
      %9644 = vmatprep.mubr.f32.mxu0 0.0
      %9645 = vmatmul.mubr.f32.gmra.mxu0 %v9569
      %v9646 = vpop.f32.mrf.mxu0
      %v9647 = vadd.f32 %v9550, %v9646
      %v9648 = vpop.f32.mrf.mxu0
      %9649 = vmatprep.mubr.f32.mxu0 0.0
      %9650 = vmatmul.mubr.f32.gmra.mxu0 %v9572
      %v9651 = vpop.f32.mrf.mxu0
      %v9652 = vadd.f32 %v9555, %v9651
      %v9653 = vpop.f32.mrf.mxu0
      %9654 = vmatprep.mubr.f32.mxu0 0.0
      %9655 = vmatmul.mubr.f32.gmra.mxu0 %v9575
      %v9656 = vpop.f32.mrf.mxu0
      %v9657 = vadd.f32 %v9560, %v9656
      %v9658 = vpop.f32.mrf.mxu0
      %9659 = vmatprep.mubr.f32.mxu0 0.0
      %9660 = vmatmul.mubr.f32.gmra.mxu0 %v9578
      %v9661 = vpop.f32.mrf.mxu0
      %v9662 = vadd.f32 %v9565, %v9661
      %v9663 = vpop.f32.mrf.mxu0
      %9664 = vdwg.mxu0
      %v9666 = vsel %vm4656, %v9373, 0
      %v9669 = vsel %vm4656, %v9378, 0
      %v9672 = vsel %vm4656, %v9383, 0
      %v9675 = vsel %vm4656, %v9388, 0
      %9677 = vmatprep.subr.mxu0 0.0
      %9678 = vmatpush1.msra.mxu0 0.0
      %9679 = vmatprep.subr.mxu0 0.0
      %9680 = vmatpush1.msra.mxu0 0.0
      %9681 = vmatprep.subr.mxu0 0.0
      %9682 = vmatpush1.msra.mxu0 0.0
      %9683 = vmatprep.subr.mxu0 0.0
      %9684 = vmatpush1.msra.mxu0 0.0
      %9685 = vmatprep.subr.mxu0 0.0
      %9686 = vmatpush1.msra.mxu0 0.0
      %9687 = vmatprep.subr.mxu0 0.0
      %9688 = vmatpush1.msra.mxu0 0.0
      %9689 = vmatprep.subr.mxu0 0.0
      %9690 = vmatpush1.msra.mxu0 0.0
      %9691 = vmatprep.subr.mxu0 0.0
      %9692 = vmatpush1.msra.mxu0 0.0
      %9693 = vmatprep.subr.mxu0 0.0
      %9694 = vmatpush1.msra.mxu0 0.0
      %9695 = vmatprep.subr.mxu0 0.0
      %9696 = vmatpush1.msra.mxu0 0.0
      %9697 = vmatprep.subr.mxu0 0.0
      %9698 = vmatpush1.msra.mxu0 0.0
      %9699 = vmatprep.subr.mxu0 0.0
      %9700 = vmatpush1.msra.mxu0 0.0
      %9701 = vmatprep.subr.mxu0 0.0
      %9702 = vmatpush1.msra.mxu0 %v839
      %9703 = vmatprep.subr.mxu0 0.0
      %9704 = vmatpush1.msra.mxu0 %v838
      %9705 = vmatprep.subr.mxu0 0.0
      %9706 = vmatpush1.msra.mxu0 %v837
      %9707 = vmatprep.subr.mxu0 0.0
      %9708 = vmatpush1.msra.mxu0 %v836
      %9709 = vmatprep.subr.mxu0 0.0
      %9710 = vmatpush2.msra.mxu0 0.0
      %9711 = vmatprep.subr.mxu0 0.0
      %9712 = vmatpush2.msra.mxu0 0.0
      %9713 = vmatprep.subr.mxu0 0.0
      %9714 = vmatpush2.msra.mxu0 0.0
      %9715 = vmatprep.subr.mxu0 0.0
      %9716 = vmatpush2.msra.mxu0 0.0
      %9717 = vmatprep.subr.mxu0 0.0
      %9718 = vmatpush2.msra.mxu0 0.0
      %9719 = vmatprep.subr.mxu0 0.0
      %9720 = vmatpush2.msra.mxu0 0.0
      %9721 = vmatprep.subr.mxu0 0.0
      %9722 = vmatpush2.msra.mxu0 0.0
      %9723 = vmatprep.subr.mxu0 0.0
      %9724 = vmatpush2.msra.mxu0 0.0
      %9725 = vmatprep.subr.mxu0 0.0
      %9726 = vmatpush2.msra.mxu0 0.0
      %9727 = vmatprep.subr.mxu0 0.0
      %9728 = vmatpush2.msra.mxu0 0.0
      %9729 = vmatprep.subr.mxu0 0.0
      %9730 = vmatpush2.msra.mxu0 0.0
      %9731 = vmatprep.subr.mxu0 0.0
      %9732 = vmatpush2.msra.mxu0 0.0
      %9733 = vmatprep.subr.mxu0 0.0
      %9734 = vmatpush2.msra.mxu0 0.0
      %9735 = vmatprep.subr.mxu0 0.0
      %9736 = vmatpush2.msra.mxu0 0.0
      %9737 = vmatprep.subr.mxu0 0.0
      %9738 = vmatpush2.msra.mxu0 0.0
      %9739 = vmatprep.subr.mxu0 0.0
      %9740 = vmatpush2.msra.mxu0 0.0
      %9741 = vmatprep.mubr.f32.mxu0 0.0
      %9742 = vmatmul.mubr.f32.gmra.mxu0 %v9666
      %v9743 = vpop.f32.mrf.mxu0
      %v9744 = vadd.f32 0.0, %v9743
      %v9745 = vpop.f32.mrf.mxu0
      %9746 = vmatprep.mubr.f32.mxu0 0.0
      %9747 = vmatmul.mubr.f32.gmra.mxu0 %v9669
      %v9748 = vpop.f32.mrf.mxu0
      %v9749 = vadd.f32 0.0, %v9748
      %v9750 = vpop.f32.mrf.mxu0
      %9751 = vmatprep.mubr.f32.mxu0 0.0
      %9752 = vmatmul.mubr.f32.gmra.mxu0 %v9672
      %v9753 = vpop.f32.mrf.mxu0
      %v9754 = vadd.f32 0.0, %v9753
      %v9755 = vpop.f32.mrf.mxu0
      %9756 = vmatprep.mubr.f32.mxu0 0.0
      %9757 = vmatmul.mubr.f32.gmra.mxu0 %v9675
      %v9758 = vpop.f32.mrf.mxu0
      %v9759 = vadd.f32 0.0, %v9758
      %v9760 = vpop.f32.mrf.mxu0
      %9761 = vdwg.mxu0
      %v9762 = vadd.f32 %v9647, %v9744
      %v9763 = vadd.f32 %v9652, %v9749
      %v9764 = vadd.f32 %v9657, %v9754
      %v9765 = vadd.f32 %v9662, %v9759
      %v9767 = vsel %vm4656, %v9393, 0
      %v9770 = vsel %vm4656, %v9398, 0
      %v9773 = vsel %vm4656, %v9403, 0
      %v9776 = vsel %vm4656, %v9408, 0
      %9778 = vmatprep.subr.mxu0 0.0
      %9779 = vmatpush1.msra.mxu0 0.0
      %9780 = vmatprep.subr.mxu0 0.0
      %9781 = vmatpush1.msra.mxu0 0.0
      %9782 = vmatprep.subr.mxu0 0.0
      %9783 = vmatpush1.msra.mxu0 0.0
      %9784 = vmatprep.subr.mxu0 0.0
      %9785 = vmatpush1.msra.mxu0 0.0
      %9786 = vmatprep.subr.mxu0 0.0
      %9787 = vmatpush1.msra.mxu0 0.0
      %9788 = vmatprep.subr.mxu0 0.0
      %9789 = vmatpush1.msra.mxu0 0.0
      %9790 = vmatprep.subr.mxu0 0.0
      %9791 = vmatpush1.msra.mxu0 0.0
      %9792 = vmatprep.subr.mxu0 0.0
      %9793 = vmatpush1.msra.mxu0 0.0
      %9794 = vmatprep.subr.mxu0 0.0
      %9795 = vmatpush1.msra.mxu0 0.0
      %9796 = vmatprep.subr.mxu0 0.0
      %9797 = vmatpush1.msra.mxu0 0.0
      %9798 = vmatprep.subr.mxu0 0.0
      %9799 = vmatpush1.msra.mxu0 0.0
      %9800 = vmatprep.subr.mxu0 0.0
      %9801 = vmatpush1.msra.mxu0 0.0
      %9802 = vmatprep.subr.mxu0 0.0
      %9803 = vmatpush1.msra.mxu0 %v887
      %9804 = vmatprep.subr.mxu0 0.0
      %9805 = vmatpush1.msra.mxu0 %v886
      %9806 = vmatprep.subr.mxu0 0.0
      %9807 = vmatpush1.msra.mxu0 %v885
      %9808 = vmatprep.subr.mxu0 0.0
      %9809 = vmatpush1.msra.mxu0 %v884
      %9810 = vmatprep.subr.mxu0 0.0
      %9811 = vmatpush2.msra.mxu0 0.0
      %9812 = vmatprep.subr.mxu0 0.0
      %9813 = vmatpush2.msra.mxu0 0.0
      %9814 = vmatprep.subr.mxu0 0.0
      %9815 = vmatpush2.msra.mxu0 0.0
      %9816 = vmatprep.subr.mxu0 0.0
      %9817 = vmatpush2.msra.mxu0 0.0
      %9818 = vmatprep.subr.mxu0 0.0
      %9819 = vmatpush2.msra.mxu0 0.0
      %9820 = vmatprep.subr.mxu0 0.0
      %9821 = vmatpush2.msra.mxu0 0.0
      %9822 = vmatprep.subr.mxu0 0.0
      %9823 = vmatpush2.msra.mxu0 0.0
      %9824 = vmatprep.subr.mxu0 0.0
      %9825 = vmatpush2.msra.mxu0 0.0
      %9826 = vmatprep.subr.mxu0 0.0
      %9827 = vmatpush2.msra.mxu0 0.0
      %9828 = vmatprep.subr.mxu0 0.0
      %9829 = vmatpush2.msra.mxu0 0.0
      %9830 = vmatprep.subr.mxu0 0.0
      %9831 = vmatpush2.msra.mxu0 0.0
      %9832 = vmatprep.subr.mxu0 0.0
      %9833 = vmatpush2.msra.mxu0 0.0
      %9834 = vmatprep.subr.mxu0 0.0
      %9835 = vmatpush2.msra.mxu0 0.0
      %9836 = vmatprep.subr.mxu0 0.0
      %9837 = vmatpush2.msra.mxu0 0.0
      %9838 = vmatprep.subr.mxu0 0.0
      %9839 = vmatpush2.msra.mxu0 0.0
      %9840 = vmatprep.subr.mxu0 0.0
      %9841 = vmatpush2.msra.mxu0 0.0
      %9842 = vmatprep.mubr.f32.mxu0 0.0
      %9843 = vmatmul.mubr.f32.gmra.mxu0 %v9767
      %v9844 = vpop.f32.mrf.mxu0
      %v9845 = vadd.f32 0.0, %v9844
      %v9846 = vpop.f32.mrf.mxu0
      %9847 = vmatprep.mubr.f32.mxu0 0.0
      %9848 = vmatmul.mubr.f32.gmra.mxu0 %v9770
      %v9849 = vpop.f32.mrf.mxu0
      %v9850 = vadd.f32 0.0, %v9849
      %v9851 = vpop.f32.mrf.mxu0
      %9852 = vmatprep.mubr.f32.mxu0 0.0
      %9853 = vmatmul.mubr.f32.gmra.mxu0 %v9773
      %v9854 = vpop.f32.mrf.mxu0
      %v9855 = vadd.f32 0.0, %v9854
      %v9856 = vpop.f32.mrf.mxu0
      %9857 = vmatprep.mubr.f32.mxu0 0.0
      %9858 = vmatmul.mubr.f32.gmra.mxu0 %v9776
      %v9859 = vpop.f32.mrf.mxu0
      %v9860 = vadd.f32 0.0, %v9859
      %v9861 = vpop.f32.mrf.mxu0
      %9862 = vdwg.mxu0
      %v9863 = vadd.f32 %v9762, %v9845
      %v9864 = vadd.f32 %v9763, %v9850
      %v9865 = vadd.f32 %v9764, %v9855
      %v9866 = vadd.f32 %v9765, %v9860
      %v9868 = vsel %vm4656, %v9413, 0
      %v9871 = vsel %vm4656, %v9418, 0
      %v9874 = vsel %vm4656, %v9423, 0
      %v9877 = vsel %vm4656, %v9428, 0
      %9879 = vmatprep.subr.mxu0 0.0
      %9880 = vmatpush1.msra.mxu0 0.0
      %9881 = vmatprep.subr.mxu0 0.0
      %9882 = vmatpush1.msra.mxu0 0.0
      %9883 = vmatprep.subr.mxu0 0.0
      %9884 = vmatpush1.msra.mxu0 0.0
      %9885 = vmatprep.subr.mxu0 0.0
      %9886 = vmatpush1.msra.mxu0 0.0
      %9887 = vmatprep.subr.mxu0 0.0
      %9888 = vmatpush1.msra.mxu0 0.0
      %9889 = vmatprep.subr.mxu0 0.0
      %9890 = vmatpush1.msra.mxu0 0.0
      %9891 = vmatprep.subr.mxu0 0.0
      %9892 = vmatpush1.msra.mxu0 0.0
      %9893 = vmatprep.subr.mxu0 0.0
      %9894 = vmatpush1.msra.mxu0 0.0
      %9895 = vmatprep.subr.mxu0 0.0
      %9896 = vmatpush1.msra.mxu0 0.0
      %9897 = vmatprep.subr.mxu0 0.0
      %9898 = vmatpush1.msra.mxu0 0.0
      %9899 = vmatprep.subr.mxu0 0.0
      %9900 = vmatpush1.msra.mxu0 0.0
      %9901 = vmatprep.subr.mxu0 0.0
      %9902 = vmatpush1.msra.mxu0 0.0
      %9903 = vmatprep.subr.mxu0 0.0
      %9904 = vmatpush1.msra.mxu0 %v936
      %9905 = vmatprep.subr.mxu0 0.0
      %9906 = vmatpush1.msra.mxu0 %v935
      %9907 = vmatprep.subr.mxu0 0.0
      %9908 = vmatpush1.msra.mxu0 %v934
      %9909 = vmatprep.subr.mxu0 0.0
      %9910 = vmatpush1.msra.mxu0 %v933
      %9911 = vmatprep.subr.mxu0 0.0
      %9912 = vmatpush2.msra.mxu0 0.0
      %9913 = vmatprep.subr.mxu0 0.0
      %9914 = vmatpush2.msra.mxu0 0.0
      %9915 = vmatprep.subr.mxu0 0.0
      %9916 = vmatpush2.msra.mxu0 0.0
      %9917 = vmatprep.subr.mxu0 0.0
      %9918 = vmatpush2.msra.mxu0 0.0
      %9919 = vmatprep.subr.mxu0 0.0
      %9920 = vmatpush2.msra.mxu0 0.0
      %9921 = vmatprep.subr.mxu0 0.0
      %9922 = vmatpush2.msra.mxu0 0.0
      %9923 = vmatprep.subr.mxu0 0.0
      %9924 = vmatpush2.msra.mxu0 0.0
      %9925 = vmatprep.subr.mxu0 0.0
      %9926 = vmatpush2.msra.mxu0 0.0
      %9927 = vmatprep.subr.mxu0 0.0
      %9928 = vmatpush2.msra.mxu0 0.0
      %9929 = vmatprep.subr.mxu0 0.0
      %9930 = vmatpush2.msra.mxu0 0.0
      %9931 = vmatprep.subr.mxu0 0.0
      %9932 = vmatpush2.msra.mxu0 0.0
      %9933 = vmatprep.subr.mxu0 0.0
      %9934 = vmatpush2.msra.mxu0 0.0
      %9935 = vmatprep.subr.mxu0 0.0
      %9936 = vmatpush2.msra.mxu0 0.0
      %9937 = vmatprep.subr.mxu0 0.0
      %9938 = vmatpush2.msra.mxu0 0.0
      %9939 = vmatprep.subr.mxu0 0.0
      %9940 = vmatpush2.msra.mxu0 0.0
      %9941 = vmatprep.subr.mxu0 0.0
      %9942 = vmatpush2.msra.mxu0 0.0
      %9943 = vmatprep.mubr.f32.mxu0 0.0
      %9944 = vmatmul.mubr.f32.gmra.mxu0 %v9868
      %v9945 = vpop.f32.mrf.mxu0
      %v9946 = vadd.f32 0.0, %v9945
      %v9947 = vpop.f32.mrf.mxu0
      %9948 = vmatprep.mubr.f32.mxu0 0.0
      %9949 = vmatmul.mubr.f32.gmra.mxu0 %v9871
      %v9950 = vpop.f32.mrf.mxu0
      %v9951 = vadd.f32 0.0, %v9950
      %v9952 = vpop.f32.mrf.mxu0
      %9953 = vmatprep.mubr.f32.mxu0 0.0
      %9954 = vmatmul.mubr.f32.gmra.mxu0 %v9874
      %v9955 = vpop.f32.mrf.mxu0
      %v9956 = vadd.f32 0.0, %v9955
      %v9957 = vpop.f32.mrf.mxu0
      %9958 = vmatprep.mubr.f32.mxu0 0.0
      %9959 = vmatmul.mubr.f32.gmra.mxu0 %v9877
      %v9960 = vpop.f32.mrf.mxu0
      %v9961 = vadd.f32 0.0, %v9960
      %v9962 = vpop.f32.mrf.mxu0
      %9963 = vdwg.mxu0
      %v9964 = vadd.f32 %v9863, %v9946
      %v9965 = vadd.f32 %v9864, %v9951
      %v9966 = vadd.f32 %v9865, %v9956
      %v9967 = vadd.f32 %v9866, %v9961
      %v9969 = vsel %vm4656, %v9433, 0
      %v9972 = vsel %vm4656, %v9438, 0
      %v9975 = vsel %vm4656, %v9443, 0
      %v9978 = vsel %vm4656, %v9448, 0
      %9980 = vmatprep.subr.mxu0 0.0
      %9981 = vmatpush1.msra.mxu0 0.0
      %9982 = vmatprep.subr.mxu0 0.0
      %9983 = vmatpush1.msra.mxu0 0.0
      %9984 = vmatprep.subr.mxu0 0.0
      %9985 = vmatpush1.msra.mxu0 0.0
      %9986 = vmatprep.subr.mxu0 0.0
      %9987 = vmatpush1.msra.mxu0 0.0
      %9988 = vmatprep.subr.mxu0 0.0
      %9989 = vmatpush1.msra.mxu0 0.0
      %9990 = vmatprep.subr.mxu0 0.0
      %9991 = vmatpush1.msra.mxu0 0.0
      %9992 = vmatprep.subr.mxu0 0.0
      %9993 = vmatpush1.msra.mxu0 0.0
      %9994 = vmatprep.subr.mxu0 0.0
      %9995 = vmatpush1.msra.mxu0 0.0
      %9996 = vmatprep.subr.mxu0 0.0
      %9997 = vmatpush1.msra.mxu0 0.0
      %9998 = vmatprep.subr.mxu0 0.0
      %9999 = vmatpush1.msra.mxu0 0.0
      %10000 = vmatprep.subr.mxu0 0.0
      %10001 = vmatpush1.msra.mxu0 0.0
      %10002 = vmatprep.subr.mxu0 0.0
      %10003 = vmatpush1.msra.mxu0 0.0
      %10004 = vmatprep.subr.mxu0 0.0
      %10005 = vmatpush1.msra.mxu0 %v985
      %10006 = vmatprep.subr.mxu0 0.0
      %10007 = vmatpush1.msra.mxu0 %v984
      %10008 = vmatprep.subr.mxu0 0.0
      %10009 = vmatpush1.msra.mxu0 %v983
      %10010 = vmatprep.subr.mxu0 0.0
      %10011 = vmatpush1.msra.mxu0 %v982
      %10012 = vmatprep.subr.mxu0 0.0
      %10013 = vmatpush2.msra.mxu0 0.0
      %10014 = vmatprep.subr.mxu0 0.0
      %10015 = vmatpush2.msra.mxu0 0.0
      %10016 = vmatprep.subr.mxu0 0.0
      %10017 = vmatpush2.msra.mxu0 0.0
      %10018 = vmatprep.subr.mxu0 0.0
      %10019 = vmatpush2.msra.mxu0 0.0
      %10020 = vmatprep.subr.mxu0 0.0
      %10021 = vmatpush2.msra.mxu0 0.0
      %10022 = vmatprep.subr.mxu0 0.0
      %10023 = vmatpush2.msra.mxu0 0.0
      %10024 = vmatprep.subr.mxu0 0.0
      %10025 = vmatpush2.msra.mxu0 0.0
      %10026 = vmatprep.subr.mxu0 0.0
      %10027 = vmatpush2.msra.mxu0 0.0
      %10028 = vmatprep.subr.mxu0 0.0
      %10029 = vmatpush2.msra.mxu0 0.0
      %10030 = vmatprep.subr.mxu0 0.0
      %10031 = vmatpush2.msra.mxu0 0.0
      %10032 = vmatprep.subr.mxu0 0.0
      %10033 = vmatpush2.msra.mxu0 0.0
      %10034 = vmatprep.subr.mxu0 0.0
      %10035 = vmatpush2.msra.mxu0 0.0
      %10036 = vmatprep.subr.mxu0 0.0
      %10037 = vmatpush2.msra.mxu0 0.0
      %10038 = vmatprep.subr.mxu0 0.0
      %10039 = vmatpush2.msra.mxu0 0.0
      %10040 = vmatprep.subr.mxu0 0.0
      %10041 = vmatpush2.msra.mxu0 0.0
      %10042 = vmatprep.subr.mxu0 0.0
      %10043 = vmatpush2.msra.mxu0 0.0
      %10044 = vmatprep.mubr.f32.mxu0 0.0
      %10045 = vmatmul.mubr.f32.gmra.mxu0 %v9969
      %v10046 = vpop.f32.mrf.mxu0
      %v10047 = vadd.f32 0.0, %v10046
      %v10048 = vpop.f32.mrf.mxu0
      %10049 = vmatprep.mubr.f32.mxu0 0.0
      %10050 = vmatmul.mubr.f32.gmra.mxu0 %v9972
      %v10051 = vpop.f32.mrf.mxu0
      %v10052 = vadd.f32 0.0, %v10051
      %v10053 = vpop.f32.mrf.mxu0
      %10054 = vmatprep.mubr.f32.mxu0 0.0
      %10055 = vmatmul.mubr.f32.gmra.mxu0 %v9975
      %v10056 = vpop.f32.mrf.mxu0
      %v10057 = vadd.f32 0.0, %v10056
      %v10058 = vpop.f32.mrf.mxu0
      %10059 = vmatprep.mubr.f32.mxu0 0.0
      %10060 = vmatmul.mubr.f32.gmra.mxu0 %v9978
      %v10061 = vpop.f32.mrf.mxu0
      %v10062 = vadd.f32 0.0, %v10061
      %v10063 = vpop.f32.mrf.mxu0
      %10064 = vdwg.mxu0
      %v10065 = vadd.f32 %v9964, %v10047
      %v10066 = vadd.f32 %v9965, %v10052
      %v10067 = vadd.f32 %v9966, %v10057
      %v10068 = vadd.f32 %v9967, %v10062
      %v10070 = vsel %vm4656, %v9453, 0
      %v10073 = vsel %vm4656, %v9458, 0
      %v10076 = vsel %vm4656, %v9463, 0
      %v10079 = vsel %vm4656, %v9468, 0
      %10081 = vmatprep.subr.mxu0 0.0
      %10082 = vmatpush1.msra.mxu0 0.0
      %10083 = vmatprep.subr.mxu0 0.0
      %10084 = vmatpush1.msra.mxu0 0.0
      %10085 = vmatprep.subr.mxu0 0.0
      %10086 = vmatpush1.msra.mxu0 0.0
      %10087 = vmatprep.subr.mxu0 0.0
      %10088 = vmatpush1.msra.mxu0 0.0
      %10089 = vmatprep.subr.mxu0 0.0
      %10090 = vmatpush1.msra.mxu0 0.0
      %10091 = vmatprep.subr.mxu0 0.0
      %10092 = vmatpush1.msra.mxu0 0.0
      %10093 = vmatprep.subr.mxu0 0.0
      %10094 = vmatpush1.msra.mxu0 0.0
      %10095 = vmatprep.subr.mxu0 0.0
      %10096 = vmatpush1.msra.mxu0 0.0
      %10097 = vmatprep.subr.mxu0 0.0
      %10098 = vmatpush1.msra.mxu0 0.0
      %10099 = vmatprep.subr.mxu0 0.0
      %10100 = vmatpush1.msra.mxu0 0.0
      %10101 = vmatprep.subr.mxu0 0.0
      %10102 = vmatpush1.msra.mxu0 0.0
      %10103 = vmatprep.subr.mxu0 0.0
      %10104 = vmatpush1.msra.mxu0 0.0
      %10105 = vmatprep.subr.mxu0 0.0
      %10106 = vmatpush1.msra.mxu0 %v1034
      %10107 = vmatprep.subr.mxu0 0.0
      %10108 = vmatpush1.msra.mxu0 %v1033
      %10109 = vmatprep.subr.mxu0 0.0
      %10110 = vmatpush1.msra.mxu0 %v1032
      %10111 = vmatprep.subr.mxu0 0.0
      %10112 = vmatpush1.msra.mxu0 %v1031
      %10113 = vmatprep.subr.mxu0 0.0
      %10114 = vmatpush2.msra.mxu0 0.0
      %10115 = vmatprep.subr.mxu0 0.0
      %10116 = vmatpush2.msra.mxu0 0.0
      %10117 = vmatprep.subr.mxu0 0.0
      %10118 = vmatpush2.msra.mxu0 0.0
      %10119 = vmatprep.subr.mxu0 0.0
      %10120 = vmatpush2.msra.mxu0 0.0
      %10121 = vmatprep.subr.mxu0 0.0
      %10122 = vmatpush2.msra.mxu0 0.0
      %10123 = vmatprep.subr.mxu0 0.0
      %10124 = vmatpush2.msra.mxu0 0.0
      %10125 = vmatprep.subr.mxu0 0.0
      %10126 = vmatpush2.msra.mxu0 0.0
      %10127 = vmatprep.subr.mxu0 0.0
      %10128 = vmatpush2.msra.mxu0 0.0
      %10129 = vmatprep.subr.mxu0 0.0
      %10130 = vmatpush2.msra.mxu0 0.0
      %10131 = vmatprep.subr.mxu0 0.0
      %10132 = vmatpush2.msra.mxu0 0.0
      %10133 = vmatprep.subr.mxu0 0.0
      %10134 = vmatpush2.msra.mxu0 0.0
      %10135 = vmatprep.subr.mxu0 0.0
      %10136 = vmatpush2.msra.mxu0 0.0
      %10137 = vmatprep.subr.mxu0 0.0
      %10138 = vmatpush2.msra.mxu0 0.0
      %10139 = vmatprep.subr.mxu0 0.0
      %10140 = vmatpush2.msra.mxu0 0.0
      %10141 = vmatprep.subr.mxu0 0.0
      %10142 = vmatpush2.msra.mxu0 0.0
      %10143 = vmatprep.subr.mxu0 0.0
      %10144 = vmatpush2.msra.mxu0 0.0
      %10145 = vmatprep.mubr.f32.mxu0 0.0
      %10146 = vmatmul.mubr.f32.gmra.mxu0 %v10070
      %v10147 = vpop.f32.mrf.mxu0
      %v10148 = vadd.f32 0.0, %v10147
      %v10149 = vpop.f32.mrf.mxu0
      %10150 = vmatprep.mubr.f32.mxu0 0.0
      %10151 = vmatmul.mubr.f32.gmra.mxu0 %v10073
      %v10152 = vpop.f32.mrf.mxu0
      %v10153 = vadd.f32 0.0, %v10152
      %v10154 = vpop.f32.mrf.mxu0
      %10155 = vmatprep.mubr.f32.mxu0 0.0
      %10156 = vmatmul.mubr.f32.gmra.mxu0 %v10076
      %v10157 = vpop.f32.mrf.mxu0
      %v10158 = vadd.f32 0.0, %v10157
      %v10159 = vpop.f32.mrf.mxu0
      %10160 = vmatprep.mubr.f32.mxu0 0.0
      %10161 = vmatmul.mubr.f32.gmra.mxu0 %v10079
      %v10162 = vpop.f32.mrf.mxu0
      %v10163 = vadd.f32 0.0, %v10162
      %v10164 = vpop.f32.mrf.mxu0
      %10165 = vdwg.mxu0
      %v10166 = vadd.f32 %v10065, %v10148
      %v10167 = vadd.f32 %v10066, %v10153
      %v10168 = vadd.f32 %v10067, %v10158
      %v10169 = vadd.f32 %v10068, %v10163
      %v10170 = vld [vmem:[%s18] sm:$0xff]
      %v10171 = vld [vmem:[%s18 + $0x8] sm:$0xff]
      %v10172 = vld [vmem:[%s18 + $0x10] sm:$0xff]
      %v10173 = vld [vmem:[%s18 + $0x18] sm:$0xff]
      %10175 = vset.pattern.permute.xlu0 0
      %10176 = vperm.xlu0 %10175, %v10170
      %v10177 = vpop.permute.xlu0 %10176
      %10180 = vset.pattern.permute.xlu0 0
      %10181 = vperm.xlu0 %10180, %v10171
      %v10182 = vpop.permute.xlu0 %10181
      %10185 = vset.pattern.permute.xlu0 0
      %10186 = vperm.xlu0 %10185, %v10172
      %v10187 = vpop.permute.xlu0 %10186
      %10190 = vset.pattern.permute.xlu0 0
      %10191 = vperm.xlu0 %10190, %v10173
      %v10192 = vpop.permute.xlu0 %10191
      %v10194 = vadd.f32 %v10166, %v10177
      %v10195 = vadd.f32 %v10167, %v10182
      %v10196 = vadd.f32 %v10168, %v10187
      %v10197 = vadd.f32 %v10169, %v10192
      %v10198 = vmax.f32 %v10194, 0.0
      %v10199 = vmax.f32 %v10195, 0.0
      %v10200 = vmax.f32 %v10196, 0.0
      %v10201 = vmax.f32 %v10197, 0.0
      %s10202 = scalar_lea.vmem %s18, 32
      %v10203 = vld [vmem:[%s10202] sm:$0xff]
      %v10204 = vld [vmem:[%s10202 + $0x8] sm:$0xff]
      %v10205 = vld [vmem:[%s10202 + $0x10] sm:$0xff]
      %v10206 = vld [vmem:[%s10202 + $0x18] sm:$0xff]
      %10208 = vset.pattern.permute.xlu0 0
      %10209 = vperm.xlu0 %10208, %v10203
      %v10210 = vpop.permute.xlu0 %10209
      %10213 = vset.pattern.permute.xlu0 0
      %10214 = vperm.xlu0 %10213, %v10204
      %v10215 = vpop.permute.xlu0 %10214
      %10218 = vset.pattern.permute.xlu0 0
      %10219 = vperm.xlu0 %10218, %v10205
      %v10220 = vpop.permute.xlu0 %10219
      %10223 = vset.pattern.permute.xlu0 0
      %10224 = vperm.xlu0 %10223, %v10206
      %v10225 = vpop.permute.xlu0 %10224
      %v10227 = vmul.f32 %v10198, %v10210
      %v10228 = vmul.f32 %v10199, %v10215
      %v10229 = vmul.f32 %v10200, %v10220
      %v10230 = vmul.f32 %v10201, %v10225
      %s10231 = scalar_lea.vmem %s18, 64
      %v10232 = vld [vmem:[%s10231] sm:$0xff]
      %v10233 = vld [vmem:[%s10231 + $0x8] sm:$0xff]
      %v10234 = vld [vmem:[%s10231 + $0x10] sm:$0xff]
      %v10235 = vld [vmem:[%s10231 + $0x18] sm:$0xff]
      %10237 = vset.pattern.permute.xlu0 0
      %10238 = vperm.xlu0 %10237, %v10232
      %v10239 = vpop.permute.xlu0 %10238
      %10242 = vset.pattern.permute.xlu0 0
      %10243 = vperm.xlu0 %10242, %v10233
      %v10244 = vpop.permute.xlu0 %10243
      %10247 = vset.pattern.permute.xlu0 0
      %10248 = vperm.xlu0 %10247, %v10234
      %v10249 = vpop.permute.xlu0 %10248
      %10252 = vset.pattern.permute.xlu0 0
      %10253 = vperm.xlu0 %10252, %v10235
      %v10254 = vpop.permute.xlu0 %10253
      %v10256 = vadd.f32 %v10227, %v10239
      %v10257 = vadd.f32 %v10228, %v10244
      %v10258 = vadd.f32 %v10229, %v10249
      %v10259 = vadd.f32 %v10230, %v10254
      %v10260 = vld [vmem:[%s19] sm:$0xff]
      %v10261 = vld [vmem:[%s19 + $0x8] sm:$0xff]
      %v10262 = vld [vmem:[%s19 + $0x10] sm:$0xff]
      %v10263 = vld [vmem:[%s19 + $0x18] sm:$0xff]
      %v10264 = vld [vmem:[%s19 + $0x20] sm:$0xff]
      %v10265 = vld [vmem:[%s19 + $0x28] sm:$0xff]
      %v10266 = vld [vmem:[%s19 + $0x30] sm:$0xff]
      %v10267 = vld [vmem:[%s19 + $0x38] sm:$0xff]
      %v10268 = vld [vmem:[%s19 + $0x40] sm:$0xff]
      %v10269 = vld [vmem:[%s19 + $0x48] sm:$0xff]
      %v10270 = vld [vmem:[%s19 + $0x50] sm:$0xff]
      %v10271 = vld [vmem:[%s19 + $0x58] sm:$0xff]
      %v10272 = vld [vmem:[%s19 + $0x60] sm:$0xff]
      %v10273 = vld [vmem:[%s19 + $0x68] sm:$0xff]
      %v10274 = vld [vmem:[%s19 + $0x70] sm:$0xff]
      %v10275 = vld [vmem:[%s19 + $0x78] sm:$0xff]
      %v10276 = vld [vmem:[%s19 + $0x80] sm:$0xff]
      %v10277 = vld [vmem:[%s19 + $0x88] sm:$0xff]
      %v10278 = vld [vmem:[%s19 + $0x90] sm:$0xff]
      %v10279 = vld [vmem:[%s19 + $0x98] sm:$0xff]
      %v10280 = vld [vmem:[%s19 + $0xa0] sm:$0xff]
      %v10281 = vld [vmem:[%s19 + $0xa8] sm:$0xff]
      %v10282 = vld [vmem:[%s19 + $0xb0] sm:$0xff]
      %v10283 = vld [vmem:[%s19 + $0xb8] sm:$0xff]
      %v10284 = vld [vmem:[%s19 + $0xc0] sm:$0xff]
      %v10285 = vld [vmem:[%s19 + $0xc8] sm:$0xff]
      %v10286 = vld [vmem:[%s19 + $0xd0] sm:$0xff]
      %v10287 = vld [vmem:[%s19 + $0xd8] sm:$0xff]
      %v10289 = vsel %vm4656, %v10260, 0
      %v10292 = vsel %vm4656, %v10261, 0
      %v10295 = vsel %vm4656, %v10262, 0
      %v10298 = vsel %vm4656, %v10263, 0
      %v10301 = vsel %vm4656, %v10264, 0
      %v10304 = vsel %vm4656, %v10265, 0
      %v10307 = vsel %vm4656, %v10266, 0
      %v10310 = vsel %vm4656, %v10267, 0
      %v10313 = vsel %vm4656, %v10268, 0
      %v10316 = vsel %vm4656, %v10269, 0
      %v10319 = vsel %vm4656, %v10270, 0
      %v10322 = vsel %vm4656, %v10271, 0
      %v10325 = vsel %vm4656, %v10272, 0
      %v10328 = vsel %vm4656, %v10273, 0
      %v10331 = vsel %vm4656, %v10274, 0
      %v10334 = vsel %vm4656, %v10275, 0
      %v10337 = vsel %vm4656, %v10276, 0
      %v10340 = vsel %vm4656, %v10277, 0
      %v10343 = vsel %vm4656, %v10278, 0
      %v10346 = vsel %vm4656, %v10279, 0
      %v10349 = vsel %vm4656, %v10280, 0
      %v10352 = vsel %vm4656, %v10281, 0
      %v10355 = vsel %vm4656, %v10282, 0
      %v10358 = vsel %vm4656, %v10283, 0
      %v10361 = vsel %vm4656, %v10284, 0
      %v10364 = vsel %vm4656, %v10285, 0
      %v10367 = vsel %vm4656, %v10286, 0
      %v10370 = vsel %vm4656, %v10287, 0
      %10372 = vmatprep.subr.mxu0 0.0
      %10373 = vmatpush1.msra.mxu0 0.0
      %10374 = vmatprep.subr.mxu0 0.0
      %10375 = vmatpush1.msra.mxu0 0.0
      %10376 = vmatprep.subr.mxu0 0.0
      %10377 = vmatpush1.msra.mxu0 0.0
      %10378 = vmatprep.subr.mxu0 0.0
      %10379 = vmatpush1.msra.mxu0 0.0
      %10380 = vmatprep.subr.mxu0 0.0
      %10381 = vmatpush1.msra.mxu0 0.0
      %10382 = vmatprep.subr.mxu0 0.0
      %10383 = vmatpush1.msra.mxu0 0.0
      %10384 = vmatprep.subr.mxu0 0.0
      %10385 = vmatpush1.msra.mxu0 0.0
      %10386 = vmatprep.subr.mxu0 0.0
      %10387 = vmatpush1.msra.mxu0 0.0
      %10388 = vmatprep.subr.mxu0 0.0
      %10389 = vmatpush1.msra.mxu0 0.0
      %10390 = vmatprep.subr.mxu0 0.0
      %10391 = vmatpush1.msra.mxu0 0.0
      %10392 = vmatprep.subr.mxu0 0.0
      %10393 = vmatpush1.msra.mxu0 0.0
      %10394 = vmatprep.subr.mxu0 0.0
      %10395 = vmatpush1.msra.mxu0 0.0
      %10396 = vmatprep.subr.mxu0 0.0
      %10397 = vmatpush1.msra.mxu0 %v10259
      %10398 = vmatprep.subr.mxu0 0.0
      %10399 = vmatpush1.msra.mxu0 %v10258
      %10400 = vmatprep.subr.mxu0 0.0
      %10401 = vmatpush1.msra.mxu0 %v10257
      %10402 = vmatprep.subr.mxu0 0.0
      %10403 = vmatpush1.msra.mxu0 %v10256
      %10404 = vmatprep.subr.mxu0 0.0
      %10405 = vmatpush2.msra.mxu0 0.0
      %10406 = vmatprep.subr.mxu0 0.0
      %10407 = vmatpush2.msra.mxu0 0.0
      %10408 = vmatprep.subr.mxu0 0.0
      %10409 = vmatpush2.msra.mxu0 0.0
      %10410 = vmatprep.subr.mxu0 0.0
      %10411 = vmatpush2.msra.mxu0 0.0
      %10412 = vmatprep.subr.mxu0 0.0
      %10413 = vmatpush2.msra.mxu0 0.0
      %10414 = vmatprep.subr.mxu0 0.0
      %10415 = vmatpush2.msra.mxu0 0.0
      %10416 = vmatprep.subr.mxu0 0.0
      %10417 = vmatpush2.msra.mxu0 0.0
      %10418 = vmatprep.subr.mxu0 0.0
      %10419 = vmatpush2.msra.mxu0 0.0
      %10420 = vmatprep.subr.mxu0 0.0
      %10421 = vmatpush2.msra.mxu0 0.0
      %10422 = vmatprep.subr.mxu0 0.0
      %10423 = vmatpush2.msra.mxu0 0.0
      %10424 = vmatprep.subr.mxu0 0.0
      %10425 = vmatpush2.msra.mxu0 0.0
      %10426 = vmatprep.subr.mxu0 0.0
      %10427 = vmatpush2.msra.mxu0 0.0
      %10428 = vmatprep.subr.mxu0 0.0
      %10429 = vmatpush2.msra.mxu0 0.0
      %10430 = vmatprep.subr.mxu0 0.0
      %10431 = vmatpush2.msra.mxu0 0.0
      %10432 = vmatprep.subr.mxu0 0.0
      %10433 = vmatpush2.msra.mxu0 0.0
      %10434 = vmatprep.subr.mxu0 0.0
      %10435 = vmatpush2.msra.mxu0 0.0
      %10436 = vmatprep.mubr.f32.mxu0 0.0
      %10437 = vmatmul.mubr.f32.gmra.mxu0 %v10289
      %v10438 = vpop.f32.mrf.mxu0
      %v10439 = vadd.f32 0.0, %v10438
      %v10440 = vpop.f32.mrf.mxu0
      %10441 = vmatprep.mubr.f32.mxu0 0.0
      %10442 = vmatmul.mubr.f32.gmra.mxu0 %v10292
      %v10443 = vpop.f32.mrf.mxu0
      %v10444 = vadd.f32 0.0, %v10443
      %v10445 = vpop.f32.mrf.mxu0
      %10446 = vmatprep.mubr.f32.mxu0 0.0
      %10447 = vmatmul.mubr.f32.gmra.mxu0 %v10295
      %v10448 = vpop.f32.mrf.mxu0
      %v10449 = vadd.f32 0.0, %v10448
      %v10450 = vpop.f32.mrf.mxu0
      %10451 = vmatprep.mubr.f32.mxu0 0.0
      %10452 = vmatmul.mubr.f32.gmra.mxu0 %v10298
      %v10453 = vpop.f32.mrf.mxu0
      %v10454 = vadd.f32 0.0, %v10453
      %v10455 = vpop.f32.mrf.mxu0
      %10456 = vmatprep.mubr.f32.mxu0 0.0
      %10457 = vmatmul.mubr.f32.gmra.mxu0 %v10301
      %v10458 = vpop.f32.mrf.mxu0
      %v10459 = vadd.f32 0.0, %v10458
      %v10460 = vpop.f32.mrf.mxu0
      %10461 = vmatprep.mubr.f32.mxu0 0.0
      %10462 = vmatmul.mubr.f32.gmra.mxu0 %v10304
      %v10463 = vpop.f32.mrf.mxu0
      %v10464 = vadd.f32 0.0, %v10463
      %v10465 = vpop.f32.mrf.mxu0
      %10466 = vmatprep.mubr.f32.mxu0 0.0
      %10467 = vmatmul.mubr.f32.gmra.mxu0 %v10307
      %v10468 = vpop.f32.mrf.mxu0
      %v10469 = vadd.f32 0.0, %v10468
      %v10470 = vpop.f32.mrf.mxu0
      %10471 = vmatprep.mubr.f32.mxu0 0.0
      %10472 = vmatmul.mubr.f32.gmra.mxu0 %v10310
      %v10473 = vpop.f32.mrf.mxu0
      %v10474 = vadd.f32 0.0, %v10473
      %v10475 = vpop.f32.mrf.mxu0
      %10476 = vmatprep.mubr.f32.mxu0 0.0
      %10477 = vmatmul.mubr.f32.gmra.mxu0 %v10313
      %v10478 = vpop.f32.mrf.mxu0
      %v10479 = vadd.f32 0.0, %v10478
      %v10480 = vpop.f32.mrf.mxu0
      %10481 = vmatprep.mubr.f32.mxu0 0.0
      %10482 = vmatmul.mubr.f32.gmra.mxu0 %v10316
      %v10483 = vpop.f32.mrf.mxu0
      %v10484 = vadd.f32 0.0, %v10483
      %v10485 = vpop.f32.mrf.mxu0
      %10486 = vmatprep.mubr.f32.mxu0 0.0
      %10487 = vmatmul.mubr.f32.gmra.mxu0 %v10319
      %v10488 = vpop.f32.mrf.mxu0
      %v10489 = vadd.f32 0.0, %v10488
      %v10490 = vpop.f32.mrf.mxu0
      %10491 = vmatprep.mubr.f32.mxu0 0.0
      %10492 = vmatmul.mubr.f32.gmra.mxu0 %v10322
      %v10493 = vpop.f32.mrf.mxu0
      %v10494 = vadd.f32 0.0, %v10493
      %v10495 = vpop.f32.mrf.mxu0
      %10496 = vmatprep.mubr.f32.mxu0 0.0
      %10497 = vmatmul.mubr.f32.gmra.mxu0 %v10325
      %v10498 = vpop.f32.mrf.mxu0
      %v10499 = vadd.f32 0.0, %v10498
      %v10500 = vpop.f32.mrf.mxu0
      %10501 = vmatprep.mubr.f32.mxu0 0.0
      %10502 = vmatmul.mubr.f32.gmra.mxu0 %v10328
      %v10503 = vpop.f32.mrf.mxu0
      %v10504 = vadd.f32 0.0, %v10503
      %v10505 = vpop.f32.mrf.mxu0
      %10506 = vmatprep.mubr.f32.mxu0 0.0
      %10507 = vmatmul.mubr.f32.gmra.mxu0 %v10331
      %v10508 = vpop.f32.mrf.mxu0
      %v10509 = vadd.f32 0.0, %v10508
      %v10510 = vpop.f32.mrf.mxu0
      %10511 = vmatprep.mubr.f32.mxu0 0.0
      %10512 = vmatmul.mubr.f32.gmra.mxu0 %v10334
      %v10513 = vpop.f32.mrf.mxu0
      %v10514 = vadd.f32 0.0, %v10513
      %v10515 = vpop.f32.mrf.mxu0
      %10516 = vmatprep.mubr.f32.mxu0 0.0
      %10517 = vmatmul.mubr.f32.gmra.mxu0 %v10337
      %v10518 = vpop.f32.mrf.mxu0
      %v10519 = vadd.f32 0.0, %v10518
      %v10520 = vpop.f32.mrf.mxu0
      %10521 = vmatprep.mubr.f32.mxu0 0.0
      %10522 = vmatmul.mubr.f32.gmra.mxu0 %v10340
      %v10523 = vpop.f32.mrf.mxu0
      %v10524 = vadd.f32 0.0, %v10523
      %v10525 = vpop.f32.mrf.mxu0
      %10526 = vmatprep.mubr.f32.mxu0 0.0
      %10527 = vmatmul.mubr.f32.gmra.mxu0 %v10343
      %v10528 = vpop.f32.mrf.mxu0
      %v10529 = vadd.f32 0.0, %v10528
      %v10530 = vpop.f32.mrf.mxu0
      %10531 = vmatprep.mubr.f32.mxu0 0.0
      %10532 = vmatmul.mubr.f32.gmra.mxu0 %v10346
      %v10533 = vpop.f32.mrf.mxu0
      %v10534 = vadd.f32 0.0, %v10533
      %v10535 = vpop.f32.mrf.mxu0
      %10536 = vmatprep.mubr.f32.mxu0 0.0
      %10537 = vmatmul.mubr.f32.gmra.mxu0 %v10349
      %v10538 = vpop.f32.mrf.mxu0
      %v10539 = vadd.f32 0.0, %v10538
      %v10540 = vpop.f32.mrf.mxu0
      %10541 = vmatprep.mubr.f32.mxu0 0.0
      %10542 = vmatmul.mubr.f32.gmra.mxu0 %v10352
      %v10543 = vpop.f32.mrf.mxu0
      %v10544 = vadd.f32 0.0, %v10543
      %v10545 = vpop.f32.mrf.mxu0
      %10546 = vmatprep.mubr.f32.mxu0 0.0
      %10547 = vmatmul.mubr.f32.gmra.mxu0 %v10355
      %v10548 = vpop.f32.mrf.mxu0
      %v10549 = vadd.f32 0.0, %v10548
      %v10550 = vpop.f32.mrf.mxu0
      %10551 = vmatprep.mubr.f32.mxu0 0.0
      %10552 = vmatmul.mubr.f32.gmra.mxu0 %v10358
      %v10553 = vpop.f32.mrf.mxu0
      %v10554 = vadd.f32 0.0, %v10553
      %v10555 = vpop.f32.mrf.mxu0
      %10556 = vmatprep.mubr.f32.mxu0 0.0
      %10557 = vmatmul.mubr.f32.gmra.mxu0 %v10361
      %v10558 = vpop.f32.mrf.mxu0
      %v10559 = vadd.f32 0.0, %v10558
      %v10560 = vpop.f32.mrf.mxu0
      %10561 = vmatprep.mubr.f32.mxu0 0.0
      %10562 = vmatmul.mubr.f32.gmra.mxu0 %v10364
      %v10563 = vpop.f32.mrf.mxu0
      %v10564 = vadd.f32 0.0, %v10563
      %v10565 = vpop.f32.mrf.mxu0
      %10566 = vmatprep.mubr.f32.mxu0 0.0
      %10567 = vmatmul.mubr.f32.gmra.mxu0 %v10367
      %v10568 = vpop.f32.mrf.mxu0
      %v10569 = vadd.f32 0.0, %v10568
      %v10570 = vpop.f32.mrf.mxu0
      %10571 = vmatprep.mubr.f32.mxu0 0.0
      %10572 = vmatmul.mubr.f32.gmra.mxu0 %v10370
      %v10573 = vpop.f32.mrf.mxu0
      %v10574 = vadd.f32 0.0, %v10573
      %v10575 = vpop.f32.mrf.mxu0
      %10576 = vdwg.mxu0
      %v10578 = vsel %vm4656, %v10459, 0
      %v10581 = vsel %vm4656, %v10464, 0
      %v10584 = vsel %vm4656, %v10469, 0
      %v10587 = vsel %vm4656, %v10474, 0
      %10589 = vmatprep.subr.mxu0 0.0
      %10590 = vmatpush1.msra.mxu0 0.0
      %10591 = vmatprep.subr.mxu0 0.0
      %10592 = vmatpush1.msra.mxu0 0.0
      %10593 = vmatprep.subr.mxu0 0.0
      %10594 = vmatpush1.msra.mxu0 0.0
      %10595 = vmatprep.subr.mxu0 0.0
      %10596 = vmatpush1.msra.mxu0 0.0
      %10597 = vmatprep.subr.mxu0 0.0
      %10598 = vmatpush1.msra.mxu0 0.0
      %10599 = vmatprep.subr.mxu0 0.0
      %10600 = vmatpush1.msra.mxu0 0.0
      %10601 = vmatprep.subr.mxu0 0.0
      %10602 = vmatpush1.msra.mxu0 0.0
      %10603 = vmatprep.subr.mxu0 0.0
      %10604 = vmatpush1.msra.mxu0 0.0
      %10605 = vmatprep.subr.mxu0 0.0
      %10606 = vmatpush1.msra.mxu0 0.0
      %10607 = vmatprep.subr.mxu0 0.0
      %10608 = vmatpush1.msra.mxu0 0.0
      %10609 = vmatprep.subr.mxu0 0.0
      %10610 = vmatpush1.msra.mxu0 0.0
      %10611 = vmatprep.subr.mxu0 0.0
      %10612 = vmatpush1.msra.mxu0 0.0
      %10613 = vmatprep.subr.mxu0 0.0
      %10614 = vmatpush1.msra.mxu0 %v790
      %10615 = vmatprep.subr.mxu0 0.0
      %10616 = vmatpush1.msra.mxu0 %v789
      %10617 = vmatprep.subr.mxu0 0.0
      %10618 = vmatpush1.msra.mxu0 %v788
      %10619 = vmatprep.subr.mxu0 0.0
      %10620 = vmatpush1.msra.mxu0 %v787
      %10621 = vmatprep.subr.mxu0 0.0
      %10622 = vmatpush2.msra.mxu0 0.0
      %10623 = vmatprep.subr.mxu0 0.0
      %10624 = vmatpush2.msra.mxu0 0.0
      %10625 = vmatprep.subr.mxu0 0.0
      %10626 = vmatpush2.msra.mxu0 0.0
      %10627 = vmatprep.subr.mxu0 0.0
      %10628 = vmatpush2.msra.mxu0 0.0
      %10629 = vmatprep.subr.mxu0 0.0
      %10630 = vmatpush2.msra.mxu0 0.0
      %10631 = vmatprep.subr.mxu0 0.0
      %10632 = vmatpush2.msra.mxu0 0.0
      %10633 = vmatprep.subr.mxu0 0.0
      %10634 = vmatpush2.msra.mxu0 0.0
      %10635 = vmatprep.subr.mxu0 0.0
      %10636 = vmatpush2.msra.mxu0 0.0
      %10637 = vmatprep.subr.mxu0 0.0
      %10638 = vmatpush2.msra.mxu0 0.0
      %10639 = vmatprep.subr.mxu0 0.0
      %10640 = vmatpush2.msra.mxu0 0.0
      %10641 = vmatprep.subr.mxu0 0.0
      %10642 = vmatpush2.msra.mxu0 0.0
      %10643 = vmatprep.subr.mxu0 0.0
      %10644 = vmatpush2.msra.mxu0 0.0
      %10645 = vmatprep.subr.mxu0 0.0
      %10646 = vmatpush2.msra.mxu0 0.0
      %10647 = vmatprep.subr.mxu0 0.0
      %10648 = vmatpush2.msra.mxu0 0.0
      %10649 = vmatprep.subr.mxu0 0.0
      %10650 = vmatpush2.msra.mxu0 0.0
      %10651 = vmatprep.subr.mxu0 0.0
      %10652 = vmatpush2.msra.mxu0 0.0
      %10653 = vmatprep.mubr.f32.mxu0 0.0
      %10654 = vmatmul.mubr.f32.gmra.mxu0 %v10578
      %v10655 = vpop.f32.mrf.mxu0
      %v10656 = vadd.f32 0.0, %v10655
      %v10657 = vpop.f32.mrf.mxu0
      %10658 = vmatprep.mubr.f32.mxu0 0.0
      %10659 = vmatmul.mubr.f32.gmra.mxu0 %v10581
      %v10660 = vpop.f32.mrf.mxu0
      %v10661 = vadd.f32 0.0, %v10660
      %v10662 = vpop.f32.mrf.mxu0
      %10663 = vmatprep.mubr.f32.mxu0 0.0
      %10664 = vmatmul.mubr.f32.gmra.mxu0 %v10584
      %v10665 = vpop.f32.mrf.mxu0
      %v10666 = vadd.f32 0.0, %v10665
      %v10667 = vpop.f32.mrf.mxu0
      %10668 = vmatprep.mubr.f32.mxu0 0.0
      %10669 = vmatmul.mubr.f32.gmra.mxu0 %v10587
      %v10670 = vpop.f32.mrf.mxu0
      %v10671 = vadd.f32 0.0, %v10670
      %v10672 = vpop.f32.mrf.mxu0
      %10673 = vdwg.mxu0
      %v10675 = vsel %vm4656, %v10439, 0
      %v10678 = vsel %vm4656, %v10444, 0
      %v10681 = vsel %vm4656, %v10449, 0
      %v10684 = vsel %vm4656, %v10454, 0
      %10686 = vmatprep.subr.mxu0 0.0
      %10687 = vmatpush1.msra.mxu0 0.0
      %10688 = vmatprep.subr.mxu0 0.0
      %10689 = vmatpush1.msra.mxu0 0.0
      %10690 = vmatprep.subr.mxu0 0.0
      %10691 = vmatpush1.msra.mxu0 0.0
      %10692 = vmatprep.subr.mxu0 0.0
      %10693 = vmatpush1.msra.mxu0 0.0
      %10694 = vmatprep.subr.mxu0 0.0
      %10695 = vmatpush1.msra.mxu0 0.0
      %10696 = vmatprep.subr.mxu0 0.0
      %10697 = vmatpush1.msra.mxu0 0.0
      %10698 = vmatprep.subr.mxu0 0.0
      %10699 = vmatpush1.msra.mxu0 0.0
      %10700 = vmatprep.subr.mxu0 0.0
      %10701 = vmatpush1.msra.mxu0 0.0
      %10702 = vmatprep.subr.mxu0 0.0
      %10703 = vmatpush1.msra.mxu0 0.0
      %10704 = vmatprep.subr.mxu0 0.0
      %10705 = vmatpush1.msra.mxu0 0.0
      %10706 = vmatprep.subr.mxu0 0.0
      %10707 = vmatpush1.msra.mxu0 0.0
      %10708 = vmatprep.subr.mxu0 0.0
      %10709 = vmatpush1.msra.mxu0 0.0
      %10710 = vmatprep.subr.mxu0 0.0
      %10711 = vmatpush1.msra.mxu0 %v741
      %10712 = vmatprep.subr.mxu0 0.0
      %10713 = vmatpush1.msra.mxu0 %v740
      %10714 = vmatprep.subr.mxu0 0.0
      %10715 = vmatpush1.msra.mxu0 %v739
      %10716 = vmatprep.subr.mxu0 0.0
      %10717 = vmatpush1.msra.mxu0 %v738
      %10718 = vmatprep.subr.mxu0 0.0
      %10719 = vmatpush2.msra.mxu0 0.0
      %10720 = vmatprep.subr.mxu0 0.0
      %10721 = vmatpush2.msra.mxu0 0.0
      %10722 = vmatprep.subr.mxu0 0.0
      %10723 = vmatpush2.msra.mxu0 0.0
      %10724 = vmatprep.subr.mxu0 0.0
      %10725 = vmatpush2.msra.mxu0 0.0
      %10726 = vmatprep.subr.mxu0 0.0
      %10727 = vmatpush2.msra.mxu0 0.0
      %10728 = vmatprep.subr.mxu0 0.0
      %10729 = vmatpush2.msra.mxu0 0.0
      %10730 = vmatprep.subr.mxu0 0.0
      %10731 = vmatpush2.msra.mxu0 0.0
      %10732 = vmatprep.subr.mxu0 0.0
      %10733 = vmatpush2.msra.mxu0 0.0
      %10734 = vmatprep.subr.mxu0 0.0
      %10735 = vmatpush2.msra.mxu0 0.0
      %10736 = vmatprep.subr.mxu0 0.0
      %10737 = vmatpush2.msra.mxu0 0.0
      %10738 = vmatprep.subr.mxu0 0.0
      %10739 = vmatpush2.msra.mxu0 0.0
      %10740 = vmatprep.subr.mxu0 0.0
      %10741 = vmatpush2.msra.mxu0 0.0
      %10742 = vmatprep.subr.mxu0 0.0
      %10743 = vmatpush2.msra.mxu0 0.0
      %10744 = vmatprep.subr.mxu0 0.0
      %10745 = vmatpush2.msra.mxu0 0.0
      %10746 = vmatprep.subr.mxu0 0.0
      %10747 = vmatpush2.msra.mxu0 0.0
      %10748 = vmatprep.subr.mxu0 0.0
      %10749 = vmatpush2.msra.mxu0 0.0
      %10750 = vmatprep.mubr.f32.mxu0 0.0
      %10751 = vmatmul.mubr.f32.gmra.mxu0 %v10675
      %v10752 = vpop.f32.mrf.mxu0
      %v10753 = vadd.f32 %v10656, %v10752
      %v10754 = vpop.f32.mrf.mxu0
      %10755 = vmatprep.mubr.f32.mxu0 0.0
      %10756 = vmatmul.mubr.f32.gmra.mxu0 %v10678
      %v10757 = vpop.f32.mrf.mxu0
      %v10758 = vadd.f32 %v10661, %v10757
      %v10759 = vpop.f32.mrf.mxu0
      %10760 = vmatprep.mubr.f32.mxu0 0.0
      %10761 = vmatmul.mubr.f32.gmra.mxu0 %v10681
      %v10762 = vpop.f32.mrf.mxu0
      %v10763 = vadd.f32 %v10666, %v10762
      %v10764 = vpop.f32.mrf.mxu0
      %10765 = vmatprep.mubr.f32.mxu0 0.0
      %10766 = vmatmul.mubr.f32.gmra.mxu0 %v10684
      %v10767 = vpop.f32.mrf.mxu0
      %v10768 = vadd.f32 %v10671, %v10767
      %v10769 = vpop.f32.mrf.mxu0
      %10770 = vdwg.mxu0
      %v10772 = vsel %vm4656, %v10479, 0
      %v10775 = vsel %vm4656, %v10484, 0
      %v10778 = vsel %vm4656, %v10489, 0
      %v10781 = vsel %vm4656, %v10494, 0
      %10783 = vmatprep.subr.mxu0 0.0
      %10784 = vmatpush1.msra.mxu0 0.0
      %10785 = vmatprep.subr.mxu0 0.0
      %10786 = vmatpush1.msra.mxu0 0.0
      %10787 = vmatprep.subr.mxu0 0.0
      %10788 = vmatpush1.msra.mxu0 0.0
      %10789 = vmatprep.subr.mxu0 0.0
      %10790 = vmatpush1.msra.mxu0 0.0
      %10791 = vmatprep.subr.mxu0 0.0
      %10792 = vmatpush1.msra.mxu0 0.0
      %10793 = vmatprep.subr.mxu0 0.0
      %10794 = vmatpush1.msra.mxu0 0.0
      %10795 = vmatprep.subr.mxu0 0.0
      %10796 = vmatpush1.msra.mxu0 0.0
      %10797 = vmatprep.subr.mxu0 0.0
      %10798 = vmatpush1.msra.mxu0 0.0
      %10799 = vmatprep.subr.mxu0 0.0
      %10800 = vmatpush1.msra.mxu0 0.0
      %10801 = vmatprep.subr.mxu0 0.0
      %10802 = vmatpush1.msra.mxu0 0.0
      %10803 = vmatprep.subr.mxu0 0.0
      %10804 = vmatpush1.msra.mxu0 0.0
      %10805 = vmatprep.subr.mxu0 0.0
      %10806 = vmatpush1.msra.mxu0 0.0
      %10807 = vmatprep.subr.mxu0 0.0
      %10808 = vmatpush1.msra.mxu0 %v839
      %10809 = vmatprep.subr.mxu0 0.0
      %10810 = vmatpush1.msra.mxu0 %v838
      %10811 = vmatprep.subr.mxu0 0.0
      %10812 = vmatpush1.msra.mxu0 %v837
      %10813 = vmatprep.subr.mxu0 0.0
      %10814 = vmatpush1.msra.mxu0 %v836
      %10815 = vmatprep.subr.mxu0 0.0
      %10816 = vmatpush2.msra.mxu0 0.0
      %10817 = vmatprep.subr.mxu0 0.0
      %10818 = vmatpush2.msra.mxu0 0.0
      %10819 = vmatprep.subr.mxu0 0.0
      %10820 = vmatpush2.msra.mxu0 0.0
      %10821 = vmatprep.subr.mxu0 0.0
      %10822 = vmatpush2.msra.mxu0 0.0
      %10823 = vmatprep.subr.mxu0 0.0
      %10824 = vmatpush2.msra.mxu0 0.0
      %10825 = vmatprep.subr.mxu0 0.0
      %10826 = vmatpush2.msra.mxu0 0.0
      %10827 = vmatprep.subr.mxu0 0.0
      %10828 = vmatpush2.msra.mxu0 0.0
      %10829 = vmatprep.subr.mxu0 0.0
      %10830 = vmatpush2.msra.mxu0 0.0
      %10831 = vmatprep.subr.mxu0 0.0
      %10832 = vmatpush2.msra.mxu0 0.0
      %10833 = vmatprep.subr.mxu0 0.0
      %10834 = vmatpush2.msra.mxu0 0.0
      %10835 = vmatprep.subr.mxu0 0.0
      %10836 = vmatpush2.msra.mxu0 0.0
      %10837 = vmatprep.subr.mxu0 0.0
      %10838 = vmatpush2.msra.mxu0 0.0
      %10839 = vmatprep.subr.mxu0 0.0
      %10840 = vmatpush2.msra.mxu0 0.0
      %10841 = vmatprep.subr.mxu0 0.0
      %10842 = vmatpush2.msra.mxu0 0.0
      %10843 = vmatprep.subr.mxu0 0.0
      %10844 = vmatpush2.msra.mxu0 0.0
      %10845 = vmatprep.subr.mxu0 0.0
      %10846 = vmatpush2.msra.mxu0 0.0
      %10847 = vmatprep.mubr.f32.mxu0 0.0
      %10848 = vmatmul.mubr.f32.gmra.mxu0 %v10772
      %v10849 = vpop.f32.mrf.mxu0
      %v10850 = vadd.f32 0.0, %v10849
      %v10851 = vpop.f32.mrf.mxu0
      %10852 = vmatprep.mubr.f32.mxu0 0.0
      %10853 = vmatmul.mubr.f32.gmra.mxu0 %v10775
      %v10854 = vpop.f32.mrf.mxu0
      %v10855 = vadd.f32 0.0, %v10854
      %v10856 = vpop.f32.mrf.mxu0
      %10857 = vmatprep.mubr.f32.mxu0 0.0
      %10858 = vmatmul.mubr.f32.gmra.mxu0 %v10778
      %v10859 = vpop.f32.mrf.mxu0
      %v10860 = vadd.f32 0.0, %v10859
      %v10861 = vpop.f32.mrf.mxu0
      %10862 = vmatprep.mubr.f32.mxu0 0.0
      %10863 = vmatmul.mubr.f32.gmra.mxu0 %v10781
      %v10864 = vpop.f32.mrf.mxu0
      %v10865 = vadd.f32 0.0, %v10864
      %v10866 = vpop.f32.mrf.mxu0
      %10867 = vdwg.mxu0
      %v10868 = vadd.f32 %v10753, %v10850
      %v10869 = vadd.f32 %v10758, %v10855
      %v10870 = vadd.f32 %v10763, %v10860
      %v10871 = vadd.f32 %v10768, %v10865
      %v10873 = vsel %vm4656, %v10499, 0
      %v10876 = vsel %vm4656, %v10504, 0
      %v10879 = vsel %vm4656, %v10509, 0
      %v10882 = vsel %vm4656, %v10514, 0
      %10884 = vmatprep.subr.mxu0 0.0
      %10885 = vmatpush1.msra.mxu0 0.0
      %10886 = vmatprep.subr.mxu0 0.0
      %10887 = vmatpush1.msra.mxu0 0.0
      %10888 = vmatprep.subr.mxu0 0.0
      %10889 = vmatpush1.msra.mxu0 0.0
      %10890 = vmatprep.subr.mxu0 0.0
      %10891 = vmatpush1.msra.mxu0 0.0
      %10892 = vmatprep.subr.mxu0 0.0
      %10893 = vmatpush1.msra.mxu0 0.0
      %10894 = vmatprep.subr.mxu0 0.0
      %10895 = vmatpush1.msra.mxu0 0.0
      %10896 = vmatprep.subr.mxu0 0.0
      %10897 = vmatpush1.msra.mxu0 0.0
      %10898 = vmatprep.subr.mxu0 0.0
      %10899 = vmatpush1.msra.mxu0 0.0
      %10900 = vmatprep.subr.mxu0 0.0
      %10901 = vmatpush1.msra.mxu0 0.0
      %10902 = vmatprep.subr.mxu0 0.0
      %10903 = vmatpush1.msra.mxu0 0.0
      %10904 = vmatprep.subr.mxu0 0.0
      %10905 = vmatpush1.msra.mxu0 0.0
      %10906 = vmatprep.subr.mxu0 0.0
      %10907 = vmatpush1.msra.mxu0 0.0
      %10908 = vmatprep.subr.mxu0 0.0
      %10909 = vmatpush1.msra.mxu0 %v887
      %10910 = vmatprep.subr.mxu0 0.0
      %10911 = vmatpush1.msra.mxu0 %v886
      %10912 = vmatprep.subr.mxu0 0.0
      %10913 = vmatpush1.msra.mxu0 %v885
      %10914 = vmatprep.subr.mxu0 0.0
      %10915 = vmatpush1.msra.mxu0 %v884
      %10916 = vmatprep.subr.mxu0 0.0
      %10917 = vmatpush2.msra.mxu0 0.0
      %10918 = vmatprep.subr.mxu0 0.0
      %10919 = vmatpush2.msra.mxu0 0.0
      %10920 = vmatprep.subr.mxu0 0.0
      %10921 = vmatpush2.msra.mxu0 0.0
      %10922 = vmatprep.subr.mxu0 0.0
      %10923 = vmatpush2.msra.mxu0 0.0
      %10924 = vmatprep.subr.mxu0 0.0
      %10925 = vmatpush2.msra.mxu0 0.0
      %10926 = vmatprep.subr.mxu0 0.0
      %10927 = vmatpush2.msra.mxu0 0.0
      %10928 = vmatprep.subr.mxu0 0.0
      %10929 = vmatpush2.msra.mxu0 0.0
      %10930 = vmatprep.subr.mxu0 0.0
      %10931 = vmatpush2.msra.mxu0 0.0
      %10932 = vmatprep.subr.mxu0 0.0
      %10933 = vmatpush2.msra.mxu0 0.0
      %10934 = vmatprep.subr.mxu0 0.0
      %10935 = vmatpush2.msra.mxu0 0.0
      %10936 = vmatprep.subr.mxu0 0.0
      %10937 = vmatpush2.msra.mxu0 0.0
      %10938 = vmatprep.subr.mxu0 0.0
      %10939 = vmatpush2.msra.mxu0 0.0
      %10940 = vmatprep.subr.mxu0 0.0
      %10941 = vmatpush2.msra.mxu0 0.0
      %10942 = vmatprep.subr.mxu0 0.0
      %10943 = vmatpush2.msra.mxu0 0.0
      %10944 = vmatprep.subr.mxu0 0.0
      %10945 = vmatpush2.msra.mxu0 0.0
      %10946 = vmatprep.subr.mxu0 0.0
      %10947 = vmatpush2.msra.mxu0 0.0
      %10948 = vmatprep.mubr.f32.mxu0 0.0
      %10949 = vmatmul.mubr.f32.gmra.mxu0 %v10873
      %v10950 = vpop.f32.mrf.mxu0
      %v10951 = vadd.f32 0.0, %v10950
      %v10952 = vpop.f32.mrf.mxu0
      %10953 = vmatprep.mubr.f32.mxu0 0.0
      %10954 = vmatmul.mubr.f32.gmra.mxu0 %v10876
      %v10955 = vpop.f32.mrf.mxu0
      %v10956 = vadd.f32 0.0, %v10955
      %v10957 = vpop.f32.mrf.mxu0
      %10958 = vmatprep.mubr.f32.mxu0 0.0
      %10959 = vmatmul.mubr.f32.gmra.mxu0 %v10879
      %v10960 = vpop.f32.mrf.mxu0
      %v10961 = vadd.f32 0.0, %v10960
      %v10962 = vpop.f32.mrf.mxu0
      %10963 = vmatprep.mubr.f32.mxu0 0.0
      %10964 = vmatmul.mubr.f32.gmra.mxu0 %v10882
      %v10965 = vpop.f32.mrf.mxu0
      %v10966 = vadd.f32 0.0, %v10965
      %v10967 = vpop.f32.mrf.mxu0
      %10968 = vdwg.mxu0
      %v10969 = vadd.f32 %v10868, %v10951
      %v10970 = vadd.f32 %v10869, %v10956
      %v10971 = vadd.f32 %v10870, %v10961
      %v10972 = vadd.f32 %v10871, %v10966
      %v10974 = vsel %vm4656, %v10519, 0
      %v10977 = vsel %vm4656, %v10524, 0
      %v10980 = vsel %vm4656, %v10529, 0
      %v10983 = vsel %vm4656, %v10534, 0
      %10985 = vmatprep.subr.mxu0 0.0
      %10986 = vmatpush1.msra.mxu0 0.0
      %10987 = vmatprep.subr.mxu0 0.0
      %10988 = vmatpush1.msra.mxu0 0.0
      %10989 = vmatprep.subr.mxu0 0.0
      %10990 = vmatpush1.msra.mxu0 0.0
      %10991 = vmatprep.subr.mxu0 0.0
      %10992 = vmatpush1.msra.mxu0 0.0
      %10993 = vmatprep.subr.mxu0 0.0
      %10994 = vmatpush1.msra.mxu0 0.0
      %10995 = vmatprep.subr.mxu0 0.0
      %10996 = vmatpush1.msra.mxu0 0.0
      %10997 = vmatprep.subr.mxu0 0.0
      %10998 = vmatpush1.msra.mxu0 0.0
      %10999 = vmatprep.subr.mxu0 0.0
      %11000 = vmatpush1.msra.mxu0 0.0
      %11001 = vmatprep.subr.mxu0 0.0
      %11002 = vmatpush1.msra.mxu0 0.0
      %11003 = vmatprep.subr.mxu0 0.0
      %11004 = vmatpush1.msra.mxu0 0.0
      %11005 = vmatprep.subr.mxu0 0.0
      %11006 = vmatpush1.msra.mxu0 0.0
      %11007 = vmatprep.subr.mxu0 0.0
      %11008 = vmatpush1.msra.mxu0 0.0
      %11009 = vmatprep.subr.mxu0 0.0
      %11010 = vmatpush1.msra.mxu0 %v936
      %11011 = vmatprep.subr.mxu0 0.0
      %11012 = vmatpush1.msra.mxu0 %v935
      %11013 = vmatprep.subr.mxu0 0.0
      %11014 = vmatpush1.msra.mxu0 %v934
      %11015 = vmatprep.subr.mxu0 0.0
      %11016 = vmatpush1.msra.mxu0 %v933
      %11017 = vmatprep.subr.mxu0 0.0
      %11018 = vmatpush2.msra.mxu0 0.0
      %11019 = vmatprep.subr.mxu0 0.0
      %11020 = vmatpush2.msra.mxu0 0.0
      %11021 = vmatprep.subr.mxu0 0.0
      %11022 = vmatpush2.msra.mxu0 0.0
      %11023 = vmatprep.subr.mxu0 0.0
      %11024 = vmatpush2.msra.mxu0 0.0
      %11025 = vmatprep.subr.mxu0 0.0
      %11026 = vmatpush2.msra.mxu0 0.0
      %11027 = vmatprep.subr.mxu0 0.0
      %11028 = vmatpush2.msra.mxu0 0.0
      %11029 = vmatprep.subr.mxu0 0.0
      %11030 = vmatpush2.msra.mxu0 0.0
      %11031 = vmatprep.subr.mxu0 0.0
      %11032 = vmatpush2.msra.mxu0 0.0
      %11033 = vmatprep.subr.mxu0 0.0
      %11034 = vmatpush2.msra.mxu0 0.0
      %11035 = vmatprep.subr.mxu0 0.0
      %11036 = vmatpush2.msra.mxu0 0.0
      %11037 = vmatprep.subr.mxu0 0.0
      %11038 = vmatpush2.msra.mxu0 0.0
      %11039 = vmatprep.subr.mxu0 0.0
      %11040 = vmatpush2.msra.mxu0 0.0
      %11041 = vmatprep.subr.mxu0 0.0
      %11042 = vmatpush2.msra.mxu0 0.0
      %11043 = vmatprep.subr.mxu0 0.0
      %11044 = vmatpush2.msra.mxu0 0.0
      %11045 = vmatprep.subr.mxu0 0.0
      %11046 = vmatpush2.msra.mxu0 0.0
      %11047 = vmatprep.subr.mxu0 0.0
      %11048 = vmatpush2.msra.mxu0 0.0
      %11049 = vmatprep.mubr.f32.mxu0 0.0
      %11050 = vmatmul.mubr.f32.gmra.mxu0 %v10974
      %v11051 = vpop.f32.mrf.mxu0
      %v11052 = vadd.f32 0.0, %v11051
      %v11053 = vpop.f32.mrf.mxu0
      %11054 = vmatprep.mubr.f32.mxu0 0.0
      %11055 = vmatmul.mubr.f32.gmra.mxu0 %v10977
      %v11056 = vpop.f32.mrf.mxu0
      %v11057 = vadd.f32 0.0, %v11056
      %v11058 = vpop.f32.mrf.mxu0
      %11059 = vmatprep.mubr.f32.mxu0 0.0
      %11060 = vmatmul.mubr.f32.gmra.mxu0 %v10980
      %v11061 = vpop.f32.mrf.mxu0
      %v11062 = vadd.f32 0.0, %v11061
      %v11063 = vpop.f32.mrf.mxu0
      %11064 = vmatprep.mubr.f32.mxu0 0.0
      %11065 = vmatmul.mubr.f32.gmra.mxu0 %v10983
      %v11066 = vpop.f32.mrf.mxu0
      %v11067 = vadd.f32 0.0, %v11066
      %v11068 = vpop.f32.mrf.mxu0
      %11069 = vdwg.mxu0
      %v11070 = vadd.f32 %v10969, %v11052
      %v11071 = vadd.f32 %v10970, %v11057
      %v11072 = vadd.f32 %v10971, %v11062
      %v11073 = vadd.f32 %v10972, %v11067
      %v11075 = vsel %vm4656, %v10539, 0
      %v11078 = vsel %vm4656, %v10544, 0
      %v11081 = vsel %vm4656, %v10549, 0
      %v11084 = vsel %vm4656, %v10554, 0
      %11086 = vmatprep.subr.mxu0 0.0
      %11087 = vmatpush1.msra.mxu0 0.0
      %11088 = vmatprep.subr.mxu0 0.0
      %11089 = vmatpush1.msra.mxu0 0.0
      %11090 = vmatprep.subr.mxu0 0.0
      %11091 = vmatpush1.msra.mxu0 0.0
      %11092 = vmatprep.subr.mxu0 0.0
      %11093 = vmatpush1.msra.mxu0 0.0
      %11094 = vmatprep.subr.mxu0 0.0
      %11095 = vmatpush1.msra.mxu0 0.0
      %11096 = vmatprep.subr.mxu0 0.0
      %11097 = vmatpush1.msra.mxu0 0.0
      %11098 = vmatprep.subr.mxu0 0.0
      %11099 = vmatpush1.msra.mxu0 0.0
      %11100 = vmatprep.subr.mxu0 0.0
      %11101 = vmatpush1.msra.mxu0 0.0
      %11102 = vmatprep.subr.mxu0 0.0
      %11103 = vmatpush1.msra.mxu0 0.0
      %11104 = vmatprep.subr.mxu0 0.0
      %11105 = vmatpush1.msra.mxu0 0.0
      %11106 = vmatprep.subr.mxu0 0.0
      %11107 = vmatpush1.msra.mxu0 0.0
      %11108 = vmatprep.subr.mxu0 0.0
      %11109 = vmatpush1.msra.mxu0 0.0
      %11110 = vmatprep.subr.mxu0 0.0
      %11111 = vmatpush1.msra.mxu0 %v985
      %11112 = vmatprep.subr.mxu0 0.0
      %11113 = vmatpush1.msra.mxu0 %v984
      %11114 = vmatprep.subr.mxu0 0.0
      %11115 = vmatpush1.msra.mxu0 %v983
      %11116 = vmatprep.subr.mxu0 0.0
      %11117 = vmatpush1.msra.mxu0 %v982
      %11118 = vmatprep.subr.mxu0 0.0
      %11119 = vmatpush2.msra.mxu0 0.0
      %11120 = vmatprep.subr.mxu0 0.0
      %11121 = vmatpush2.msra.mxu0 0.0
      %11122 = vmatprep.subr.mxu0 0.0
      %11123 = vmatpush2.msra.mxu0 0.0
      %11124 = vmatprep.subr.mxu0 0.0
      %11125 = vmatpush2.msra.mxu0 0.0
      %11126 = vmatprep.subr.mxu0 0.0
      %11127 = vmatpush2.msra.mxu0 0.0
      %11128 = vmatprep.subr.mxu0 0.0
      %11129 = vmatpush2.msra.mxu0 0.0
      %11130 = vmatprep.subr.mxu0 0.0
      %11131 = vmatpush2.msra.mxu0 0.0
      %11132 = vmatprep.subr.mxu0 0.0
      %11133 = vmatpush2.msra.mxu0 0.0
      %11134 = vmatprep.subr.mxu0 0.0
      %11135 = vmatpush2.msra.mxu0 0.0
      %11136 = vmatprep.subr.mxu0 0.0
      %11137 = vmatpush2.msra.mxu0 0.0
      %11138 = vmatprep.subr.mxu0 0.0
      %11139 = vmatpush2.msra.mxu0 0.0
      %11140 = vmatprep.subr.mxu0 0.0
      %11141 = vmatpush2.msra.mxu0 0.0
      %11142 = vmatprep.subr.mxu0 0.0
      %11143 = vmatpush2.msra.mxu0 0.0
      %11144 = vmatprep.subr.mxu0 0.0
      %11145 = vmatpush2.msra.mxu0 0.0
      %11146 = vmatprep.subr.mxu0 0.0
      %11147 = vmatpush2.msra.mxu0 0.0
      %11148 = vmatprep.subr.mxu0 0.0
      %11149 = vmatpush2.msra.mxu0 0.0
      %11150 = vmatprep.mubr.f32.mxu0 0.0
      %11151 = vmatmul.mubr.f32.gmra.mxu0 %v11075
      %v11152 = vpop.f32.mrf.mxu0
      %v11153 = vadd.f32 0.0, %v11152
      %v11154 = vpop.f32.mrf.mxu0
      %11155 = vmatprep.mubr.f32.mxu0 0.0
      %11156 = vmatmul.mubr.f32.gmra.mxu0 %v11078
      %v11157 = vpop.f32.mrf.mxu0
      %v11158 = vadd.f32 0.0, %v11157
      %v11159 = vpop.f32.mrf.mxu0
      %11160 = vmatprep.mubr.f32.mxu0 0.0
      %11161 = vmatmul.mubr.f32.gmra.mxu0 %v11081
      %v11162 = vpop.f32.mrf.mxu0
      %v11163 = vadd.f32 0.0, %v11162
      %v11164 = vpop.f32.mrf.mxu0
      %11165 = vmatprep.mubr.f32.mxu0 0.0
      %11166 = vmatmul.mubr.f32.gmra.mxu0 %v11084
      %v11167 = vpop.f32.mrf.mxu0
      %v11168 = vadd.f32 0.0, %v11167
      %v11169 = vpop.f32.mrf.mxu0
      %11170 = vdwg.mxu0
      %v11171 = vadd.f32 %v11070, %v11153
      %v11172 = vadd.f32 %v11071, %v11158
      %v11173 = vadd.f32 %v11072, %v11163
      %v11174 = vadd.f32 %v11073, %v11168
      %v11176 = vsel %vm4656, %v10559, 0
      %v11179 = vsel %vm4656, %v10564, 0
      %v11182 = vsel %vm4656, %v10569, 0
      %v11185 = vsel %vm4656, %v10574, 0
      %11187 = vmatprep.subr.mxu0 0.0
      %11188 = vmatpush1.msra.mxu0 0.0
      %11189 = vmatprep.subr.mxu0 0.0
      %11190 = vmatpush1.msra.mxu0 0.0
      %11191 = vmatprep.subr.mxu0 0.0
      %11192 = vmatpush1.msra.mxu0 0.0
      %11193 = vmatprep.subr.mxu0 0.0
      %11194 = vmatpush1.msra.mxu0 0.0
      %11195 = vmatprep.subr.mxu0 0.0
      %11196 = vmatpush1.msra.mxu0 0.0
      %11197 = vmatprep.subr.mxu0 0.0
      %11198 = vmatpush1.msra.mxu0 0.0
      %11199 = vmatprep.subr.mxu0 0.0
      %11200 = vmatpush1.msra.mxu0 0.0
      %11201 = vmatprep.subr.mxu0 0.0
      %11202 = vmatpush1.msra.mxu0 0.0
      %11203 = vmatprep.subr.mxu0 0.0
      %11204 = vmatpush1.msra.mxu0 0.0
      %11205 = vmatprep.subr.mxu0 0.0
      %11206 = vmatpush1.msra.mxu0 0.0
      %11207 = vmatprep.subr.mxu0 0.0
      %11208 = vmatpush1.msra.mxu0 0.0
      %11209 = vmatprep.subr.mxu0 0.0
      %11210 = vmatpush1.msra.mxu0 0.0
      %11211 = vmatprep.subr.mxu0 0.0
      %11212 = vmatpush1.msra.mxu0 %v1034
      %11213 = vmatprep.subr.mxu0 0.0
      %11214 = vmatpush1.msra.mxu0 %v1033
      %11215 = vmatprep.subr.mxu0 0.0
      %11216 = vmatpush1.msra.mxu0 %v1032
      %11217 = vmatprep.subr.mxu0 0.0
      %11218 = vmatpush1.msra.mxu0 %v1031
      %11219 = vmatprep.subr.mxu0 0.0
      %11220 = vmatpush2.msra.mxu0 0.0
      %11221 = vmatprep.subr.mxu0 0.0
      %11222 = vmatpush2.msra.mxu0 0.0
      %11223 = vmatprep.subr.mxu0 0.0
      %11224 = vmatpush2.msra.mxu0 0.0
      %11225 = vmatprep.subr.mxu0 0.0
      %11226 = vmatpush2.msra.mxu0 0.0
      %11227 = vmatprep.subr.mxu0 0.0
      %11228 = vmatpush2.msra.mxu0 0.0
      %11229 = vmatprep.subr.mxu0 0.0
      %11230 = vmatpush2.msra.mxu0 0.0
      %11231 = vmatprep.subr.mxu0 0.0
      %11232 = vmatpush2.msra.mxu0 0.0
      %11233 = vmatprep.subr.mxu0 0.0
      %11234 = vmatpush2.msra.mxu0 0.0
      %11235 = vmatprep.subr.mxu0 0.0
      %11236 = vmatpush2.msra.mxu0 0.0
      %11237 = vmatprep.subr.mxu0 0.0
      %11238 = vmatpush2.msra.mxu0 0.0
      %11239 = vmatprep.subr.mxu0 0.0
      %11240 = vmatpush2.msra.mxu0 0.0
      %11241 = vmatprep.subr.mxu0 0.0
      %11242 = vmatpush2.msra.mxu0 0.0
      %11243 = vmatprep.subr.mxu0 0.0
      %11244 = vmatpush2.msra.mxu0 0.0
      %11245 = vmatprep.subr.mxu0 0.0
      %11246 = vmatpush2.msra.mxu0 0.0
      %11247 = vmatprep.subr.mxu0 0.0
      %11248 = vmatpush2.msra.mxu0 0.0
      %11249 = vmatprep.subr.mxu0 0.0
      %11250 = vmatpush2.msra.mxu0 0.0
      %11251 = vmatprep.mubr.f32.mxu0 0.0
      %11252 = vmatmul.mubr.f32.gmra.mxu0 %v11176
      %v11253 = vpop.f32.mrf.mxu0
      %v11254 = vadd.f32 0.0, %v11253
      %v11255 = vpop.f32.mrf.mxu0
      %11256 = vmatprep.mubr.f32.mxu0 0.0
      %11257 = vmatmul.mubr.f32.gmra.mxu0 %v11179
      %v11258 = vpop.f32.mrf.mxu0
      %v11259 = vadd.f32 0.0, %v11258
      %v11260 = vpop.f32.mrf.mxu0
      %11261 = vmatprep.mubr.f32.mxu0 0.0
      %11262 = vmatmul.mubr.f32.gmra.mxu0 %v11182
      %v11263 = vpop.f32.mrf.mxu0
      %v11264 = vadd.f32 0.0, %v11263
      %v11265 = vpop.f32.mrf.mxu0
      %11266 = vmatprep.mubr.f32.mxu0 0.0
      %11267 = vmatmul.mubr.f32.gmra.mxu0 %v11185
      %v11268 = vpop.f32.mrf.mxu0
      %v11269 = vadd.f32 0.0, %v11268
      %v11270 = vpop.f32.mrf.mxu0
      %11271 = vdwg.mxu0
      %v11272 = vadd.f32 %v11171, %v11254
      %v11273 = vadd.f32 %v11172, %v11259
      %v11274 = vadd.f32 %v11173, %v11264
      %v11275 = vadd.f32 %v11174, %v11269
      %v11276 = vld [vmem:[%s20] sm:$0xff]
      %v11277 = vld [vmem:[%s20 + $0x8] sm:$0xff]
      %v11278 = vld [vmem:[%s20 + $0x10] sm:$0xff]
      %v11279 = vld [vmem:[%s20 + $0x18] sm:$0xff]
      %11281 = vset.pattern.permute.xlu0 0
      %11282 = vperm.xlu0 %11281, %v11276
      %v11283 = vpop.permute.xlu0 %11282
      %11286 = vset.pattern.permute.xlu0 0
      %11287 = vperm.xlu0 %11286, %v11277
      %v11288 = vpop.permute.xlu0 %11287
      %11291 = vset.pattern.permute.xlu0 0
      %11292 = vperm.xlu0 %11291, %v11278
      %v11293 = vpop.permute.xlu0 %11292
      %11296 = vset.pattern.permute.xlu0 0
      %11297 = vperm.xlu0 %11296, %v11279
      %v11298 = vpop.permute.xlu0 %11297
      %v11300 = vadd.f32 %v11272, %v11283
      %v11301 = vadd.f32 %v11273, %v11288
      %v11302 = vadd.f32 %v11274, %v11293
      %v11303 = vadd.f32 %v11275, %v11298
      %v11304 = vmax.f32 %v11300, 0.0
      %v11305 = vmax.f32 %v11301, 0.0
      %v11306 = vmax.f32 %v11302, 0.0
      %v11307 = vmax.f32 %v11303, 0.0
      %s11308 = scalar_lea.vmem %s20, 32
      %v11309 = vld [vmem:[%s11308] sm:$0xff]
      %v11310 = vld [vmem:[%s11308 + $0x8] sm:$0xff]
      %v11311 = vld [vmem:[%s11308 + $0x10] sm:$0xff]
      %v11312 = vld [vmem:[%s11308 + $0x18] sm:$0xff]
      %11314 = vset.pattern.permute.xlu0 0
      %11315 = vperm.xlu0 %11314, %v11309
      %v11316 = vpop.permute.xlu0 %11315
      %11319 = vset.pattern.permute.xlu0 0
      %11320 = vperm.xlu0 %11319, %v11310
      %v11321 = vpop.permute.xlu0 %11320
      %11324 = vset.pattern.permute.xlu0 0
      %11325 = vperm.xlu0 %11324, %v11311
      %v11326 = vpop.permute.xlu0 %11325
      %11329 = vset.pattern.permute.xlu0 0
      %11330 = vperm.xlu0 %11329, %v11312
      %v11331 = vpop.permute.xlu0 %11330
      %v11333 = vmul.f32 %v11304, %v11316
      %v11334 = vmul.f32 %v11305, %v11321
      %v11335 = vmul.f32 %v11306, %v11326
      %v11336 = vmul.f32 %v11307, %v11331
      %s11337 = scalar_lea.vmem %s20, 64
      %v11338 = vld [vmem:[%s11337] sm:$0xff]
      %v11339 = vld [vmem:[%s11337 + $0x8] sm:$0xff]
      %v11340 = vld [vmem:[%s11337 + $0x10] sm:$0xff]
      %v11341 = vld [vmem:[%s11337 + $0x18] sm:$0xff]
      %11343 = vset.pattern.permute.xlu0 0
      %11344 = vperm.xlu0 %11343, %v11338
      %v11345 = vpop.permute.xlu0 %11344
      %11348 = vset.pattern.permute.xlu0 0
      %11349 = vperm.xlu0 %11348, %v11339
      %v11350 = vpop.permute.xlu0 %11349
      %11353 = vset.pattern.permute.xlu0 0
      %11354 = vperm.xlu0 %11353, %v11340
      %v11355 = vpop.permute.xlu0 %11354
      %11358 = vset.pattern.permute.xlu0 0
      %11359 = vperm.xlu0 %11358, %v11341
      %v11360 = vpop.permute.xlu0 %11359
      %v11362 = vadd.f32 %v11333, %v11345
      %v11363 = vadd.f32 %v11334, %v11350
      %v11364 = vadd.f32 %v11335, %v11355
      %v11365 = vadd.f32 %v11336, %v11360
      %v11366 = vadd.f32 %v9150, %v11362
      %v11367 = vadd.f32 %v9151, %v11363
      %v11368 = vadd.f32 %v9152, %v11364
      %v11369 = vadd.f32 %v9153, %v11365
      %v11370 = vld [vmem:[%s21] sm:$0xff]
      %v11371 = vld [vmem:[%s21 + $0x8] sm:$0xff]
      %v11372 = vld [vmem:[%s21 + $0x10] sm:$0xff]
      %v11373 = vld [vmem:[%s21 + $0x18] sm:$0xff]
      %v11375 = vsel %vm4656, %v11366, 0
      %v11378 = vsel %vm4656, %v11367, 0
      %v11381 = vsel %vm4656, %v11368, 0
      %v11384 = vsel %vm4656, %v11369, 0
      %11386 = vmatprep.subr.mxu0 0.0
      %11387 = vmatpush1.msra.mxu0 0.0
      %11388 = vmatprep.subr.mxu0 0.0
      %11389 = vmatpush1.msra.mxu0 0.0
      %11390 = vmatprep.subr.mxu0 0.0
      %11391 = vmatpush1.msra.mxu0 0.0
      %11392 = vmatprep.subr.mxu0 0.0
      %11393 = vmatpush1.msra.mxu0 0.0
      %11394 = vmatprep.subr.mxu0 0.0
      %11395 = vmatpush1.msra.mxu0 0.0
      %11396 = vmatprep.subr.mxu0 0.0
      %11397 = vmatpush1.msra.mxu0 0.0
      %11398 = vmatprep.subr.mxu0 0.0
      %11399 = vmatpush1.msra.mxu0 0.0
      %11400 = vmatprep.subr.mxu0 0.0
      %11401 = vmatpush1.msra.mxu0 0.0
      %11402 = vmatprep.subr.mxu0 0.0
      %11403 = vmatpush1.msra.mxu0 0.0
      %11404 = vmatprep.subr.mxu0 0.0
      %11405 = vmatpush1.msra.mxu0 0.0
      %11406 = vmatprep.subr.mxu0 0.0
      %11407 = vmatpush1.msra.mxu0 0.0
      %11408 = vmatprep.subr.mxu0 0.0
      %11409 = vmatpush1.msra.mxu0 0.0
      %11410 = vmatprep.subr.mxu0 0.0
      %11411 = vmatpush1.msra.mxu0 %v11373
      %11412 = vmatprep.subr.mxu0 0.0
      %11413 = vmatpush1.msra.mxu0 %v11372
      %11414 = vmatprep.subr.mxu0 0.0
      %11415 = vmatpush1.msra.mxu0 %v11371
      %11416 = vmatprep.subr.mxu0 0.0
      %11417 = vmatpush1.msra.mxu0 %v11370
      %11418 = vmatprep.subr.mxu0 0.0
      %11419 = vmatpush2.msra.mxu0 0.0
      %11420 = vmatprep.subr.mxu0 0.0
      %11421 = vmatpush2.msra.mxu0 0.0
      %11422 = vmatprep.subr.mxu0 0.0
      %11423 = vmatpush2.msra.mxu0 0.0
      %11424 = vmatprep.subr.mxu0 0.0
      %11425 = vmatpush2.msra.mxu0 0.0
      %11426 = vmatprep.subr.mxu0 0.0
      %11427 = vmatpush2.msra.mxu0 0.0
      %11428 = vmatprep.subr.mxu0 0.0
      %11429 = vmatpush2.msra.mxu0 0.0
      %11430 = vmatprep.subr.mxu0 0.0
      %11431 = vmatpush2.msra.mxu0 0.0
      %11432 = vmatprep.subr.mxu0 0.0
      %11433 = vmatpush2.msra.mxu0 0.0
      %11434 = vmatprep.subr.mxu0 0.0
      %11435 = vmatpush2.msra.mxu0 0.0
      %11436 = vmatprep.subr.mxu0 0.0
      %11437 = vmatpush2.msra.mxu0 0.0
      %11438 = vmatprep.subr.mxu0 0.0
      %11439 = vmatpush2.msra.mxu0 0.0
      %11440 = vmatprep.subr.mxu0 0.0
      %11441 = vmatpush2.msra.mxu0 0.0
      %11442 = vmatprep.subr.mxu0 0.0
      %11443 = vmatpush2.msra.mxu0 0.0
      %11444 = vmatprep.subr.mxu0 0.0
      %11445 = vmatpush2.msra.mxu0 0.0
      %11446 = vmatprep.subr.mxu0 0.0
      %11447 = vmatpush2.msra.mxu0 0.0
      %11448 = vmatprep.subr.mxu0 0.0
      %11449 = vmatpush2.msra.mxu0 0.0
      %11450 = vmatprep.mubr.f32.mxu0 0.0
      %11451 = vmatmul.mubr.f32.gmra.mxu0 %v11375
      %v11452 = vpop.f32.mrf.mxu0
      %v11453 = vadd.f32 0.0, %v11452
      %v11454 = vpop.f32.mrf.mxu0
      %11455 = vmatprep.mubr.f32.mxu0 0.0
      %11456 = vmatmul.mubr.f32.gmra.mxu0 %v11378
      %v11457 = vpop.f32.mrf.mxu0
      %v11458 = vadd.f32 0.0, %v11457
      %v11459 = vpop.f32.mrf.mxu0
      %11460 = vmatprep.mubr.f32.mxu0 0.0
      %11461 = vmatmul.mubr.f32.gmra.mxu0 %v11381
      %v11462 = vpop.f32.mrf.mxu0
      %v11463 = vadd.f32 0.0, %v11462
      %v11464 = vpop.f32.mrf.mxu0
      %11465 = vmatprep.mubr.f32.mxu0 0.0
      %11466 = vmatmul.mubr.f32.gmra.mxu0 %v11384
      %v11467 = vpop.f32.mrf.mxu0
      %v11468 = vadd.f32 0.0, %v11467
      %v11469 = vpop.f32.mrf.mxu0
      %11470 = vdwg.mxu0
      %11471 = vst.msk [vmem:[%s683] sm:$0xff] %vm1079, %v11453
      %11472 = vst.msk [vmem:[%s683 + $0x8] sm:$0xff] %vm1079, %v11458
      %11473 = vst.msk [vmem:[%s683 + $0x10] sm:$0xff] %vm1079, %v11463
      %11474 = vst.msk [vmem:[%s683 + $0x18] sm:$0xff] %vm1079, %v11468
      %p11475 = scmp.lt.s32.totalorder %s33, 1
      %s11476 = scalar_select %p11475, %s33, 1
      %s11477 = smul.addr %s11476, 4
      %s11478 = smul.addr %s11477, 8
      %s11479 = scalar_lea.vmem %s22, %s11478
      // Predicated region
      $region109: #{reasoner_forward.1} parent=107 // pred_check
        %p11480 = pneg %p518
      $region110: #{reasoner_forward.1} parent=107 // pred_check_branch
        %11482 = sbr.rel (%p11480) target = $region112
      $region111: #{reasoner_forward.1} parent=107 // pred_region
        _
      $region112: #{reasoner_forward.1} parent=107 // pred_fallthru
        _
    $region108: #{reasoner_forward.1} parent=5 // pred_fallthru
      _
    %p11483 = scmp.le.s32.totalorder 2, %s28
    // Predicated region
    $region113: #{reasoner_forward.1} parent=5 // pred_check
      %p11484 = pneg %p11483
    $region114: #{reasoner_forward.1} parent=5 // pred_check_branch
      %11486 = sbr.rel (%p11484) target = $region116
    $region115: #{reasoner_forward.1} parent=5 // pred_region
      %s11487 = ssub.s32 %s28, 2
      // Predicated region
      $region117: #{reasoner_forward.1} parent=115 // pred_check
        %p11488 = pneg %p524
      $region118: #{reasoner_forward.1} parent=115 // pred_check_branch
        %11490 = sbr.rel (%p11488) target = $region120
      $region119: #{reasoner_forward.1} parent=115 // pred_region
        %p11491 = scmp.lt.s32.totalorder %s34, 1
        %s11492 = scalar_select %p11491, %s34, 1
        %s11493 = smul.addr %s11492, 4
        %s11494 = smul.addr %s11493, 8
        %s11495 = scalar_lea.vmem %s22, %s11494
      $region120: #{reasoner_forward.1} parent=115 // pred_fallthru
        _
    $region116: #{reasoner_forward.1} parent=5 // pred_fallthru
      _
  $region6: #{reasoner_forward.1} parent=0 // loop_footer
    %s32 = sadd.s32 1, %s28
  $region7: #{reasoner_forward.1} parent=0 // loop_footer_branch
    %27 = sbr.rel target = $region3
  $region8: #{reasoner_forward.1} parent=0 // loop_exit
    _

</llo_original>
